<compile_context>
chip_gen: v7x
topology: tpu7x:2x2x1
jax: 0.10.0
libtpu: 0.0.40
codegen_flags: <defaults>
</compile_context>

<pallas_src>
import jax
import jax.numpy as jnp
from jax.experimental import pallas as pl
from jax.experimental.pallas import tpu as pltpu


def _vmem_limit_bytes():
    """Generation-aware VMEM limit: ~85% of physical, capped at 100 MiB.

    v5e/v6e have 128 MiB of VMEM per TensorCore, v7x only 64 MiB, so derive the
    limit from the actual chip instead of a flat conservative constant.
    """
    try:
        cap = int(pltpu.get_tpu_info().vmem_capacity_bytes)
        return min(int(cap * 0.85), 100 * 1024 * 1024)
    except Exception:
        return 48 * 1024 * 1024   # safe on every generation


# ---------------------------------------------------------------------------
# Fused BasicBlock kernel
# ---------------------------------------------------------------------------
def _conv3x3_from_padded(xpad_ref, w_ref, H, W, Cin, Cout):
    """3x3 conv over a zero-padded (H+2, W+2, Cin) bf16 VMEM tile.

    Sum of 9 shifted (H*W, Cin) x (Cin, Cout) MXU dots; the dots target the
    same f32 accumulator back-to-back (v7x MRB can accumulate in place).
    """
    acc = jnp.zeros((H * W, Cout), jnp.float32)
    for kh in range(3):
        for kw in range(3):
            win = xpad_ref[kh:kh + H, kw:kw + W, :].reshape(H * W, Cin)
            acc = acc + jnp.dot(win, w_ref[kh * 3 + kw],
                                preferred_element_type=jnp.float32)
    return acc


def _basic_block_kernel(x_ref, w1_ref, w2_ref, bn_ref, o_ref,
                        xpad_ref, hpad_ref):
    """Whole BasicBlock for one batch element, entirely in VMEM.

    x_ref   : (1, H, W, C)   bf16  input tile (also serves as the residual)
    w1_ref  : (9, C, C)      bf16  conv1 weight, laid out (kh*3+kw, Cin, Cout)
    w2_ref  : (9, C, C)      bf16  conv2 weight
    bn_ref  : (4, C)         f32   rows = [scale1, shift1, scale2, shift2]
    o_ref   : (1, H*W, C)    f32   output tile (same layout as accumulator)
    xpad_ref: (H+2, W+2, C)  bf16  scratch: zero-padded input
    hpad_ref: (H+2, W+2, C)  bf16  scratch: zero-padded conv1 activation
    """
    _, H, W, C = x_ref.shape

    # Build the zero-padded input tile on chip (no HBM jnp.pad pass).
    xpad_ref[...] = jnp.zeros_like(xpad_ref)
    xpad_ref[1:H + 1, 1:W + 1, :] = x_ref[0]

    # conv1 + folded BN1 + ReLU -> padded VMEM scratch (never touches HBM).
    acc1 = _conv3x3_from_padded(xpad_ref, w1_ref, H, W, C, C)
    acc1 = acc1 * bn_ref[0:1, :] + bn_ref[1:2, :]
    h = jnp.maximum(acc1, 0.0).astype(jnp.bfloat16)
    hpad_ref[...] = jnp.zeros_like(hpad_ref)
    hpad_ref[1:H + 1, 1:W + 1, :] = h.reshape(H, W, C)

    # conv2 + folded BN2 + residual add + ReLU.
    acc2 = _conv3x3_from_padded(hpad_ref, w2_ref, H, W, C, C)
    acc2 = acc2 * bn_ref[2:3, :] + bn_ref[3:4, :]
    acc2 = acc2 + x_ref[0].reshape(H * W, C).astype(jnp.float32)
    acc2 = jnp.maximum(acc2, 0.0)
    o_ref[0] = acc2.astype(o_ref.dtype)


# ---------------------------------------------------------------------------
# Wrapper
# ---------------------------------------------------------------------------
def basic_block_forward(params, x_nchw):
    """x: (B, C, H, W) float32 NCHW -> (B, C, H, W) float32 NCHW."""
    B, C, H, W = x_nchw.shape
    # NCHW -> NHWC and f32 -> bf16 in one fused XLA pass, done once per block.
    # TODO(synk): if the surrounding model stays NHWC/bf16 end-to-end these
    #             boundary transposes disappear entirely.
    x = jnp.transpose(x_nchw, (0, 2, 3, 1)).astype(jnp.bfloat16)

    out = pl.pallas_call(
        _basic_block_kernel,
        out_shape=jax.ShapeDtypeStruct((B, H * W, C), jnp.float32),
        grid=(B,),
        in_specs=[
            pl.BlockSpec((1, H, W, C), lambda b: (b, 0, 0, 0)),
            pl.BlockSpec((9, C, C), lambda b: (0, 0, 0)),
            pl.BlockSpec((9, C, C), lambda b: (0, 0, 0)),
            pl.BlockSpec((4, C), lambda b: (0, 0)),
        ],
        out_specs=pl.BlockSpec((1, H * W, C), lambda b: (b, 0, 0)),
        scratch_shapes=[
            pltpu.VMEM((H + 2, W + 2, C), jnp.bfloat16),
            pltpu.VMEM((H + 2, W + 2, C), jnp.bfloat16),
        ],
        compiler_params=pltpu.CompilerParams(
            dimension_semantics=("parallel",),   # batch axis -> megacore
            vmem_limit_bytes=_vmem_limit_bytes(),
        ),
    )(x, params["w1"], params["w2"], params["bn"])

    # (B, H*W, C) -> (B, H, W, C) is a free row-major reshape; back to NCHW.
    return jnp.transpose(out.reshape(B, H, W, C), (0, 3, 1, 2))


# ---------------------------------------------------------------------------
# Parameter handling (done once, outside the per-step forward)
# ---------------------------------------------------------------------------
def init_raw_params(key, channels):
    ks = jax.random.split(key, 10)
    c = channels
    p = {}
    p["conv1_w"] = jax.random.normal(ks[0], (c, c, 3, 3), jnp.float32) * 0.1
    p["bn1_gamma"] = 1.0 + 0.1 * jax.random.normal(ks[1], (c,), jnp.float32)
    p["bn1_beta"] = 0.1 * jax.random.normal(ks[2], (c,), jnp.float32)
    p["bn1_mean"] = 0.1 * jax.random.normal(ks[3], (c,), jnp.float32)
    p["bn1_var"] = 1.0 + 0.1 * jnp.abs(jax.random.normal(ks[4], (c,), jnp.float32))
    p["conv2_w"] = jax.random.normal(ks[5], (c, c, 3, 3), jnp.float32) * 0.1
    p["bn2_gamma"] = 1.0 + 0.1 * jax.random.normal(ks[6], (c,), jnp.float32)
    p["bn2_beta"] = 0.1 * jax.random.normal(ks[7], (c,), jnp.float32)
    p["bn2_mean"] = 0.1 * jax.random.normal(ks[8], (c,), jnp.float32)
    p["bn2_var"] = 1.0 + 0.1 * jnp.abs(jax.random.normal(ks[9], (c,), jnp.float32))
    return p


def fold_params(raw, eps=1e-5):
    """Pre-transpose conv weights to (9, Cin, Cout) bf16 and fold both BNs
    (eval mode) into one (4, C) scale/shift array.  Done once."""
    def fold_w(w):
        cout, cin = w.shape[0], w.shape[1]
        # OIHW -> (kh, kw, Cin, Cout) -> (9, Cin, Cout)
        return jnp.transpose(w, (2, 3, 1, 0)).reshape(9, cin, cout).astype(jnp.bfloat16)

    def fold_bn(gamma, beta, mean, var):
        scale = gamma / jnp.sqrt(var + eps)
        shift = beta - mean * scale
        return scale, shift

    s1, t1 = fold_bn(raw["bn1_gamma"], raw["bn1_beta"], raw["bn1_mean"], raw["bn1_var"])
    s2, t2 = fold_bn(raw["bn2_gamma"], raw["bn2_beta"], raw["bn2_mean"], raw["bn2_var"])
    return {
        "w1": fold_w(raw["conv1_w"]),
        "w2": fold_w(raw["conv2_w"]),
        "bn": jnp.stack([s1, t1, s2, t2], axis=0).astype(jnp.float32),   # (4, C)
    }


# ---------------------------------------------------------------------------
# Pure-JAX reference (eval-mode BasicBlock) for a loose numerical check
# ---------------------------------------------------------------------------
def _reference_forward(raw, x, eps=1e-5):
    def conv(y, w):
        return jax.lax.conv_general_dilated(
            y, w, window_strides=(1, 1), padding=((1, 1), (1, 1)),
            dimension_numbers=("NCHW", "OIHW", "NCHW"))

    def bn(y, g, b, m, v):
        inv = g / jnp.sqrt(v + eps)
        return y * inv[None, :, None, None] + (b - m * inv)[None, :, None, None]

    h = jax.nn.relu(bn(conv(x, raw["conv1_w"]), raw["bn1_gamma"], raw["bn1_beta"],
                       raw["bn1_mean"], raw["bn1_var"]))
    y = bn(conv(h, raw["conv2_w"]), raw["bn2_gamma"], raw["bn2_beta"],
           raw["bn2_mean"], raw["bn2_var"])
    return jax.nn.relu(y + x)


if __name__ == "__main__":
    key = jax.random.PRNGKey(0)
    k_param, k_input = jax.random.split(key)

    B, C, H, W = 2, 4, 16, 16                 # small shapes consistent with the module
    raw = init_raw_params(k_param, C)
    params = fold_params(raw)
    x = jax.random.normal(k_input, (B, C, H, W), jnp.float32)

    fwd = jax.jit(basic_block_forward)
    out = jax.block_until_ready(fwd(params, x))

    assert out.shape == (B, C, H, W), out.shape
    assert out.dtype == jnp.float32
    assert bool(jnp.all(jnp.isfinite(out)))
    assert bool(jnp.all(out >= 0.0))          # final ReLU

    # Loose tolerance: the kernel feeds the MXU in bf16 (f32 accumulation).
    ref = _reference_forward(raw, x)
    max_err = float(jnp.max(jnp.abs(out - ref)))
    assert bool(jnp.all(jnp.abs(out - ref) <= 0.05 + 0.05 * jnp.abs(ref))), max_err

    print("KERNEL_OK")
</pallas_src>

<mosaic_0001>
module attributes {stable_mosaic.version = 11 : i64} {
  func.func @_basic_block_kernel(%arg0: i32, %arg1: memref<1x16x16x4xbf16, #tpu.memory_space<vmem>>, %arg2: memref<9x4x4xbf16, #tpu.memory_space<vmem>>, %arg3: memref<9x4x4xbf16, #tpu.memory_space<vmem>>, %arg4: memref<4x4xf32, #tpu.memory_space<vmem>>, %arg5: memref<1x256x4xf32, #tpu.memory_space<vmem>>, %arg6: memref<18x18x4xbf16, #tpu.memory_space<vmem>>, %arg7: memref<18x18x4xbf16, #tpu.memory_space<vmem>>) attributes {dimension_semantics = [#tpu.dimension_semantics<parallel>], iteration_bounds = array<i64: 2>, scalar_prefetch = 0 : i64, scratch_operands = 2 : i64, tpu.core_type = #tpu.core_type<tc>, window_params = [{transform_indices = @transform_0, window_bounds = array<i64: 1, 16, 16, 4>}, {pipeline_mode = #tpu.pipeline_mode<synchronous>, transform_indices = @transform_1, window_bounds = array<i64: 9, 4, 4>}, {pipeline_mode = #tpu.pipeline_mode<synchronous>, transform_indices = @transform_2, window_bounds = array<i64: 9, 4, 4>}, {pipeline_mode = #tpu.pipeline_mode<synchronous>, transform_indices = @transform_3, window_bounds = array<i64: 4, 4>}, {transform_indices = @transform_4, window_bounds = array<i64: 1, 256, 4>}]} {
    %cst = arith.constant 0.000000e+00 : bf16
    %0 = vector.broadcast %cst : bf16 to vector<18x18x4xbf16>
    %c0 = arith.constant 0 : index
    %c0_0 = arith.constant 0 : index
    %c0_1 = arith.constant 0 : index
    %1 = vector.load %arg6[%c0, %c0_0, %c0_1] : memref<18x18x4xbf16, #tpu.memory_space<vmem>>, vector<18x18x4xbf16>
    tpu.vector_store %arg6[%c0, %c0_0, %c0_1], %0 {strides = array<i32>} : memref<18x18x4xbf16, #tpu.memory_space<vmem>>, vector<18x18x4xbf16>,
    %c0_2 = arith.constant 0 : index
    %c0_3 = arith.constant 0 : index
    %c0_4 = arith.constant 0 : index
    %c0_5 = arith.constant 0 : index
    %2 = vector.load %arg1[%c0_2, %c0_3, %c0_4, %c0_5] : memref<1x16x16x4xbf16, #tpu.memory_space<vmem>>, vector<1x16x16x4xbf16>
    %3 = vector.shape_cast %2 : vector<1x16x16x4xbf16> to vector<16x16x4xbf16>
    %c1 = arith.constant 1 : index
    %c1_6 = arith.constant 1 : index
    %c0_7 = arith.constant 0 : index
    %4 = vector.load %arg6[%c1, %c1_6, %c0_7] : memref<18x18x4xbf16, #tpu.memory_space<vmem>>, vector<16x16x4xbf16>
    tpu.vector_store %arg6[%c1, %c1_6, %c0_7], %3 {strides = array<i32>} : memref<18x18x4xbf16, #tpu.memory_space<vmem>>, vector<16x16x4xbf16>,
    %cst_8 = arith.constant 0.000000e+00 : f32
    %5 = vector.broadcast %cst_8 : f32 to vector<256x4xf32>
    %c0_9 = arith.constant 0 : index
    %c0_10 = arith.constant 0 : index
    %c0_11 = arith.constant 0 : index
    %6 = vector.load %arg6[%c0_9, %c0_10, %c0_11] : memref<18x18x4xbf16, #tpu.memory_space<vmem>>, vector<16x16x4xbf16>
    %7 = vector.shape_cast %6 : vector<16x16x4xbf16> to vector<256x4xbf16>
    %c0_12 = arith.constant 0 : index
    %c0_13 = arith.constant 0 : index
    %c0_14 = arith.constant 0 : index
    %8 = vector.load %arg2[%c0_12, %c0_13, %c0_14] : memref<9x4x4xbf16, #tpu.memory_space<vmem>>, vector<1x4x4xbf16>
    %9 = vector.shape_cast %8 : vector<1x4x4xbf16> to vector<4x4xbf16>
    %cst_15 = arith.constant dense<0.000000e+00> : vector<256x4xf32>
    %10 = tpu.matmul %7, %9, %cst_15 {dimension_numbers = #tpu.dot_dimension_numbers<[1], [0], [0], [1], [0, 0, 1, 1], [], []>} : vector<256x4xbf16>, vector<4x4xbf16>, vector<256x4xf32> -> vector<256x4xf32>
    %11 = arith.addf %5, %10 : vector<256x4xf32>
    %c0_16 = arith.constant 0 : index
    %c1_17 = arith.constant 1 : index
    %c0_18 = arith.constant 0 : index
    %12 = vector.load %arg6[%c0_16, %c1_17, %c0_18] : memref<18x18x4xbf16, #tpu.memory_space<vmem>>, vector<16x16x4xbf16>
    %13 = vector.shape_cast %12 : vector<16x16x4xbf16> to vector<256x4xbf16>
    %c1_19 = arith.constant 1 : index
    %c0_20 = arith.constant 0 : index
    %c0_21 = arith.constant 0 : index
    %14 = vector.load %arg2[%c1_19, %c0_20, %c0_21] : memref<9x4x4xbf16, #tpu.memory_space<vmem>>, vector<1x4x4xbf16>
    %15 = vector.shape_cast %14 : vector<1x4x4xbf16> to vector<4x4xbf16>
    %cst_22 = arith.constant dense<0.000000e+00> : vector<256x4xf32>
    %16 = tpu.matmul %13, %15, %cst_22 {dimension_numbers = #tpu.dot_dimension_numbers<[1], [0], [0], [1], [0, 0, 1, 1], [], []>} : vector<256x4xbf16>, vector<4x4xbf16>, vector<256x4xf32> -> vector<256x4xf32>
    %17 = arith.addf %11, %16 : vector<256x4xf32>
    %c0_23 = arith.constant 0 : index
    %c2 = arith.constant 2 : index
    %c0_24 = arith.constant 0 : index
    %18 = vector.load %arg6[%c0_23, %c2, %c0_24] : memref<18x18x4xbf16, #tpu.memory_space<vmem>>, vector<16x16x4xbf16>
    %19 = vector.shape_cast %18 : vector<16x16x4xbf16> to vector<256x4xbf16>
    %c2_25 = arith.constant 2 : index
    %c0_26 = arith.constant 0 : index
    %c0_27 = arith.constant 0 : index
    %20 = vector.load %arg2[%c2_25, %c0_26, %c0_27] : memref<9x4x4xbf16, #tpu.memory_space<vmem>>, vector<1x4x4xbf16>
    %21 = vector.shape_cast %20 : vector<1x4x4xbf16> to vector<4x4xbf16>
    %cst_28 = arith.constant dense<0.000000e+00> : vector<256x4xf32>
    %22 = tpu.matmul %19, %21, %cst_28 {dimension_numbers = #tpu.dot_dimension_numbers<[1], [0], [0], [1], [0, 0, 1, 1], [], []>} : vector<256x4xbf16>, vector<4x4xbf16>, vector<256x4xf32> -> vector<256x4xf32>
    %23 = arith.addf %17, %22 : vector<256x4xf32>
    %c1_29 = arith.constant 1 : index
    %c0_30 = arith.constant 0 : index
    %c0_31 = arith.constant 0 : index
    %24 = vector.load %arg6[%c1_29, %c0_30, %c0_31] : memref<18x18x4xbf16, #tpu.memory_space<vmem>>, vector<16x16x4xbf16>
    %25 = vector.shape_cast %24 : vector<16x16x4xbf16> to vector<256x4xbf16>
    %c3 = arith.constant 3 : index
    %c0_32 = arith.constant 0 : index
    %c0_33 = arith.constant 0 : index
    %26 = vector.load %arg2[%c3, %c0_32, %c0_33] : memref<9x4x4xbf16, #tpu.memory_space<vmem>>, vector<1x4x4xbf16>
    %27 = vector.shape_cast %26 : vector<1x4x4xbf16> to vector<4x4xbf16>
    %cst_34 = arith.constant dense<0.000000e+00> : vector<256x4xf32>
    %28 = tpu.matmul %25, %27, %cst_34 {dimension_numbers = #tpu.dot_dimension_numbers<[1], [0], [0], [1], [0, 0, 1, 1], [], []>} : vector<256x4xbf16>, vector<4x4xbf16>, vector<256x4xf32> -> vector<256x4xf32>
    %29 = arith.addf %23, %28 : vector<256x4xf32>
    %c1_35 = arith.constant 1 : index
    %c1_36 = arith.constant 1 : index
    %c0_37 = arith.constant 0 : index
    %30 = vector.load %arg6[%c1_35, %c1_36, %c0_37] : memref<18x18x4xbf16, #tpu.memory_space<vmem>>, vector<16x16x4xbf16>
    %31 = vector.shape_cast %30 : vector<16x16x4xbf16> to vector<256x4xbf16>
    %c4 = arith.constant 4 : index
    %c0_38 = arith.constant 0 : index
    %c0_39 = arith.constant 0 : index
    %32 = vector.load %arg2[%c4, %c0_38, %c0_39] : memref<9x4x4xbf16, #tpu.memory_space<vmem>>, vector<1x4x4xbf16>
    %33 = vector.shape_cast %32 : vector<1x4x4xbf16> to vector<4x4xbf16>
    %cst_40 = arith.constant dense<0.000000e+00> : vector<256x4xf32>
    %34 = tpu.matmul %31, %33, %cst_40 {dimension_numbers = #tpu.dot_dimension_numbers<[1], [0], [0], [1], [0, 0, 1, 1], [], []>} : vector<256x4xbf16>, vector<4x4xbf16>, vector<256x4xf32> -> vector<256x4xf32>
    %35 = arith.addf %29, %34 : vector<256x4xf32>
    %c1_41 = arith.constant 1 : index
    %c2_42 = arith.constant 2 : index
    %c0_43 = arith.constant 0 : index
    %36 = vector.load %arg6[%c1_41, %c2_42, %c0_43] : memref<18x18x4xbf16, #tpu.memory_space<vmem>>, vector<16x16x4xbf16>
    %37 = vector.shape_cast %36 : vector<16x16x4xbf16> to vector<256x4xbf16>
    %c5 = arith.constant 5 : index
    %c0_44 = arith.constant 0 : index
    %c0_45 = arith.constant 0 : index
    %38 = vector.load %arg2[%c5, %c0_44, %c0_45] : memref<9x4x4xbf16, #tpu.memory_space<vmem>>, vector<1x4x4xbf16>
    %39 = vector.shape_cast %38 : vector<1x4x4xbf16> to vector<4x4xbf16>
    %cst_46 = arith.constant dense<0.000000e+00> : vector<256x4xf32>
    %40 = tpu.matmul %37, %39, %cst_46 {dimension_numbers = #tpu.dot_dimension_numbers<[1], [0], [0], [1], [0, 0, 1, 1], [], []>} : vector<256x4xbf16>, vector<4x4xbf16>, vector<256x4xf32> -> vector<256x4xf32>
    %41 = arith.addf %35, %40 : vector<256x4xf32>
    %c2_47 = arith.constant 2 : index
    %c0_48 = arith.constant 0 : index
    %c0_49 = arith.constant 0 : index
    %42 = vector.load %arg6[%c2_47, %c0_48, %c0_49] : memref<18x18x4xbf16, #tpu.memory_space<vmem>>, vector<16x16x4xbf16>
    %43 = vector.shape_cast %42 : vector<16x16x4xbf16> to vector<256x4xbf16>
    %c6 = arith.constant 6 : index
    %c0_50 = arith.constant 0 : index
    %c0_51 = arith.constant 0 : index
    %44 = vector.load %arg2[%c6, %c0_50, %c0_51] : memref<9x4x4xbf16, #tpu.memory_space<vmem>>, vector<1x4x4xbf16>
    %45 = vector.shape_cast %44 : vector<1x4x4xbf16> to vector<4x4xbf16>
    %cst_52 = arith.constant dense<0.000000e+00> : vector<256x4xf32>
    %46 = tpu.matmul %43, %45, %cst_52 {dimension_numbers = #tpu.dot_dimension_numbers<[1], [0], [0], [1], [0, 0, 1, 1], [], []>} : vector<256x4xbf16>, vector<4x4xbf16>, vector<256x4xf32> -> vector<256x4xf32>
    %47 = arith.addf %41, %46 : vector<256x4xf32>
    %c2_53 = arith.constant 2 : index
    %c1_54 = arith.constant 1 : index
    %c0_55 = arith.constant 0 : index
    %48 = vector.load %arg6[%c2_53, %c1_54, %c0_55] : memref<18x18x4xbf16, #tpu.memory_space<vmem>>, vector<16x16x4xbf16>
    %49 = vector.shape_cast %48 : vector<16x16x4xbf16> to vector<256x4xbf16>
    %c7 = arith.constant 7 : index
    %c0_56 = arith.constant 0 : index
    %c0_57 = arith.constant 0 : index
    %50 = vector.load %arg2[%c7, %c0_56, %c0_57] : memref<9x4x4xbf16, #tpu.memory_space<vmem>>, vector<1x4x4xbf16>
    %51 = vector.shape_cast %50 : vector<1x4x4xbf16> to vector<4x4xbf16>
    %cst_58 = arith.constant dense<0.000000e+00> : vector<256x4xf32>
    %52 = tpu.matmul %49, %51, %cst_58 {dimension_numbers = #tpu.dot_dimension_numbers<[1], [0], [0], [1], [0, 0, 1, 1], [], []>} : vector<256x4xbf16>, vector<4x4xbf16>, vector<256x4xf32> -> vector<256x4xf32>
    %53 = arith.addf %47, %52 : vector<256x4xf32>
    %c2_59 = arith.constant 2 : index
    %c2_60 = arith.constant 2 : index
    %c0_61 = arith.constant 0 : index
    %54 = vector.load %arg6[%c2_59, %c2_60, %c0_61] : memref<18x18x4xbf16, #tpu.memory_space<vmem>>, vector<16x16x4xbf16>
    %55 = vector.shape_cast %54 : vector<16x16x4xbf16> to vector<256x4xbf16>
    %c8 = arith.constant 8 : index
    %c0_62 = arith.constant 0 : index
    %c0_63 = arith.constant 0 : index
    %56 = vector.load %arg2[%c8, %c0_62, %c0_63] : memref<9x4x4xbf16, #tpu.memory_space<vmem>>, vector<1x4x4xbf16>
    %57 = vector.shape_cast %56 : vector<1x4x4xbf16> to vector<4x4xbf16>
    %cst_64 = arith.constant dense<0.000000e+00> : vector<256x4xf32>
    %58 = tpu.matmul %55, %57, %cst_64 {dimension_numbers = #tpu.dot_dimension_numbers<[1], [0], [0], [1], [0, 0, 1, 1], [], []>} : vector<256x4xbf16>, vector<4x4xbf16>, vector<256x4xf32> -> vector<256x4xf32>
    %59 = arith.addf %53, %58 : vector<256x4xf32>
    %c0_65 = arith.constant 0 : index
    %c0_66 = arith.constant 0 : index
    %60 = vector.load %arg4[%c0_65, %c0_66] : memref<4x4xf32, #tpu.memory_space<vmem>>, vector<1x4xf32>
    %61 = vector.broadcast %60 : vector<1x4xf32> to vector<256x4xf32>
    %62 = arith.mulf %59, %61 : vector<256x4xf32>
    %c1_67 = arith.constant 1 : index
    %c0_68 = arith.constant 0 : index
    %63 = vector.load %arg4[%c1_67, %c0_68] : memref<4x4xf32, #tpu.memory_space<vmem>>, vector<1x4xf32>
    %64 = vector.broadcast %63 : vector<1x4xf32> to vector<256x4xf32>
    %65 = arith.addf %62, %64 : vector<256x4xf32>
    %cst_69 = arith.constant 0.000000e+00 : f32
    %66 = vector.broadcast %cst_69 : f32 to vector<256x4xf32>
    %67 = arith.maximumf %65, %66 : vector<256x4xf32>
    %68 = arith.truncf %67 : vector<256x4xf32> to vector<256x4xbf16>
    %cst_70 = arith.constant 0.000000e+00 : bf16
    %69 = vector.broadcast %cst_70 : bf16 to vector<18x18x4xbf16>
    %c0_71 = arith.constant 0 : index
    %c0_72 = arith.constant 0 : index
    %c0_73 = arith.constant 0 : index
    %70 = vector.load %arg7[%c0_71, %c0_72, %c0_73] : memref<18x18x4xbf16, #tpu.memory_space<vmem>>, vector<18x18x4xbf16>
    tpu.vector_store %arg7[%c0_71, %c0_72, %c0_73], %69 {strides = array<i32>} : memref<18x18x4xbf16, #tpu.memory_space<vmem>>, vector<18x18x4xbf16>,
    %71 = vector.shape_cast %68 : vector<256x4xbf16> to vector<16x16x4xbf16>
    %c1_74 = arith.constant 1 : index
    %c1_75 = arith.constant 1 : index
    %c0_76 = arith.constant 0 : index
    %72 = vector.load %arg7[%c1_74, %c1_75, %c0_76] : memref<18x18x4xbf16, #tpu.memory_space<vmem>>, vector<16x16x4xbf16>
    tpu.vector_store %arg7[%c1_74, %c1_75, %c0_76], %71 {strides = array<i32>} : memref<18x18x4xbf16, #tpu.memory_space<vmem>>, vector<16x16x4xbf16>,
    %cst_77 = arith.constant 0.000000e+00 : f32
    %73 = vector.broadcast %cst_77 : f32 to vector<256x4xf32>
    %c0_78 = arith.constant 0 : index
    %c0_79 = arith.constant 0 : index
    %c0_80 = arith.constant 0 : index
    %74 = vector.load %arg7[%c0_78, %c0_79, %c0_80] : memref<18x18x4xbf16, #tpu.memory_space<vmem>>, vector<16x16x4xbf16>
    %75 = vector.shape_cast %74 : vector<16x16x4xbf16> to vector<256x4xbf16>
    %c0_81 = arith.constant 0 : index
    %c0_82 = arith.constant 0 : index
    %c0_83 = arith.constant 0 : index
    %76 = vector.load %arg3[%c0_81, %c0_82, %c0_83] : memref<9x4x4xbf16, #tpu.memory_space<vmem>>, vector<1x4x4xbf16>
    %77 = vector.shape_cast %76 : vector<1x4x4xbf16> to vector<4x4xbf16>
    %cst_84 = arith.constant dense<0.000000e+00> : vector<256x4xf32>
    %78 = tpu.matmul %75, %77, %cst_84 {dimension_numbers = #tpu.dot_dimension_numbers<[1], [0], [0], [1], [0, 0, 1, 1], [], []>} : vector<256x4xbf16>, vector<4x4xbf16>, vector<256x4xf32> -> vector<256x4xf32>
    %79 = arith.addf %73, %78 : vector<256x4xf32>
    %c0_85 = arith.constant 0 : index
    %c1_86 = arith.constant 1 : index
    %c0_87 = arith.constant 0 : index
    %80 = vector.load %arg7[%c0_85, %c1_86, %c0_87] : memref<18x18x4xbf16, #tpu.memory_space<vmem>>, vector<16x16x4xbf16>
    %81 = vector.shape_cast %80 : vector<16x16x4xbf16> to vector<256x4xbf16>
    %c1_88 = arith.constant 1 : index
    %c0_89 = arith.constant 0 : index
    %c0_90 = arith.constant 0 : index
    %82 = vector.load %arg3[%c1_88, %c0_89, %c0_90] : memref<9x4x4xbf16, #tpu.memory_space<vmem>>, vector<1x4x4xbf16>
    %83 = vector.shape_cast %82 : vector<1x4x4xbf16> to vector<4x4xbf16>
    %cst_91 = arith.constant dense<0.000000e+00> : vector<256x4xf32>
    %84 = tpu.matmul %81, %83, %cst_91 {dimension_numbers = #tpu.dot_dimension_numbers<[1], [0], [0], [1], [0, 0, 1, 1], [], []>} : vector<256x4xbf16>, vector<4x4xbf16>, vector<256x4xf32> -> vector<256x4xf32>
    %85 = arith.addf %79, %84 : vector<256x4xf32>
    %c0_92 = arith.constant 0 : index
    %c2_93 = arith.constant 2 : index
    %c0_94 = arith.constant 0 : index
    %86 = vector.load %arg7[%c0_92, %c2_93, %c0_94] : memref<18x18x4xbf16, #tpu.memory_space<vmem>>, vector<16x16x4xbf16>
    %87 = vector.shape_cast %86 : vector<16x16x4xbf16> to vector<256x4xbf16>
    %c2_95 = arith.constant 2 : index
    %c0_96 = arith.constant 0 : index
    %c0_97 = arith.constant 0 : index
    %88 = vector.load %arg3[%c2_95, %c0_96, %c0_97] : memref<9x4x4xbf16, #tpu.memory_space<vmem>>, vector<1x4x4xbf16>
    %89 = vector.shape_cast %88 : vector<1x4x4xbf16> to vector<4x4xbf16>
    %cst_98 = arith.constant dense<0.000000e+00> : vector<256x4xf32>
    %90 = tpu.matmul %87, %89, %cst_98 {dimension_numbers = #tpu.dot_dimension_numbers<[1], [0], [0], [1], [0, 0, 1, 1], [], []>} : vector<256x4xbf16>, vector<4x4xbf16>, vector<256x4xf32> -> vector<256x4xf32>
    %91 = arith.addf %85, %90 : vector<256x4xf32>
    %c1_99 = arith.constant 1 : index
    %c0_100 = arith.constant 0 : index
    %c0_101 = arith.constant 0 : index
    %92 = vector.load %arg7[%c1_99, %c0_100, %c0_101] : memref<18x18x4xbf16, #tpu.memory_space<vmem>>, vector<16x16x4xbf16>
    %93 = vector.shape_cast %92 : vector<16x16x4xbf16> to vector<256x4xbf16>
    %c3_102 = arith.constant 3 : index
    %c0_103 = arith.constant 0 : index
    %c0_104 = arith.constant 0 : index
    %94 = vector.load %arg3[%c3_102, %c0_103, %c0_104] : memref<9x4x4xbf16, #tpu.memory_space<vmem>>, vector<1x4x4xbf16>
    %95 = vector.shape_cast %94 : vector<1x4x4xbf16> to vector<4x4xbf16>
    %cst_105 = arith.constant dense<0.000000e+00> : vector<256x4xf32>
    %96 = tpu.matmul %93, %95, %cst_105 {dimension_numbers = #tpu.dot_dimension_numbers<[1], [0], [0], [1], [0, 0, 1, 1], [], []>} : vector<256x4xbf16>, vector<4x4xbf16>, vector<256x4xf32> -> vector<256x4xf32>
    %97 = arith.addf %91, %96 : vector<256x4xf32>
    %c1_106 = arith.constant 1 : index
    %c1_107 = arith.constant 1 : index
    %c0_108 = arith.constant 0 : index
    %98 = vector.load %arg7[%c1_106, %c1_107, %c0_108] : memref<18x18x4xbf16, #tpu.memory_space<vmem>>, vector<16x16x4xbf16>
    %99 = vector.shape_cast %98 : vector<16x16x4xbf16> to vector<256x4xbf16>
    %c4_109 = arith.constant 4 : index
    %c0_110 = arith.constant 0 : index
    %c0_111 = arith.constant 0 : index
    %100 = vector.load %arg3[%c4_109, %c0_110, %c0_111] : memref<9x4x4xbf16, #tpu.memory_space<vmem>>, vector<1x4x4xbf16>
    %101 = vector.shape_cast %100 : vector<1x4x4xbf16> to vector<4x4xbf16>
    %cst_112 = arith.constant dense<0.000000e+00> : vector<256x4xf32>
    %102 = tpu.matmul %99, %101, %cst_112 {dimension_numbers = #tpu.dot_dimension_numbers<[1], [0], [0], [1], [0, 0, 1, 1], [], []>} : vector<256x4xbf16>, vector<4x4xbf16>, vector<256x4xf32> -> vector<256x4xf32>
    %103 = arith.addf %97, %102 : vector<256x4xf32>
    %c1_113 = arith.constant 1 : index
    %c2_114 = arith.constant 2 : index
    %c0_115 = arith.constant 0 : index
    %104 = vector.load %arg7[%c1_113, %c2_114, %c0_115] : memref<18x18x4xbf16, #tpu.memory_space<vmem>>, vector<16x16x4xbf16>
    %105 = vector.shape_cast %104 : vector<16x16x4xbf16> to vector<256x4xbf16>
    %c5_116 = arith.constant 5 : index
    %c0_117 = arith.constant 0 : index
    %c0_118 = arith.constant 0 : index
    %106 = vector.load %arg3[%c5_116, %c0_117, %c0_118] : memref<9x4x4xbf16, #tpu.memory_space<vmem>>, vector<1x4x4xbf16>
    %107 = vector.shape_cast %106 : vector<1x4x4xbf16> to vector<4x4xbf16>
    %cst_119 = arith.constant dense<0.000000e+00> : vector<256x4xf32>
    %108 = tpu.matmul %105, %107, %cst_119 {dimension_numbers = #tpu.dot_dimension_numbers<[1], [0], [0], [1], [0, 0, 1, 1], [], []>} : vector<256x4xbf16>, vector<4x4xbf16>, vector<256x4xf32> -> vector<256x4xf32>
    %109 = arith.addf %103, %108 : vector<256x4xf32>
    %c2_120 = arith.constant 2 : index
    %c0_121 = arith.constant 0 : index
    %c0_122 = arith.constant 0 : index
    %110 = vector.load %arg7[%c2_120, %c0_121, %c0_122] : memref<18x18x4xbf16, #tpu.memory_space<vmem>>, vector<16x16x4xbf16>
    %111 = vector.shape_cast %110 : vector<16x16x4xbf16> to vector<256x4xbf16>
    %c6_123 = arith.constant 6 : index
    %c0_124 = arith.constant 0 : index
    %c0_125 = arith.constant 0 : index
    %112 = vector.load %arg3[%c6_123, %c0_124, %c0_125] : memref<9x4x4xbf16, #tpu.memory_space<vmem>>, vector<1x4x4xbf16>
    %113 = vector.shape_cast %112 : vector<1x4x4xbf16> to vector<4x4xbf16>
    %cst_126 = arith.constant dense<0.000000e+00> : vector<256x4xf32>
    %114 = tpu.matmul %111, %113, %cst_126 {dimension_numbers = #tpu.dot_dimension_numbers<[1], [0], [0], [1], [0, 0, 1, 1], [], []>} : vector<256x4xbf16>, vector<4x4xbf16>, vector<256x4xf32> -> vector<256x4xf32>
    %115 = arith.addf %109, %114 : vector<256x4xf32>
    %c2_127 = arith.constant 2 : index
    %c1_128 = arith.constant 1 : index
    %c0_129 = arith.constant 0 : index
    %116 = vector.load %arg7[%c2_127, %c1_128, %c0_129] : memref<18x18x4xbf16, #tpu.memory_space<vmem>>, vector<16x16x4xbf16>
    %117 = vector.shape_cast %116 : vector<16x16x4xbf16> to vector<256x4xbf16>
    %c7_130 = arith.constant 7 : index
    %c0_131 = arith.constant 0 : index
    %c0_132 = arith.constant 0 : index
    %118 = vector.load %arg3[%c7_130, %c0_131, %c0_132] : memref<9x4x4xbf16, #tpu.memory_space<vmem>>, vector<1x4x4xbf16>
    %119 = vector.shape_cast %118 : vector<1x4x4xbf16> to vector<4x4xbf16>
    %cst_133 = arith.constant dense<0.000000e+00> : vector<256x4xf32>
    %120 = tpu.matmul %117, %119, %cst_133 {dimension_numbers = #tpu.dot_dimension_numbers<[1], [0], [0], [1], [0, 0, 1, 1], [], []>} : vector<256x4xbf16>, vector<4x4xbf16>, vector<256x4xf32> -> vector<256x4xf32>
    %121 = arith.addf %115, %120 : vector<256x4xf32>
    %c2_134 = arith.constant 2 : index
    %c2_135 = arith.constant 2 : index
    %c0_136 = arith.constant 0 : index
    %122 = vector.load %arg7[%c2_134, %c2_135, %c0_136] : memref<18x18x4xbf16, #tpu.memory_space<vmem>>, vector<16x16x4xbf16>
    %123 = vector.shape_cast %122 : vector<16x16x4xbf16> to vector<256x4xbf16>
    %c8_137 = arith.constant 8 : index
    %c0_138 = arith.constant 0 : index
    %c0_139 = arith.constant 0 : index
    %124 = vector.load %arg3[%c8_137, %c0_138, %c0_139] : memref<9x4x4xbf16, #tpu.memory_space<vmem>>, vector<1x4x4xbf16>
    %125 = vector.shape_cast %124 : vector<1x4x4xbf16> to vector<4x4xbf16>
    %cst_140 = arith.constant dense<0.000000e+00> : vector<256x4xf32>
    %126 = tpu.matmul %123, %125, %cst_140 {dimension_numbers = #tpu.dot_dimension_numbers<[1], [0], [0], [1], [0, 0, 1, 1], [], []>} : vector<256x4xbf16>, vector<4x4xbf16>, vector<256x4xf32> -> vector<256x4xf32>
    %127 = arith.addf %121, %126 : vector<256x4xf32>
    %c2_141 = arith.constant 2 : index
    %c0_142 = arith.constant 0 : index
    %128 = vector.load %arg4[%c2_141, %c0_142] : memref<4x4xf32, #tpu.memory_space<vmem>>, vector<1x4xf32>
    %129 = vector.broadcast %128 : vector<1x4xf32> to vector<256x4xf32>
    %130 = arith.mulf %127, %129 : vector<256x4xf32>
    %c3_143 = arith.constant 3 : index
    %c0_144 = arith.constant 0 : index
    %131 = vector.load %arg4[%c3_143, %c0_144] : memref<4x4xf32, #tpu.memory_space<vmem>>, vector<1x4xf32>
    %132 = vector.broadcast %131 : vector<1x4xf32> to vector<256x4xf32>
    %133 = arith.addf %130, %132 : vector<256x4xf32>
    %c0_145 = arith.constant 0 : index
    %c0_146 = arith.constant 0 : index
    %c0_147 = arith.constant 0 : index
    %c0_148 = arith.constant 0 : index
    %134 = vector.load %arg1[%c0_145, %c0_146, %c0_147, %c0_148] : memref<1x16x16x4xbf16, #tpu.memory_space<vmem>>, vector<1x16x16x4xbf16>
    %135 = vector.shape_cast %134 : vector<1x16x16x4xbf16> to vector<16x16x4xbf16>
    %136 = vector.shape_cast %135 : vector<16x16x4xbf16> to vector<256x4xbf16>
    %137 = arith.extf %136 : vector<256x4xbf16> to vector<256x4xf32>
    %138 = arith.addf %133, %137 : vector<256x4xf32>
    %cst_149 = arith.constant 0.000000e+00 : f32
    %139 = vector.broadcast %cst_149 : f32 to vector<256x4xf32>
    %140 = arith.maximumf %138, %139 : vector<256x4xf32>
    %c0_150 = arith.constant 0 : index
    %c0_151 = arith.constant 0 : index
    %c0_152 = arith.constant 0 : index
    %141 = vector.load %arg5[%c0_150, %c0_151, %c0_152] : memref<1x256x4xf32, #tpu.memory_space<vmem>>, vector<1x256x4xf32>
    %142 = vector.shape_cast %141 : vector<1x256x4xf32> to vector<256x4xf32>
    %143 = vector.shape_cast %140 : vector<256x4xf32> to vector<1x256x4xf32>
    tpu.vector_store %arg5[%c0_150, %c0_151, %c0_152], %143 {strides = array<i32>} : memref<1x256x4xf32, #tpu.memory_space<vmem>>, vector<1x256x4xf32>,
    return
  }
  func.func @transform_0(%arg0: i32) -> (i32, i32, i32, i32) {
    %c0_i32 = arith.constant 0 : i32
    %c0_i32_0 = arith.constant 0 : i32
    %c0_i32_1 = arith.constant 0 : i32
    %c0_i32_2 = arith.constant 0 : i32
    return %arg0, %c0_i32, %c0_i32_0, %c0_i32_1 : i32, i32, i32, i32
  }
  func.func @transform_1(%arg0: i32) -> (i32, i32, i32) {
    %c0_i32 = arith.constant 0 : i32
    %c0_i32_0 = arith.constant 0 : i32
    %c0_i32_1 = arith.constant 0 : i32
    %c0_i32_2 = arith.constant 0 : i32
    return %c0_i32, %c0_i32_0, %c0_i32_1 : i32, i32, i32
  }
  func.func @transform_2(%arg0: i32) -> (i32, i32, i32) {
    %c0_i32 = arith.constant 0 : i32
    %c0_i32_0 = arith.constant 0 : i32
    %c0_i32_1 = arith.constant 0 : i32
    %c0_i32_2 = arith.constant 0 : i32
    return %c0_i32, %c0_i32_0, %c0_i32_1 : i32, i32, i32
  }
  func.func @transform_3(%arg0: i32) -> (i32, i32) {
    %c0_i32 = arith.constant 0 : i32
    %c0_i32_0 = arith.constant 0 : i32
    %c0_i32_1 = arith.constant 0 : i32
    return %c0_i32, %c0_i32_0 : i32, i32
  }
  func.func @transform_4(%arg0: i32) -> (i32, i32, i32) {
    %c0_i32 = arith.constant 0 : i32
    %c0_i32_0 = arith.constant 0 : i32
    %c0_i32_1 = arith.constant 0 : i32
    return %arg0, %c0_i32, %c0_i32_0 : i32, i32, i32
  }
}

</mosaic_0001>

<llo_original>
// kernel: basic_block_forward.1
$region0: #{basic_block_forward.1}
  #allocation0 [shape = 'u32[]', space=smem, size = 0x4, offset = 0x4, fixed_abs, tag = 'smem constant byte address 0x4 - core index']
  #allocation1 [shape = 'u32[144,128]{1,0:T(1,128)}', space=vmem, size = 0x12000, scoped, tag = 'internal scratch']
  #allocation2 [shape = 'bf16[18,18,4]{2,1,0:T(8,128)(2,1)}', space=vmem, size = 0x1b000, scoped, tag = 'scratch operand']
  #allocation3 [shape = 'bf16[18,18,4]{2,1,0:T(8,128)(2,1)}', space=vmem, size = 0x1b000, scoped, tag = 'scratch operand']
  %s0 = inlined_call_operand.vmem [shape: bf16[2,16,16,4], index: 0, kind: input, shape index: {}]
  %s1 = inlined_call_operand.vmem [shape: bf16[9,4,4], index: 1, kind: input, shape index: {}]
  %s2 = inlined_call_operand.vmem [shape: bf16[9,4,4], index: 2, kind: input, shape index: {}]
  %s3 = inlined_call_operand.vmem [shape: f32[4,4], index: 3, kind: input, shape index: {}]
  %s4 = inlined_call_operand.vmem [shape: f32[2,256,4], index: 4, kind: output, shape index: {}]
  %s5 = sld [smem:[#allocation0]]
  $region49: #{basic_block_forward.1} parent=0
    _
  %s7 = ssub.s32 1, %s5
  %s8 = scalar_select 0, %s7, %s5
  loop: start=0, step=1, limit=4
  $region2: #{basic_block_forward.1} parent=0 // loop_pre_header
    _
  $region3: #{basic_block_forward.1} parent=0 // loop_header
    %s10 = sphi 0, %s14
    %p11 = scmp.ge.s32.totalorder %s10, 4
    %s20 = sphi 0, %s22
    %s23 = sphi 0, %s20
    %s24 = sphi 0, %s23
    %s40 = sphi 0, %s24
    %s44 = sphi 0, %s44
    %s46 = sphi 0, %s44
    %s47 = sphi 0, %s46
    %s61 = sphi 0, %s47
    %s65 = sphi 0, %s65
    %s67 = sphi 0, %s65
    %s68 = sphi 0, %s67
    %s82 = sphi 0, %s68
    %s86 = sphi 0, %s86
    %s88 = sphi 0, %s86
    %s89 = sphi 0, %s88
    %s103 = sphi 0, %s89
    %s109 = sphi 0, %s111
    %s112 = sphi 0, %s109
    %s113 = sphi 0, %s112
    %s129 = sphi 0, %s113
  $region4: #{basic_block_forward.1} parent=0 // loop_header_branch
    %13 = sbr.rel (%p11) target = $region8
  $region5: #{basic_block_forward.1} parent=0 // loop_body
    %s15 = ssub.s32 %s10, 1
    %s16 = ssub.s32 %s10, 2
    %s17 = sadd.s32 %s10, 1
    %s18 = ssub.s32 %s10, %s17
    %p19 = scmp.eq.s32.totalorder %s18, 0
    %s21 = sadd.s32 %s20, 1
    %s22 = scalar_select %p19, %s20, %s21
    %p25 = pneg %p19
    %p26 = scmp.eq.s32.totalorder %s10, 1
    %p27 = por %p25, %p26
    %p28 = scmp.ne.s32.totalorder %s20, %s23
    %p29 = scmp.eq.s32.totalorder %s10, 0
    %p30 = por %p28, %p29
    %p31 = scmp.ne.s32.totalorder %s20, %s23
    %p32 = scmp.eq.s32.totalorder %s15, 1
    %p33 = por %p31, %p32
    %p34 = scmp.ne.s32.totalorder %s23, %s24
    %p35 = scmp.eq.s32.totalorder %s15, 0
    %p36 = por %p34, %p35
    %p37 = scmp.ne.s32.totalorder %s23, %s24
    %p38 = scmp.eq.s32.totalorder %s16, 1
    %p39 = por %p37, %p38
    %p41 = scmp.ne.s32.totalorder %s24, %s40
    %p42 = scmp.eq.s32.totalorder %s16, 0
    %p43 = por %p41, %p42
    %s45 = sadd.s32 %s44, 1
    %p48 = scmp.eq.s32.totalorder %s10, 1
    %p49 = scmp.ne.s32.totalorder %s44, %s46
    %p50 = scmp.eq.s32.totalorder %s10, 0
    %p51 = por %p49, %p50
    %p52 = scmp.ne.s32.totalorder %s44, %s46
    %p53 = scmp.eq.s32.totalorder %s15, 1
    %p54 = por %p52, %p53
    %p55 = scmp.ne.s32.totalorder %s46, %s47
    %p56 = scmp.eq.s32.totalorder %s15, 0
    %p57 = por %p55, %p56
    %p58 = scmp.ne.s32.totalorder %s46, %s47
    %p59 = scmp.eq.s32.totalorder %s16, 1
    %p60 = por %p58, %p59
    %p62 = scmp.ne.s32.totalorder %s47, %s61
    %p63 = scmp.eq.s32.totalorder %s16, 0
    %p64 = por %p62, %p63
    %s66 = sadd.s32 %s65, 1
    %p69 = scmp.eq.s32.totalorder %s10, 1
    %p70 = scmp.ne.s32.totalorder %s65, %s67
    %p71 = scmp.eq.s32.totalorder %s10, 0
    %p72 = por %p70, %p71
    %p73 = scmp.ne.s32.totalorder %s65, %s67
    %p74 = scmp.eq.s32.totalorder %s15, 1
    %p75 = por %p73, %p74
    %p76 = scmp.ne.s32.totalorder %s67, %s68
    %p77 = scmp.eq.s32.totalorder %s15, 0
    %p78 = por %p76, %p77
    %p79 = scmp.ne.s32.totalorder %s67, %s68
    %p80 = scmp.eq.s32.totalorder %s16, 1
    %p81 = por %p79, %p80
    %p83 = scmp.ne.s32.totalorder %s68, %s82
    %p84 = scmp.eq.s32.totalorder %s16, 0
    %p85 = por %p83, %p84
    %s87 = sadd.s32 %s86, 1
    %p90 = scmp.eq.s32.totalorder %s10, 1
    %p91 = scmp.ne.s32.totalorder %s86, %s88
    %p92 = scmp.eq.s32.totalorder %s10, 0
    %p93 = por %p91, %p92
    %p94 = scmp.ne.s32.totalorder %s86, %s88
    %p95 = scmp.eq.s32.totalorder %s15, 1
    %p96 = por %p94, %p95
    %p97 = scmp.ne.s32.totalorder %s88, %s89
    %p98 = scmp.eq.s32.totalorder %s15, 0
    %p99 = por %p97, %p98
    %p100 = scmp.ne.s32.totalorder %s88, %s89
    %p101 = scmp.eq.s32.totalorder %s16, 1
    %p102 = por %p100, %p101
    %p104 = scmp.ne.s32.totalorder %s89, %s103
    %p105 = scmp.eq.s32.totalorder %s16, 0
    %p106 = por %p104, %p105
    %s107 = ssub.s32 %s10, %s17
    %p108 = scmp.eq.s32.totalorder %s107, 0
    %s110 = sadd.s32 %s109, 1
    %s111 = scalar_select %p108, %s109, %s110
    %p114 = pneg %p108
    %p115 = scmp.eq.s32.totalorder %s10, 1
    %p116 = por %p114, %p115
    %p117 = scmp.ne.s32.totalorder %s109, %s112
    %p118 = scmp.eq.s32.totalorder %s10, 0
    %p119 = por %p117, %p118
    %p120 = scmp.ne.s32.totalorder %s109, %s112
    %p121 = scmp.eq.s32.totalorder %s15, 1
    %p122 = por %p120, %p121
    %p123 = scmp.ne.s32.totalorder %s112, %s113
    %p124 = scmp.eq.s32.totalorder %s15, 0
    %p125 = por %p123, %p124
    %p126 = scmp.ne.s32.totalorder %s112, %s113
    %p127 = scmp.eq.s32.totalorder %s16, 1
    %p128 = por %p126, %p127
    %p130 = scmp.ne.s32.totalorder %s113, %s129
    %p131 = scmp.eq.s32.totalorder %s16, 0
    %p132 = por %p130, %p131
    %p133 = scmp.le.s32.totalorder 1, %s10
    %p134 = scmp.lt.s32.totalorder %s10, 3
    %p135 = pnand %p133, %p134
    %p136 = pneg %p135
    // Predicated region
    $region9: #{basic_block_forward.1} parent=5 // pred_check
      _
    $region10: #{basic_block_forward.1} parent=5 // pred_check_branch
      %138 = sbr.rel (%p135) target = $region12
    $region11: #{basic_block_forward.1} parent=5 // pred_region
      %s139 = ssub.s32 %s10, 1
      // Predicated region
      $region13: #{basic_block_forward.1} parent=11 // pred_check
        %p140 = pneg %p57
      $region14: #{basic_block_forward.1} parent=11 // pred_check_branch
        %142 = sbr.rel (%p140) target = $region16
      $region15: #{basic_block_forward.1} parent=11 // pred_region
        _
      $region16: #{basic_block_forward.1} parent=11 // pred_fallthru
        _
      // Predicated region
      $region17: #{basic_block_forward.1} parent=11 // pred_check
        %p143 = pneg %p78
      $region18: #{basic_block_forward.1} parent=11 // pred_check_branch
        %145 = sbr.rel (%p143) target = $region20
      $region19: #{basic_block_forward.1} parent=11 // pred_region
        _
      $region20: #{basic_block_forward.1} parent=11 // pred_fallthru
        _
      // Predicated region
      $region21: #{basic_block_forward.1} parent=11 // pred_check
        %p146 = pneg %p99
      $region22: #{basic_block_forward.1} parent=11 // pred_check_branch
        %148 = sbr.rel (%p146) target = $region24
      $region23: #{basic_block_forward.1} parent=11 // pred_region
        _
      $region24: #{basic_block_forward.1} parent=11 // pred_fallthru
        _
    $region12: #{basic_block_forward.1} parent=5 // pred_fallthru
      _
    %p149 = scmp.lt.s32.totalorder %s10, 2
    // Predicated region
    $region25: #{basic_block_forward.1} parent=5 // pred_check
      %p150 = pneg %p149
    $region26: #{basic_block_forward.1} parent=5 // pred_check_branch
      %152 = sbr.rel (%p150) target = $region28
    $region27: #{basic_block_forward.1} parent=5 // pred_region
      // Predicated region
      $region29: #{basic_block_forward.1} parent=27 // pred_check
        %p153 = pneg %p30
      $region30: #{basic_block_forward.1} parent=27 // pred_check_branch
        %155 = sbr.rel (%p153) target = $region32
      $region31: #{basic_block_forward.1} parent=27 // pred_region
        %p156 = scmp.lt.s32.totalorder %s10, 1
        %s157 = scalar_select %p156, %s10, 1
        %s158 = smul.addr %s157, 32
        %s159 = smul.addr %s158, 4
        %s160 = scalar_lea.vmem %s0, %s159
      $region32: #{basic_block_forward.1} parent=27 // pred_fallthru
        _
    $region28: #{basic_block_forward.1} parent=5 // pred_fallthru
      _
    %p161 = scmp.le.s32.totalorder 1, %s10
    %p162 = scmp.lt.s32.totalorder %s10, 3
    %p163 = pnand %p161, %p162
    %p164 = pneg %p163
    // Predicated region
    $region33: #{basic_block_forward.1} parent=5 // pred_check
      _
    $region34: #{basic_block_forward.1} parent=5 // pred_check_branch
      %166 = sbr.rel (%p163) target = $region36
    $region35: #{basic_block_forward.1} parent=5 // pred_region
      %s167 = ssub.s32 %s10, 1
      %p168 = scmp.lt.s32.totalorder %s15, 1
      %s169 = scalar_select %p168, %s15, 1
      %s170 = smul.addr %s169, 32
      %s171 = smul.addr %s170, 4
      %s172 = scalar_lea.vmem %s0, %s171
      %p173 = pneg %p36
      %p174 = pneg %p33
      %p175 = pneg %p57
      %p176 = pneg %p54
      %p177 = pneg %p78
      %p178 = pneg %p75
      %p179 = pneg %p99
      %p180 = pneg %p96
      %p181 = pneg %p125
      %p182 = pneg %p122
      %p183 = scmp.lt.s32.totalorder %s15, 1
      %s184 = scalar_select %p183, %s15, 1
      %s185 = smul.addr %s184, 32
      %s186 = smul.addr %s185, 8
      %s187 = scalar_lea.vmem %s4, %s186
      %p188 = scmp.lt.s32.totalorder %s15, 1
      %s189 = scalar_select %p188, %s15, 1
      %s190 = smul.addr %s189, 32
      %s191 = smul.addr %s190, 4
      %s192 = scalar_lea.vmem %s0, %s191
      %p193 = scmp.lt.s32.totalorder %s15, 1
      %s194 = scalar_select %p193, %s15, 1
      %s195 = smul.addr %s194, 32
      %s196 = smul.addr %s195, 8
      %s197 = scalar_lea.vmem %s4, %s196
      %vm199 = vcmask 27648
      %200 = vst.msk [vmem:[#allocation2] sm:$0xf] %vm199, 0
      %201 = vst.msk [vmem:[#allocation2 + $0x4] sm:$0xf] %vm199, 0
      %vm202 = vcmask 24576
      %203 = vst.msk [vmem:[#allocation2 + $0x8] sm:$0x1] %vm202, 0
      %204 = vst.msk [vmem:[#allocation2 + $0xc] sm:$0xf] %vm199, 0
      %205 = vst.msk [vmem:[#allocation2 + $0x10] sm:$0xf] %vm199, 0
      %206 = vst.msk [vmem:[#allocation2 + $0x14] sm:$0x1] %vm202, 0
      %207 = vst.msk [vmem:[#allocation2 + $0x18] sm:$0xf] %vm199, 0
      %208 = vst.msk [vmem:[#allocation2 + $0x1c] sm:$0xf] %vm199, 0
      %209 = vst.msk [vmem:[#allocation2 + $0x20] sm:$0x1] %vm202, 0
      %210 = vst.msk [vmem:[#allocation2 + $0x24] sm:$0xf] %vm199, 0
      %211 = vst.msk [vmem:[#allocation2 + $0x28] sm:$0xf] %vm199, 0
      %212 = vst.msk [vmem:[#allocation2 + $0x2c] sm:$0x1] %vm202, 0
      %213 = vst.msk [vmem:[#allocation2 + $0x30] sm:$0xf] %vm199, 0
      %214 = vst.msk [vmem:[#allocation2 + $0x34] sm:$0xf] %vm199, 0
      %215 = vst.msk [vmem:[#allocation2 + $0x38] sm:$0x1] %vm202, 0
      %216 = vst.msk [vmem:[#allocation2 + $0x3c] sm:$0xf] %vm199, 0
      %217 = vst.msk [vmem:[#allocation2 + $0x40] sm:$0xf] %vm199, 0
      %218 = vst.msk [vmem:[#allocation2 + $0x44] sm:$0x1] %vm202, 0
      %219 = vst.msk [vmem:[#allocation2 + $0x48] sm:$0xf] %vm199, 0
      %220 = vst.msk [vmem:[#allocation2 + $0x4c] sm:$0xf] %vm199, 0
      %221 = vst.msk [vmem:[#allocation2 + $0x50] sm:$0x1] %vm202, 0
      %222 = vst.msk [vmem:[#allocation2 + $0x54] sm:$0xf] %vm199, 0
      %223 = vst.msk [vmem:[#allocation2 + $0x58] sm:$0xf] %vm199, 0
      %224 = vst.msk [vmem:[#allocation2 + $0x5c] sm:$0x1] %vm202, 0
      %225 = vst.msk [vmem:[#allocation2 + $0x60] sm:$0xf] %vm199, 0
      %226 = vst.msk [vmem:[#allocation2 + $0x64] sm:$0xf] %vm199, 0
      %227 = vst.msk [vmem:[#allocation2 + $0x68] sm:$0x1] %vm202, 0
      %228 = vst.msk [vmem:[#allocation2 + $0x6c] sm:$0xf] %vm199, 0
      %229 = vst.msk [vmem:[#allocation2 + $0x70] sm:$0xf] %vm199, 0
      %230 = vst.msk [vmem:[#allocation2 + $0x74] sm:$0x1] %vm202, 0
      %231 = vst.msk [vmem:[#allocation2 + $0x78] sm:$0xf] %vm199, 0
      %232 = vst.msk [vmem:[#allocation2 + $0x7c] sm:$0xf] %vm199, 0
      %233 = vst.msk [vmem:[#allocation2 + $0x80] sm:$0x1] %vm202, 0
      %234 = vst.msk [vmem:[#allocation2 + $0x84] sm:$0xf] %vm199, 0
      %235 = vst.msk [vmem:[#allocation2 + $0x88] sm:$0xf] %vm199, 0
      %236 = vst.msk [vmem:[#allocation2 + $0x8c] sm:$0x1] %vm202, 0
      %237 = vst.msk [vmem:[#allocation2 + $0x90] sm:$0xf] %vm199, 0
      %238 = vst.msk [vmem:[#allocation2 + $0x94] sm:$0xf] %vm199, 0
      %239 = vst.msk [vmem:[#allocation2 + $0x98] sm:$0x1] %vm202, 0
      %240 = vst.msk [vmem:[#allocation2 + $0x9c] sm:$0xf] %vm199, 0
      %241 = vst.msk [vmem:[#allocation2 + $0xa0] sm:$0xf] %vm199, 0
      %242 = vst.msk [vmem:[#allocation2 + $0xa4] sm:$0x1] %vm202, 0
      %243 = vst.msk [vmem:[#allocation2 + $0xa8] sm:$0xf] %vm199, 0
      %244 = vst.msk [vmem:[#allocation2 + $0xac] sm:$0xf] %vm199, 0
      %245 = vst.msk [vmem:[#allocation2 + $0xb0] sm:$0x1] %vm202, 0
      %246 = vst.msk [vmem:[#allocation2 + $0xb4] sm:$0xf] %vm199, 0
      %247 = vst.msk [vmem:[#allocation2 + $0xb8] sm:$0xf] %vm199, 0
      %248 = vst.msk [vmem:[#allocation2 + $0xbc] sm:$0x1] %vm202, 0
      %249 = vst.msk [vmem:[#allocation2 + $0xc0] sm:$0xf] %vm199, 0
      %250 = vst.msk [vmem:[#allocation2 + $0xc4] sm:$0xf] %vm199, 0
      %251 = vst.msk [vmem:[#allocation2 + $0xc8] sm:$0x1] %vm202, 0
      %252 = vst.msk [vmem:[#allocation2 + $0xcc] sm:$0xf] %vm199, 0
      %253 = vst.msk [vmem:[#allocation2 + $0xd0] sm:$0xf] %vm199, 0
      %254 = vst.msk [vmem:[#allocation2 + $0xd4] sm:$0x1] %vm202, 0
      %v255 = vld [vmem:[%s192] sm:$0xf]
      %v256 = vld [vmem:[%s192 + $0x4] sm:$0xf]
      %v257 = vld [vmem:[%s192 + $0x8] sm:$0xf]
      %v258 = vld [vmem:[%s192 + $0xc] sm:$0xf]
      %v259 = vld [vmem:[%s192 + $0x10] sm:$0xf]
      %v260 = vld [vmem:[%s192 + $0x14] sm:$0xf]
      %v261 = vld [vmem:[%s192 + $0x18] sm:$0xf]
      %v262 = vld [vmem:[%s192 + $0x1c] sm:$0xf]
      %v263 = vld [vmem:[%s192 + $0x20] sm:$0xf]
      %v264 = vld [vmem:[%s192 + $0x24] sm:$0xf]
      %v265 = vld [vmem:[%s192 + $0x28] sm:$0xf]
      %v266 = vld [vmem:[%s192 + $0x2c] sm:$0xf]
      %v267 = vld [vmem:[%s192 + $0x30] sm:$0xf]
      %v268 = vld [vmem:[%s192 + $0x34] sm:$0xf]
      %v269 = vld [vmem:[%s192 + $0x38] sm:$0xf]
      %v270 = vld [vmem:[%s192 + $0x3c] sm:$0xf]
      %v271 = vld [vmem:[%s192 + $0x40] sm:$0xf]
      %v272 = vld [vmem:[%s192 + $0x44] sm:$0xf]
      %v273 = vld [vmem:[%s192 + $0x48] sm:$0xf]
      %v274 = vld [vmem:[%s192 + $0x4c] sm:$0xf]
      %v275 = vld [vmem:[%s192 + $0x50] sm:$0xf]
      %v276 = vld [vmem:[%s192 + $0x54] sm:$0xf]
      %v277 = vld [vmem:[%s192 + $0x58] sm:$0xf]
      %v278 = vld [vmem:[%s192 + $0x5c] sm:$0xf]
      %v279 = vld [vmem:[%s192 + $0x60] sm:$0xf]
      %v280 = vld [vmem:[%s192 + $0x64] sm:$0xf]
      %v281 = vld [vmem:[%s192 + $0x68] sm:$0xf]
      %v282 = vld [vmem:[%s192 + $0x6c] sm:$0xf]
      %v283 = vld [vmem:[%s192 + $0x70] sm:$0xf]
      %v284 = vld [vmem:[%s192 + $0x74] sm:$0xf]
      %v285 = vld [vmem:[%s192 + $0x78] sm:$0xf]
      %v286 = vld [vmem:[%s192 + $0x7c] sm:$0xf]
      %vm287 = vsmask.f32 256
      %vm288 = vsmask.f32 4368
      %vm289 = vmor %vm287, %vm288
      %v291 = vshrl.u32 %v255, 16
      %v293 = vrot.slane %v291, 7
      %v294 = vshll.u32 %v255, 16
      %v296 = vor.u32 %v293, %v294
      %v297 = vrot.slane %v293, 4
      %v299 = vshrl.u32 %v256, 16
      %v301 = vrot.slane %v299, 7
      %v302 = vshll.u32 %v256, 16
      %v304 = vor.u32 %v301, %v302
      %v305 = vsel %vm289, %v297, %v304
      %v306 = vrot.slane %v301, 4
      %v308 = vshrl.u32 %v257, 16
      %v310 = vrot.slane %v308, 7
      %v311 = vshll.u32 %v257, 16
      %v313 = vor.u32 %v310, %v311
      %v314 = vrot.slane %v310, 4
      %v316 = vshrl.u32 %v258, 16
      %v318 = vrot.slane %v316, 7
      %v319 = vshll.u32 %v258, 16
      %v321 = vor.u32 %v318, %v319
      %v322 = vsel %vm289, %v314, %v321
      %v323 = vrot.slane %v318, 4
      %v325 = vshrl.u32 %v259, 16
      %v327 = vrot.slane %v325, 7
      %v328 = vshll.u32 %v259, 16
      %v330 = vor.u32 %v327, %v328
      %v331 = vrot.slane %v327, 4
      %v333 = vshrl.u32 %v260, 16
      %v335 = vrot.slane %v333, 7
      %v336 = vshll.u32 %v260, 16
      %v338 = vor.u32 %v335, %v336
      %v339 = vsel %vm289, %v331, %v338
      %v340 = vrot.slane %v335, 4
      %v342 = vshrl.u32 %v261, 16
      %v344 = vrot.slane %v342, 7
      %v345 = vshll.u32 %v261, 16
      %v347 = vor.u32 %v344, %v345
      %v348 = vrot.slane %v344, 4
      %v350 = vshrl.u32 %v262, 16
      %v352 = vrot.slane %v350, 7
      %v353 = vshll.u32 %v262, 16
      %v355 = vor.u32 %v352, %v353
      %v356 = vsel %vm289, %v348, %v355
      %v357 = vrot.slane %v352, 4
      %v359 = vshrl.u32 %v263, 16
      %v361 = vrot.slane %v359, 7
      %v362 = vshll.u32 %v263, 16
      %v364 = vor.u32 %v361, %v362
      %v365 = vrot.slane %v361, 4
      %v367 = vshrl.u32 %v264, 16
      %v369 = vrot.slane %v367, 7
      %v370 = vshll.u32 %v264, 16
      %v372 = vor.u32 %v369, %v370
      %v373 = vsel %vm289, %v365, %v372
      %v374 = vrot.slane %v369, 4
      %v376 = vshrl.u32 %v265, 16
      %v378 = vrot.slane %v376, 7
      %v379 = vshll.u32 %v265, 16
      %v381 = vor.u32 %v378, %v379
      %v382 = vrot.slane %v378, 4
      %v384 = vshrl.u32 %v266, 16
      %v386 = vrot.slane %v384, 7
      %v387 = vshll.u32 %v266, 16
      %v389 = vor.u32 %v386, %v387
      %v390 = vsel %vm289, %v382, %v389
      %v391 = vrot.slane %v386, 4
      %v393 = vshrl.u32 %v267, 16
      %v395 = vrot.slane %v393, 7
      %v396 = vshll.u32 %v267, 16
      %v398 = vor.u32 %v395, %v396
      %v399 = vrot.slane %v395, 4
      %v401 = vshrl.u32 %v268, 16
      %v403 = vrot.slane %v401, 7
      %v404 = vshll.u32 %v268, 16
      %v406 = vor.u32 %v403, %v404
      %v407 = vsel %vm289, %v399, %v406
      %v408 = vrot.slane %v403, 4
      %v410 = vshrl.u32 %v269, 16
      %v412 = vrot.slane %v410, 7
      %v413 = vshll.u32 %v269, 16
      %v415 = vor.u32 %v412, %v413
      %v416 = vrot.slane %v412, 4
      %v418 = vshrl.u32 %v270, 16
      %v420 = vrot.slane %v418, 7
      %v421 = vshll.u32 %v270, 16
      %v423 = vor.u32 %v420, %v421
      %v424 = vsel %vm289, %v416, %v423
      %v425 = vrot.slane %v420, 4
      %v427 = vshrl.u32 %v271, 16
      %v429 = vrot.slane %v427, 7
      %v430 = vshll.u32 %v271, 16
      %v432 = vor.u32 %v429, %v430
      %v433 = vrot.slane %v429, 4
      %v435 = vshrl.u32 %v272, 16
      %v437 = vrot.slane %v435, 7
      %v438 = vshll.u32 %v272, 16
      %v440 = vor.u32 %v437, %v438
      %v441 = vsel %vm289, %v433, %v440
      %v442 = vrot.slane %v437, 4
      %v444 = vshrl.u32 %v273, 16
      %v446 = vrot.slane %v444, 7
      %v447 = vshll.u32 %v273, 16
      %v449 = vor.u32 %v446, %v447
      %v450 = vrot.slane %v446, 4
      %v452 = vshrl.u32 %v274, 16
      %v454 = vrot.slane %v452, 7
      %v455 = vshll.u32 %v274, 16
      %v457 = vor.u32 %v454, %v455
      %v458 = vsel %vm289, %v450, %v457
      %v459 = vrot.slane %v454, 4
      %v461 = vshrl.u32 %v275, 16
      %v463 = vrot.slane %v461, 7
      %v464 = vshll.u32 %v275, 16
      %v466 = vor.u32 %v463, %v464
      %v467 = vrot.slane %v463, 4
      %v469 = vshrl.u32 %v276, 16
      %v471 = vrot.slane %v469, 7
      %v472 = vshll.u32 %v276, 16
      %v474 = vor.u32 %v471, %v472
      %v475 = vsel %vm289, %v467, %v474
      %v476 = vrot.slane %v471, 4
      %v478 = vshrl.u32 %v277, 16
      %v480 = vrot.slane %v478, 7
      %v481 = vshll.u32 %v277, 16
      %v483 = vor.u32 %v480, %v481
      %v484 = vrot.slane %v480, 4
      %v486 = vshrl.u32 %v278, 16
      %v488 = vrot.slane %v486, 7
      %v489 = vshll.u32 %v278, 16
      %v491 = vor.u32 %v488, %v489
      %v492 = vsel %vm289, %v484, %v491
      %v493 = vrot.slane %v488, 4
      %v495 = vshrl.u32 %v279, 16
      %v497 = vrot.slane %v495, 7
      %v498 = vshll.u32 %v279, 16
      %v500 = vor.u32 %v497, %v498
      %v501 = vrot.slane %v497, 4
      %v503 = vshrl.u32 %v280, 16
      %v505 = vrot.slane %v503, 7
      %v506 = vshll.u32 %v280, 16
      %v508 = vor.u32 %v505, %v506
      %v509 = vsel %vm289, %v501, %v508
      %v510 = vrot.slane %v505, 4
      %v512 = vshrl.u32 %v281, 16
      %v514 = vrot.slane %v512, 7
      %v515 = vshll.u32 %v281, 16
      %v517 = vor.u32 %v514, %v515
      %v518 = vrot.slane %v514, 4
      %v520 = vshrl.u32 %v282, 16
      %v522 = vrot.slane %v520, 7
      %v523 = vshll.u32 %v282, 16
      %v525 = vor.u32 %v522, %v523
      %v526 = vsel %vm289, %v518, %v525
      %v527 = vrot.slane %v522, 4
      %v529 = vshrl.u32 %v283, 16
      %v531 = vrot.slane %v529, 7
      %v532 = vshll.u32 %v283, 16
      %v534 = vor.u32 %v531, %v532
      %v535 = vrot.slane %v531, 4
      %v537 = vshrl.u32 %v284, 16
      %v539 = vrot.slane %v537, 7
      %v540 = vshll.u32 %v284, 16
      %v542 = vor.u32 %v539, %v540
      %v543 = vsel %vm289, %v535, %v542
      %v544 = vrot.slane %v539, 4
      %v546 = vshrl.u32 %v285, 16
      %v548 = vrot.slane %v546, 7
      %v549 = vshll.u32 %v285, 16
      %v551 = vor.u32 %v548, %v549
      %v552 = vrot.slane %v548, 4
      %v554 = vshrl.u32 %v286, 16
      %v556 = vrot.slane %v554, 7
      %v557 = vshll.u32 %v286, 16
      %v559 = vor.u32 %v556, %v557
      %v560 = vsel %vm289, %v552, %v559
      %v561 = vrot.slane %v556, 4
      %s610 = scalar_lea.vmem [#allocation2], 12
      %vm611 = vcmask 27648
      %vm612 = vsmask.f32 7938
      %vm613 = vmand %vm611, %vm612
      %v614 = vld [vmem:[%s610] sm:$0xf]
      %v615 = vsel %vm613, %v296, %v614
      %616 = vst [vmem:[%s610] sm:$0xf] %v615
      %617 = vst.msk [vmem:[%s610 + $0x4] sm:$0xf] %vm199, %v305
      %vm618 = vcmask 24576
      %vm619 = vmand %vm618, %vm287
      %v620 = vld [vmem:[%s610 + $0x8] sm:$0x1]
      %v621 = vsel %vm619, %v306, %v620
      %622 = vst [vmem:[%s610 + $0x8] sm:$0x1] %v621
      %v623 = vld [vmem:[%s610 + $0xc] sm:$0xf]
      %v624 = vsel %vm613, %v313, %v623
      %625 = vst [vmem:[%s610 + $0xc] sm:$0xf] %v624
      %626 = vst.msk [vmem:[%s610 + $0x10] sm:$0xf] %vm199, %v322
      %v627 = vld [vmem:[%s610 + $0x14] sm:$0x1]
      %v628 = vsel %vm619, %v323, %v627
      %629 = vst [vmem:[%s610 + $0x14] sm:$0x1] %v628
      %v630 = vld [vmem:[%s610 + $0x18] sm:$0xf]
      %v631 = vsel %vm613, %v330, %v630
      %632 = vst [vmem:[%s610 + $0x18] sm:$0xf] %v631
      %633 = vst.msk [vmem:[%s610 + $0x1c] sm:$0xf] %vm199, %v339
      %v634 = vld [vmem:[%s610 + $0x20] sm:$0x1]
      %v635 = vsel %vm619, %v340, %v634
      %636 = vst [vmem:[%s610 + $0x20] sm:$0x1] %v635
      %v637 = vld [vmem:[%s610 + $0x24] sm:$0xf]
      %v638 = vsel %vm613, %v347, %v637
      %639 = vst [vmem:[%s610 + $0x24] sm:$0xf] %v638
      %640 = vst.msk [vmem:[%s610 + $0x28] sm:$0xf] %vm199, %v356
      %v641 = vld [vmem:[%s610 + $0x2c] sm:$0x1]
      %v642 = vsel %vm619, %v357, %v641
      %643 = vst [vmem:[%s610 + $0x2c] sm:$0x1] %v642
      %v644 = vld [vmem:[%s610 + $0x30] sm:$0xf]
      %v645 = vsel %vm613, %v364, %v644
      %646 = vst [vmem:[%s610 + $0x30] sm:$0xf] %v645
      %647 = vst.msk [vmem:[%s610 + $0x34] sm:$0xf] %vm199, %v373
      %v648 = vld [vmem:[%s610 + $0x38] sm:$0x1]
      %v649 = vsel %vm619, %v374, %v648
      %650 = vst [vmem:[%s610 + $0x38] sm:$0x1] %v649
      %v651 = vld [vmem:[%s610 + $0x3c] sm:$0xf]
      %v652 = vsel %vm613, %v381, %v651
      %653 = vst [vmem:[%s610 + $0x3c] sm:$0xf] %v652
      %654 = vst.msk [vmem:[%s610 + $0x40] sm:$0xf] %vm199, %v390
      %v655 = vld [vmem:[%s610 + $0x44] sm:$0x1]
      %v656 = vsel %vm619, %v391, %v655
      %657 = vst [vmem:[%s610 + $0x44] sm:$0x1] %v656
      %v658 = vld [vmem:[%s610 + $0x48] sm:$0xf]
      %v659 = vsel %vm613, %v398, %v658
      %660 = vst [vmem:[%s610 + $0x48] sm:$0xf] %v659
      %661 = vst.msk [vmem:[%s610 + $0x4c] sm:$0xf] %vm199, %v407
      %v662 = vld [vmem:[%s610 + $0x50] sm:$0x1]
      %v663 = vsel %vm619, %v408, %v662
      %664 = vst [vmem:[%s610 + $0x50] sm:$0x1] %v663
      %v665 = vld [vmem:[%s610 + $0x54] sm:$0xf]
      %v666 = vsel %vm613, %v415, %v665
      %667 = vst [vmem:[%s610 + $0x54] sm:$0xf] %v666
      %668 = vst.msk [vmem:[%s610 + $0x58] sm:$0xf] %vm199, %v424
      %v669 = vld [vmem:[%s610 + $0x5c] sm:$0x1]
      %v670 = vsel %vm619, %v425, %v669
      %671 = vst [vmem:[%s610 + $0x5c] sm:$0x1] %v670
      %v672 = vld [vmem:[%s610 + $0x60] sm:$0xf]
      %v673 = vsel %vm613, %v432, %v672
      %674 = vst [vmem:[%s610 + $0x60] sm:$0xf] %v673
      %675 = vst.msk [vmem:[%s610 + $0x64] sm:$0xf] %vm199, %v441
      %v676 = vld [vmem:[%s610 + $0x68] sm:$0x1]
      %v677 = vsel %vm619, %v442, %v676
      %678 = vst [vmem:[%s610 + $0x68] sm:$0x1] %v677
      %v679 = vld [vmem:[%s610 + $0x6c] sm:$0xf]
      %v680 = vsel %vm613, %v449, %v679
      %681 = vst [vmem:[%s610 + $0x6c] sm:$0xf] %v680
      %682 = vst.msk [vmem:[%s610 + $0x70] sm:$0xf] %vm199, %v458
      %v683 = vld [vmem:[%s610 + $0x74] sm:$0x1]
      %v684 = vsel %vm619, %v459, %v683
      %685 = vst [vmem:[%s610 + $0x74] sm:$0x1] %v684
      %v686 = vld [vmem:[%s610 + $0x78] sm:$0xf]
      %v687 = vsel %vm613, %v466, %v686
      %688 = vst [vmem:[%s610 + $0x78] sm:$0xf] %v687
      %689 = vst.msk [vmem:[%s610 + $0x7c] sm:$0xf] %vm199, %v475
      %v690 = vld [vmem:[%s610 + $0x80] sm:$0x1]
      %v691 = vsel %vm619, %v476, %v690
      %692 = vst [vmem:[%s610 + $0x80] sm:$0x1] %v691
      %v693 = vld [vmem:[%s610 + $0x84] sm:$0xf]
      %v694 = vsel %vm613, %v483, %v693
      %695 = vst [vmem:[%s610 + $0x84] sm:$0xf] %v694
      %696 = vst.msk [vmem:[%s610 + $0x88] sm:$0xf] %vm199, %v492
      %v697 = vld [vmem:[%s610 + $0x8c] sm:$0x1]
      %v698 = vsel %vm619, %v493, %v697
      %699 = vst [vmem:[%s610 + $0x8c] sm:$0x1] %v698
      %v700 = vld [vmem:[%s610 + $0x90] sm:$0xf]
      %v701 = vsel %vm613, %v500, %v700
      %702 = vst [vmem:[%s610 + $0x90] sm:$0xf] %v701
      %703 = vst.msk [vmem:[%s610 + $0x94] sm:$0xf] %vm199, %v509
      %v704 = vld [vmem:[%s610 + $0x98] sm:$0x1]
      %v705 = vsel %vm619, %v510, %v704
      %706 = vst [vmem:[%s610 + $0x98] sm:$0x1] %v705
      %v707 = vld [vmem:[%s610 + $0x9c] sm:$0xf]
      %v708 = vsel %vm613, %v517, %v707
      %709 = vst [vmem:[%s610 + $0x9c] sm:$0xf] %v708
      %710 = vst.msk [vmem:[%s610 + $0xa0] sm:$0xf] %vm199, %v526
      %v711 = vld [vmem:[%s610 + $0xa4] sm:$0x1]
      %v712 = vsel %vm619, %v527, %v711
      %713 = vst [vmem:[%s610 + $0xa4] sm:$0x1] %v712
      %v714 = vld [vmem:[%s610 + $0xa8] sm:$0xf]
      %v715 = vsel %vm613, %v534, %v714
      %716 = vst [vmem:[%s610 + $0xa8] sm:$0xf] %v715
      %717 = vst.msk [vmem:[%s610 + $0xac] sm:$0xf] %vm199, %v543
      %v718 = vld [vmem:[%s610 + $0xb0] sm:$0x1]
      %v719 = vsel %vm619, %v544, %v718
      %720 = vst [vmem:[%s610 + $0xb0] sm:$0x1] %v719
      %v721 = vld [vmem:[%s610 + $0xb4] sm:$0xf]
      %v722 = vsel %vm613, %v551, %v721
      %723 = vst [vmem:[%s610 + $0xb4] sm:$0xf] %v722
      %724 = vst.msk [vmem:[%s610 + $0xb8] sm:$0xf] %vm199, %v560
      %v725 = vld [vmem:[%s610 + $0xbc] sm:$0x1]
      %v726 = vsel %vm619, %v561, %v725
      %727 = vst [vmem:[%s610 + $0xbc] sm:$0x1] %v726
      %v728 = vld [vmem:[#allocation2] sm:$0xf]
      %v729 = vld [vmem:[#allocation2 + $0x4] sm:$0xf]
      %v730 = vld [vmem:[#allocation2 + $0xc] sm:$0xf]
      %v731 = vld [vmem:[#allocation2 + $0x10] sm:$0xf]
      %v732 = vld [vmem:[#allocation2 + $0x18] sm:$0xf]
      %v733 = vld [vmem:[#allocation2 + $0x1c] sm:$0xf]
      %v734 = vld [vmem:[#allocation2 + $0x24] sm:$0xf]
      %v735 = vld [vmem:[#allocation2 + $0x28] sm:$0xf]
      %v736 = vld [vmem:[#allocation2 + $0x30] sm:$0xf]
      %v737 = vld [vmem:[#allocation2 + $0x34] sm:$0xf]
      %v738 = vld [vmem:[#allocation2 + $0x3c] sm:$0xf]
      %v739 = vld [vmem:[#allocation2 + $0x40] sm:$0xf]
      %v740 = vld [vmem:[#allocation2 + $0x48] sm:$0xf]
      %v741 = vld [vmem:[#allocation2 + $0x4c] sm:$0xf]
      %v742 = vld [vmem:[#allocation2 + $0x54] sm:$0xf]
      %v743 = vld [vmem:[#allocation2 + $0x58] sm:$0xf]
      %v744 = vld [vmem:[#allocation2 + $0x60] sm:$0xf]
      %v745 = vld [vmem:[#allocation2 + $0x64] sm:$0xf]
      %v746 = vld [vmem:[#allocation2 + $0x6c] sm:$0xf]
      %v747 = vld [vmem:[#allocation2 + $0x70] sm:$0xf]
      %v748 = vld [vmem:[#allocation2 + $0x78] sm:$0xf]
      %v749 = vld [vmem:[#allocation2 + $0x7c] sm:$0xf]
      %v750 = vld [vmem:[#allocation2 + $0x84] sm:$0xf]
      %v751 = vld [vmem:[#allocation2 + $0x88] sm:$0xf]
      %v752 = vld [vmem:[#allocation2 + $0x90] sm:$0xf]
      %v753 = vld [vmem:[#allocation2 + $0x94] sm:$0xf]
      %v754 = vld [vmem:[#allocation2 + $0x9c] sm:$0xf]
      %v755 = vld [vmem:[#allocation2 + $0xa0] sm:$0xf]
      %v756 = vld [vmem:[#allocation2 + $0xa8] sm:$0xf]
      %v757 = vld [vmem:[#allocation2 + $0xac] sm:$0xf]
      %v758 = vld [vmem:[#allocation2 + $0xb4] sm:$0xf]
      %v759 = vld [vmem:[#allocation2 + $0xb8] sm:$0xf]
      %v760 = vld [vmem:[%s1] sm:$0x3]
      %v761 = vld [vmem:[#allocation2 + $0x8] sm:$0x1]
      %v762 = vld [vmem:[#allocation2 + $0x14] sm:$0x1]
      %v763 = vld [vmem:[#allocation2 + $0x20] sm:$0x1]
      %v764 = vld [vmem:[#allocation2 + $0x2c] sm:$0x1]
      %v765 = vld [vmem:[#allocation2 + $0x38] sm:$0x1]
      %v766 = vld [vmem:[#allocation2 + $0x44] sm:$0x1]
      %v767 = vld [vmem:[#allocation2 + $0x50] sm:$0x1]
      %v768 = vld [vmem:[#allocation2 + $0x5c] sm:$0x1]
      %v769 = vld [vmem:[#allocation2 + $0x68] sm:$0x1]
      %v770 = vld [vmem:[#allocation2 + $0x74] sm:$0x1]
      %v771 = vld [vmem:[#allocation2 + $0x80] sm:$0x1]
      %v772 = vld [vmem:[#allocation2 + $0x8c] sm:$0x1]
      %v773 = vld [vmem:[#allocation2 + $0x98] sm:$0x1]
      %v774 = vld [vmem:[#allocation2 + $0xa4] sm:$0x1]
      %v775 = vld [vmem:[#allocation2 + $0xb0] sm:$0x1]
      %v776 = vld [vmem:[#allocation2 + $0xbc] sm:$0x1]
      %vm777 = vsmask.f32 3328
      %vm778 = vsmask.f32 7440
      %vm779 = vmor %vm777, %vm778
      %v781 = vshrl.u32 %v728, 16
      %v783 = vrot.slane %v781, 4
      %v784 = vshll.u32 %v728, 16
      %v786 = vrot.slane %v784, 5
      %v787 = vor.u32 %v783, %v786
      %v788 = vrot.slane %v787, 4
      %v790 = vshll.u32 %v729, 16
      %v792 = vrot.slane %v790, 5
      %v793 = vsel %vm779, %v788, %v792
      %v794 = vshrl.u32 %v729, 16
      %v796 = vrot.slane %v794, 4
      %v797 = vor.u32 %v796, %v792
      %v798 = vrot.slane %v797, 4
      %v800 = vshll.u32 %v761, 16
      %v802 = vrot.slane %v800, 5
      %v803 = vsel %vm779, %v798, %v802
      %v805 = vshrl.u32 %v730, 16
      %v807 = vrot.slane %v805, 4
      %v808 = vshll.u32 %v730, 16
      %v810 = vrot.slane %v808, 5
      %v811 = vor.u32 %v807, %v810
      %v812 = vrot.slane %v811, 4
      %v814 = vshll.u32 %v731, 16
      %v816 = vrot.slane %v814, 5
      %v817 = vsel %vm779, %v812, %v816
      %v818 = vshrl.u32 %v731, 16
      %v820 = vrot.slane %v818, 4
      %v821 = vor.u32 %v820, %v816
      %v822 = vrot.slane %v821, 4
      %v824 = vshll.u32 %v762, 16
      %v826 = vrot.slane %v824, 5
      %v827 = vsel %vm779, %v822, %v826
      %v829 = vshrl.u32 %v732, 16
      %v831 = vrot.slane %v829, 4
      %v832 = vshll.u32 %v732, 16
      %v834 = vrot.slane %v832, 5
      %v835 = vor.u32 %v831, %v834
      %v836 = vrot.slane %v835, 4
      %v838 = vshll.u32 %v733, 16
      %v840 = vrot.slane %v838, 5
      %v841 = vsel %vm779, %v836, %v840
      %v842 = vshrl.u32 %v733, 16
      %v844 = vrot.slane %v842, 4
      %v845 = vor.u32 %v844, %v840
      %v846 = vrot.slane %v845, 4
      %v848 = vshll.u32 %v763, 16
      %v850 = vrot.slane %v848, 5
      %v851 = vsel %vm779, %v846, %v850
      %v853 = vshrl.u32 %v734, 16
      %v855 = vrot.slane %v853, 4
      %v856 = vshll.u32 %v734, 16
      %v858 = vrot.slane %v856, 5
      %v859 = vor.u32 %v855, %v858
      %v860 = vrot.slane %v859, 4
      %v862 = vshll.u32 %v735, 16
      %v864 = vrot.slane %v862, 5
      %v865 = vsel %vm779, %v860, %v864
      %v866 = vshrl.u32 %v735, 16
      %v868 = vrot.slane %v866, 4
      %v869 = vor.u32 %v868, %v864
      %v870 = vrot.slane %v869, 4
      %v872 = vshll.u32 %v764, 16
      %v874 = vrot.slane %v872, 5
      %v875 = vsel %vm779, %v870, %v874
      %v877 = vshrl.u32 %v736, 16
      %v879 = vrot.slane %v877, 4
      %v880 = vshll.u32 %v736, 16
      %v882 = vrot.slane %v880, 5
      %v883 = vor.u32 %v879, %v882
      %v884 = vrot.slane %v883, 4
      %v886 = vshll.u32 %v737, 16
      %v888 = vrot.slane %v886, 5
      %v889 = vsel %vm779, %v884, %v888
      %v890 = vshrl.u32 %v737, 16
      %v892 = vrot.slane %v890, 4
      %v893 = vor.u32 %v892, %v888
      %v894 = vrot.slane %v893, 4
      %v896 = vshll.u32 %v765, 16
      %v898 = vrot.slane %v896, 5
      %v899 = vsel %vm779, %v894, %v898
      %v901 = vshrl.u32 %v738, 16
      %v903 = vrot.slane %v901, 4
      %v904 = vshll.u32 %v738, 16
      %v906 = vrot.slane %v904, 5
      %v907 = vor.u32 %v903, %v906
      %v908 = vrot.slane %v907, 4
      %v910 = vshll.u32 %v739, 16
      %v912 = vrot.slane %v910, 5
      %v913 = vsel %vm779, %v908, %v912
      %v914 = vshrl.u32 %v739, 16
      %v916 = vrot.slane %v914, 4
      %v917 = vor.u32 %v916, %v912
      %v918 = vrot.slane %v917, 4
      %v920 = vshll.u32 %v766, 16
      %v922 = vrot.slane %v920, 5
      %v923 = vsel %vm779, %v918, %v922
      %v925 = vshrl.u32 %v740, 16
      %v927 = vrot.slane %v925, 4
      %v928 = vshll.u32 %v740, 16
      %v930 = vrot.slane %v928, 5
      %v931 = vor.u32 %v927, %v930
      %v932 = vrot.slane %v931, 4
      %v934 = vshll.u32 %v741, 16
      %v936 = vrot.slane %v934, 5
      %v937 = vsel %vm779, %v932, %v936
      %v938 = vshrl.u32 %v741, 16
      %v940 = vrot.slane %v938, 4
      %v941 = vor.u32 %v940, %v936
      %v942 = vrot.slane %v941, 4
      %v944 = vshll.u32 %v767, 16
      %v946 = vrot.slane %v944, 5
      %v947 = vsel %vm779, %v942, %v946
      %v949 = vshrl.u32 %v742, 16
      %v951 = vrot.slane %v949, 4
      %v952 = vshll.u32 %v742, 16
      %v954 = vrot.slane %v952, 5
      %v955 = vor.u32 %v951, %v954
      %v956 = vrot.slane %v955, 4
      %v958 = vshll.u32 %v743, 16
      %v960 = vrot.slane %v958, 5
      %v961 = vsel %vm779, %v956, %v960
      %v962 = vshrl.u32 %v743, 16
      %v964 = vrot.slane %v962, 4
      %v965 = vor.u32 %v964, %v960
      %v966 = vrot.slane %v965, 4
      %v968 = vshll.u32 %v768, 16
      %v970 = vrot.slane %v968, 5
      %v971 = vsel %vm779, %v966, %v970
      %v973 = vshrl.u32 %v744, 16
      %v975 = vrot.slane %v973, 4
      %v976 = vshll.u32 %v744, 16
      %v978 = vrot.slane %v976, 5
      %v979 = vor.u32 %v975, %v978
      %v980 = vrot.slane %v979, 4
      %v982 = vshll.u32 %v745, 16
      %v984 = vrot.slane %v982, 5
      %v985 = vsel %vm779, %v980, %v984
      %v986 = vshrl.u32 %v745, 16
      %v988 = vrot.slane %v986, 4
      %v989 = vor.u32 %v988, %v984
      %v990 = vrot.slane %v989, 4
      %v992 = vshll.u32 %v769, 16
      %v994 = vrot.slane %v992, 5
      %v995 = vsel %vm779, %v990, %v994
      %v997 = vshrl.u32 %v746, 16
      %v999 = vrot.slane %v997, 4
      %v1000 = vshll.u32 %v746, 16
      %v1002 = vrot.slane %v1000, 5
      %v1003 = vor.u32 %v999, %v1002
      %v1004 = vrot.slane %v1003, 4
      %v1006 = vshll.u32 %v747, 16
      %v1008 = vrot.slane %v1006, 5
      %v1009 = vsel %vm779, %v1004, %v1008
      %v1010 = vshrl.u32 %v747, 16
      %v1012 = vrot.slane %v1010, 4
      %v1013 = vor.u32 %v1012, %v1008
      %v1014 = vrot.slane %v1013, 4
      %v1016 = vshll.u32 %v770, 16
      %v1018 = vrot.slane %v1016, 5
      %v1019 = vsel %vm779, %v1014, %v1018
      %v1021 = vshrl.u32 %v748, 16
      %v1023 = vrot.slane %v1021, 4
      %v1024 = vshll.u32 %v748, 16
      %v1026 = vrot.slane %v1024, 5
      %v1027 = vor.u32 %v1023, %v1026
      %v1028 = vrot.slane %v1027, 4
      %v1030 = vshll.u32 %v749, 16
      %v1032 = vrot.slane %v1030, 5
      %v1033 = vsel %vm779, %v1028, %v1032
      %v1034 = vshrl.u32 %v749, 16
      %v1036 = vrot.slane %v1034, 4
      %v1037 = vor.u32 %v1036, %v1032
      %v1038 = vrot.slane %v1037, 4
      %v1040 = vshll.u32 %v771, 16
      %v1042 = vrot.slane %v1040, 5
      %v1043 = vsel %vm779, %v1038, %v1042
      %v1045 = vshrl.u32 %v750, 16
      %v1047 = vrot.slane %v1045, 4
      %v1048 = vshll.u32 %v750, 16
      %v1050 = vrot.slane %v1048, 5
      %v1051 = vor.u32 %v1047, %v1050
      %v1052 = vrot.slane %v1051, 4
      %v1054 = vshll.u32 %v751, 16
      %v1056 = vrot.slane %v1054, 5
      %v1057 = vsel %vm779, %v1052, %v1056
      %v1058 = vshrl.u32 %v751, 16
      %v1060 = vrot.slane %v1058, 4
      %v1061 = vor.u32 %v1060, %v1056
      %v1062 = vrot.slane %v1061, 4
      %v1064 = vshll.u32 %v772, 16
      %v1066 = vrot.slane %v1064, 5
      %v1067 = vsel %vm779, %v1062, %v1066
      %v1069 = vshrl.u32 %v752, 16
      %v1071 = vrot.slane %v1069, 4
      %v1072 = vshll.u32 %v752, 16
      %v1074 = vrot.slane %v1072, 5
      %v1075 = vor.u32 %v1071, %v1074
      %v1076 = vrot.slane %v1075, 4
      %v1078 = vshll.u32 %v753, 16
      %v1080 = vrot.slane %v1078, 5
      %v1081 = vsel %vm779, %v1076, %v1080
      %v1082 = vshrl.u32 %v753, 16
      %v1084 = vrot.slane %v1082, 4
      %v1085 = vor.u32 %v1084, %v1080
      %v1086 = vrot.slane %v1085, 4
      %v1088 = vshll.u32 %v773, 16
      %v1090 = vrot.slane %v1088, 5
      %v1091 = vsel %vm779, %v1086, %v1090
      %v1093 = vshrl.u32 %v754, 16
      %v1095 = vrot.slane %v1093, 4
      %v1096 = vshll.u32 %v754, 16
      %v1098 = vrot.slane %v1096, 5
      %v1099 = vor.u32 %v1095, %v1098
      %v1100 = vrot.slane %v1099, 4
      %v1102 = vshll.u32 %v755, 16
      %v1104 = vrot.slane %v1102, 5
      %v1105 = vsel %vm779, %v1100, %v1104
      %v1106 = vshrl.u32 %v755, 16
      %v1108 = vrot.slane %v1106, 4
      %v1109 = vor.u32 %v1108, %v1104
      %v1110 = vrot.slane %v1109, 4
      %v1112 = vshll.u32 %v774, 16
      %v1114 = vrot.slane %v1112, 5
      %v1115 = vsel %vm779, %v1110, %v1114
      %v1117 = vshrl.u32 %v756, 16
      %v1119 = vrot.slane %v1117, 4
      %v1120 = vshll.u32 %v756, 16
      %v1122 = vrot.slane %v1120, 5
      %v1123 = vor.u32 %v1119, %v1122
      %v1124 = vrot.slane %v1123, 4
      %v1126 = vshll.u32 %v757, 16
      %v1128 = vrot.slane %v1126, 5
      %v1129 = vsel %vm779, %v1124, %v1128
      %v1130 = vshrl.u32 %v757, 16
      %v1132 = vrot.slane %v1130, 4
      %v1133 = vor.u32 %v1132, %v1128
      %v1134 = vrot.slane %v1133, 4
      %v1136 = vshll.u32 %v775, 16
      %v1138 = vrot.slane %v1136, 5
      %v1139 = vsel %vm779, %v1134, %v1138
      %v1141 = vshrl.u32 %v758, 16
      %v1143 = vrot.slane %v1141, 4
      %v1144 = vshll.u32 %v758, 16
      %v1146 = vrot.slane %v1144, 5
      %v1147 = vor.u32 %v1143, %v1146
      %v1148 = vrot.slane %v1147, 4
      %v1150 = vshll.u32 %v759, 16
      %v1152 = vrot.slane %v1150, 5
      %v1153 = vsel %vm779, %v1148, %v1152
      %v1154 = vshrl.u32 %v759, 16
      %v1156 = vrot.slane %v1154, 4
      %v1157 = vor.u32 %v1156, %v1152
      %v1158 = vrot.slane %v1157, 4
      %v1160 = vshll.u32 %v776, 16
      %v1162 = vrot.slane %v1160, 5
      %v1163 = vsel %vm779, %v1158, %v1162
      %s1164 = scalar_lea.vmem %s1, 2
      %v1165 = vld [vmem:[%s1164] sm:$0x3]
      %v1166 = vunpack.c.l.b16 %v793
      %v1167 = vunpack.c.l.b16 %v803
      %v1168 = vunpack.c.l.b16 %v817
      %v1169 = vunpack.c.l.b16 %v827
      %v1170 = vunpack.c.l.b16 %v841
      %v1171 = vunpack.c.l.b16 %v851
      %v1172 = vunpack.c.l.b16 %v865
      %v1173 = vunpack.c.l.b16 %v875
      %v1174 = vunpack.c.l.b16 %v889
      %v1175 = vunpack.c.l.b16 %v899
      %v1176 = vunpack.c.l.b16 %v913
      %v1177 = vunpack.c.l.b16 %v923
      %v1178 = vunpack.c.l.b16 %v937
      %v1179 = vunpack.c.l.b16 %v947
      %v1180 = vunpack.c.l.b16 %v961
      %v1181 = vunpack.c.l.b16 %v971
      %v1182 = vunpack.c.l.b16 %v985
      %v1183 = vunpack.c.l.b16 %v995
      %v1184 = vunpack.c.l.b16 %v1009
      %v1185 = vunpack.c.l.b16 %v1019
      %v1186 = vunpack.c.l.b16 %v1033
      %v1187 = vunpack.c.l.b16 %v1043
      %v1188 = vunpack.c.l.b16 %v1057
      %v1189 = vunpack.c.l.b16 %v1067
      %v1190 = vunpack.c.l.b16 %v1081
      %v1191 = vunpack.c.l.b16 %v1091
      %v1192 = vunpack.c.l.b16 %v1105
      %v1193 = vunpack.c.l.b16 %v1115
      %v1194 = vunpack.c.l.b16 %v1129
      %v1195 = vunpack.c.l.b16 %v1139
      %v1196 = vunpack.c.l.b16 %v1153
      %v1197 = vunpack.c.l.b16 %v1163
      %v1198 = vpack.c.b16 %v1167, %v1166
      %v1199 = vpack.c.b16 %v1169, %v1168
      %v1200 = vpack.c.b16 %v1171, %v1170
      %v1201 = vpack.c.b16 %v1173, %v1172
      %v1202 = vpack.c.b16 %v1175, %v1174
      %v1203 = vpack.c.b16 %v1177, %v1176
      %v1204 = vpack.c.b16 %v1179, %v1178
      %v1205 = vpack.c.b16 %v1181, %v1180
      %v1206 = vpack.c.b16 %v1183, %v1182
      %v1207 = vpack.c.b16 %v1185, %v1184
      %v1208 = vpack.c.b16 %v1187, %v1186
      %v1209 = vpack.c.b16 %v1189, %v1188
      %v1210 = vpack.c.b16 %v1191, %v1190
      %v1211 = vpack.c.b16 %v1193, %v1192
      %v1212 = vpack.c.b16 %v1195, %v1194
      %v1213 = vpack.c.b16 %v1197, %v1196
      %vm1214 = vcmask 31744
      %v1216 = vsel %vm1214, %v1198, 0
      %v1219 = vsel %vm1214, %v1199, 0
      %v1222 = vsel %vm1214, %v1200, 0
      %v1225 = vsel %vm1214, %v1201, 0
      %v1228 = vsel %vm1214, %v1202, 0
      %v1231 = vsel %vm1214, %v1203, 0
      %v1234 = vsel %vm1214, %v1204, 0
      %v1237 = vsel %vm1214, %v1205, 0
      %v1240 = vsel %vm1214, %v1206, 0
      %v1243 = vsel %vm1214, %v1207, 0
      %v1246 = vsel %vm1214, %v1208, 0
      %v1249 = vsel %vm1214, %v1209, 0
      %v1252 = vsel %vm1214, %v1210, 0
      %v1255 = vsel %vm1214, %v1211, 0
      %v1258 = vsel %vm1214, %v1212, 0
      %v1261 = vsel %vm1214, %v1213, 0
      %vm1263 = vcmask 1041408
      %v1265 = vsel %vm1263, %v1165, 0
      %1267 = vmatprep.subr.bf16.mxu0 0
      %1268 = vmatpush1.bf16.msra.mxu0 %v1265
      %1269 = vmatprep.subr.bf16.mxu0 0
      %1270 = vmatpush1.bf16.msra.mxu0 0
      %1271 = vmatprep.subr.bf16.mxu0 0
      %1272 = vmatpush1.bf16.msra.mxu0 0
      %1273 = vmatprep.subr.bf16.mxu0 0
      %1274 = vmatpush1.bf16.msra.mxu0 0
      %1275 = vmatprep.subr.bf16.mxu0 0
      %1276 = vmatpush1.bf16.msra.mxu0 0
      %1277 = vmatprep.subr.bf16.mxu0 0
      %1278 = vmatpush1.bf16.msra.mxu0 0
      %1279 = vmatprep.subr.bf16.mxu0 0
      %1280 = vmatpush1.bf16.msra.mxu0 0
      %1281 = vmatprep.subr.bf16.mxu0 0
      %1282 = vmatpush1.bf16.msra.mxu0 0
      %1283 = vmatprep.subr.bf16.mxu0 0
      %1284 = vmatpush1.bf16.msra.mxu0 0
      %1285 = vmatprep.subr.bf16.mxu0 0
      %1286 = vmatpush1.bf16.msra.mxu0 0
      %1287 = vmatprep.subr.bf16.mxu0 0
      %1288 = vmatpush1.bf16.msra.mxu0 0
      %1289 = vmatprep.subr.bf16.mxu0 0
      %1290 = vmatpush1.bf16.msra.mxu0 0
      %1291 = vmatprep.subr.bf16.mxu0 0
      %1292 = vmatpush1.bf16.msra.mxu0 0
      %1293 = vmatprep.subr.bf16.mxu0 0
      %1294 = vmatpush1.bf16.msra.mxu0 0
      %1295 = vmatprep.subr.bf16.mxu0 0
      %1296 = vmatpush1.bf16.msra.mxu0 0
      %1297 = vmatprep.subr.bf16.mxu0 0
      %1298 = vmatpush1.bf16.msra.mxu0 0
      %1299 = vmatprep.mubr.bf16.mxu0 0
      %1300 = vmatmul.mubr.bf16.gmra.mrb[0].mxu0 %v1216
      %v1301 = vpop.f32.mrb[0].mxu0
      %v1302 = vadd.f32 0.0, %v1301
      %v1303 = vpop.f32.mrb[0].mxu0
      %v1304 = vpop.f32.mrb[0].mxu0
      %v1305 = vadd.f32 0.0, %v1304
      %v1306 = vpop.f32.mrb[0].mxu0
      %1307 = vmatprep.mubr.bf16.mxu0 0
      %1308 = vmatmul.mubr.bf16.gmra.mrb[0].mxu0 %v1219
      %v1309 = vpop.f32.mrb[0].mxu0
      %v1310 = vadd.f32 0.0, %v1309
      %v1311 = vpop.f32.mrb[0].mxu0
      %v1312 = vpop.f32.mrb[0].mxu0
      %v1313 = vadd.f32 0.0, %v1312
      %v1314 = vpop.f32.mrb[0].mxu0
      %1315 = vmatprep.mubr.bf16.mxu0 0
      %1316 = vmatmul.mubr.bf16.gmra.mrb[0].mxu0 %v1222
      %v1317 = vpop.f32.mrb[0].mxu0
      %v1318 = vadd.f32 0.0, %v1317
      %v1319 = vpop.f32.mrb[0].mxu0
      %v1320 = vpop.f32.mrb[0].mxu0
      %v1321 = vadd.f32 0.0, %v1320
      %v1322 = vpop.f32.mrb[0].mxu0
      %1323 = vmatprep.mubr.bf16.mxu0 0
      %1324 = vmatmul.mubr.bf16.gmra.mrb[0].mxu0 %v1225
      %v1325 = vpop.f32.mrb[0].mxu0
      %v1326 = vadd.f32 0.0, %v1325
      %v1327 = vpop.f32.mrb[0].mxu0
      %v1328 = vpop.f32.mrb[0].mxu0
      %v1329 = vadd.f32 0.0, %v1328
      %v1330 = vpop.f32.mrb[0].mxu0
      %1331 = vmatprep.mubr.bf16.mxu0 0
      %1332 = vmatmul.mubr.bf16.gmra.mrb[0].mxu0 %v1228
      %v1333 = vpop.f32.mrb[0].mxu0
      %v1334 = vadd.f32 0.0, %v1333
      %v1335 = vpop.f32.mrb[0].mxu0
      %v1336 = vpop.f32.mrb[0].mxu0
      %v1337 = vadd.f32 0.0, %v1336
      %v1338 = vpop.f32.mrb[0].mxu0
      %1339 = vmatprep.mubr.bf16.mxu0 0
      %1340 = vmatmul.mubr.bf16.gmra.mrb[0].mxu0 %v1231
      %v1341 = vpop.f32.mrb[0].mxu0
      %v1342 = vadd.f32 0.0, %v1341
      %v1343 = vpop.f32.mrb[0].mxu0
      %v1344 = vpop.f32.mrb[0].mxu0
      %v1345 = vadd.f32 0.0, %v1344
      %v1346 = vpop.f32.mrb[0].mxu0
      %1347 = vmatprep.mubr.bf16.mxu0 0
      %1348 = vmatmul.mubr.bf16.gmra.mrb[0].mxu0 %v1234
      %v1349 = vpop.f32.mrb[0].mxu0
      %v1350 = vadd.f32 0.0, %v1349
      %v1351 = vpop.f32.mrb[0].mxu0
      %v1352 = vpop.f32.mrb[0].mxu0
      %v1353 = vadd.f32 0.0, %v1352
      %v1354 = vpop.f32.mrb[0].mxu0
      %1355 = vmatprep.mubr.bf16.mxu0 0
      %1356 = vmatmul.mubr.bf16.gmra.mrb[0].mxu0 %v1237
      %v1357 = vpop.f32.mrb[0].mxu0
      %v1358 = vadd.f32 0.0, %v1357
      %v1359 = vpop.f32.mrb[0].mxu0
      %v1360 = vpop.f32.mrb[0].mxu0
      %v1361 = vadd.f32 0.0, %v1360
      %v1362 = vpop.f32.mrb[0].mxu0
      %1363 = vmatprep.mubr.bf16.mxu0 0
      %1364 = vmatmul.mubr.bf16.gmra.mrb[0].mxu0 %v1240
      %v1365 = vpop.f32.mrb[0].mxu0
      %v1366 = vadd.f32 0.0, %v1365
      %v1367 = vpop.f32.mrb[0].mxu0
      %v1368 = vpop.f32.mrb[0].mxu0
      %v1369 = vadd.f32 0.0, %v1368
      %v1370 = vpop.f32.mrb[0].mxu0
      %1371 = vmatprep.mubr.bf16.mxu0 0
      %1372 = vmatmul.mubr.bf16.gmra.mrb[0].mxu0 %v1243
      %v1373 = vpop.f32.mrb[0].mxu0
      %v1374 = vadd.f32 0.0, %v1373
      %v1375 = vpop.f32.mrb[0].mxu0
      %v1376 = vpop.f32.mrb[0].mxu0
      %v1377 = vadd.f32 0.0, %v1376
      %v1378 = vpop.f32.mrb[0].mxu0
      %1379 = vmatprep.mubr.bf16.mxu0 0
      %1380 = vmatmul.mubr.bf16.gmra.mrb[0].mxu0 %v1246
      %v1381 = vpop.f32.mrb[0].mxu0
      %v1382 = vadd.f32 0.0, %v1381
      %v1383 = vpop.f32.mrb[0].mxu0
      %v1384 = vpop.f32.mrb[0].mxu0
      %v1385 = vadd.f32 0.0, %v1384
      %v1386 = vpop.f32.mrb[0].mxu0
      %1387 = vmatprep.mubr.bf16.mxu0 0
      %1388 = vmatmul.mubr.bf16.gmra.mrb[0].mxu0 %v1249
      %v1389 = vpop.f32.mrb[0].mxu0
      %v1390 = vadd.f32 0.0, %v1389
      %v1391 = vpop.f32.mrb[0].mxu0
      %v1392 = vpop.f32.mrb[0].mxu0
      %v1393 = vadd.f32 0.0, %v1392
      %v1394 = vpop.f32.mrb[0].mxu0
      %1395 = vmatprep.mubr.bf16.mxu0 0
      %1396 = vmatmul.mubr.bf16.gmra.mrb[0].mxu0 %v1252
      %v1397 = vpop.f32.mrb[0].mxu0
      %v1398 = vadd.f32 0.0, %v1397
      %v1399 = vpop.f32.mrb[0].mxu0
      %v1400 = vpop.f32.mrb[0].mxu0
      %v1401 = vadd.f32 0.0, %v1400
      %v1402 = vpop.f32.mrb[0].mxu0
      %1403 = vmatprep.mubr.bf16.mxu0 0
      %1404 = vmatmul.mubr.bf16.gmra.mrb[0].mxu0 %v1255
      %v1405 = vpop.f32.mrb[0].mxu0
      %v1406 = vadd.f32 0.0, %v1405
      %v1407 = vpop.f32.mrb[0].mxu0
      %v1408 = vpop.f32.mrb[0].mxu0
      %v1409 = vadd.f32 0.0, %v1408
      %v1410 = vpop.f32.mrb[0].mxu0
      %1411 = vmatprep.mubr.bf16.mxu0 0
      %1412 = vmatmul.mubr.bf16.gmra.mrb[0].mxu0 %v1258
      %v1413 = vpop.f32.mrb[0].mxu0
      %v1414 = vadd.f32 0.0, %v1413
      %v1415 = vpop.f32.mrb[0].mxu0
      %v1416 = vpop.f32.mrb[0].mxu0
      %v1417 = vadd.f32 0.0, %v1416
      %v1418 = vpop.f32.mrb[0].mxu0
      %1419 = vmatprep.mubr.bf16.mxu0 0
      %1420 = vmatmul.mubr.bf16.gmra.mrb[0].mxu0 %v1261
      %v1421 = vpop.f32.mrb[0].mxu0
      %v1422 = vadd.f32 0.0, %v1421
      %v1423 = vpop.f32.mrb[0].mxu0
      %v1424 = vpop.f32.mrb[0].mxu0
      %v1425 = vadd.f32 0.0, %v1424
      %v1426 = vpop.f32.mrb[0].mxu0
      %1427 = vdwg.mxu0
      %v1460 = vunpack.c.l.b16 %v728
      %v1461 = vunpack.c.l.b16 %v729
      %v1462 = vunpack.c.l.b16 %v730
      %v1463 = vunpack.c.l.b16 %v731
      %v1464 = vunpack.c.l.b16 %v732
      %v1465 = vunpack.c.l.b16 %v733
      %v1466 = vunpack.c.l.b16 %v734
      %v1467 = vunpack.c.l.b16 %v735
      %v1468 = vunpack.c.l.b16 %v736
      %v1469 = vunpack.c.l.b16 %v737
      %v1470 = vunpack.c.l.b16 %v738
      %v1471 = vunpack.c.l.b16 %v739
      %v1472 = vunpack.c.l.b16 %v740
      %v1473 = vunpack.c.l.b16 %v741
      %v1474 = vunpack.c.l.b16 %v742
      %v1475 = vunpack.c.l.b16 %v743
      %v1476 = vunpack.c.l.b16 %v744
      %v1477 = vunpack.c.l.b16 %v745
      %v1478 = vunpack.c.l.b16 %v746
      %v1479 = vunpack.c.l.b16 %v747
      %v1480 = vunpack.c.l.b16 %v748
      %v1481 = vunpack.c.l.b16 %v749
      %v1482 = vunpack.c.l.b16 %v750
      %v1483 = vunpack.c.l.b16 %v751
      %v1484 = vunpack.c.l.b16 %v752
      %v1485 = vunpack.c.l.b16 %v753
      %v1486 = vunpack.c.l.b16 %v754
      %v1487 = vunpack.c.l.b16 %v755
      %v1488 = vunpack.c.l.b16 %v756
      %v1489 = vunpack.c.l.b16 %v757
      %v1490 = vunpack.c.l.b16 %v758
      %v1491 = vunpack.c.l.b16 %v759
      %v1492 = vpack.c.b16 %v1461, %v1460
      %v1493 = vpack.c.b16 %v1463, %v1462
      %v1494 = vpack.c.b16 %v1465, %v1464
      %v1495 = vpack.c.b16 %v1467, %v1466
      %v1496 = vpack.c.b16 %v1469, %v1468
      %v1497 = vpack.c.b16 %v1471, %v1470
      %v1498 = vpack.c.b16 %v1473, %v1472
      %v1499 = vpack.c.b16 %v1475, %v1474
      %v1500 = vpack.c.b16 %v1477, %v1476
      %v1501 = vpack.c.b16 %v1479, %v1478
      %v1502 = vpack.c.b16 %v1481, %v1480
      %v1503 = vpack.c.b16 %v1483, %v1482
      %v1504 = vpack.c.b16 %v1485, %v1484
      %v1505 = vpack.c.b16 %v1487, %v1486
      %v1506 = vpack.c.b16 %v1489, %v1488
      %v1507 = vpack.c.b16 %v1491, %v1490
      %v1509 = vsel %vm1214, %v1492, 0
      %v1512 = vsel %vm1214, %v1493, 0
      %v1515 = vsel %vm1214, %v1494, 0
      %v1518 = vsel %vm1214, %v1495, 0
      %v1521 = vsel %vm1214, %v1496, 0
      %v1524 = vsel %vm1214, %v1497, 0
      %v1527 = vsel %vm1214, %v1498, 0
      %v1530 = vsel %vm1214, %v1499, 0
      %v1533 = vsel %vm1214, %v1500, 0
      %v1536 = vsel %vm1214, %v1501, 0
      %v1539 = vsel %vm1214, %v1502, 0
      %v1542 = vsel %vm1214, %v1503, 0
      %v1545 = vsel %vm1214, %v1504, 0
      %v1548 = vsel %vm1214, %v1505, 0
      %v1551 = vsel %vm1214, %v1506, 0
      %v1554 = vsel %vm1214, %v1507, 0
      %v1557 = vsel %vm1263, %v760, 0
      %1559 = vmatprep.subr.bf16.mxu0 0
      %1560 = vmatpush1.bf16.msra.mxu0 %v1557
      %1561 = vmatprep.subr.bf16.mxu0 0
      %1562 = vmatpush1.bf16.msra.mxu0 0
      %1563 = vmatprep.subr.bf16.mxu0 0
      %1564 = vmatpush1.bf16.msra.mxu0 0
      %1565 = vmatprep.subr.bf16.mxu0 0
      %1566 = vmatpush1.bf16.msra.mxu0 0
      %1567 = vmatprep.subr.bf16.mxu0 0
      %1568 = vmatpush1.bf16.msra.mxu0 0
      %1569 = vmatprep.subr.bf16.mxu0 0
      %1570 = vmatpush1.bf16.msra.mxu0 0
      %1571 = vmatprep.subr.bf16.mxu0 0
      %1572 = vmatpush1.bf16.msra.mxu0 0
      %1573 = vmatprep.subr.bf16.mxu0 0
      %1574 = vmatpush1.bf16.msra.mxu0 0
      %1575 = vmatprep.subr.bf16.mxu0 0
      %1576 = vmatpush1.bf16.msra.mxu0 0
      %1577 = vmatprep.subr.bf16.mxu0 0
      %1578 = vmatpush1.bf16.msra.mxu0 0
      %1579 = vmatprep.subr.bf16.mxu0 0
      %1580 = vmatpush1.bf16.msra.mxu0 0
      %1581 = vmatprep.subr.bf16.mxu0 0
      %1582 = vmatpush1.bf16.msra.mxu0 0
      %1583 = vmatprep.subr.bf16.mxu0 0
      %1584 = vmatpush1.bf16.msra.mxu0 0
      %1585 = vmatprep.subr.bf16.mxu0 0
      %1586 = vmatpush1.bf16.msra.mxu0 0
      %1587 = vmatprep.subr.bf16.mxu0 0
      %1588 = vmatpush1.bf16.msra.mxu0 0
      %1589 = vmatprep.subr.bf16.mxu0 0
      %1590 = vmatpush1.bf16.msra.mxu0 0
      %1591 = vmatprep.mubr.bf16.mxu0 0
      %1592 = vmatmul.mubr.bf16.gmra.mrb[0].mxu0 %v1509
      %v1593 = vpop.f32.mrb[0].mxu0
      %v1594 = vadd.f32 %v1302, %v1593
      %v1595 = vpop.f32.mrb[0].mxu0
      %v1596 = vpop.f32.mrb[0].mxu0
      %v1597 = vadd.f32 %v1305, %v1596
      %v1598 = vpop.f32.mrb[0].mxu0
      %1599 = vmatprep.mubr.bf16.mxu0 0
      %1600 = vmatmul.mubr.bf16.gmra.mrb[0].mxu0 %v1512
      %v1601 = vpop.f32.mrb[0].mxu0
      %v1602 = vadd.f32 %v1310, %v1601
      %v1603 = vpop.f32.mrb[0].mxu0
      %v1604 = vpop.f32.mrb[0].mxu0
      %v1605 = vadd.f32 %v1313, %v1604
      %v1606 = vpop.f32.mrb[0].mxu0
      %1607 = vmatprep.mubr.bf16.mxu0 0
      %1608 = vmatmul.mubr.bf16.gmra.mrb[0].mxu0 %v1515
      %v1609 = vpop.f32.mrb[0].mxu0
      %v1610 = vadd.f32 %v1318, %v1609
      %v1611 = vpop.f32.mrb[0].mxu0
      %v1612 = vpop.f32.mrb[0].mxu0
      %v1613 = vadd.f32 %v1321, %v1612
      %v1614 = vpop.f32.mrb[0].mxu0
      %1615 = vmatprep.mubr.bf16.mxu0 0
      %1616 = vmatmul.mubr.bf16.gmra.mrb[0].mxu0 %v1518
      %v1617 = vpop.f32.mrb[0].mxu0
      %v1618 = vadd.f32 %v1326, %v1617
      %v1619 = vpop.f32.mrb[0].mxu0
      %v1620 = vpop.f32.mrb[0].mxu0
      %v1621 = vadd.f32 %v1329, %v1620
      %v1622 = vpop.f32.mrb[0].mxu0
      %1623 = vmatprep.mubr.bf16.mxu0 0
      %1624 = vmatmul.mubr.bf16.gmra.mrb[0].mxu0 %v1521
      %v1625 = vpop.f32.mrb[0].mxu0
      %v1626 = vadd.f32 %v1334, %v1625
      %v1627 = vpop.f32.mrb[0].mxu0
      %v1628 = vpop.f32.mrb[0].mxu0
      %v1629 = vadd.f32 %v1337, %v1628
      %v1630 = vpop.f32.mrb[0].mxu0
      %1631 = vmatprep.mubr.bf16.mxu0 0
      %1632 = vmatmul.mubr.bf16.gmra.mrb[0].mxu0 %v1524
      %v1633 = vpop.f32.mrb[0].mxu0
      %v1634 = vadd.f32 %v1342, %v1633
      %v1635 = vpop.f32.mrb[0].mxu0
      %v1636 = vpop.f32.mrb[0].mxu0
      %v1637 = vadd.f32 %v1345, %v1636
      %v1638 = vpop.f32.mrb[0].mxu0
      %1639 = vmatprep.mubr.bf16.mxu0 0
      %1640 = vmatmul.mubr.bf16.gmra.mrb[0].mxu0 %v1527
      %v1641 = vpop.f32.mrb[0].mxu0
      %v1642 = vadd.f32 %v1350, %v1641
      %v1643 = vpop.f32.mrb[0].mxu0
      %v1644 = vpop.f32.mrb[0].mxu0
      %v1645 = vadd.f32 %v1353, %v1644
      %v1646 = vpop.f32.mrb[0].mxu0
      %1647 = vmatprep.mubr.bf16.mxu0 0
      %1648 = vmatmul.mubr.bf16.gmra.mrb[0].mxu0 %v1530
      %v1649 = vpop.f32.mrb[0].mxu0
      %v1650 = vadd.f32 %v1358, %v1649
      %v1651 = vpop.f32.mrb[0].mxu0
      %v1652 = vpop.f32.mrb[0].mxu0
      %v1653 = vadd.f32 %v1361, %v1652
      %v1654 = vpop.f32.mrb[0].mxu0
      %1655 = vmatprep.mubr.bf16.mxu0 0
      %1656 = vmatmul.mubr.bf16.gmra.mrb[0].mxu0 %v1533
      %v1657 = vpop.f32.mrb[0].mxu0
      %v1658 = vadd.f32 %v1366, %v1657
      %v1659 = vpop.f32.mrb[0].mxu0
      %v1660 = vpop.f32.mrb[0].mxu0
      %v1661 = vadd.f32 %v1369, %v1660
      %v1662 = vpop.f32.mrb[0].mxu0
      %1663 = vmatprep.mubr.bf16.mxu0 0
      %1664 = vmatmul.mubr.bf16.gmra.mrb[0].mxu0 %v1536
      %v1665 = vpop.f32.mrb[0].mxu0
      %v1666 = vadd.f32 %v1374, %v1665
      %v1667 = vpop.f32.mrb[0].mxu0
      %v1668 = vpop.f32.mrb[0].mxu0
      %v1669 = vadd.f32 %v1377, %v1668
      %v1670 = vpop.f32.mrb[0].mxu0
      %1671 = vmatprep.mubr.bf16.mxu0 0
      %1672 = vmatmul.mubr.bf16.gmra.mrb[0].mxu0 %v1539
      %v1673 = vpop.f32.mrb[0].mxu0
      %v1674 = vadd.f32 %v1382, %v1673
      %v1675 = vpop.f32.mrb[0].mxu0
      %v1676 = vpop.f32.mrb[0].mxu0
      %v1677 = vadd.f32 %v1385, %v1676
      %v1678 = vpop.f32.mrb[0].mxu0
      %1679 = vmatprep.mubr.bf16.mxu0 0
      %1680 = vmatmul.mubr.bf16.gmra.mrb[0].mxu0 %v1542
      %v1681 = vpop.f32.mrb[0].mxu0
      %v1682 = vadd.f32 %v1390, %v1681
      %v1683 = vpop.f32.mrb[0].mxu0
      %v1684 = vpop.f32.mrb[0].mxu0
      %v1685 = vadd.f32 %v1393, %v1684
      %v1686 = vpop.f32.mrb[0].mxu0
      %1687 = vmatprep.mubr.bf16.mxu0 0
      %1688 = vmatmul.mubr.bf16.gmra.mrb[0].mxu0 %v1545
      %v1689 = vpop.f32.mrb[0].mxu0
      %v1690 = vadd.f32 %v1398, %v1689
      %v1691 = vpop.f32.mrb[0].mxu0
      %v1692 = vpop.f32.mrb[0].mxu0
      %v1693 = vadd.f32 %v1401, %v1692
      %v1694 = vpop.f32.mrb[0].mxu0
      %1695 = vmatprep.mubr.bf16.mxu0 0
      %1696 = vmatmul.mubr.bf16.gmra.mrb[0].mxu0 %v1548
      %v1697 = vpop.f32.mrb[0].mxu0
      %v1698 = vadd.f32 %v1406, %v1697
      %v1699 = vpop.f32.mrb[0].mxu0
      %v1700 = vpop.f32.mrb[0].mxu0
      %v1701 = vadd.f32 %v1409, %v1700
      %v1702 = vpop.f32.mrb[0].mxu0
      %1703 = vmatprep.mubr.bf16.mxu0 0
      %1704 = vmatmul.mubr.bf16.gmra.mrb[0].mxu0 %v1551
      %v1705 = vpop.f32.mrb[0].mxu0
      %v1706 = vadd.f32 %v1414, %v1705
      %v1707 = vpop.f32.mrb[0].mxu0
      %v1708 = vpop.f32.mrb[0].mxu0
      %v1709 = vadd.f32 %v1417, %v1708
      %v1710 = vpop.f32.mrb[0].mxu0
      %1711 = vmatprep.mubr.bf16.mxu0 0
      %1712 = vmatmul.mubr.bf16.gmra.mrb[0].mxu0 %v1554
      %v1713 = vpop.f32.mrb[0].mxu0
      %v1714 = vadd.f32 %v1422, %v1713
      %v1715 = vpop.f32.mrb[0].mxu0
      %v1716 = vpop.f32.mrb[0].mxu0
      %v1717 = vadd.f32 %v1425, %v1716
      %v1718 = vpop.f32.mrb[0].mxu0
      %1719 = vdwg.mxu0
      %v1720 = vld [vmem:[#allocation2] sm:$0xe]
      %v1721 = vld [vmem:[#allocation2 + $0xc] sm:$0xe]
      %v1722 = vld [vmem:[#allocation2 + $0x18] sm:$0xe]
      %v1723 = vld [vmem:[#allocation2 + $0x24] sm:$0xe]
      %v1724 = vld [vmem:[#allocation2 + $0x30] sm:$0xe]
      %v1725 = vld [vmem:[#allocation2 + $0x3c] sm:$0xe]
      %v1726 = vld [vmem:[#allocation2 + $0x48] sm:$0xe]
      %v1727 = vld [vmem:[#allocation2 + $0x54] sm:$0xe]
      %v1728 = vld [vmem:[#allocation2 + $0x60] sm:$0xe]
      %v1729 = vld [vmem:[#allocation2 + $0x6c] sm:$0xe]
      %v1730 = vld [vmem:[#allocation2 + $0x78] sm:$0xe]
      %v1731 = vld [vmem:[#allocation2 + $0x84] sm:$0xe]
      %v1732 = vld [vmem:[#allocation2 + $0x90] sm:$0xe]
      %v1733 = vld [vmem:[#allocation2 + $0x9c] sm:$0xe]
      %v1734 = vld [vmem:[#allocation2 + $0xa8] sm:$0xe]
      %v1735 = vld [vmem:[#allocation2 + $0xb4] sm:$0xe]
      %vm1768 = vcmask 1042432
      %vm1769 = vcmask 1046532
      %vm1770 = vmor %vm1768, %vm1769
      %v1771 = vrot.slane %v1720, 5
      %v1772 = vrot.slane %v1771, 4
      %v1773 = vrot.slane %v729, 5
      %v1774 = vsel %vm1770, %v1772, %v1773
      %v1775 = vrot.slane %v1773, 4
      %v1776 = vrot.slane %v761, 5
      %v1777 = vsel %vm1770, %v1775, %v1776
      %v1778 = vrot.slane %v1721, 5
      %v1779 = vrot.slane %v1778, 4
      %v1780 = vrot.slane %v731, 5
      %v1781 = vsel %vm1770, %v1779, %v1780
      %v1782 = vrot.slane %v1780, 4
      %v1783 = vrot.slane %v762, 5
      %v1784 = vsel %vm1770, %v1782, %v1783
      %v1785 = vrot.slane %v1722, 5
      %v1786 = vrot.slane %v1785, 4
      %v1787 = vrot.slane %v733, 5
      %v1788 = vsel %vm1770, %v1786, %v1787
      %v1789 = vrot.slane %v1787, 4
      %v1790 = vrot.slane %v763, 5
      %v1791 = vsel %vm1770, %v1789, %v1790
      %v1792 = vrot.slane %v1723, 5
      %v1793 = vrot.slane %v1792, 4
      %v1794 = vrot.slane %v735, 5
      %v1795 = vsel %vm1770, %v1793, %v1794
      %v1796 = vrot.slane %v1794, 4
      %v1797 = vrot.slane %v764, 5
      %v1798 = vsel %vm1770, %v1796, %v1797
      %v1799 = vrot.slane %v1724, 5
      %v1800 = vrot.slane %v1799, 4
      %v1801 = vrot.slane %v737, 5
      %v1802 = vsel %vm1770, %v1800, %v1801
      %v1803 = vrot.slane %v1801, 4
      %v1804 = vrot.slane %v765, 5
      %v1805 = vsel %vm1770, %v1803, %v1804
      %v1806 = vrot.slane %v1725, 5
      %v1807 = vrot.slane %v1806, 4
      %v1808 = vrot.slane %v739, 5
      %v1809 = vsel %vm1770, %v1807, %v1808
      %v1810 = vrot.slane %v1808, 4
      %v1811 = vrot.slane %v766, 5
      %v1812 = vsel %vm1770, %v1810, %v1811
      %v1813 = vrot.slane %v1726, 5
      %v1814 = vrot.slane %v1813, 4
      %v1815 = vrot.slane %v741, 5
      %v1816 = vsel %vm1770, %v1814, %v1815
      %v1817 = vrot.slane %v1815, 4
      %v1818 = vrot.slane %v767, 5
      %v1819 = vsel %vm1770, %v1817, %v1818
      %v1820 = vrot.slane %v1727, 5
      %v1821 = vrot.slane %v1820, 4
      %v1822 = vrot.slane %v743, 5
      %v1823 = vsel %vm1770, %v1821, %v1822
      %v1824 = vrot.slane %v1822, 4
      %v1825 = vrot.slane %v768, 5
      %v1826 = vsel %vm1770, %v1824, %v1825
      %v1827 = vrot.slane %v1728, 5
      %v1828 = vrot.slane %v1827, 4
      %v1829 = vrot.slane %v745, 5
      %v1830 = vsel %vm1770, %v1828, %v1829
      %v1831 = vrot.slane %v1829, 4
      %v1832 = vrot.slane %v769, 5
      %v1833 = vsel %vm1770, %v1831, %v1832
      %v1834 = vrot.slane %v1729, 5
      %v1835 = vrot.slane %v1834, 4
      %v1836 = vrot.slane %v747, 5
      %v1837 = vsel %vm1770, %v1835, %v1836
      %v1838 = vrot.slane %v1836, 4
      %v1839 = vrot.slane %v770, 5
      %v1840 = vsel %vm1770, %v1838, %v1839
      %v1841 = vrot.slane %v1730, 5
      %v1842 = vrot.slane %v1841, 4
      %v1843 = vrot.slane %v749, 5
      %v1844 = vsel %vm1770, %v1842, %v1843
      %v1845 = vrot.slane %v1843, 4
      %v1846 = vrot.slane %v771, 5
      %v1847 = vsel %vm1770, %v1845, %v1846
      %v1848 = vrot.slane %v1731, 5
      %v1849 = vrot.slane %v1848, 4
      %v1850 = vrot.slane %v751, 5
      %v1851 = vsel %vm1770, %v1849, %v1850
      %v1852 = vrot.slane %v1850, 4
      %v1853 = vrot.slane %v772, 5
      %v1854 = vsel %vm1770, %v1852, %v1853
      %v1855 = vrot.slane %v1732, 5
      %v1856 = vrot.slane %v1855, 4
      %v1857 = vrot.slane %v753, 5
      %v1858 = vsel %vm1770, %v1856, %v1857
      %v1859 = vrot.slane %v1857, 4
      %v1860 = vrot.slane %v773, 5
      %v1861 = vsel %vm1770, %v1859, %v1860
      %v1862 = vrot.slane %v1733, 5
      %v1863 = vrot.slane %v1862, 4
      %v1864 = vrot.slane %v755, 5
      %v1865 = vsel %vm1770, %v1863, %v1864
      %v1866 = vrot.slane %v1864, 4
      %v1867 = vrot.slane %v774, 5
      %v1868 = vsel %vm1770, %v1866, %v1867
      %v1869 = vrot.slane %v1734, 5
      %v1870 = vrot.slane %v1869, 4
      %v1871 = vrot.slane %v757, 5
      %v1872 = vsel %vm1770, %v1870, %v1871
      %v1873 = vrot.slane %v1871, 4
      %v1874 = vrot.slane %v775, 5
      %v1875 = vsel %vm1770, %v1873, %v1874
      %v1876 = vrot.slane %v1735, 5
      %v1877 = vrot.slane %v1876, 4
      %v1878 = vrot.slane %v759, 5
      %v1879 = vsel %vm1770, %v1877, %v1878
      %v1880 = vrot.slane %v1878, 4
      %v1881 = vrot.slane %v776, 5
      %v1882 = vsel %vm1770, %v1880, %v1881
      %s1883 = scalar_lea.vmem %s1, 4
      %v1884 = vld [vmem:[%s1883] sm:$0x3]
      %v1885 = vunpack.c.l.b16 %v1774
      %v1886 = vunpack.c.l.b16 %v1777
      %v1887 = vunpack.c.l.b16 %v1781
      %v1888 = vunpack.c.l.b16 %v1784
      %v1889 = vunpack.c.l.b16 %v1788
      %v1890 = vunpack.c.l.b16 %v1791
      %v1891 = vunpack.c.l.b16 %v1795
      %v1892 = vunpack.c.l.b16 %v1798
      %v1893 = vunpack.c.l.b16 %v1802
      %v1894 = vunpack.c.l.b16 %v1805
      %v1895 = vunpack.c.l.b16 %v1809
      %v1896 = vunpack.c.l.b16 %v1812
      %v1897 = vunpack.c.l.b16 %v1816
      %v1898 = vunpack.c.l.b16 %v1819
      %v1899 = vunpack.c.l.b16 %v1823
      %v1900 = vunpack.c.l.b16 %v1826
      %v1901 = vunpack.c.l.b16 %v1830
      %v1902 = vunpack.c.l.b16 %v1833
      %v1903 = vunpack.c.l.b16 %v1837
      %v1904 = vunpack.c.l.b16 %v1840
      %v1905 = vunpack.c.l.b16 %v1844
      %v1906 = vunpack.c.l.b16 %v1847
      %v1907 = vunpack.c.l.b16 %v1851
      %v1908 = vunpack.c.l.b16 %v1854
      %v1909 = vunpack.c.l.b16 %v1858
      %v1910 = vunpack.c.l.b16 %v1861
      %v1911 = vunpack.c.l.b16 %v1865
      %v1912 = vunpack.c.l.b16 %v1868
      %v1913 = vunpack.c.l.b16 %v1872
      %v1914 = vunpack.c.l.b16 %v1875
      %v1915 = vunpack.c.l.b16 %v1879
      %v1916 = vunpack.c.l.b16 %v1882
      %v1917 = vpack.c.b16 %v1886, %v1885
      %v1918 = vpack.c.b16 %v1888, %v1887
      %v1919 = vpack.c.b16 %v1890, %v1889
      %v1920 = vpack.c.b16 %v1892, %v1891
      %v1921 = vpack.c.b16 %v1894, %v1893
      %v1922 = vpack.c.b16 %v1896, %v1895
      %v1923 = vpack.c.b16 %v1898, %v1897
      %v1924 = vpack.c.b16 %v1900, %v1899
      %v1925 = vpack.c.b16 %v1902, %v1901
      %v1926 = vpack.c.b16 %v1904, %v1903
      %v1927 = vpack.c.b16 %v1906, %v1905
      %v1928 = vpack.c.b16 %v1908, %v1907
      %v1929 = vpack.c.b16 %v1910, %v1909
      %v1930 = vpack.c.b16 %v1912, %v1911
      %v1931 = vpack.c.b16 %v1914, %v1913
      %v1932 = vpack.c.b16 %v1916, %v1915
      %v1934 = vsel %vm1214, %v1917, 0
      %v1937 = vsel %vm1214, %v1918, 0
      %v1940 = vsel %vm1214, %v1919, 0
      %v1943 = vsel %vm1214, %v1920, 0
      %v1946 = vsel %vm1214, %v1921, 0
      %v1949 = vsel %vm1214, %v1922, 0
      %v1952 = vsel %vm1214, %v1923, 0
      %v1955 = vsel %vm1214, %v1924, 0
      %v1958 = vsel %vm1214, %v1925, 0
      %v1961 = vsel %vm1214, %v1926, 0
      %v1964 = vsel %vm1214, %v1927, 0
      %v1967 = vsel %vm1214, %v1928, 0
      %v1970 = vsel %vm1214, %v1929, 0
      %v1973 = vsel %vm1214, %v1930, 0
      %v1976 = vsel %vm1214, %v1931, 0
      %v1979 = vsel %vm1214, %v1932, 0
      %v1982 = vsel %vm1263, %v1884, 0
      %1984 = vmatprep.subr.bf16.mxu0 0
      %1985 = vmatpush1.bf16.msra.mxu0 %v1982
      %1986 = vmatprep.subr.bf16.mxu0 0
      %1987 = vmatpush1.bf16.msra.mxu0 0
      %1988 = vmatprep.subr.bf16.mxu0 0
      %1989 = vmatpush1.bf16.msra.mxu0 0
      %1990 = vmatprep.subr.bf16.mxu0 0
      %1991 = vmatpush1.bf16.msra.mxu0 0
      %1992 = vmatprep.subr.bf16.mxu0 0
      %1993 = vmatpush1.bf16.msra.mxu0 0
      %1994 = vmatprep.subr.bf16.mxu0 0
      %1995 = vmatpush1.bf16.msra.mxu0 0
      %1996 = vmatprep.subr.bf16.mxu0 0
      %1997 = vmatpush1.bf16.msra.mxu0 0
      %1998 = vmatprep.subr.bf16.mxu0 0
      %1999 = vmatpush1.bf16.msra.mxu0 0
      %2000 = vmatprep.subr.bf16.mxu0 0
      %2001 = vmatpush1.bf16.msra.mxu0 0
      %2002 = vmatprep.subr.bf16.mxu0 0
      %2003 = vmatpush1.bf16.msra.mxu0 0
      %2004 = vmatprep.subr.bf16.mxu0 0
      %2005 = vmatpush1.bf16.msra.mxu0 0
      %2006 = vmatprep.subr.bf16.mxu0 0
      %2007 = vmatpush1.bf16.msra.mxu0 0
      %2008 = vmatprep.subr.bf16.mxu0 0
      %2009 = vmatpush1.bf16.msra.mxu0 0
      %2010 = vmatprep.subr.bf16.mxu0 0
      %2011 = vmatpush1.bf16.msra.mxu0 0
      %2012 = vmatprep.subr.bf16.mxu0 0
      %2013 = vmatpush1.bf16.msra.mxu0 0
      %2014 = vmatprep.subr.bf16.mxu0 0
      %2015 = vmatpush1.bf16.msra.mxu0 0
      %2016 = vmatprep.mubr.bf16.mxu0 0
      %2017 = vmatmul.mubr.bf16.gmra.mrb[0].mxu0 %v1934
      %v2018 = vpop.f32.mrb[0].mxu0
      %v2019 = vadd.f32 0.0, %v2018
      %v2020 = vpop.f32.mrb[0].mxu0
      %v2021 = vpop.f32.mrb[0].mxu0
      %v2022 = vadd.f32 0.0, %v2021
      %v2023 = vpop.f32.mrb[0].mxu0
      %2024 = vmatprep.mubr.bf16.mxu0 0
      %2025 = vmatmul.mubr.bf16.gmra.mrb[0].mxu0 %v1937
      %v2026 = vpop.f32.mrb[0].mxu0
      %v2027 = vadd.f32 0.0, %v2026
      %v2028 = vpop.f32.mrb[0].mxu0
      %v2029 = vpop.f32.mrb[0].mxu0
      %v2030 = vadd.f32 0.0, %v2029
      %v2031 = vpop.f32.mrb[0].mxu0
      %2032 = vmatprep.mubr.bf16.mxu0 0
      %2033 = vmatmul.mubr.bf16.gmra.mrb[0].mxu0 %v1940
      %v2034 = vpop.f32.mrb[0].mxu0
      %v2035 = vadd.f32 0.0, %v2034
      %v2036 = vpop.f32.mrb[0].mxu0
      %v2037 = vpop.f32.mrb[0].mxu0
      %v2038 = vadd.f32 0.0, %v2037
      %v2039 = vpop.f32.mrb[0].mxu0
      %2040 = vmatprep.mubr.bf16.mxu0 0
      %2041 = vmatmul.mubr.bf16.gmra.mrb[0].mxu0 %v1943
      %v2042 = vpop.f32.mrb[0].mxu0
      %v2043 = vadd.f32 0.0, %v2042
      %v2044 = vpop.f32.mrb[0].mxu0
      %v2045 = vpop.f32.mrb[0].mxu0
      %v2046 = vadd.f32 0.0, %v2045
      %v2047 = vpop.f32.mrb[0].mxu0
      %2048 = vmatprep.mubr.bf16.mxu0 0
      %2049 = vmatmul.mubr.bf16.gmra.mrb[0].mxu0 %v1946
      %v2050 = vpop.f32.mrb[0].mxu0
      %v2051 = vadd.f32 0.0, %v2050
      %v2052 = vpop.f32.mrb[0].mxu0
      %v2053 = vpop.f32.mrb[0].mxu0
      %v2054 = vadd.f32 0.0, %v2053
      %v2055 = vpop.f32.mrb[0].mxu0
      %2056 = vmatprep.mubr.bf16.mxu0 0
      %2057 = vmatmul.mubr.bf16.gmra.mrb[0].mxu0 %v1949
      %v2058 = vpop.f32.mrb[0].mxu0
      %v2059 = vadd.f32 0.0, %v2058
      %v2060 = vpop.f32.mrb[0].mxu0
      %v2061 = vpop.f32.mrb[0].mxu0
      %v2062 = vadd.f32 0.0, %v2061
      %v2063 = vpop.f32.mrb[0].mxu0
      %2064 = vmatprep.mubr.bf16.mxu0 0
      %2065 = vmatmul.mubr.bf16.gmra.mrb[0].mxu0 %v1952
      %v2066 = vpop.f32.mrb[0].mxu0
      %v2067 = vadd.f32 0.0, %v2066
      %v2068 = vpop.f32.mrb[0].mxu0
      %v2069 = vpop.f32.mrb[0].mxu0
      %v2070 = vadd.f32 0.0, %v2069
      %v2071 = vpop.f32.mrb[0].mxu0
      %2072 = vmatprep.mubr.bf16.mxu0 0
      %2073 = vmatmul.mubr.bf16.gmra.mrb[0].mxu0 %v1955
      %v2074 = vpop.f32.mrb[0].mxu0
      %v2075 = vadd.f32 0.0, %v2074
      %v2076 = vpop.f32.mrb[0].mxu0
      %v2077 = vpop.f32.mrb[0].mxu0
      %v2078 = vadd.f32 0.0, %v2077
      %v2079 = vpop.f32.mrb[0].mxu0
      %2080 = vmatprep.mubr.bf16.mxu0 0
      %2081 = vmatmul.mubr.bf16.gmra.mrb[0].mxu0 %v1958
      %v2082 = vpop.f32.mrb[0].mxu0
      %v2083 = vadd.f32 0.0, %v2082
      %v2084 = vpop.f32.mrb[0].mxu0
      %v2085 = vpop.f32.mrb[0].mxu0
      %v2086 = vadd.f32 0.0, %v2085
      %v2087 = vpop.f32.mrb[0].mxu0
      %2088 = vmatprep.mubr.bf16.mxu0 0
      %2089 = vmatmul.mubr.bf16.gmra.mrb[0].mxu0 %v1961
      %v2090 = vpop.f32.mrb[0].mxu0
      %v2091 = vadd.f32 0.0, %v2090
      %v2092 = vpop.f32.mrb[0].mxu0
      %v2093 = vpop.f32.mrb[0].mxu0
      %v2094 = vadd.f32 0.0, %v2093
      %v2095 = vpop.f32.mrb[0].mxu0
      %2096 = vmatprep.mubr.bf16.mxu0 0
      %2097 = vmatmul.mubr.bf16.gmra.mrb[0].mxu0 %v1964
      %v2098 = vpop.f32.mrb[0].mxu0
      %v2099 = vadd.f32 0.0, %v2098
      %v2100 = vpop.f32.mrb[0].mxu0
      %v2101 = vpop.f32.mrb[0].mxu0
      %v2102 = vadd.f32 0.0, %v2101
      %v2103 = vpop.f32.mrb[0].mxu0
      %2104 = vmatprep.mubr.bf16.mxu0 0
      %2105 = vmatmul.mubr.bf16.gmra.mrb[0].mxu0 %v1967
      %v2106 = vpop.f32.mrb[0].mxu0
      %v2107 = vadd.f32 0.0, %v2106
      %v2108 = vpop.f32.mrb[0].mxu0
      %v2109 = vpop.f32.mrb[0].mxu0
      %v2110 = vadd.f32 0.0, %v2109
      %v2111 = vpop.f32.mrb[0].mxu0
      %2112 = vmatprep.mubr.bf16.mxu0 0
      %2113 = vmatmul.mubr.bf16.gmra.mrb[0].mxu0 %v1970
      %v2114 = vpop.f32.mrb[0].mxu0
      %v2115 = vadd.f32 0.0, %v2114
      %v2116 = vpop.f32.mrb[0].mxu0
      %v2117 = vpop.f32.mrb[0].mxu0
      %v2118 = vadd.f32 0.0, %v2117
      %v2119 = vpop.f32.mrb[0].mxu0
      %2120 = vmatprep.mubr.bf16.mxu0 0
      %2121 = vmatmul.mubr.bf16.gmra.mrb[0].mxu0 %v1973
      %v2122 = vpop.f32.mrb[0].mxu0
      %v2123 = vadd.f32 0.0, %v2122
      %v2124 = vpop.f32.mrb[0].mxu0
      %v2125 = vpop.f32.mrb[0].mxu0
      %v2126 = vadd.f32 0.0, %v2125
      %v2127 = vpop.f32.mrb[0].mxu0
      %2128 = vmatprep.mubr.bf16.mxu0 0
      %2129 = vmatmul.mubr.bf16.gmra.mrb[0].mxu0 %v1976
      %v2130 = vpop.f32.mrb[0].mxu0
      %v2131 = vadd.f32 0.0, %v2130
      %v2132 = vpop.f32.mrb[0].mxu0
      %v2133 = vpop.f32.mrb[0].mxu0
      %v2134 = vadd.f32 0.0, %v2133
      %v2135 = vpop.f32.mrb[0].mxu0
      %2136 = vmatprep.mubr.bf16.mxu0 0
      %2137 = vmatmul.mubr.bf16.gmra.mrb[0].mxu0 %v1979
      %v2138 = vpop.f32.mrb[0].mxu0
      %v2139 = vadd.f32 0.0, %v2138
      %v2140 = vpop.f32.mrb[0].mxu0
      %v2141 = vpop.f32.mrb[0].mxu0
      %v2142 = vadd.f32 0.0, %v2141
      %v2143 = vpop.f32.mrb[0].mxu0
      %2144 = vdwg.mxu0
      %v2145 = vadd.f32 %v1594, %v2019
      %v2146 = vadd.f32 %v1597, %v2022
      %v2147 = vadd.f32 %v1602, %v2027
      %v2148 = vadd.f32 %v1605, %v2030
      %v2149 = vadd.f32 %v1610, %v2035
      %v2150 = vadd.f32 %v1613, %v2038
      %v2151 = vadd.f32 %v1618, %v2043
      %v2152 = vadd.f32 %v1621, %v2046
      %v2153 = vadd.f32 %v1626, %v2051
      %v2154 = vadd.f32 %v1629, %v2054
      %v2155 = vadd.f32 %v1634, %v2059
      %v2156 = vadd.f32 %v1637, %v2062
      %v2157 = vadd.f32 %v1642, %v2067
      %v2158 = vadd.f32 %v1645, %v2070
      %v2159 = vadd.f32 %v1650, %v2075
      %v2160 = vadd.f32 %v1653, %v2078
      %v2161 = vadd.f32 %v1658, %v2083
      %v2162 = vadd.f32 %v1661, %v2086
      %v2163 = vadd.f32 %v1666, %v2091
      %v2164 = vadd.f32 %v1669, %v2094
      %v2165 = vadd.f32 %v1674, %v2099
      %v2166 = vadd.f32 %v1677, %v2102
      %v2167 = vadd.f32 %v1682, %v2107
      %v2168 = vadd.f32 %v1685, %v2110
      %v2169 = vadd.f32 %v1690, %v2115
      %v2170 = vadd.f32 %v1693, %v2118
      %v2171 = vadd.f32 %v1698, %v2123
      %v2172 = vadd.f32 %v1701, %v2126
      %v2173 = vadd.f32 %v1706, %v2131
      %v2174 = vadd.f32 %v1709, %v2134
      %v2175 = vadd.f32 %v1714, %v2139
      %v2176 = vadd.f32 %v1717, %v2142
      %v2177 = vld [vmem:[%s610] sm:$0xf]
      %v2178 = vld [vmem:[%s610 + $0x4] sm:$0xf]
      %v2179 = vld [vmem:[%s610 + $0xc] sm:$0xf]
      %v2180 = vld [vmem:[%s610 + $0x10] sm:$0xf]
      %v2181 = vld [vmem:[%s610 + $0x18] sm:$0xf]
      %v2182 = vld [vmem:[%s610 + $0x1c] sm:$0xf]
      %v2183 = vld [vmem:[%s610 + $0x24] sm:$0xf]
      %v2184 = vld [vmem:[%s610 + $0x28] sm:$0xf]
      %v2185 = vld [vmem:[%s610 + $0x30] sm:$0xf]
      %v2186 = vld [vmem:[%s610 + $0x34] sm:$0xf]
      %v2187 = vld [vmem:[%s610 + $0x3c] sm:$0xf]
      %v2188 = vld [vmem:[%s610 + $0x40] sm:$0xf]
      %v2189 = vld [vmem:[%s610 + $0x48] sm:$0xf]
      %v2190 = vld [vmem:[%s610 + $0x4c] sm:$0xf]
      %v2191 = vld [vmem:[%s610 + $0x54] sm:$0xf]
      %v2192 = vld [vmem:[%s610 + $0x58] sm:$0xf]
      %v2193 = vld [vmem:[%s610 + $0x60] sm:$0xf]
      %v2194 = vld [vmem:[%s610 + $0x64] sm:$0xf]
      %v2195 = vld [vmem:[%s610 + $0x6c] sm:$0xf]
      %v2196 = vld [vmem:[%s610 + $0x70] sm:$0xf]
      %v2197 = vld [vmem:[%s610 + $0x78] sm:$0xf]
      %v2198 = vld [vmem:[%s610 + $0x7c] sm:$0xf]
      %v2199 = vld [vmem:[%s610 + $0x84] sm:$0xf]
      %v2200 = vld [vmem:[%s610 + $0x88] sm:$0xf]
      %v2201 = vld [vmem:[%s610 + $0x90] sm:$0xf]
      %v2202 = vld [vmem:[%s610 + $0x94] sm:$0xf]
      %v2203 = vld [vmem:[%s610 + $0x9c] sm:$0xf]
      %v2204 = vld [vmem:[%s610 + $0xa0] sm:$0xf]
      %v2205 = vld [vmem:[%s610 + $0xa8] sm:$0xf]
      %v2206 = vld [vmem:[%s610 + $0xac] sm:$0xf]
      %v2207 = vld [vmem:[%s610 + $0xb4] sm:$0xf]
      %v2208 = vld [vmem:[%s610 + $0xb8] sm:$0xf]
      %s2209 = scalar_lea.vmem %s1, 6
      %v2210 = vld [vmem:[%s2209] sm:$0x3]
      %v2243 = vunpack.c.l.b16 %v2177
      %v2244 = vunpack.c.l.b16 %v2178
      %v2245 = vunpack.c.l.b16 %v2179
      %v2246 = vunpack.c.l.b16 %v2180
      %v2247 = vunpack.c.l.b16 %v2181
      %v2248 = vunpack.c.l.b16 %v2182
      %v2249 = vunpack.c.l.b16 %v2183
      %v2250 = vunpack.c.l.b16 %v2184
      %v2251 = vunpack.c.l.b16 %v2185
      %v2252 = vunpack.c.l.b16 %v2186
      %v2253 = vunpack.c.l.b16 %v2187
      %v2254 = vunpack.c.l.b16 %v2188
      %v2255 = vunpack.c.l.b16 %v2189
      %v2256 = vunpack.c.l.b16 %v2190
      %v2257 = vunpack.c.l.b16 %v2191
      %v2258 = vunpack.c.l.b16 %v2192
      %v2259 = vunpack.c.l.b16 %v2193
      %v2260 = vunpack.c.l.b16 %v2194
      %v2261 = vunpack.c.l.b16 %v2195
      %v2262 = vunpack.c.l.b16 %v2196
      %v2263 = vunpack.c.l.b16 %v2197
      %v2264 = vunpack.c.l.b16 %v2198
      %v2265 = vunpack.c.l.b16 %v2199
      %v2266 = vunpack.c.l.b16 %v2200
      %v2267 = vunpack.c.l.b16 %v2201
      %v2268 = vunpack.c.l.b16 %v2202
      %v2269 = vunpack.c.l.b16 %v2203
      %v2270 = vunpack.c.l.b16 %v2204
      %v2271 = vunpack.c.l.b16 %v2205
      %v2272 = vunpack.c.l.b16 %v2206
      %v2273 = vunpack.c.l.b16 %v2207
      %v2274 = vunpack.c.l.b16 %v2208
      %v2275 = vpack.c.b16 %v2244, %v2243
      %v2276 = vpack.c.b16 %v2246, %v2245
      %v2277 = vpack.c.b16 %v2248, %v2247
      %v2278 = vpack.c.b16 %v2250, %v2249
      %v2279 = vpack.c.b16 %v2252, %v2251
      %v2280 = vpack.c.b16 %v2254, %v2253
      %v2281 = vpack.c.b16 %v2256, %v2255
      %v2282 = vpack.c.b16 %v2258, %v2257
      %v2283 = vpack.c.b16 %v2260, %v2259
      %v2284 = vpack.c.b16 %v2262, %v2261
      %v2285 = vpack.c.b16 %v2264, %v2263
      %v2286 = vpack.c.b16 %v2266, %v2265
      %v2287 = vpack.c.b16 %v2268, %v2267
      %v2288 = vpack.c.b16 %v2270, %v2269
      %v2289 = vpack.c.b16 %v2272, %v2271
      %v2290 = vpack.c.b16 %v2274, %v2273
      %v2292 = vsel %vm1214, %v2275, 0
      %v2295 = vsel %vm1214, %v2276, 0
      %v2298 = vsel %vm1214, %v2277, 0
      %v2301 = vsel %vm1214, %v2278, 0
      %v2304 = vsel %vm1214, %v2279, 0
      %v2307 = vsel %vm1214, %v2280, 0
      %v2310 = vsel %vm1214, %v2281, 0
      %v2313 = vsel %vm1214, %v2282, 0
      %v2316 = vsel %vm1214, %v2283, 0
      %v2319 = vsel %vm1214, %v2284, 0
      %v2322 = vsel %vm1214, %v2285, 0
      %v2325 = vsel %vm1214, %v2286, 0
      %v2328 = vsel %vm1214, %v2287, 0
      %v2331 = vsel %vm1214, %v2288, 0
      %v2334 = vsel %vm1214, %v2289, 0
      %v2337 = vsel %vm1214, %v2290, 0
      %v2340 = vsel %vm1263, %v2210, 0
      %2342 = vmatprep.subr.bf16.mxu0 0
      %2343 = vmatpush1.bf16.msra.mxu0 %v2340
      %2344 = vmatprep.subr.bf16.mxu0 0
      %2345 = vmatpush1.bf16.msra.mxu0 0
      %2346 = vmatprep.subr.bf16.mxu0 0
      %2347 = vmatpush1.bf16.msra.mxu0 0
      %2348 = vmatprep.subr.bf16.mxu0 0
      %2349 = vmatpush1.bf16.msra.mxu0 0
      %2350 = vmatprep.subr.bf16.mxu0 0
      %2351 = vmatpush1.bf16.msra.mxu0 0
      %2352 = vmatprep.subr.bf16.mxu0 0
      %2353 = vmatpush1.bf16.msra.mxu0 0
      %2354 = vmatprep.subr.bf16.mxu0 0
      %2355 = vmatpush1.bf16.msra.mxu0 0
      %2356 = vmatprep.subr.bf16.mxu0 0
      %2357 = vmatpush1.bf16.msra.mxu0 0
      %2358 = vmatprep.subr.bf16.mxu0 0
      %2359 = vmatpush1.bf16.msra.mxu0 0
      %2360 = vmatprep.subr.bf16.mxu0 0
      %2361 = vmatpush1.bf16.msra.mxu0 0
      %2362 = vmatprep.subr.bf16.mxu0 0
      %2363 = vmatpush1.bf16.msra.mxu0 0
      %2364 = vmatprep.subr.bf16.mxu0 0
      %2365 = vmatpush1.bf16.msra.mxu0 0
      %2366 = vmatprep.subr.bf16.mxu0 0
      %2367 = vmatpush1.bf16.msra.mxu0 0
      %2368 = vmatprep.subr.bf16.mxu0 0
      %2369 = vmatpush1.bf16.msra.mxu0 0
      %2370 = vmatprep.subr.bf16.mxu0 0
      %2371 = vmatpush1.bf16.msra.mxu0 0
      %2372 = vmatprep.subr.bf16.mxu0 0
      %2373 = vmatpush1.bf16.msra.mxu0 0
      %2374 = vmatprep.mubr.bf16.mxu0 0
      %2375 = vmatmul.mubr.bf16.gmra.mrb[0].mxu0 %v2292
      %v2376 = vpop.f32.mrb[0].mxu0
      %v2377 = vadd.f32 0.0, %v2376
      %v2378 = vpop.f32.mrb[0].mxu0
      %v2379 = vpop.f32.mrb[0].mxu0
      %v2380 = vadd.f32 0.0, %v2379
      %v2381 = vpop.f32.mrb[0].mxu0
      %2382 = vmatprep.mubr.bf16.mxu0 0
      %2383 = vmatmul.mubr.bf16.gmra.mrb[0].mxu0 %v2295
      %v2384 = vpop.f32.mrb[0].mxu0
      %v2385 = vadd.f32 0.0, %v2384
      %v2386 = vpop.f32.mrb[0].mxu0
      %v2387 = vpop.f32.mrb[0].mxu0
      %v2388 = vadd.f32 0.0, %v2387
      %v2389 = vpop.f32.mrb[0].mxu0
      %2390 = vmatprep.mubr.bf16.mxu0 0
      %2391 = vmatmul.mubr.bf16.gmra.mrb[0].mxu0 %v2298
      %v2392 = vpop.f32.mrb[0].mxu0
      %v2393 = vadd.f32 0.0, %v2392
      %v2394 = vpop.f32.mrb[0].mxu0
      %v2395 = vpop.f32.mrb[0].mxu0
      %v2396 = vadd.f32 0.0, %v2395
      %v2397 = vpop.f32.mrb[0].mxu0
      %2398 = vmatprep.mubr.bf16.mxu0 0
      %2399 = vmatmul.mubr.bf16.gmra.mrb[0].mxu0 %v2301
      %v2400 = vpop.f32.mrb[0].mxu0
      %v2401 = vadd.f32 0.0, %v2400
      %v2402 = vpop.f32.mrb[0].mxu0
      %v2403 = vpop.f32.mrb[0].mxu0
      %v2404 = vadd.f32 0.0, %v2403
      %v2405 = vpop.f32.mrb[0].mxu0
      %2406 = vmatprep.mubr.bf16.mxu0 0
      %2407 = vmatmul.mubr.bf16.gmra.mrb[0].mxu0 %v2304
      %v2408 = vpop.f32.mrb[0].mxu0
      %v2409 = vadd.f32 0.0, %v2408
      %v2410 = vpop.f32.mrb[0].mxu0
      %v2411 = vpop.f32.mrb[0].mxu0
      %v2412 = vadd.f32 0.0, %v2411
      %v2413 = vpop.f32.mrb[0].mxu0
      %2414 = vmatprep.mubr.bf16.mxu0 0
      %2415 = vmatmul.mubr.bf16.gmra.mrb[0].mxu0 %v2307
      %v2416 = vpop.f32.mrb[0].mxu0
      %v2417 = vadd.f32 0.0, %v2416
      %v2418 = vpop.f32.mrb[0].mxu0
      %v2419 = vpop.f32.mrb[0].mxu0
      %v2420 = vadd.f32 0.0, %v2419
      %v2421 = vpop.f32.mrb[0].mxu0
      %2422 = vmatprep.mubr.bf16.mxu0 0
      %2423 = vmatmul.mubr.bf16.gmra.mrb[0].mxu0 %v2310
      %v2424 = vpop.f32.mrb[0].mxu0
      %v2425 = vadd.f32 0.0, %v2424
      %v2426 = vpop.f32.mrb[0].mxu0
      %v2427 = vpop.f32.mrb[0].mxu0
      %v2428 = vadd.f32 0.0, %v2427
      %v2429 = vpop.f32.mrb[0].mxu0
      %2430 = vmatprep.mubr.bf16.mxu0 0
      %2431 = vmatmul.mubr.bf16.gmra.mrb[0].mxu0 %v2313
      %v2432 = vpop.f32.mrb[0].mxu0
      %v2433 = vadd.f32 0.0, %v2432
      %v2434 = vpop.f32.mrb[0].mxu0
      %v2435 = vpop.f32.mrb[0].mxu0
      %v2436 = vadd.f32 0.0, %v2435
      %v2437 = vpop.f32.mrb[0].mxu0
      %2438 = vmatprep.mubr.bf16.mxu0 0
      %2439 = vmatmul.mubr.bf16.gmra.mrb[0].mxu0 %v2316
      %v2440 = vpop.f32.mrb[0].mxu0
      %v2441 = vadd.f32 0.0, %v2440
      %v2442 = vpop.f32.mrb[0].mxu0
      %v2443 = vpop.f32.mrb[0].mxu0
      %v2444 = vadd.f32 0.0, %v2443
      %v2445 = vpop.f32.mrb[0].mxu0
      %2446 = vmatprep.mubr.bf16.mxu0 0
      %2447 = vmatmul.mubr.bf16.gmra.mrb[0].mxu0 %v2319
      %v2448 = vpop.f32.mrb[0].mxu0
      %v2449 = vadd.f32 0.0, %v2448
      %v2450 = vpop.f32.mrb[0].mxu0
      %v2451 = vpop.f32.mrb[0].mxu0
      %v2452 = vadd.f32 0.0, %v2451
      %v2453 = vpop.f32.mrb[0].mxu0
      %2454 = vmatprep.mubr.bf16.mxu0 0
      %2455 = vmatmul.mubr.bf16.gmra.mrb[0].mxu0 %v2322
      %v2456 = vpop.f32.mrb[0].mxu0
      %v2457 = vadd.f32 0.0, %v2456
      %v2458 = vpop.f32.mrb[0].mxu0
      %v2459 = vpop.f32.mrb[0].mxu0
      %v2460 = vadd.f32 0.0, %v2459
      %v2461 = vpop.f32.mrb[0].mxu0
      %2462 = vmatprep.mubr.bf16.mxu0 0
      %2463 = vmatmul.mubr.bf16.gmra.mrb[0].mxu0 %v2325
      %v2464 = vpop.f32.mrb[0].mxu0
      %v2465 = vadd.f32 0.0, %v2464
      %v2466 = vpop.f32.mrb[0].mxu0
      %v2467 = vpop.f32.mrb[0].mxu0
      %v2468 = vadd.f32 0.0, %v2467
      %v2469 = vpop.f32.mrb[0].mxu0
      %2470 = vmatprep.mubr.bf16.mxu0 0
      %2471 = vmatmul.mubr.bf16.gmra.mrb[0].mxu0 %v2328
      %v2472 = vpop.f32.mrb[0].mxu0
      %v2473 = vadd.f32 0.0, %v2472
      %v2474 = vpop.f32.mrb[0].mxu0
      %v2475 = vpop.f32.mrb[0].mxu0
      %v2476 = vadd.f32 0.0, %v2475
      %v2477 = vpop.f32.mrb[0].mxu0
      %2478 = vmatprep.mubr.bf16.mxu0 0
      %2479 = vmatmul.mubr.bf16.gmra.mrb[0].mxu0 %v2331
      %v2480 = vpop.f32.mrb[0].mxu0
      %v2481 = vadd.f32 0.0, %v2480
      %v2482 = vpop.f32.mrb[0].mxu0
      %v2483 = vpop.f32.mrb[0].mxu0
      %v2484 = vadd.f32 0.0, %v2483
      %v2485 = vpop.f32.mrb[0].mxu0
      %2486 = vmatprep.mubr.bf16.mxu0 0
      %2487 = vmatmul.mubr.bf16.gmra.mrb[0].mxu0 %v2334
      %v2488 = vpop.f32.mrb[0].mxu0
      %v2489 = vadd.f32 0.0, %v2488
      %v2490 = vpop.f32.mrb[0].mxu0
      %v2491 = vpop.f32.mrb[0].mxu0
      %v2492 = vadd.f32 0.0, %v2491
      %v2493 = vpop.f32.mrb[0].mxu0
      %2494 = vmatprep.mubr.bf16.mxu0 0
      %2495 = vmatmul.mubr.bf16.gmra.mrb[0].mxu0 %v2337
      %v2496 = vpop.f32.mrb[0].mxu0
      %v2497 = vadd.f32 0.0, %v2496
      %v2498 = vpop.f32.mrb[0].mxu0
      %v2499 = vpop.f32.mrb[0].mxu0
      %v2500 = vadd.f32 0.0, %v2499
      %v2501 = vpop.f32.mrb[0].mxu0
      %2502 = vdwg.mxu0
      %v2503 = vadd.f32 %v2145, %v2377
      %v2504 = vadd.f32 %v2146, %v2380
      %v2505 = vadd.f32 %v2147, %v2385
      %v2506 = vadd.f32 %v2148, %v2388
      %v2507 = vadd.f32 %v2149, %v2393
      %v2508 = vadd.f32 %v2150, %v2396
      %v2509 = vadd.f32 %v2151, %v2401
      %v2510 = vadd.f32 %v2152, %v2404
      %v2511 = vadd.f32 %v2153, %v2409
      %v2512 = vadd.f32 %v2154, %v2412
      %v2513 = vadd.f32 %v2155, %v2417
      %v2514 = vadd.f32 %v2156, %v2420
      %v2515 = vadd.f32 %v2157, %v2425
      %v2516 = vadd.f32 %v2158, %v2428
      %v2517 = vadd.f32 %v2159, %v2433
      %v2518 = vadd.f32 %v2160, %v2436
      %v2519 = vadd.f32 %v2161, %v2441
      %v2520 = vadd.f32 %v2162, %v2444
      %v2521 = vadd.f32 %v2163, %v2449
      %v2522 = vadd.f32 %v2164, %v2452
      %v2523 = vadd.f32 %v2165, %v2457
      %v2524 = vadd.f32 %v2166, %v2460
      %v2525 = vadd.f32 %v2167, %v2465
      %v2526 = vadd.f32 %v2168, %v2468
      %v2527 = vadd.f32 %v2169, %v2473
      %v2528 = vadd.f32 %v2170, %v2476
      %v2529 = vadd.f32 %v2171, %v2481
      %v2530 = vadd.f32 %v2172, %v2484
      %v2531 = vadd.f32 %v2173, %v2489
      %v2532 = vadd.f32 %v2174, %v2492
      %v2533 = vadd.f32 %v2175, %v2497
      %v2534 = vadd.f32 %v2176, %v2500
      %v2535 = vld [vmem:[%s610] sm:$0xf]
      %v2536 = vld [vmem:[%s610 + $0x4] sm:$0xf]
      %v2537 = vld [vmem:[%s610 + $0x8] sm:$0x1]
      %v2538 = vld [vmem:[%s610 + $0xc] sm:$0xf]
      %v2539 = vld [vmem:[%s610 + $0x10] sm:$0xf]
      %v2540 = vld [vmem:[%s610 + $0x14] sm:$0x1]
      %v2541 = vld [vmem:[%s610 + $0x18] sm:$0xf]
      %v2542 = vld [vmem:[%s610 + $0x1c] sm:$0xf]
      %v2543 = vld [vmem:[%s610 + $0x20] sm:$0x1]
      %v2544 = vld [vmem:[%s610 + $0x24] sm:$0xf]
      %v2545 = vld [vmem:[%s610 + $0x28] sm:$0xf]
      %v2546 = vld [vmem:[%s610 + $0x2c] sm:$0x1]
      %v2547 = vld [vmem:[%s610 + $0x30] sm:$0xf]
      %v2548 = vld [vmem:[%s610 + $0x34] sm:$0xf]
      %v2549 = vld [vmem:[%s610 + $0x38] sm:$0x1]
      %v2550 = vld [vmem:[%s610 + $0x3c] sm:$0xf]
      %v2551 = vld [vmem:[%s610 + $0x40] sm:$0xf]
      %v2552 = vld [vmem:[%s610 + $0x44] sm:$0x1]
      %v2553 = vld [vmem:[%s610 + $0x48] sm:$0xf]
      %v2554 = vld [vmem:[%s610 + $0x4c] sm:$0xf]
      %v2555 = vld [vmem:[%s610 + $0x50] sm:$0x1]
      %v2556 = vld [vmem:[%s610 + $0x54] sm:$0xf]
      %v2557 = vld [vmem:[%s610 + $0x58] sm:$0xf]
      %v2558 = vld [vmem:[%s610 + $0x5c] sm:$0x1]
      %v2559 = vld [vmem:[%s610 + $0x60] sm:$0xf]
      %v2560 = vld [vmem:[%s610 + $0x64] sm:$0xf]
      %v2561 = vld [vmem:[%s610 + $0x68] sm:$0x1]
      %v2562 = vld [vmem:[%s610 + $0x6c] sm:$0xf]
      %v2563 = vld [vmem:[%s610 + $0x70] sm:$0xf]
      %v2564 = vld [vmem:[%s610 + $0x74] sm:$0x1]
      %v2565 = vld [vmem:[%s610 + $0x78] sm:$0xf]
      %v2566 = vld [vmem:[%s610 + $0x7c] sm:$0xf]
      %v2567 = vld [vmem:[%s610 + $0x80] sm:$0x1]
      %v2568 = vld [vmem:[%s610 + $0x84] sm:$0xf]
      %v2569 = vld [vmem:[%s610 + $0x88] sm:$0xf]
      %v2570 = vld [vmem:[%s610 + $0x8c] sm:$0x1]
      %v2571 = vld [vmem:[%s610 + $0x90] sm:$0xf]
      %v2572 = vld [vmem:[%s610 + $0x94] sm:$0xf]
      %v2573 = vld [vmem:[%s610 + $0x98] sm:$0x1]
      %v2574 = vld [vmem:[%s610 + $0x9c] sm:$0xf]
      %v2575 = vld [vmem:[%s610 + $0xa0] sm:$0xf]
      %v2576 = vld [vmem:[%s610 + $0xa4] sm:$0x1]
      %v2577 = vld [vmem:[%s610 + $0xa8] sm:$0xf]
      %v2578 = vld [vmem:[%s610 + $0xac] sm:$0xf]
      %v2579 = vld [vmem:[%s610 + $0xb0] sm:$0x1]
      %v2580 = vld [vmem:[%s610 + $0xb4] sm:$0xf]
      %v2581 = vld [vmem:[%s610 + $0xb8] sm:$0xf]
      %v2582 = vld [vmem:[%s610 + $0xbc] sm:$0x1]
      %v2584 = vshrl.u32 %v2535, 16
      %v2586 = vrot.slane %v2584, 4
      %v2587 = vshll.u32 %v2535, 16
      %v2589 = vrot.slane %v2587, 5
      %v2590 = vor.u32 %v2586, %v2589
      %v2591 = vrot.slane %v2590, 4
      %v2593 = vshll.u32 %v2536, 16
      %v2595 = vrot.slane %v2593, 5
      %v2596 = vsel %vm779, %v2591, %v2595
      %v2597 = vshrl.u32 %v2536, 16
      %v2599 = vrot.slane %v2597, 4
      %v2600 = vor.u32 %v2599, %v2595
      %v2601 = vrot.slane %v2600, 4
      %v2603 = vshll.u32 %v2537, 16
      %v2605 = vrot.slane %v2603, 5
      %v2606 = vsel %vm779, %v2601, %v2605
      %v2608 = vshrl.u32 %v2538, 16
      %v2610 = vrot.slane %v2608, 4
      %v2611 = vshll.u32 %v2538, 16
      %v2613 = vrot.slane %v2611, 5
      %v2614 = vor.u32 %v2610, %v2613
      %v2615 = vrot.slane %v2614, 4
      %v2617 = vshll.u32 %v2539, 16
      %v2619 = vrot.slane %v2617, 5
      %v2620 = vsel %vm779, %v2615, %v2619
      %v2621 = vshrl.u32 %v2539, 16
      %v2623 = vrot.slane %v2621, 4
      %v2624 = vor.u32 %v2623, %v2619
      %v2625 = vrot.slane %v2624, 4
      %v2627 = vshll.u32 %v2540, 16
      %v2629 = vrot.slane %v2627, 5
      %v2630 = vsel %vm779, %v2625, %v2629
      %v2632 = vshrl.u32 %v2541, 16
      %v2634 = vrot.slane %v2632, 4
      %v2635 = vshll.u32 %v2541, 16
      %v2637 = vrot.slane %v2635, 5
      %v2638 = vor.u32 %v2634, %v2637
      %v2639 = vrot.slane %v2638, 4
      %v2641 = vshll.u32 %v2542, 16
      %v2643 = vrot.slane %v2641, 5
      %v2644 = vsel %vm779, %v2639, %v2643
      %v2645 = vshrl.u32 %v2542, 16
      %v2647 = vrot.slane %v2645, 4
      %v2648 = vor.u32 %v2647, %v2643
      %v2649 = vrot.slane %v2648, 4
      %v2651 = vshll.u32 %v2543, 16
      %v2653 = vrot.slane %v2651, 5
      %v2654 = vsel %vm779, %v2649, %v2653
      %v2656 = vshrl.u32 %v2544, 16
      %v2658 = vrot.slane %v2656, 4
      %v2659 = vshll.u32 %v2544, 16
      %v2661 = vrot.slane %v2659, 5
      %v2662 = vor.u32 %v2658, %v2661
      %v2663 = vrot.slane %v2662, 4
      %v2665 = vshll.u32 %v2545, 16
      %v2667 = vrot.slane %v2665, 5
      %v2668 = vsel %vm779, %v2663, %v2667
      %v2669 = vshrl.u32 %v2545, 16
      %v2671 = vrot.slane %v2669, 4
      %v2672 = vor.u32 %v2671, %v2667
      %v2673 = vrot.slane %v2672, 4
      %v2675 = vshll.u32 %v2546, 16
      %v2677 = vrot.slane %v2675, 5
      %v2678 = vsel %vm779, %v2673, %v2677
      %v2680 = vshrl.u32 %v2547, 16
      %v2682 = vrot.slane %v2680, 4
      %v2683 = vshll.u32 %v2547, 16
      %v2685 = vrot.slane %v2683, 5
      %v2686 = vor.u32 %v2682, %v2685
      %v2687 = vrot.slane %v2686, 4
      %v2689 = vshll.u32 %v2548, 16
      %v2691 = vrot.slane %v2689, 5
      %v2692 = vsel %vm779, %v2687, %v2691
      %v2693 = vshrl.u32 %v2548, 16
      %v2695 = vrot.slane %v2693, 4
      %v2696 = vor.u32 %v2695, %v2691
      %v2697 = vrot.slane %v2696, 4
      %v2699 = vshll.u32 %v2549, 16
      %v2701 = vrot.slane %v2699, 5
      %v2702 = vsel %vm779, %v2697, %v2701
      %v2704 = vshrl.u32 %v2550, 16
      %v2706 = vrot.slane %v2704, 4
      %v2707 = vshll.u32 %v2550, 16
      %v2709 = vrot.slane %v2707, 5
      %v2710 = vor.u32 %v2706, %v2709
      %v2711 = vrot.slane %v2710, 4
      %v2713 = vshll.u32 %v2551, 16
      %v2715 = vrot.slane %v2713, 5
      %v2716 = vsel %vm779, %v2711, %v2715
      %v2717 = vshrl.u32 %v2551, 16
      %v2719 = vrot.slane %v2717, 4
      %v2720 = vor.u32 %v2719, %v2715
      %v2721 = vrot.slane %v2720, 4
      %v2723 = vshll.u32 %v2552, 16
      %v2725 = vrot.slane %v2723, 5
      %v2726 = vsel %vm779, %v2721, %v2725
      %v2728 = vshrl.u32 %v2553, 16
      %v2730 = vrot.slane %v2728, 4
      %v2731 = vshll.u32 %v2553, 16
      %v2733 = vrot.slane %v2731, 5
      %v2734 = vor.u32 %v2730, %v2733
      %v2735 = vrot.slane %v2734, 4
      %v2737 = vshll.u32 %v2554, 16
      %v2739 = vrot.slane %v2737, 5
      %v2740 = vsel %vm779, %v2735, %v2739
      %v2741 = vshrl.u32 %v2554, 16
      %v2743 = vrot.slane %v2741, 4
      %v2744 = vor.u32 %v2743, %v2739
      %v2745 = vrot.slane %v2744, 4
      %v2747 = vshll.u32 %v2555, 16
      %v2749 = vrot.slane %v2747, 5
      %v2750 = vsel %vm779, %v2745, %v2749
      %v2752 = vshrl.u32 %v2556, 16
      %v2754 = vrot.slane %v2752, 4
      %v2755 = vshll.u32 %v2556, 16
      %v2757 = vrot.slane %v2755, 5
      %v2758 = vor.u32 %v2754, %v2757
      %v2759 = vrot.slane %v2758, 4
      %v2761 = vshll.u32 %v2557, 16
      %v2763 = vrot.slane %v2761, 5
      %v2764 = vsel %vm779, %v2759, %v2763
      %v2765 = vshrl.u32 %v2557, 16
      %v2767 = vrot.slane %v2765, 4
      %v2768 = vor.u32 %v2767, %v2763
      %v2769 = vrot.slane %v2768, 4
      %v2771 = vshll.u32 %v2558, 16
      %v2773 = vrot.slane %v2771, 5
      %v2774 = vsel %vm779, %v2769, %v2773
      %v2776 = vshrl.u32 %v2559, 16
      %v2778 = vrot.slane %v2776, 4
      %v2779 = vshll.u32 %v2559, 16
      %v2781 = vrot.slane %v2779, 5
      %v2782 = vor.u32 %v2778, %v2781
      %v2783 = vrot.slane %v2782, 4
      %v2785 = vshll.u32 %v2560, 16
      %v2787 = vrot.slane %v2785, 5
      %v2788 = vsel %vm779, %v2783, %v2787
      %v2789 = vshrl.u32 %v2560, 16
      %v2791 = vrot.slane %v2789, 4
      %v2792 = vor.u32 %v2791, %v2787
      %v2793 = vrot.slane %v2792, 4
      %v2795 = vshll.u32 %v2561, 16
      %v2797 = vrot.slane %v2795, 5
      %v2798 = vsel %vm779, %v2793, %v2797
      %v2800 = vshrl.u32 %v2562, 16
      %v2802 = vrot.slane %v2800, 4
      %v2803 = vshll.u32 %v2562, 16
      %v2805 = vrot.slane %v2803, 5
      %v2806 = vor.u32 %v2802, %v2805
      %v2807 = vrot.slane %v2806, 4
      %v2809 = vshll.u32 %v2563, 16
      %v2811 = vrot.slane %v2809, 5
      %v2812 = vsel %vm779, %v2807, %v2811
      %v2813 = vshrl.u32 %v2563, 16
      %v2815 = vrot.slane %v2813, 4
      %v2816 = vor.u32 %v2815, %v2811
      %v2817 = vrot.slane %v2816, 4
      %v2819 = vshll.u32 %v2564, 16
      %v2821 = vrot.slane %v2819, 5
      %v2822 = vsel %vm779, %v2817, %v2821
      %v2824 = vshrl.u32 %v2565, 16
      %v2826 = vrot.slane %v2824, 4
      %v2827 = vshll.u32 %v2565, 16
      %v2829 = vrot.slane %v2827, 5
      %v2830 = vor.u32 %v2826, %v2829
      %v2831 = vrot.slane %v2830, 4
      %v2833 = vshll.u32 %v2566, 16
      %v2835 = vrot.slane %v2833, 5
      %v2836 = vsel %vm779, %v2831, %v2835
      %v2837 = vshrl.u32 %v2566, 16
      %v2839 = vrot.slane %v2837, 4
      %v2840 = vor.u32 %v2839, %v2835
      %v2841 = vrot.slane %v2840, 4
      %v2843 = vshll.u32 %v2567, 16
      %v2845 = vrot.slane %v2843, 5
      %v2846 = vsel %vm779, %v2841, %v2845
      %v2848 = vshrl.u32 %v2568, 16
      %v2850 = vrot.slane %v2848, 4
      %v2851 = vshll.u32 %v2568, 16
      %v2853 = vrot.slane %v2851, 5
      %v2854 = vor.u32 %v2850, %v2853
      %v2855 = vrot.slane %v2854, 4
      %v2857 = vshll.u32 %v2569, 16
      %v2859 = vrot.slane %v2857, 5
      %v2860 = vsel %vm779, %v2855, %v2859
      %v2861 = vshrl.u32 %v2569, 16
      %v2863 = vrot.slane %v2861, 4
      %v2864 = vor.u32 %v2863, %v2859
      %v2865 = vrot.slane %v2864, 4
      %v2867 = vshll.u32 %v2570, 16
      %v2869 = vrot.slane %v2867, 5
      %v2870 = vsel %vm779, %v2865, %v2869
      %v2872 = vshrl.u32 %v2571, 16
      %v2874 = vrot.slane %v2872, 4
      %v2875 = vshll.u32 %v2571, 16
      %v2877 = vrot.slane %v2875, 5
      %v2878 = vor.u32 %v2874, %v2877
      %v2879 = vrot.slane %v2878, 4
      %v2881 = vshll.u32 %v2572, 16
      %v2883 = vrot.slane %v2881, 5
      %v2884 = vsel %vm779, %v2879, %v2883
      %v2885 = vshrl.u32 %v2572, 16
      %v2887 = vrot.slane %v2885, 4
      %v2888 = vor.u32 %v2887, %v2883
      %v2889 = vrot.slane %v2888, 4
      %v2891 = vshll.u32 %v2573, 16
      %v2893 = vrot.slane %v2891, 5
      %v2894 = vsel %vm779, %v2889, %v2893
      %v2896 = vshrl.u32 %v2574, 16
      %v2898 = vrot.slane %v2896, 4
      %v2899 = vshll.u32 %v2574, 16
      %v2901 = vrot.slane %v2899, 5
      %v2902 = vor.u32 %v2898, %v2901
      %v2903 = vrot.slane %v2902, 4
      %v2905 = vshll.u32 %v2575, 16
      %v2907 = vrot.slane %v2905, 5
      %v2908 = vsel %vm779, %v2903, %v2907
      %v2909 = vshrl.u32 %v2575, 16
      %v2911 = vrot.slane %v2909, 4
      %v2912 = vor.u32 %v2911, %v2907
      %v2913 = vrot.slane %v2912, 4
      %v2915 = vshll.u32 %v2576, 16
      %v2917 = vrot.slane %v2915, 5
      %v2918 = vsel %vm779, %v2913, %v2917
      %v2920 = vshrl.u32 %v2577, 16
      %v2922 = vrot.slane %v2920, 4
      %v2923 = vshll.u32 %v2577, 16
      %v2925 = vrot.slane %v2923, 5
      %v2926 = vor.u32 %v2922, %v2925
      %v2927 = vrot.slane %v2926, 4
      %v2929 = vshll.u32 %v2578, 16
      %v2931 = vrot.slane %v2929, 5
      %v2932 = vsel %vm779, %v2927, %v2931
      %v2933 = vshrl.u32 %v2578, 16
      %v2935 = vrot.slane %v2933, 4
      %v2936 = vor.u32 %v2935, %v2931
      %v2937 = vrot.slane %v2936, 4
      %v2939 = vshll.u32 %v2579, 16
      %v2941 = vrot.slane %v2939, 5
      %v2942 = vsel %vm779, %v2937, %v2941
      %v2944 = vshrl.u32 %v2580, 16
      %v2946 = vrot.slane %v2944, 4
      %v2947 = vshll.u32 %v2580, 16
      %v2949 = vrot.slane %v2947, 5
      %v2950 = vor.u32 %v2946, %v2949
      %v2951 = vrot.slane %v2950, 4
      %v2953 = vshll.u32 %v2581, 16
      %v2955 = vrot.slane %v2953, 5
      %v2956 = vsel %vm779, %v2951, %v2955
      %v2957 = vshrl.u32 %v2581, 16
      %v2959 = vrot.slane %v2957, 4
      %v2960 = vor.u32 %v2959, %v2955
      %v2961 = vrot.slane %v2960, 4
      %v2963 = vshll.u32 %v2582, 16
      %v2965 = vrot.slane %v2963, 5
      %v2966 = vsel %vm779, %v2961, %v2965
      %s2967 = scalar_lea.vmem %s1, 8
      %v2968 = vld [vmem:[%s2967] sm:$0x3]
      %v2969 = vunpack.c.l.b16 %v2596
      %v2970 = vunpack.c.l.b16 %v2606
      %v2971 = vunpack.c.l.b16 %v2620
      %v2972 = vunpack.c.l.b16 %v2630
      %v2973 = vunpack.c.l.b16 %v2644
      %v2974 = vunpack.c.l.b16 %v2654
      %v2975 = vunpack.c.l.b16 %v2668
      %v2976 = vunpack.c.l.b16 %v2678
      %v2977 = vunpack.c.l.b16 %v2692
      %v2978 = vunpack.c.l.b16 %v2702
      %v2979 = vunpack.c.l.b16 %v2716
      %v2980 = vunpack.c.l.b16 %v2726
      %v2981 = vunpack.c.l.b16 %v2740
      %v2982 = vunpack.c.l.b16 %v2750
      %v2983 = vunpack.c.l.b16 %v2764
      %v2984 = vunpack.c.l.b16 %v2774
      %v2985 = vunpack.c.l.b16 %v2788
      %v2986 = vunpack.c.l.b16 %v2798
      %v2987 = vunpack.c.l.b16 %v2812
      %v2988 = vunpack.c.l.b16 %v2822
      %v2989 = vunpack.c.l.b16 %v2836
      %v2990 = vunpack.c.l.b16 %v2846
      %v2991 = vunpack.c.l.b16 %v2860
      %v2992 = vunpack.c.l.b16 %v2870
      %v2993 = vunpack.c.l.b16 %v2884
      %v2994 = vunpack.c.l.b16 %v2894
      %v2995 = vunpack.c.l.b16 %v2908
      %v2996 = vunpack.c.l.b16 %v2918
      %v2997 = vunpack.c.l.b16 %v2932
      %v2998 = vunpack.c.l.b16 %v2942
      %v2999 = vunpack.c.l.b16 %v2956
      %v3000 = vunpack.c.l.b16 %v2966
      %v3001 = vpack.c.b16 %v2970, %v2969
      %v3002 = vpack.c.b16 %v2972, %v2971
      %v3003 = vpack.c.b16 %v2974, %v2973
      %v3004 = vpack.c.b16 %v2976, %v2975
      %v3005 = vpack.c.b16 %v2978, %v2977
      %v3006 = vpack.c.b16 %v2980, %v2979
      %v3007 = vpack.c.b16 %v2982, %v2981
      %v3008 = vpack.c.b16 %v2984, %v2983
      %v3009 = vpack.c.b16 %v2986, %v2985
      %v3010 = vpack.c.b16 %v2988, %v2987
      %v3011 = vpack.c.b16 %v2990, %v2989
      %v3012 = vpack.c.b16 %v2992, %v2991
      %v3013 = vpack.c.b16 %v2994, %v2993
      %v3014 = vpack.c.b16 %v2996, %v2995
      %v3015 = vpack.c.b16 %v2998, %v2997
      %v3016 = vpack.c.b16 %v3000, %v2999
      %v3018 = vsel %vm1214, %v3001, 0
      %v3021 = vsel %vm1214, %v3002, 0
      %v3024 = vsel %vm1214, %v3003, 0
      %v3027 = vsel %vm1214, %v3004, 0
      %v3030 = vsel %vm1214, %v3005, 0
      %v3033 = vsel %vm1214, %v3006, 0
      %v3036 = vsel %vm1214, %v3007, 0
      %v3039 = vsel %vm1214, %v3008, 0
      %v3042 = vsel %vm1214, %v3009, 0
      %v3045 = vsel %vm1214, %v3010, 0
      %v3048 = vsel %vm1214, %v3011, 0
      %v3051 = vsel %vm1214, %v3012, 0
      %v3054 = vsel %vm1214, %v3013, 0
      %v3057 = vsel %vm1214, %v3014, 0
      %v3060 = vsel %vm1214, %v3015, 0
      %v3063 = vsel %vm1214, %v3016, 0
      %v3066 = vsel %vm1263, %v2968, 0
      %3068 = vmatprep.subr.bf16.mxu0 0
      %3069 = vmatpush1.bf16.msra.mxu0 %v3066
      %3070 = vmatprep.subr.bf16.mxu0 0
      %3071 = vmatpush1.bf16.msra.mxu0 0
      %3072 = vmatprep.subr.bf16.mxu0 0
      %3073 = vmatpush1.bf16.msra.mxu0 0
      %3074 = vmatprep.subr.bf16.mxu0 0
      %3075 = vmatpush1.bf16.msra.mxu0 0
      %3076 = vmatprep.subr.bf16.mxu0 0
      %3077 = vmatpush1.bf16.msra.mxu0 0
      %3078 = vmatprep.subr.bf16.mxu0 0
      %3079 = vmatpush1.bf16.msra.mxu0 0
      %3080 = vmatprep.subr.bf16.mxu0 0
      %3081 = vmatpush1.bf16.msra.mxu0 0
      %3082 = vmatprep.subr.bf16.mxu0 0
      %3083 = vmatpush1.bf16.msra.mxu0 0
      %3084 = vmatprep.subr.bf16.mxu0 0
      %3085 = vmatpush1.bf16.msra.mxu0 0
      %3086 = vmatprep.subr.bf16.mxu0 0
      %3087 = vmatpush1.bf16.msra.mxu0 0
      %3088 = vmatprep.subr.bf16.mxu0 0
      %3089 = vmatpush1.bf16.msra.mxu0 0
      %3090 = vmatprep.subr.bf16.mxu0 0
      %3091 = vmatpush1.bf16.msra.mxu0 0
      %3092 = vmatprep.subr.bf16.mxu0 0
      %3093 = vmatpush1.bf16.msra.mxu0 0
      %3094 = vmatprep.subr.bf16.mxu0 0
      %3095 = vmatpush1.bf16.msra.mxu0 0
      %3096 = vmatprep.subr.bf16.mxu0 0
      %3097 = vmatpush1.bf16.msra.mxu0 0
      %3098 = vmatprep.subr.bf16.mxu0 0
      %3099 = vmatpush1.bf16.msra.mxu0 0
      %3100 = vmatprep.mubr.bf16.mxu0 0
      %3101 = vmatmul.mubr.bf16.gmra.mrb[0].mxu0 %v3018
      %v3102 = vpop.f32.mrb[0].mxu0
      %v3103 = vadd.f32 0.0, %v3102
      %v3104 = vpop.f32.mrb[0].mxu0
      %v3105 = vpop.f32.mrb[0].mxu0
      %v3106 = vadd.f32 0.0, %v3105
      %v3107 = vpop.f32.mrb[0].mxu0
      %3108 = vmatprep.mubr.bf16.mxu0 0
      %3109 = vmatmul.mubr.bf16.gmra.mrb[0].mxu0 %v3021
      %v3110 = vpop.f32.mrb[0].mxu0
      %v3111 = vadd.f32 0.0, %v3110
      %v3112 = vpop.f32.mrb[0].mxu0
      %v3113 = vpop.f32.mrb[0].mxu0
      %v3114 = vadd.f32 0.0, %v3113
      %v3115 = vpop.f32.mrb[0].mxu0
      %3116 = vmatprep.mubr.bf16.mxu0 0
      %3117 = vmatmul.mubr.bf16.gmra.mrb[0].mxu0 %v3024
      %v3118 = vpop.f32.mrb[0].mxu0
      %v3119 = vadd.f32 0.0, %v3118
      %v3120 = vpop.f32.mrb[0].mxu0
      %v3121 = vpop.f32.mrb[0].mxu0
      %v3122 = vadd.f32 0.0, %v3121
      %v3123 = vpop.f32.mrb[0].mxu0
      %3124 = vmatprep.mubr.bf16.mxu0 0
      %3125 = vmatmul.mubr.bf16.gmra.mrb[0].mxu0 %v3027
      %v3126 = vpop.f32.mrb[0].mxu0
      %v3127 = vadd.f32 0.0, %v3126
      %v3128 = vpop.f32.mrb[0].mxu0
      %v3129 = vpop.f32.mrb[0].mxu0
      %v3130 = vadd.f32 0.0, %v3129
      %v3131 = vpop.f32.mrb[0].mxu0
      %3132 = vmatprep.mubr.bf16.mxu0 0
      %3133 = vmatmul.mubr.bf16.gmra.mrb[0].mxu0 %v3030
      %v3134 = vpop.f32.mrb[0].mxu0
      %v3135 = vadd.f32 0.0, %v3134
      %v3136 = vpop.f32.mrb[0].mxu0
      %v3137 = vpop.f32.mrb[0].mxu0
      %v3138 = vadd.f32 0.0, %v3137
      %v3139 = vpop.f32.mrb[0].mxu0
      %3140 = vmatprep.mubr.bf16.mxu0 0
      %3141 = vmatmul.mubr.bf16.gmra.mrb[0].mxu0 %v3033
      %v3142 = vpop.f32.mrb[0].mxu0
      %v3143 = vadd.f32 0.0, %v3142
      %v3144 = vpop.f32.mrb[0].mxu0
      %v3145 = vpop.f32.mrb[0].mxu0
      %v3146 = vadd.f32 0.0, %v3145
      %v3147 = vpop.f32.mrb[0].mxu0
      %3148 = vmatprep.mubr.bf16.mxu0 0
      %3149 = vmatmul.mubr.bf16.gmra.mrb[0].mxu0 %v3036
      %v3150 = vpop.f32.mrb[0].mxu0
      %v3151 = vadd.f32 0.0, %v3150
      %v3152 = vpop.f32.mrb[0].mxu0
      %v3153 = vpop.f32.mrb[0].mxu0
      %v3154 = vadd.f32 0.0, %v3153
      %v3155 = vpop.f32.mrb[0].mxu0
      %3156 = vmatprep.mubr.bf16.mxu0 0
      %3157 = vmatmul.mubr.bf16.gmra.mrb[0].mxu0 %v3039
      %v3158 = vpop.f32.mrb[0].mxu0
      %v3159 = vadd.f32 0.0, %v3158
      %v3160 = vpop.f32.mrb[0].mxu0
      %v3161 = vpop.f32.mrb[0].mxu0
      %v3162 = vadd.f32 0.0, %v3161
      %v3163 = vpop.f32.mrb[0].mxu0
      %3164 = vmatprep.mubr.bf16.mxu0 0
      %3165 = vmatmul.mubr.bf16.gmra.mrb[0].mxu0 %v3042
      %v3166 = vpop.f32.mrb[0].mxu0
      %v3167 = vadd.f32 0.0, %v3166
      %v3168 = vpop.f32.mrb[0].mxu0
      %v3169 = vpop.f32.mrb[0].mxu0
      %v3170 = vadd.f32 0.0, %v3169
      %v3171 = vpop.f32.mrb[0].mxu0
      %3172 = vmatprep.mubr.bf16.mxu0 0
      %3173 = vmatmul.mubr.bf16.gmra.mrb[0].mxu0 %v3045
      %v3174 = vpop.f32.mrb[0].mxu0
      %v3175 = vadd.f32 0.0, %v3174
      %v3176 = vpop.f32.mrb[0].mxu0
      %v3177 = vpop.f32.mrb[0].mxu0
      %v3178 = vadd.f32 0.0, %v3177
      %v3179 = vpop.f32.mrb[0].mxu0
      %3180 = vmatprep.mubr.bf16.mxu0 0
      %3181 = vmatmul.mubr.bf16.gmra.mrb[0].mxu0 %v3048
      %v3182 = vpop.f32.mrb[0].mxu0
      %v3183 = vadd.f32 0.0, %v3182
      %v3184 = vpop.f32.mrb[0].mxu0
      %v3185 = vpop.f32.mrb[0].mxu0
      %v3186 = vadd.f32 0.0, %v3185
      %v3187 = vpop.f32.mrb[0].mxu0
      %3188 = vmatprep.mubr.bf16.mxu0 0
      %3189 = vmatmul.mubr.bf16.gmra.mrb[0].mxu0 %v3051
      %v3190 = vpop.f32.mrb[0].mxu0
      %v3191 = vadd.f32 0.0, %v3190
      %v3192 = vpop.f32.mrb[0].mxu0
      %v3193 = vpop.f32.mrb[0].mxu0
      %v3194 = vadd.f32 0.0, %v3193
      %v3195 = vpop.f32.mrb[0].mxu0
      %3196 = vmatprep.mubr.bf16.mxu0 0
      %3197 = vmatmul.mubr.bf16.gmra.mrb[0].mxu0 %v3054
      %v3198 = vpop.f32.mrb[0].mxu0
      %v3199 = vadd.f32 0.0, %v3198
      %v3200 = vpop.f32.mrb[0].mxu0
      %v3201 = vpop.f32.mrb[0].mxu0
      %v3202 = vadd.f32 0.0, %v3201
      %v3203 = vpop.f32.mrb[0].mxu0
      %3204 = vmatprep.mubr.bf16.mxu0 0
      %3205 = vmatmul.mubr.bf16.gmra.mrb[0].mxu0 %v3057
      %v3206 = vpop.f32.mrb[0].mxu0
      %v3207 = vadd.f32 0.0, %v3206
      %v3208 = vpop.f32.mrb[0].mxu0
      %v3209 = vpop.f32.mrb[0].mxu0
      %v3210 = vadd.f32 0.0, %v3209
      %v3211 = vpop.f32.mrb[0].mxu0
      %3212 = vmatprep.mubr.bf16.mxu0 0
      %3213 = vmatmul.mubr.bf16.gmra.mrb[0].mxu0 %v3060
      %v3214 = vpop.f32.mrb[0].mxu0
      %v3215 = vadd.f32 0.0, %v3214
      %v3216 = vpop.f32.mrb[0].mxu0
      %v3217 = vpop.f32.mrb[0].mxu0
      %v3218 = vadd.f32 0.0, %v3217
      %v3219 = vpop.f32.mrb[0].mxu0
      %3220 = vmatprep.mubr.bf16.mxu0 0
      %3221 = vmatmul.mubr.bf16.gmra.mrb[0].mxu0 %v3063
      %v3222 = vpop.f32.mrb[0].mxu0
      %v3223 = vadd.f32 0.0, %v3222
      %v3224 = vpop.f32.mrb[0].mxu0
      %v3225 = vpop.f32.mrb[0].mxu0
      %v3226 = vadd.f32 0.0, %v3225
      %v3227 = vpop.f32.mrb[0].mxu0
      %3228 = vdwg.mxu0
      %v3229 = vadd.f32 %v2503, %v3103
      %v3230 = vadd.f32 %v2504, %v3106
      %v3231 = vadd.f32 %v2505, %v3111
      %v3232 = vadd.f32 %v2506, %v3114
      %v3233 = vadd.f32 %v2507, %v3119
      %v3234 = vadd.f32 %v2508, %v3122
      %v3235 = vadd.f32 %v2509, %v3127
      %v3236 = vadd.f32 %v2510, %v3130
      %v3237 = vadd.f32 %v2511, %v3135
      %v3238 = vadd.f32 %v2512, %v3138
      %v3239 = vadd.f32 %v2513, %v3143
      %v3240 = vadd.f32 %v2514, %v3146
      %v3241 = vadd.f32 %v2515, %v3151
      %v3242 = vadd.f32 %v2516, %v3154
      %v3243 = vadd.f32 %v2517, %v3159
      %v3244 = vadd.f32 %v2518, %v3162
      %v3245 = vadd.f32 %v2519, %v3167
      %v3246 = vadd.f32 %v2520, %v3170
      %v3247 = vadd.f32 %v2521, %v3175
      %v3248 = vadd.f32 %v2522, %v3178
      %v3249 = vadd.f32 %v2523, %v3183
      %v3250 = vadd.f32 %v2524, %v3186
      %v3251 = vadd.f32 %v2525, %v3191
      %v3252 = vadd.f32 %v2526, %v3194
      %v3253 = vadd.f32 %v2527, %v3199
      %v3254 = vadd.f32 %v2528, %v3202
      %v3255 = vadd.f32 %v2529, %v3207
      %v3256 = vadd.f32 %v2530, %v3210
      %v3257 = vadd.f32 %v2531, %v3215
      %v3258 = vadd.f32 %v2532, %v3218
      %v3259 = vadd.f32 %v2533, %v3223
      %v3260 = vadd.f32 %v2534, %v3226
      %v3261 = vld [vmem:[%s610] sm:$0xe]
      %v3262 = vld [vmem:[%s610 + $0xc] sm:$0xe]
      %v3263 = vld [vmem:[%s610 + $0x18] sm:$0xe]
      %v3264 = vld [vmem:[%s610 + $0x24] sm:$0xe]
      %v3265 = vld [vmem:[%s610 + $0x30] sm:$0xe]
      %v3266 = vld [vmem:[%s610 + $0x3c] sm:$0xe]
      %v3267 = vld [vmem:[%s610 + $0x48] sm:$0xe]
      %v3268 = vld [vmem:[%s610 + $0x54] sm:$0xe]
      %v3269 = vld [vmem:[%s610 + $0x60] sm:$0xe]
      %v3270 = vld [vmem:[%s610 + $0x6c] sm:$0xe]
      %v3271 = vld [vmem:[%s610 + $0x78] sm:$0xe]
      %v3272 = vld [vmem:[%s610 + $0x84] sm:$0xe]
      %v3273 = vld [vmem:[%s610 + $0x90] sm:$0xe]
      %v3274 = vld [vmem:[%s610 + $0x9c] sm:$0xe]
      %v3275 = vld [vmem:[%s610 + $0xa8] sm:$0xe]
      %v3276 = vld [vmem:[%s610 + $0xb4] sm:$0xe]
      %v3325 = vrot.slane %v3261, 5
      %v3326 = vrot.slane %v3325, 4
      %v3327 = vrot.slane %v2536, 5
      %v3328 = vsel %vm1770, %v3326, %v3327
      %v3329 = vrot.slane %v3327, 4
      %v3330 = vrot.slane %v2537, 5
      %v3331 = vsel %vm1770, %v3329, %v3330
      %v3332 = vrot.slane %v3262, 5
      %v3333 = vrot.slane %v3332, 4
      %v3334 = vrot.slane %v2539, 5
      %v3335 = vsel %vm1770, %v3333, %v3334
      %v3336 = vrot.slane %v3334, 4
      %v3337 = vrot.slane %v2540, 5
      %v3338 = vsel %vm1770, %v3336, %v3337
      %v3339 = vrot.slane %v3263, 5
      %v3340 = vrot.slane %v3339, 4
      %v3341 = vrot.slane %v2542, 5
      %v3342 = vsel %vm1770, %v3340, %v3341
      %v3343 = vrot.slane %v3341, 4
      %v3344 = vrot.slane %v2543, 5
      %v3345 = vsel %vm1770, %v3343, %v3344
      %v3346 = vrot.slane %v3264, 5
      %v3347 = vrot.slane %v3346, 4
      %v3348 = vrot.slane %v2545, 5
      %v3349 = vsel %vm1770, %v3347, %v3348
      %v3350 = vrot.slane %v3348, 4
      %v3351 = vrot.slane %v2546, 5
      %v3352 = vsel %vm1770, %v3350, %v3351
      %v3353 = vrot.slane %v3265, 5
      %v3354 = vrot.slane %v3353, 4
      %v3355 = vrot.slane %v2548, 5
      %v3356 = vsel %vm1770, %v3354, %v3355
      %v3357 = vrot.slane %v3355, 4
      %v3358 = vrot.slane %v2549, 5
      %v3359 = vsel %vm1770, %v3357, %v3358
      %v3360 = vrot.slane %v3266, 5
      %v3361 = vrot.slane %v3360, 4
      %v3362 = vrot.slane %v2551, 5
      %v3363 = vsel %vm1770, %v3361, %v3362
      %v3364 = vrot.slane %v3362, 4
      %v3365 = vrot.slane %v2552, 5
      %v3366 = vsel %vm1770, %v3364, %v3365
      %v3367 = vrot.slane %v3267, 5
      %v3368 = vrot.slane %v3367, 4
      %v3369 = vrot.slane %v2554, 5
      %v3370 = vsel %vm1770, %v3368, %v3369
      %v3371 = vrot.slane %v3369, 4
      %v3372 = vrot.slane %v2555, 5
      %v3373 = vsel %vm1770, %v3371, %v3372
      %v3374 = vrot.slane %v3268, 5
      %v3375 = vrot.slane %v3374, 4
      %v3376 = vrot.slane %v2557, 5
      %v3377 = vsel %vm1770, %v3375, %v3376
      %v3378 = vrot.slane %v3376, 4
      %v3379 = vrot.slane %v2558, 5
      %v3380 = vsel %vm1770, %v3378, %v3379
      %v3381 = vrot.slane %v3269, 5
      %v3382 = vrot.slane %v3381, 4
      %v3383 = vrot.slane %v2560, 5
      %v3384 = vsel %vm1770, %v3382, %v3383
      %v3385 = vrot.slane %v3383, 4
      %v3386 = vrot.slane %v2561, 5
      %v3387 = vsel %vm1770, %v3385, %v3386
      %v3388 = vrot.slane %v3270, 5
      %v3389 = vrot.slane %v3388, 4
      %v3390 = vrot.slane %v2563, 5
      %v3391 = vsel %vm1770, %v3389, %v3390
      %v3392 = vrot.slane %v3390, 4
      %v3393 = vrot.slane %v2564, 5
      %v3394 = vsel %vm1770, %v3392, %v3393
      %v3395 = vrot.slane %v3271, 5
      %v3396 = vrot.slane %v3395, 4
      %v3397 = vrot.slane %v2566, 5
      %v3398 = vsel %vm1770, %v3396, %v3397
      %v3399 = vrot.slane %v3397, 4
      %v3400 = vrot.slane %v2567, 5
      %v3401 = vsel %vm1770, %v3399, %v3400
      %v3402 = vrot.slane %v3272, 5
      %v3403 = vrot.slane %v3402, 4
      %v3404 = vrot.slane %v2569, 5
      %v3405 = vsel %vm1770, %v3403, %v3404
      %v3406 = vrot.slane %v3404, 4
      %v3407 = vrot.slane %v2570, 5
      %v3408 = vsel %vm1770, %v3406, %v3407
      %v3409 = vrot.slane %v3273, 5
      %v3410 = vrot.slane %v3409, 4
      %v3411 = vrot.slane %v2572, 5
      %v3412 = vsel %vm1770, %v3410, %v3411
      %v3413 = vrot.slane %v3411, 4
      %v3414 = vrot.slane %v2573, 5
      %v3415 = vsel %vm1770, %v3413, %v3414
      %v3416 = vrot.slane %v3274, 5
      %v3417 = vrot.slane %v3416, 4
      %v3418 = vrot.slane %v2575, 5
      %v3419 = vsel %vm1770, %v3417, %v3418
      %v3420 = vrot.slane %v3418, 4
      %v3421 = vrot.slane %v2576, 5
      %v3422 = vsel %vm1770, %v3420, %v3421
      %v3423 = vrot.slane %v3275, 5
      %v3424 = vrot.slane %v3423, 4
      %v3425 = vrot.slane %v2578, 5
      %v3426 = vsel %vm1770, %v3424, %v3425
      %v3427 = vrot.slane %v3425, 4
      %v3428 = vrot.slane %v2579, 5
      %v3429 = vsel %vm1770, %v3427, %v3428
      %v3430 = vrot.slane %v3276, 5
      %v3431 = vrot.slane %v3430, 4
      %v3432 = vrot.slane %v2581, 5
      %v3433 = vsel %vm1770, %v3431, %v3432
      %v3434 = vrot.slane %v3432, 4
      %v3435 = vrot.slane %v2582, 5
      %v3436 = vsel %vm1770, %v3434, %v3435
      %s3437 = scalar_lea.vmem %s1, 10
      %v3438 = vld [vmem:[%s3437] sm:$0x3]
      %v3439 = vunpack.c.l.b16 %v3328
      %v3440 = vunpack.c.l.b16 %v3331
      %v3441 = vunpack.c.l.b16 %v3335
      %v3442 = vunpack.c.l.b16 %v3338
      %v3443 = vunpack.c.l.b16 %v3342
      %v3444 = vunpack.c.l.b16 %v3345
      %v3445 = vunpack.c.l.b16 %v3349
      %v3446 = vunpack.c.l.b16 %v3352
      %v3447 = vunpack.c.l.b16 %v3356
      %v3448 = vunpack.c.l.b16 %v3359
      %v3449 = vunpack.c.l.b16 %v3363
      %v3450 = vunpack.c.l.b16 %v3366
      %v3451 = vunpack.c.l.b16 %v3370
      %v3452 = vunpack.c.l.b16 %v3373
      %v3453 = vunpack.c.l.b16 %v3377
      %v3454 = vunpack.c.l.b16 %v3380
      %v3455 = vunpack.c.l.b16 %v3384
      %v3456 = vunpack.c.l.b16 %v3387
      %v3457 = vunpack.c.l.b16 %v3391
      %v3458 = vunpack.c.l.b16 %v3394
      %v3459 = vunpack.c.l.b16 %v3398
      %v3460 = vunpack.c.l.b16 %v3401
      %v3461 = vunpack.c.l.b16 %v3405
      %v3462 = vunpack.c.l.b16 %v3408
      %v3463 = vunpack.c.l.b16 %v3412
      %v3464 = vunpack.c.l.b16 %v3415
      %v3465 = vunpack.c.l.b16 %v3419
      %v3466 = vunpack.c.l.b16 %v3422
      %v3467 = vunpack.c.l.b16 %v3426
      %v3468 = vunpack.c.l.b16 %v3429
      %v3469 = vunpack.c.l.b16 %v3433
      %v3470 = vunpack.c.l.b16 %v3436
      %v3471 = vpack.c.b16 %v3440, %v3439
      %v3472 = vpack.c.b16 %v3442, %v3441
      %v3473 = vpack.c.b16 %v3444, %v3443
      %v3474 = vpack.c.b16 %v3446, %v3445
      %v3475 = vpack.c.b16 %v3448, %v3447
      %v3476 = vpack.c.b16 %v3450, %v3449
      %v3477 = vpack.c.b16 %v3452, %v3451
      %v3478 = vpack.c.b16 %v3454, %v3453
      %v3479 = vpack.c.b16 %v3456, %v3455
      %v3480 = vpack.c.b16 %v3458, %v3457
      %v3481 = vpack.c.b16 %v3460, %v3459
      %v3482 = vpack.c.b16 %v3462, %v3461
      %v3483 = vpack.c.b16 %v3464, %v3463
      %v3484 = vpack.c.b16 %v3466, %v3465
      %v3485 = vpack.c.b16 %v3468, %v3467
      %v3486 = vpack.c.b16 %v3470, %v3469
      %v3488 = vsel %vm1214, %v3471, 0
      %v3491 = vsel %vm1214, %v3472, 0
      %v3494 = vsel %vm1214, %v3473, 0
      %v3497 = vsel %vm1214, %v3474, 0
      %v3500 = vsel %vm1214, %v3475, 0
      %v3503 = vsel %vm1214, %v3476, 0
      %v3506 = vsel %vm1214, %v3477, 0
      %v3509 = vsel %vm1214, %v3478, 0
      %v3512 = vsel %vm1214, %v3479, 0
      %v3515 = vsel %vm1214, %v3480, 0
      %v3518 = vsel %vm1214, %v3481, 0
      %v3521 = vsel %vm1214, %v3482, 0
      %v3524 = vsel %vm1214, %v3483, 0
      %v3527 = vsel %vm1214, %v3484, 0
      %v3530 = vsel %vm1214, %v3485, 0
      %v3533 = vsel %vm1214, %v3486, 0
      %v3536 = vsel %vm1263, %v3438, 0
      %3538 = vmatprep.subr.bf16.mxu0 0
      %3539 = vmatpush1.bf16.msra.mxu0 %v3536
      %3540 = vmatprep.subr.bf16.mxu0 0
      %3541 = vmatpush1.bf16.msra.mxu0 0
      %3542 = vmatprep.subr.bf16.mxu0 0
      %3543 = vmatpush1.bf16.msra.mxu0 0
      %3544 = vmatprep.subr.bf16.mxu0 0
      %3545 = vmatpush1.bf16.msra.mxu0 0
      %3546 = vmatprep.subr.bf16.mxu0 0
      %3547 = vmatpush1.bf16.msra.mxu0 0
      %3548 = vmatprep.subr.bf16.mxu0 0
      %3549 = vmatpush1.bf16.msra.mxu0 0
      %3550 = vmatprep.subr.bf16.mxu0 0
      %3551 = vmatpush1.bf16.msra.mxu0 0
      %3552 = vmatprep.subr.bf16.mxu0 0
      %3553 = vmatpush1.bf16.msra.mxu0 0
      %3554 = vmatprep.subr.bf16.mxu0 0
      %3555 = vmatpush1.bf16.msra.mxu0 0
      %3556 = vmatprep.subr.bf16.mxu0 0
      %3557 = vmatpush1.bf16.msra.mxu0 0
      %3558 = vmatprep.subr.bf16.mxu0 0
      %3559 = vmatpush1.bf16.msra.mxu0 0
      %3560 = vmatprep.subr.bf16.mxu0 0
      %3561 = vmatpush1.bf16.msra.mxu0 0
      %3562 = vmatprep.subr.bf16.mxu0 0
      %3563 = vmatpush1.bf16.msra.mxu0 0
      %3564 = vmatprep.subr.bf16.mxu0 0
      %3565 = vmatpush1.bf16.msra.mxu0 0
      %3566 = vmatprep.subr.bf16.mxu0 0
      %3567 = vmatpush1.bf16.msra.mxu0 0
      %3568 = vmatprep.subr.bf16.mxu0 0
      %3569 = vmatpush1.bf16.msra.mxu0 0
      %3570 = vmatprep.mubr.bf16.mxu0 0
      %3571 = vmatmul.mubr.bf16.gmra.mrb[0].mxu0 %v3488
      %v3572 = vpop.f32.mrb[0].mxu0
      %v3573 = vadd.f32 0.0, %v3572
      %v3574 = vpop.f32.mrb[0].mxu0
      %v3575 = vpop.f32.mrb[0].mxu0
      %v3576 = vadd.f32 0.0, %v3575
      %v3577 = vpop.f32.mrb[0].mxu0
      %3578 = vmatprep.mubr.bf16.mxu0 0
      %3579 = vmatmul.mubr.bf16.gmra.mrb[0].mxu0 %v3491
      %v3580 = vpop.f32.mrb[0].mxu0
      %v3581 = vadd.f32 0.0, %v3580
      %v3582 = vpop.f32.mrb[0].mxu0
      %v3583 = vpop.f32.mrb[0].mxu0
      %v3584 = vadd.f32 0.0, %v3583
      %v3585 = vpop.f32.mrb[0].mxu0
      %3586 = vmatprep.mubr.bf16.mxu0 0
      %3587 = vmatmul.mubr.bf16.gmra.mrb[0].mxu0 %v3494
      %v3588 = vpop.f32.mrb[0].mxu0
      %v3589 = vadd.f32 0.0, %v3588
      %v3590 = vpop.f32.mrb[0].mxu0
      %v3591 = vpop.f32.mrb[0].mxu0
      %v3592 = vadd.f32 0.0, %v3591
      %v3593 = vpop.f32.mrb[0].mxu0
      %3594 = vmatprep.mubr.bf16.mxu0 0
      %3595 = vmatmul.mubr.bf16.gmra.mrb[0].mxu0 %v3497
      %v3596 = vpop.f32.mrb[0].mxu0
      %v3597 = vadd.f32 0.0, %v3596
      %v3598 = vpop.f32.mrb[0].mxu0
      %v3599 = vpop.f32.mrb[0].mxu0
      %v3600 = vadd.f32 0.0, %v3599
      %v3601 = vpop.f32.mrb[0].mxu0
      %3602 = vmatprep.mubr.bf16.mxu0 0
      %3603 = vmatmul.mubr.bf16.gmra.mrb[0].mxu0 %v3500
      %v3604 = vpop.f32.mrb[0].mxu0
      %v3605 = vadd.f32 0.0, %v3604
      %v3606 = vpop.f32.mrb[0].mxu0
      %v3607 = vpop.f32.mrb[0].mxu0
      %v3608 = vadd.f32 0.0, %v3607
      %v3609 = vpop.f32.mrb[0].mxu0
      %3610 = vmatprep.mubr.bf16.mxu0 0
      %3611 = vmatmul.mubr.bf16.gmra.mrb[0].mxu0 %v3503
      %v3612 = vpop.f32.mrb[0].mxu0
      %v3613 = vadd.f32 0.0, %v3612
      %v3614 = vpop.f32.mrb[0].mxu0
      %v3615 = vpop.f32.mrb[0].mxu0
      %v3616 = vadd.f32 0.0, %v3615
      %v3617 = vpop.f32.mrb[0].mxu0
      %3618 = vmatprep.mubr.bf16.mxu0 0
      %3619 = vmatmul.mubr.bf16.gmra.mrb[0].mxu0 %v3506
      %v3620 = vpop.f32.mrb[0].mxu0
      %v3621 = vadd.f32 0.0, %v3620
      %v3622 = vpop.f32.mrb[0].mxu0
      %v3623 = vpop.f32.mrb[0].mxu0
      %v3624 = vadd.f32 0.0, %v3623
      %v3625 = vpop.f32.mrb[0].mxu0
      %3626 = vmatprep.mubr.bf16.mxu0 0
      %3627 = vmatmul.mubr.bf16.gmra.mrb[0].mxu0 %v3509
      %v3628 = vpop.f32.mrb[0].mxu0
      %v3629 = vadd.f32 0.0, %v3628
      %v3630 = vpop.f32.mrb[0].mxu0
      %v3631 = vpop.f32.mrb[0].mxu0
      %v3632 = vadd.f32 0.0, %v3631
      %v3633 = vpop.f32.mrb[0].mxu0
      %3634 = vmatprep.mubr.bf16.mxu0 0
      %3635 = vmatmul.mubr.bf16.gmra.mrb[0].mxu0 %v3512
      %v3636 = vpop.f32.mrb[0].mxu0
      %v3637 = vadd.f32 0.0, %v3636
      %v3638 = vpop.f32.mrb[0].mxu0
      %v3639 = vpop.f32.mrb[0].mxu0
      %v3640 = vadd.f32 0.0, %v3639
      %v3641 = vpop.f32.mrb[0].mxu0
      %3642 = vmatprep.mubr.bf16.mxu0 0
      %3643 = vmatmul.mubr.bf16.gmra.mrb[0].mxu0 %v3515
      %v3644 = vpop.f32.mrb[0].mxu0
      %v3645 = vadd.f32 0.0, %v3644
      %v3646 = vpop.f32.mrb[0].mxu0
      %v3647 = vpop.f32.mrb[0].mxu0
      %v3648 = vadd.f32 0.0, %v3647
      %v3649 = vpop.f32.mrb[0].mxu0
      %3650 = vmatprep.mubr.bf16.mxu0 0
      %3651 = vmatmul.mubr.bf16.gmra.mrb[0].mxu0 %v3518
      %v3652 = vpop.f32.mrb[0].mxu0
      %v3653 = vadd.f32 0.0, %v3652
      %v3654 = vpop.f32.mrb[0].mxu0
      %v3655 = vpop.f32.mrb[0].mxu0
      %v3656 = vadd.f32 0.0, %v3655
      %v3657 = vpop.f32.mrb[0].mxu0
      %3658 = vmatprep.mubr.bf16.mxu0 0
      %3659 = vmatmul.mubr.bf16.gmra.mrb[0].mxu0 %v3521
      %v3660 = vpop.f32.mrb[0].mxu0
      %v3661 = vadd.f32 0.0, %v3660
      %v3662 = vpop.f32.mrb[0].mxu0
      %v3663 = vpop.f32.mrb[0].mxu0
      %v3664 = vadd.f32 0.0, %v3663
      %v3665 = vpop.f32.mrb[0].mxu0
      %3666 = vmatprep.mubr.bf16.mxu0 0
      %3667 = vmatmul.mubr.bf16.gmra.mrb[0].mxu0 %v3524
      %v3668 = vpop.f32.mrb[0].mxu0
      %v3669 = vadd.f32 0.0, %v3668
      %v3670 = vpop.f32.mrb[0].mxu0
      %v3671 = vpop.f32.mrb[0].mxu0
      %v3672 = vadd.f32 0.0, %v3671
      %v3673 = vpop.f32.mrb[0].mxu0
      %3674 = vmatprep.mubr.bf16.mxu0 0
      %3675 = vmatmul.mubr.bf16.gmra.mrb[0].mxu0 %v3527
      %v3676 = vpop.f32.mrb[0].mxu0
      %v3677 = vadd.f32 0.0, %v3676
      %v3678 = vpop.f32.mrb[0].mxu0
      %v3679 = vpop.f32.mrb[0].mxu0
      %v3680 = vadd.f32 0.0, %v3679
      %v3681 = vpop.f32.mrb[0].mxu0
      %3682 = vmatprep.mubr.bf16.mxu0 0
      %3683 = vmatmul.mubr.bf16.gmra.mrb[0].mxu0 %v3530
      %v3684 = vpop.f32.mrb[0].mxu0
      %v3685 = vadd.f32 0.0, %v3684
      %v3686 = vpop.f32.mrb[0].mxu0
      %v3687 = vpop.f32.mrb[0].mxu0
      %v3688 = vadd.f32 0.0, %v3687
      %v3689 = vpop.f32.mrb[0].mxu0
      %3690 = vmatprep.mubr.bf16.mxu0 0
      %3691 = vmatmul.mubr.bf16.gmra.mrb[0].mxu0 %v3533
      %v3692 = vpop.f32.mrb[0].mxu0
      %v3693 = vadd.f32 0.0, %v3692
      %v3694 = vpop.f32.mrb[0].mxu0
      %v3695 = vpop.f32.mrb[0].mxu0
      %v3696 = vadd.f32 0.0, %v3695
      %v3697 = vpop.f32.mrb[0].mxu0
      %3698 = vdwg.mxu0
      %v3699 = vadd.f32 %v3229, %v3573
      %v3700 = vadd.f32 %v3230, %v3576
      %v3701 = vadd.f32 %v3231, %v3581
      %v3702 = vadd.f32 %v3232, %v3584
      %v3703 = vadd.f32 %v3233, %v3589
      %v3704 = vadd.f32 %v3234, %v3592
      %v3705 = vadd.f32 %v3235, %v3597
      %v3706 = vadd.f32 %v3236, %v3600
      %v3707 = vadd.f32 %v3237, %v3605
      %v3708 = vadd.f32 %v3238, %v3608
      %v3709 = vadd.f32 %v3239, %v3613
      %v3710 = vadd.f32 %v3240, %v3616
      %v3711 = vadd.f32 %v3241, %v3621
      %v3712 = vadd.f32 %v3242, %v3624
      %v3713 = vadd.f32 %v3243, %v3629
      %v3714 = vadd.f32 %v3244, %v3632
      %v3715 = vadd.f32 %v3245, %v3637
      %v3716 = vadd.f32 %v3246, %v3640
      %v3717 = vadd.f32 %v3247, %v3645
      %v3718 = vadd.f32 %v3248, %v3648
      %v3719 = vadd.f32 %v3249, %v3653
      %v3720 = vadd.f32 %v3250, %v3656
      %v3721 = vadd.f32 %v3251, %v3661
      %v3722 = vadd.f32 %v3252, %v3664
      %v3723 = vadd.f32 %v3253, %v3669
      %v3724 = vadd.f32 %v3254, %v3672
      %v3725 = vadd.f32 %v3255, %v3677
      %v3726 = vadd.f32 %v3256, %v3680
      %v3727 = vadd.f32 %v3257, %v3685
      %v3728 = vadd.f32 %v3258, %v3688
      %v3729 = vadd.f32 %v3259, %v3693
      %v3730 = vadd.f32 %v3260, %v3696
      %s3731 = scalar_lea.vmem [#allocation2], 24
      %v3732 = vld [vmem:[%s3731] sm:$0xf]
      %v3733 = vld [vmem:[%s3731 + $0x4] sm:$0xf]
      %v3734 = vld [vmem:[%s3731 + $0xc] sm:$0xf]
      %v3735 = vld [vmem:[%s3731 + $0x10] sm:$0xf]
      %v3736 = vld [vmem:[%s3731 + $0x18] sm:$0xf]
      %v3737 = vld [vmem:[%s3731 + $0x1c] sm:$0xf]
      %v3738 = vld [vmem:[%s3731 + $0x24] sm:$0xf]
      %v3739 = vld [vmem:[%s3731 + $0x28] sm:$0xf]
      %v3740 = vld [vmem:[%s3731 + $0x30] sm:$0xf]
      %v3741 = vld [vmem:[%s3731 + $0x34] sm:$0xf]
      %v3742 = vld [vmem:[%s3731 + $0x3c] sm:$0xf]
      %v3743 = vld [vmem:[%s3731 + $0x40] sm:$0xf]
      %v3744 = vld [vmem:[%s3731 + $0x48] sm:$0xf]
      %v3745 = vld [vmem:[%s3731 + $0x4c] sm:$0xf]
      %v3746 = vld [vmem:[%s3731 + $0x54] sm:$0xf]
      %v3747 = vld [vmem:[%s3731 + $0x58] sm:$0xf]
      %v3748 = vld [vmem:[%s3731 + $0x60] sm:$0xf]
      %v3749 = vld [vmem:[%s3731 + $0x64] sm:$0xf]
      %v3750 = vld [vmem:[%s3731 + $0x6c] sm:$0xf]
      %v3751 = vld [vmem:[%s3731 + $0x70] sm:$0xf]
      %v3752 = vld [vmem:[%s3731 + $0x78] sm:$0xf]
      %v3753 = vld [vmem:[%s3731 + $0x7c] sm:$0xf]
      %v3754 = vld [vmem:[%s3731 + $0x84] sm:$0xf]
      %v3755 = vld [vmem:[%s3731 + $0x88] sm:$0xf]
      %v3756 = vld [vmem:[%s3731 + $0x90] sm:$0xf]
      %v3757 = vld [vmem:[%s3731 + $0x94] sm:$0xf]
      %v3758 = vld [vmem:[%s3731 + $0x9c] sm:$0xf]
      %v3759 = vld [vmem:[%s3731 + $0xa0] sm:$0xf]
      %v3760 = vld [vmem:[%s3731 + $0xa8] sm:$0xf]
      %v3761 = vld [vmem:[%s3731 + $0xac] sm:$0xf]
      %v3762 = vld [vmem:[%s3731 + $0xb4] sm:$0xf]
      %v3763 = vld [vmem:[%s3731 + $0xb8] sm:$0xf]
      %s3764 = scalar_lea.vmem %s1, 12
      %v3765 = vld [vmem:[%s3764] sm:$0x3]
      %v3798 = vunpack.c.l.b16 %v3732
      %v3799 = vunpack.c.l.b16 %v3733
      %v3800 = vunpack.c.l.b16 %v3734
      %v3801 = vunpack.c.l.b16 %v3735
      %v3802 = vunpack.c.l.b16 %v3736
      %v3803 = vunpack.c.l.b16 %v3737
      %v3804 = vunpack.c.l.b16 %v3738
      %v3805 = vunpack.c.l.b16 %v3739
      %v3806 = vunpack.c.l.b16 %v3740
      %v3807 = vunpack.c.l.b16 %v3741
      %v3808 = vunpack.c.l.b16 %v3742
      %v3809 = vunpack.c.l.b16 %v3743
      %v3810 = vunpack.c.l.b16 %v3744
      %v3811 = vunpack.c.l.b16 %v3745
      %v3812 = vunpack.c.l.b16 %v3746
      %v3813 = vunpack.c.l.b16 %v3747
      %v3814 = vunpack.c.l.b16 %v3748
      %v3815 = vunpack.c.l.b16 %v3749
      %v3816 = vunpack.c.l.b16 %v3750
      %v3817 = vunpack.c.l.b16 %v3751
      %v3818 = vunpack.c.l.b16 %v3752
      %v3819 = vunpack.c.l.b16 %v3753
      %v3820 = vunpack.c.l.b16 %v3754
      %v3821 = vunpack.c.l.b16 %v3755
      %v3822 = vunpack.c.l.b16 %v3756
      %v3823 = vunpack.c.l.b16 %v3757
      %v3824 = vunpack.c.l.b16 %v3758
      %v3825 = vunpack.c.l.b16 %v3759
      %v3826 = vunpack.c.l.b16 %v3760
      %v3827 = vunpack.c.l.b16 %v3761
      %v3828 = vunpack.c.l.b16 %v3762
      %v3829 = vunpack.c.l.b16 %v3763
      %v3830 = vpack.c.b16 %v3799, %v3798
      %v3831 = vpack.c.b16 %v3801, %v3800
      %v3832 = vpack.c.b16 %v3803, %v3802
      %v3833 = vpack.c.b16 %v3805, %v3804
      %v3834 = vpack.c.b16 %v3807, %v3806
      %v3835 = vpack.c.b16 %v3809, %v3808
      %v3836 = vpack.c.b16 %v3811, %v3810
      %v3837 = vpack.c.b16 %v3813, %v3812
      %v3838 = vpack.c.b16 %v3815, %v3814
      %v3839 = vpack.c.b16 %v3817, %v3816
      %v3840 = vpack.c.b16 %v3819, %v3818
      %v3841 = vpack.c.b16 %v3821, %v3820
      %v3842 = vpack.c.b16 %v3823, %v3822
      %v3843 = vpack.c.b16 %v3825, %v3824
      %v3844 = vpack.c.b16 %v3827, %v3826
      %v3845 = vpack.c.b16 %v3829, %v3828
      %v3847 = vsel %vm1214, %v3830, 0
      %v3850 = vsel %vm1214, %v3831, 0
      %v3853 = vsel %vm1214, %v3832, 0
      %v3856 = vsel %vm1214, %v3833, 0
      %v3859 = vsel %vm1214, %v3834, 0
      %v3862 = vsel %vm1214, %v3835, 0
      %v3865 = vsel %vm1214, %v3836, 0
      %v3868 = vsel %vm1214, %v3837, 0
      %v3871 = vsel %vm1214, %v3838, 0
      %v3874 = vsel %vm1214, %v3839, 0
      %v3877 = vsel %vm1214, %v3840, 0
      %v3880 = vsel %vm1214, %v3841, 0
      %v3883 = vsel %vm1214, %v3842, 0
      %v3886 = vsel %vm1214, %v3843, 0
      %v3889 = vsel %vm1214, %v3844, 0
      %v3892 = vsel %vm1214, %v3845, 0
      %v3895 = vsel %vm1263, %v3765, 0
      %3897 = vmatprep.subr.bf16.mxu0 0
      %3898 = vmatpush1.bf16.msra.mxu0 %v3895
      %3899 = vmatprep.subr.bf16.mxu0 0
      %3900 = vmatpush1.bf16.msra.mxu0 0
      %3901 = vmatprep.subr.bf16.mxu0 0
      %3902 = vmatpush1.bf16.msra.mxu0 0
      %3903 = vmatprep.subr.bf16.mxu0 0
      %3904 = vmatpush1.bf16.msra.mxu0 0
      %3905 = vmatprep.subr.bf16.mxu0 0
      %3906 = vmatpush1.bf16.msra.mxu0 0
      %3907 = vmatprep.subr.bf16.mxu0 0
      %3908 = vmatpush1.bf16.msra.mxu0 0
      %3909 = vmatprep.subr.bf16.mxu0 0
      %3910 = vmatpush1.bf16.msra.mxu0 0
      %3911 = vmatprep.subr.bf16.mxu0 0
      %3912 = vmatpush1.bf16.msra.mxu0 0
      %3913 = vmatprep.subr.bf16.mxu0 0
      %3914 = vmatpush1.bf16.msra.mxu0 0
      %3915 = vmatprep.subr.bf16.mxu0 0
      %3916 = vmatpush1.bf16.msra.mxu0 0
      %3917 = vmatprep.subr.bf16.mxu0 0
      %3918 = vmatpush1.bf16.msra.mxu0 0
      %3919 = vmatprep.subr.bf16.mxu0 0
      %3920 = vmatpush1.bf16.msra.mxu0 0
      %3921 = vmatprep.subr.bf16.mxu0 0
      %3922 = vmatpush1.bf16.msra.mxu0 0
      %3923 = vmatprep.subr.bf16.mxu0 0
      %3924 = vmatpush1.bf16.msra.mxu0 0
      %3925 = vmatprep.subr.bf16.mxu0 0
      %3926 = vmatpush1.bf16.msra.mxu0 0
      %3927 = vmatprep.subr.bf16.mxu0 0
      %3928 = vmatpush1.bf16.msra.mxu0 0
      %3929 = vmatprep.mubr.bf16.mxu0 0
      %3930 = vmatmul.mubr.bf16.gmra.mrb[0].mxu0 %v3847
      %v3931 = vpop.f32.mrb[0].mxu0
      %v3932 = vadd.f32 0.0, %v3931
      %v3933 = vpop.f32.mrb[0].mxu0
      %v3934 = vpop.f32.mrb[0].mxu0
      %v3935 = vadd.f32 0.0, %v3934
      %v3936 = vpop.f32.mrb[0].mxu0
      %3937 = vmatprep.mubr.bf16.mxu0 0
      %3938 = vmatmul.mubr.bf16.gmra.mrb[0].mxu0 %v3850
      %v3939 = vpop.f32.mrb[0].mxu0
      %v3940 = vadd.f32 0.0, %v3939
      %v3941 = vpop.f32.mrb[0].mxu0
      %v3942 = vpop.f32.mrb[0].mxu0
      %v3943 = vadd.f32 0.0, %v3942
      %v3944 = vpop.f32.mrb[0].mxu0
      %3945 = vmatprep.mubr.bf16.mxu0 0
      %3946 = vmatmul.mubr.bf16.gmra.mrb[0].mxu0 %v3853
      %v3947 = vpop.f32.mrb[0].mxu0
      %v3948 = vadd.f32 0.0, %v3947
      %v3949 = vpop.f32.mrb[0].mxu0
      %v3950 = vpop.f32.mrb[0].mxu0
      %v3951 = vadd.f32 0.0, %v3950
      %v3952 = vpop.f32.mrb[0].mxu0
      %3953 = vmatprep.mubr.bf16.mxu0 0
      %3954 = vmatmul.mubr.bf16.gmra.mrb[0].mxu0 %v3856
      %v3955 = vpop.f32.mrb[0].mxu0
      %v3956 = vadd.f32 0.0, %v3955
      %v3957 = vpop.f32.mrb[0].mxu0
      %v3958 = vpop.f32.mrb[0].mxu0
      %v3959 = vadd.f32 0.0, %v3958
      %v3960 = vpop.f32.mrb[0].mxu0
      %3961 = vmatprep.mubr.bf16.mxu0 0
      %3962 = vmatmul.mubr.bf16.gmra.mrb[0].mxu0 %v3859
      %v3963 = vpop.f32.mrb[0].mxu0
      %v3964 = vadd.f32 0.0, %v3963
      %v3965 = vpop.f32.mrb[0].mxu0
      %v3966 = vpop.f32.mrb[0].mxu0
      %v3967 = vadd.f32 0.0, %v3966
      %v3968 = vpop.f32.mrb[0].mxu0
      %3969 = vmatprep.mubr.bf16.mxu0 0
      %3970 = vmatmul.mubr.bf16.gmra.mrb[0].mxu0 %v3862
      %v3971 = vpop.f32.mrb[0].mxu0
      %v3972 = vadd.f32 0.0, %v3971
      %v3973 = vpop.f32.mrb[0].mxu0
      %v3974 = vpop.f32.mrb[0].mxu0
      %v3975 = vadd.f32 0.0, %v3974
      %v3976 = vpop.f32.mrb[0].mxu0
      %3977 = vmatprep.mubr.bf16.mxu0 0
      %3978 = vmatmul.mubr.bf16.gmra.mrb[0].mxu0 %v3865
      %v3979 = vpop.f32.mrb[0].mxu0
      %v3980 = vadd.f32 0.0, %v3979
      %v3981 = vpop.f32.mrb[0].mxu0
      %v3982 = vpop.f32.mrb[0].mxu0
      %v3983 = vadd.f32 0.0, %v3982
      %v3984 = vpop.f32.mrb[0].mxu0
      %3985 = vmatprep.mubr.bf16.mxu0 0
      %3986 = vmatmul.mubr.bf16.gmra.mrb[0].mxu0 %v3868
      %v3987 = vpop.f32.mrb[0].mxu0
      %v3988 = vadd.f32 0.0, %v3987
      %v3989 = vpop.f32.mrb[0].mxu0
      %v3990 = vpop.f32.mrb[0].mxu0
      %v3991 = vadd.f32 0.0, %v3990
      %v3992 = vpop.f32.mrb[0].mxu0
      %3993 = vmatprep.mubr.bf16.mxu0 0
      %3994 = vmatmul.mubr.bf16.gmra.mrb[0].mxu0 %v3871
      %v3995 = vpop.f32.mrb[0].mxu0
      %v3996 = vadd.f32 0.0, %v3995
      %v3997 = vpop.f32.mrb[0].mxu0
      %v3998 = vpop.f32.mrb[0].mxu0
      %v3999 = vadd.f32 0.0, %v3998
      %v4000 = vpop.f32.mrb[0].mxu0
      %4001 = vmatprep.mubr.bf16.mxu0 0
      %4002 = vmatmul.mubr.bf16.gmra.mrb[0].mxu0 %v3874
      %v4003 = vpop.f32.mrb[0].mxu0
      %v4004 = vadd.f32 0.0, %v4003
      %v4005 = vpop.f32.mrb[0].mxu0
      %v4006 = vpop.f32.mrb[0].mxu0
      %v4007 = vadd.f32 0.0, %v4006
      %v4008 = vpop.f32.mrb[0].mxu0
      %4009 = vmatprep.mubr.bf16.mxu0 0
      %4010 = vmatmul.mubr.bf16.gmra.mrb[0].mxu0 %v3877
      %v4011 = vpop.f32.mrb[0].mxu0
      %v4012 = vadd.f32 0.0, %v4011
      %v4013 = vpop.f32.mrb[0].mxu0
      %v4014 = vpop.f32.mrb[0].mxu0
      %v4015 = vadd.f32 0.0, %v4014
      %v4016 = vpop.f32.mrb[0].mxu0
      %4017 = vmatprep.mubr.bf16.mxu0 0
      %4018 = vmatmul.mubr.bf16.gmra.mrb[0].mxu0 %v3880
      %v4019 = vpop.f32.mrb[0].mxu0
      %v4020 = vadd.f32 0.0, %v4019
      %v4021 = vpop.f32.mrb[0].mxu0
      %v4022 = vpop.f32.mrb[0].mxu0
      %v4023 = vadd.f32 0.0, %v4022
      %v4024 = vpop.f32.mrb[0].mxu0
      %4025 = vmatprep.mubr.bf16.mxu0 0
      %4026 = vmatmul.mubr.bf16.gmra.mrb[0].mxu0 %v3883
      %v4027 = vpop.f32.mrb[0].mxu0
      %v4028 = vadd.f32 0.0, %v4027
      %v4029 = vpop.f32.mrb[0].mxu0
      %v4030 = vpop.f32.mrb[0].mxu0
      %v4031 = vadd.f32 0.0, %v4030
      %v4032 = vpop.f32.mrb[0].mxu0
      %4033 = vmatprep.mubr.bf16.mxu0 0
      %4034 = vmatmul.mubr.bf16.gmra.mrb[0].mxu0 %v3886
      %v4035 = vpop.f32.mrb[0].mxu0
      %v4036 = vadd.f32 0.0, %v4035
      %v4037 = vpop.f32.mrb[0].mxu0
      %v4038 = vpop.f32.mrb[0].mxu0
      %v4039 = vadd.f32 0.0, %v4038
      %v4040 = vpop.f32.mrb[0].mxu0
      %4041 = vmatprep.mubr.bf16.mxu0 0
      %4042 = vmatmul.mubr.bf16.gmra.mrb[0].mxu0 %v3889
      %v4043 = vpop.f32.mrb[0].mxu0
      %v4044 = vadd.f32 0.0, %v4043
      %v4045 = vpop.f32.mrb[0].mxu0
      %v4046 = vpop.f32.mrb[0].mxu0
      %v4047 = vadd.f32 0.0, %v4046
      %v4048 = vpop.f32.mrb[0].mxu0
      %4049 = vmatprep.mubr.bf16.mxu0 0
      %4050 = vmatmul.mubr.bf16.gmra.mrb[0].mxu0 %v3892
      %v4051 = vpop.f32.mrb[0].mxu0
      %v4052 = vadd.f32 0.0, %v4051
      %v4053 = vpop.f32.mrb[0].mxu0
      %v4054 = vpop.f32.mrb[0].mxu0
      %v4055 = vadd.f32 0.0, %v4054
      %v4056 = vpop.f32.mrb[0].mxu0
      %4057 = vdwg.mxu0
      %v4058 = vadd.f32 %v3699, %v3932
      %v4059 = vadd.f32 %v3700, %v3935
      %v4060 = vadd.f32 %v3701, %v3940
      %v4061 = vadd.f32 %v3702, %v3943
      %v4062 = vadd.f32 %v3703, %v3948
      %v4063 = vadd.f32 %v3704, %v3951
      %v4064 = vadd.f32 %v3705, %v3956
      %v4065 = vadd.f32 %v3706, %v3959
      %v4066 = vadd.f32 %v3707, %v3964
      %v4067 = vadd.f32 %v3708, %v3967
      %v4068 = vadd.f32 %v3709, %v3972
      %v4069 = vadd.f32 %v3710, %v3975
      %v4070 = vadd.f32 %v3711, %v3980
      %v4071 = vadd.f32 %v3712, %v3983
      %v4072 = vadd.f32 %v3713, %v3988
      %v4073 = vadd.f32 %v3714, %v3991
      %v4074 = vadd.f32 %v3715, %v3996
      %v4075 = vadd.f32 %v3716, %v3999
      %v4076 = vadd.f32 %v3717, %v4004
      %v4077 = vadd.f32 %v3718, %v4007
      %v4078 = vadd.f32 %v3719, %v4012
      %v4079 = vadd.f32 %v3720, %v4015
      %v4080 = vadd.f32 %v3721, %v4020
      %v4081 = vadd.f32 %v3722, %v4023
      %v4082 = vadd.f32 %v3723, %v4028
      %v4083 = vadd.f32 %v3724, %v4031
      %v4084 = vadd.f32 %v3725, %v4036
      %v4085 = vadd.f32 %v3726, %v4039
      %v4086 = vadd.f32 %v3727, %v4044
      %v4087 = vadd.f32 %v3728, %v4047
      %v4088 = vadd.f32 %v3729, %v4052
      %v4089 = vadd.f32 %v3730, %v4055
      %v4090 = vld [vmem:[%s3731] sm:$0xf]
      %v4091 = vld [vmem:[%s3731 + $0x4] sm:$0xf]
      %v4092 = vld [vmem:[%s3731 + $0x8] sm:$0x1]
      %v4093 = vld [vmem:[%s3731 + $0xc] sm:$0xf]
      %v4094 = vld [vmem:[%s3731 + $0x10] sm:$0xf]
      %v4095 = vld [vmem:[%s3731 + $0x14] sm:$0x1]
      %v4096 = vld [vmem:[%s3731 + $0x18] sm:$0xf]
      %v4097 = vld [vmem:[%s3731 + $0x1c] sm:$0xf]
      %v4098 = vld [vmem:[%s3731 + $0x20] sm:$0x1]
      %v4099 = vld [vmem:[%s3731 + $0x24] sm:$0xf]
      %v4100 = vld [vmem:[%s3731 + $0x28] sm:$0xf]
      %v4101 = vld [vmem:[%s3731 + $0x2c] sm:$0x1]
      %v4102 = vld [vmem:[%s3731 + $0x30] sm:$0xf]
      %v4103 = vld [vmem:[%s3731 + $0x34] sm:$0xf]
      %v4104 = vld [vmem:[%s3731 + $0x38] sm:$0x1]
      %v4105 = vld [vmem:[%s3731 + $0x3c] sm:$0xf]
      %v4106 = vld [vmem:[%s3731 + $0x40] sm:$0xf]
      %v4107 = vld [vmem:[%s3731 + $0x44] sm:$0x1]
      %v4108 = vld [vmem:[%s3731 + $0x48] sm:$0xf]
      %v4109 = vld [vmem:[%s3731 + $0x4c] sm:$0xf]
      %v4110 = vld [vmem:[%s3731 + $0x50] sm:$0x1]
      %v4111 = vld [vmem:[%s3731 + $0x54] sm:$0xf]
      %v4112 = vld [vmem:[%s3731 + $0x58] sm:$0xf]
      %v4113 = vld [vmem:[%s3731 + $0x5c] sm:$0x1]
      %v4114 = vld [vmem:[%s3731 + $0x60] sm:$0xf]
      %v4115 = vld [vmem:[%s3731 + $0x64] sm:$0xf]
      %v4116 = vld [vmem:[%s3731 + $0x68] sm:$0x1]
      %v4117 = vld [vmem:[%s3731 + $0x6c] sm:$0xf]
      %v4118 = vld [vmem:[%s3731 + $0x70] sm:$0xf]
      %v4119 = vld [vmem:[%s3731 + $0x74] sm:$0x1]
      %v4120 = vld [vmem:[%s3731 + $0x78] sm:$0xf]
      %v4121 = vld [vmem:[%s3731 + $0x7c] sm:$0xf]
      %v4122 = vld [vmem:[%s3731 + $0x80] sm:$0x1]
      %v4123 = vld [vmem:[%s3731 + $0x84] sm:$0xf]
      %v4124 = vld [vmem:[%s3731 + $0x88] sm:$0xf]
      %v4125 = vld [vmem:[%s3731 + $0x8c] sm:$0x1]
      %v4126 = vld [vmem:[%s3731 + $0x90] sm:$0xf]
      %v4127 = vld [vmem:[%s3731 + $0x94] sm:$0xf]
      %v4128 = vld [vmem:[%s3731 + $0x98] sm:$0x1]
      %v4129 = vld [vmem:[%s3731 + $0x9c] sm:$0xf]
      %v4130 = vld [vmem:[%s3731 + $0xa0] sm:$0xf]
      %v4131 = vld [vmem:[%s3731 + $0xa4] sm:$0x1]
      %v4132 = vld [vmem:[%s3731 + $0xa8] sm:$0xf]
      %v4133 = vld [vmem:[%s3731 + $0xac] sm:$0xf]
      %v4134 = vld [vmem:[%s3731 + $0xb0] sm:$0x1]
      %v4135 = vld [vmem:[%s3731 + $0xb4] sm:$0xf]
      %v4136 = vld [vmem:[%s3731 + $0xb8] sm:$0xf]
      %v4137 = vld [vmem:[%s3731 + $0xbc] sm:$0x1]
      %v4139 = vshrl.u32 %v4090, 16
      %v4141 = vrot.slane %v4139, 4
      %v4142 = vshll.u32 %v4090, 16
      %v4144 = vrot.slane %v4142, 5
      %v4145 = vor.u32 %v4141, %v4144
      %v4146 = vrot.slane %v4145, 4
      %v4148 = vshll.u32 %v4091, 16
      %v4150 = vrot.slane %v4148, 5
      %v4151 = vsel %vm779, %v4146, %v4150
      %v4152 = vshrl.u32 %v4091, 16
      %v4154 = vrot.slane %v4152, 4
      %v4155 = vor.u32 %v4154, %v4150
      %v4156 = vrot.slane %v4155, 4
      %v4158 = vshll.u32 %v4092, 16
      %v4160 = vrot.slane %v4158, 5
      %v4161 = vsel %vm779, %v4156, %v4160
      %v4163 = vshrl.u32 %v4093, 16
      %v4165 = vrot.slane %v4163, 4
      %v4166 = vshll.u32 %v4093, 16
      %v4168 = vrot.slane %v4166, 5
      %v4169 = vor.u32 %v4165, %v4168
      %v4170 = vrot.slane %v4169, 4
      %v4172 = vshll.u32 %v4094, 16
      %v4174 = vrot.slane %v4172, 5
      %v4175 = vsel %vm779, %v4170, %v4174
      %v4176 = vshrl.u32 %v4094, 16
      %v4178 = vrot.slane %v4176, 4
      %v4179 = vor.u32 %v4178, %v4174
      %v4180 = vrot.slane %v4179, 4
      %v4182 = vshll.u32 %v4095, 16
      %v4184 = vrot.slane %v4182, 5
      %v4185 = vsel %vm779, %v4180, %v4184
      %v4187 = vshrl.u32 %v4096, 16
      %v4189 = vrot.slane %v4187, 4
      %v4190 = vshll.u32 %v4096, 16
      %v4192 = vrot.slane %v4190, 5
      %v4193 = vor.u32 %v4189, %v4192
      %v4194 = vrot.slane %v4193, 4
      %v4196 = vshll.u32 %v4097, 16
      %v4198 = vrot.slane %v4196, 5
      %v4199 = vsel %vm779, %v4194, %v4198
      %v4200 = vshrl.u32 %v4097, 16
      %v4202 = vrot.slane %v4200, 4
      %v4203 = vor.u32 %v4202, %v4198
      %v4204 = vrot.slane %v4203, 4
      %v4206 = vshll.u32 %v4098, 16
      %v4208 = vrot.slane %v4206, 5
      %v4209 = vsel %vm779, %v4204, %v4208
      %v4211 = vshrl.u32 %v4099, 16
      %v4213 = vrot.slane %v4211, 4
      %v4214 = vshll.u32 %v4099, 16
      %v4216 = vrot.slane %v4214, 5
      %v4217 = vor.u32 %v4213, %v4216
      %v4218 = vrot.slane %v4217, 4
      %v4220 = vshll.u32 %v4100, 16
      %v4222 = vrot.slane %v4220, 5
      %v4223 = vsel %vm779, %v4218, %v4222
      %v4224 = vshrl.u32 %v4100, 16
      %v4226 = vrot.slane %v4224, 4
      %v4227 = vor.u32 %v4226, %v4222
      %v4228 = vrot.slane %v4227, 4
      %v4230 = vshll.u32 %v4101, 16
      %v4232 = vrot.slane %v4230, 5
      %v4233 = vsel %vm779, %v4228, %v4232
      %v4235 = vshrl.u32 %v4102, 16
      %v4237 = vrot.slane %v4235, 4
      %v4238 = vshll.u32 %v4102, 16
      %v4240 = vrot.slane %v4238, 5
      %v4241 = vor.u32 %v4237, %v4240
      %v4242 = vrot.slane %v4241, 4
      %v4244 = vshll.u32 %v4103, 16
      %v4246 = vrot.slane %v4244, 5
      %v4247 = vsel %vm779, %v4242, %v4246
      %v4248 = vshrl.u32 %v4103, 16
      %v4250 = vrot.slane %v4248, 4
      %v4251 = vor.u32 %v4250, %v4246
      %v4252 = vrot.slane %v4251, 4
      %v4254 = vshll.u32 %v4104, 16
      %v4256 = vrot.slane %v4254, 5
      %v4257 = vsel %vm779, %v4252, %v4256
      %v4259 = vshrl.u32 %v4105, 16
      %v4261 = vrot.slane %v4259, 4
      %v4262 = vshll.u32 %v4105, 16
      %v4264 = vrot.slane %v4262, 5
      %v4265 = vor.u32 %v4261, %v4264
      %v4266 = vrot.slane %v4265, 4
      %v4268 = vshll.u32 %v4106, 16
      %v4270 = vrot.slane %v4268, 5
      %v4271 = vsel %vm779, %v4266, %v4270
      %v4272 = vshrl.u32 %v4106, 16
      %v4274 = vrot.slane %v4272, 4
      %v4275 = vor.u32 %v4274, %v4270
      %v4276 = vrot.slane %v4275, 4
      %v4278 = vshll.u32 %v4107, 16
      %v4280 = vrot.slane %v4278, 5
      %v4281 = vsel %vm779, %v4276, %v4280
      %v4283 = vshrl.u32 %v4108, 16
      %v4285 = vrot.slane %v4283, 4
      %v4286 = vshll.u32 %v4108, 16
      %v4288 = vrot.slane %v4286, 5
      %v4289 = vor.u32 %v4285, %v4288
      %v4290 = vrot.slane %v4289, 4
      %v4292 = vshll.u32 %v4109, 16
      %v4294 = vrot.slane %v4292, 5
      %v4295 = vsel %vm779, %v4290, %v4294
      %v4296 = vshrl.u32 %v4109, 16
      %v4298 = vrot.slane %v4296, 4
      %v4299 = vor.u32 %v4298, %v4294
      %v4300 = vrot.slane %v4299, 4
      %v4302 = vshll.u32 %v4110, 16
      %v4304 = vrot.slane %v4302, 5
      %v4305 = vsel %vm779, %v4300, %v4304
      %v4307 = vshrl.u32 %v4111, 16
      %v4309 = vrot.slane %v4307, 4
      %v4310 = vshll.u32 %v4111, 16
      %v4312 = vrot.slane %v4310, 5
      %v4313 = vor.u32 %v4309, %v4312
      %v4314 = vrot.slane %v4313, 4
      %v4316 = vshll.u32 %v4112, 16
      %v4318 = vrot.slane %v4316, 5
      %v4319 = vsel %vm779, %v4314, %v4318
      %v4320 = vshrl.u32 %v4112, 16
      %v4322 = vrot.slane %v4320, 4
      %v4323 = vor.u32 %v4322, %v4318
      %v4324 = vrot.slane %v4323, 4
      %v4326 = vshll.u32 %v4113, 16
      %v4328 = vrot.slane %v4326, 5
      %v4329 = vsel %vm779, %v4324, %v4328
      %v4331 = vshrl.u32 %v4114, 16
      %v4333 = vrot.slane %v4331, 4
      %v4334 = vshll.u32 %v4114, 16
      %v4336 = vrot.slane %v4334, 5
      %v4337 = vor.u32 %v4333, %v4336
      %v4338 = vrot.slane %v4337, 4
      %v4340 = vshll.u32 %v4115, 16
      %v4342 = vrot.slane %v4340, 5
      %v4343 = vsel %vm779, %v4338, %v4342
      %v4344 = vshrl.u32 %v4115, 16
      %v4346 = vrot.slane %v4344, 4
      %v4347 = vor.u32 %v4346, %v4342
      %v4348 = vrot.slane %v4347, 4
      %v4350 = vshll.u32 %v4116, 16
      %v4352 = vrot.slane %v4350, 5
      %v4353 = vsel %vm779, %v4348, %v4352
      %v4355 = vshrl.u32 %v4117, 16
      %v4357 = vrot.slane %v4355, 4
      %v4358 = vshll.u32 %v4117, 16
      %v4360 = vrot.slane %v4358, 5
      %v4361 = vor.u32 %v4357, %v4360
      %v4362 = vrot.slane %v4361, 4
      %v4364 = vshll.u32 %v4118, 16
      %v4366 = vrot.slane %v4364, 5
      %v4367 = vsel %vm779, %v4362, %v4366
      %v4368 = vshrl.u32 %v4118, 16
      %v4370 = vrot.slane %v4368, 4
      %v4371 = vor.u32 %v4370, %v4366
      %v4372 = vrot.slane %v4371, 4
      %v4374 = vshll.u32 %v4119, 16
      %v4376 = vrot.slane %v4374, 5
      %v4377 = vsel %vm779, %v4372, %v4376
      %v4379 = vshrl.u32 %v4120, 16
      %v4381 = vrot.slane %v4379, 4
      %v4382 = vshll.u32 %v4120, 16
      %v4384 = vrot.slane %v4382, 5
      %v4385 = vor.u32 %v4381, %v4384
      %v4386 = vrot.slane %v4385, 4
      %v4388 = vshll.u32 %v4121, 16
      %v4390 = vrot.slane %v4388, 5
      %v4391 = vsel %vm779, %v4386, %v4390
      %v4392 = vshrl.u32 %v4121, 16
      %v4394 = vrot.slane %v4392, 4
      %v4395 = vor.u32 %v4394, %v4390
      %v4396 = vrot.slane %v4395, 4
      %v4398 = vshll.u32 %v4122, 16
      %v4400 = vrot.slane %v4398, 5
      %v4401 = vsel %vm779, %v4396, %v4400
      %v4403 = vshrl.u32 %v4123, 16
      %v4405 = vrot.slane %v4403, 4
      %v4406 = vshll.u32 %v4123, 16
      %v4408 = vrot.slane %v4406, 5
      %v4409 = vor.u32 %v4405, %v4408
      %v4410 = vrot.slane %v4409, 4
      %v4412 = vshll.u32 %v4124, 16
      %v4414 = vrot.slane %v4412, 5
      %v4415 = vsel %vm779, %v4410, %v4414
      %v4416 = vshrl.u32 %v4124, 16
      %v4418 = vrot.slane %v4416, 4
      %v4419 = vor.u32 %v4418, %v4414
      %v4420 = vrot.slane %v4419, 4
      %v4422 = vshll.u32 %v4125, 16
      %v4424 = vrot.slane %v4422, 5
      %v4425 = vsel %vm779, %v4420, %v4424
      %v4427 = vshrl.u32 %v4126, 16
      %v4429 = vrot.slane %v4427, 4
      %v4430 = vshll.u32 %v4126, 16
      %v4432 = vrot.slane %v4430, 5
      %v4433 = vor.u32 %v4429, %v4432
      %v4434 = vrot.slane %v4433, 4
      %v4436 = vshll.u32 %v4127, 16
      %v4438 = vrot.slane %v4436, 5
      %v4439 = vsel %vm779, %v4434, %v4438
      %v4440 = vshrl.u32 %v4127, 16
      %v4442 = vrot.slane %v4440, 4
      %v4443 = vor.u32 %v4442, %v4438
      %v4444 = vrot.slane %v4443, 4
      %v4446 = vshll.u32 %v4128, 16
      %v4448 = vrot.slane %v4446, 5
      %v4449 = vsel %vm779, %v4444, %v4448
      %v4451 = vshrl.u32 %v4129, 16
      %v4453 = vrot.slane %v4451, 4
      %v4454 = vshll.u32 %v4129, 16
      %v4456 = vrot.slane %v4454, 5
      %v4457 = vor.u32 %v4453, %v4456
      %v4458 = vrot.slane %v4457, 4
      %v4460 = vshll.u32 %v4130, 16
      %v4462 = vrot.slane %v4460, 5
      %v4463 = vsel %vm779, %v4458, %v4462
      %v4464 = vshrl.u32 %v4130, 16
      %v4466 = vrot.slane %v4464, 4
      %v4467 = vor.u32 %v4466, %v4462
      %v4468 = vrot.slane %v4467, 4
      %v4470 = vshll.u32 %v4131, 16
      %v4472 = vrot.slane %v4470, 5
      %v4473 = vsel %vm779, %v4468, %v4472
      %v4475 = vshrl.u32 %v4132, 16
      %v4477 = vrot.slane %v4475, 4
      %v4478 = vshll.u32 %v4132, 16
      %v4480 = vrot.slane %v4478, 5
      %v4481 = vor.u32 %v4477, %v4480
      %v4482 = vrot.slane %v4481, 4
      %v4484 = vshll.u32 %v4133, 16
      %v4486 = vrot.slane %v4484, 5
      %v4487 = vsel %vm779, %v4482, %v4486
      %v4488 = vshrl.u32 %v4133, 16
      %v4490 = vrot.slane %v4488, 4
      %v4491 = vor.u32 %v4490, %v4486
      %v4492 = vrot.slane %v4491, 4
      %v4494 = vshll.u32 %v4134, 16
      %v4496 = vrot.slane %v4494, 5
      %v4497 = vsel %vm779, %v4492, %v4496
      %v4499 = vshrl.u32 %v4135, 16
      %v4501 = vrot.slane %v4499, 4
      %v4502 = vshll.u32 %v4135, 16
      %v4504 = vrot.slane %v4502, 5
      %v4505 = vor.u32 %v4501, %v4504
      %v4506 = vrot.slane %v4505, 4
      %v4508 = vshll.u32 %v4136, 16
      %v4510 = vrot.slane %v4508, 5
      %v4511 = vsel %vm779, %v4506, %v4510
      %v4512 = vshrl.u32 %v4136, 16
      %v4514 = vrot.slane %v4512, 4
      %v4515 = vor.u32 %v4514, %v4510
      %v4516 = vrot.slane %v4515, 4
      %v4518 = vshll.u32 %v4137, 16
      %v4520 = vrot.slane %v4518, 5
      %v4521 = vsel %vm779, %v4516, %v4520
      %s4522 = scalar_lea.vmem %s1, 14
      %v4523 = vld [vmem:[%s4522] sm:$0x3]
      %v4524 = vunpack.c.l.b16 %v4151
      %v4525 = vunpack.c.l.b16 %v4161
      %v4526 = vunpack.c.l.b16 %v4175
      %v4527 = vunpack.c.l.b16 %v4185
      %v4528 = vunpack.c.l.b16 %v4199
      %v4529 = vunpack.c.l.b16 %v4209
      %v4530 = vunpack.c.l.b16 %v4223
      %v4531 = vunpack.c.l.b16 %v4233
      %v4532 = vunpack.c.l.b16 %v4247
      %v4533 = vunpack.c.l.b16 %v4257
      %v4534 = vunpack.c.l.b16 %v4271
      %v4535 = vunpack.c.l.b16 %v4281
      %v4536 = vunpack.c.l.b16 %v4295
      %v4537 = vunpack.c.l.b16 %v4305
      %v4538 = vunpack.c.l.b16 %v4319
      %v4539 = vunpack.c.l.b16 %v4329
      %v4540 = vunpack.c.l.b16 %v4343
      %v4541 = vunpack.c.l.b16 %v4353
      %v4542 = vunpack.c.l.b16 %v4367
      %v4543 = vunpack.c.l.b16 %v4377
      %v4544 = vunpack.c.l.b16 %v4391
      %v4545 = vunpack.c.l.b16 %v4401
      %v4546 = vunpack.c.l.b16 %v4415
      %v4547 = vunpack.c.l.b16 %v4425
      %v4548 = vunpack.c.l.b16 %v4439
      %v4549 = vunpack.c.l.b16 %v4449
      %v4550 = vunpack.c.l.b16 %v4463
      %v4551 = vunpack.c.l.b16 %v4473
      %v4552 = vunpack.c.l.b16 %v4487
      %v4553 = vunpack.c.l.b16 %v4497
      %v4554 = vunpack.c.l.b16 %v4511
      %v4555 = vunpack.c.l.b16 %v4521
      %v4556 = vpack.c.b16 %v4525, %v4524
      %v4557 = vpack.c.b16 %v4527, %v4526
      %v4558 = vpack.c.b16 %v4529, %v4528
      %v4559 = vpack.c.b16 %v4531, %v4530
      %v4560 = vpack.c.b16 %v4533, %v4532
      %v4561 = vpack.c.b16 %v4535, %v4534
      %v4562 = vpack.c.b16 %v4537, %v4536
      %v4563 = vpack.c.b16 %v4539, %v4538
      %v4564 = vpack.c.b16 %v4541, %v4540
      %v4565 = vpack.c.b16 %v4543, %v4542
      %v4566 = vpack.c.b16 %v4545, %v4544
      %v4567 = vpack.c.b16 %v4547, %v4546
      %v4568 = vpack.c.b16 %v4549, %v4548
      %v4569 = vpack.c.b16 %v4551, %v4550
      %v4570 = vpack.c.b16 %v4553, %v4552
      %v4571 = vpack.c.b16 %v4555, %v4554
      %v4573 = vsel %vm1214, %v4556, 0
      %v4576 = vsel %vm1214, %v4557, 0
      %v4579 = vsel %vm1214, %v4558, 0
      %v4582 = vsel %vm1214, %v4559, 0
      %v4585 = vsel %vm1214, %v4560, 0
      %v4588 = vsel %vm1214, %v4561, 0
      %v4591 = vsel %vm1214, %v4562, 0
      %v4594 = vsel %vm1214, %v4563, 0
      %v4597 = vsel %vm1214, %v4564, 0
      %v4600 = vsel %vm1214, %v4565, 0
      %v4603 = vsel %vm1214, %v4566, 0
      %v4606 = vsel %vm1214, %v4567, 0
      %v4609 = vsel %vm1214, %v4568, 0
      %v4612 = vsel %vm1214, %v4569, 0
      %v4615 = vsel %vm1214, %v4570, 0
      %v4618 = vsel %vm1214, %v4571, 0
      %v4621 = vsel %vm1263, %v4523, 0
      %4623 = vmatprep.subr.bf16.mxu0 0
      %4624 = vmatpush1.bf16.msra.mxu0 %v4621
      %4625 = vmatprep.subr.bf16.mxu0 0
      %4626 = vmatpush1.bf16.msra.mxu0 0
      %4627 = vmatprep.subr.bf16.mxu0 0
      %4628 = vmatpush1.bf16.msra.mxu0 0
      %4629 = vmatprep.subr.bf16.mxu0 0
      %4630 = vmatpush1.bf16.msra.mxu0 0
      %4631 = vmatprep.subr.bf16.mxu0 0
      %4632 = vmatpush1.bf16.msra.mxu0 0
      %4633 = vmatprep.subr.bf16.mxu0 0
      %4634 = vmatpush1.bf16.msra.mxu0 0
      %4635 = vmatprep.subr.bf16.mxu0 0
      %4636 = vmatpush1.bf16.msra.mxu0 0
      %4637 = vmatprep.subr.bf16.mxu0 0
      %4638 = vmatpush1.bf16.msra.mxu0 0
      %4639 = vmatprep.subr.bf16.mxu0 0
      %4640 = vmatpush1.bf16.msra.mxu0 0
      %4641 = vmatprep.subr.bf16.mxu0 0
      %4642 = vmatpush1.bf16.msra.mxu0 0
      %4643 = vmatprep.subr.bf16.mxu0 0
      %4644 = vmatpush1.bf16.msra.mxu0 0
      %4645 = vmatprep.subr.bf16.mxu0 0
      %4646 = vmatpush1.bf16.msra.mxu0 0
      %4647 = vmatprep.subr.bf16.mxu0 0
      %4648 = vmatpush1.bf16.msra.mxu0 0
      %4649 = vmatprep.subr.bf16.mxu0 0
      %4650 = vmatpush1.bf16.msra.mxu0 0
      %4651 = vmatprep.subr.bf16.mxu0 0
      %4652 = vmatpush1.bf16.msra.mxu0 0
      %4653 = vmatprep.subr.bf16.mxu0 0
      %4654 = vmatpush1.bf16.msra.mxu0 0
      %4655 = vmatprep.mubr.bf16.mxu0 0
      %4656 = vmatmul.mubr.bf16.gmra.mrb[0].mxu0 %v4573
      %v4657 = vpop.f32.mrb[0].mxu0
      %v4658 = vadd.f32 0.0, %v4657
      %v4659 = vpop.f32.mrb[0].mxu0
      %v4660 = vpop.f32.mrb[0].mxu0
      %v4661 = vadd.f32 0.0, %v4660
      %v4662 = vpop.f32.mrb[0].mxu0
      %4663 = vmatprep.mubr.bf16.mxu0 0
      %4664 = vmatmul.mubr.bf16.gmra.mrb[0].mxu0 %v4576
      %v4665 = vpop.f32.mrb[0].mxu0
      %v4666 = vadd.f32 0.0, %v4665
      %v4667 = vpop.f32.mrb[0].mxu0
      %v4668 = vpop.f32.mrb[0].mxu0
      %v4669 = vadd.f32 0.0, %v4668
      %v4670 = vpop.f32.mrb[0].mxu0
      %4671 = vmatprep.mubr.bf16.mxu0 0
      %4672 = vmatmul.mubr.bf16.gmra.mrb[0].mxu0 %v4579
      %v4673 = vpop.f32.mrb[0].mxu0
      %v4674 = vadd.f32 0.0, %v4673
      %v4675 = vpop.f32.mrb[0].mxu0
      %v4676 = vpop.f32.mrb[0].mxu0
      %v4677 = vadd.f32 0.0, %v4676
      %v4678 = vpop.f32.mrb[0].mxu0
      %4679 = vmatprep.mubr.bf16.mxu0 0
      %4680 = vmatmul.mubr.bf16.gmra.mrb[0].mxu0 %v4582
      %v4681 = vpop.f32.mrb[0].mxu0
      %v4682 = vadd.f32 0.0, %v4681
      %v4683 = vpop.f32.mrb[0].mxu0
      %v4684 = vpop.f32.mrb[0].mxu0
      %v4685 = vadd.f32 0.0, %v4684
      %v4686 = vpop.f32.mrb[0].mxu0
      %4687 = vmatprep.mubr.bf16.mxu0 0
      %4688 = vmatmul.mubr.bf16.gmra.mrb[0].mxu0 %v4585
      %v4689 = vpop.f32.mrb[0].mxu0
      %v4690 = vadd.f32 0.0, %v4689
      %v4691 = vpop.f32.mrb[0].mxu0
      %v4692 = vpop.f32.mrb[0].mxu0
      %v4693 = vadd.f32 0.0, %v4692
      %v4694 = vpop.f32.mrb[0].mxu0
      %4695 = vmatprep.mubr.bf16.mxu0 0
      %4696 = vmatmul.mubr.bf16.gmra.mrb[0].mxu0 %v4588
      %v4697 = vpop.f32.mrb[0].mxu0
      %v4698 = vadd.f32 0.0, %v4697
      %v4699 = vpop.f32.mrb[0].mxu0
      %v4700 = vpop.f32.mrb[0].mxu0
      %v4701 = vadd.f32 0.0, %v4700
      %v4702 = vpop.f32.mrb[0].mxu0
      %4703 = vmatprep.mubr.bf16.mxu0 0
      %4704 = vmatmul.mubr.bf16.gmra.mrb[0].mxu0 %v4591
      %v4705 = vpop.f32.mrb[0].mxu0
      %v4706 = vadd.f32 0.0, %v4705
      %v4707 = vpop.f32.mrb[0].mxu0
      %v4708 = vpop.f32.mrb[0].mxu0
      %v4709 = vadd.f32 0.0, %v4708
      %v4710 = vpop.f32.mrb[0].mxu0
      %4711 = vmatprep.mubr.bf16.mxu0 0
      %4712 = vmatmul.mubr.bf16.gmra.mrb[0].mxu0 %v4594
      %v4713 = vpop.f32.mrb[0].mxu0
      %v4714 = vadd.f32 0.0, %v4713
      %v4715 = vpop.f32.mrb[0].mxu0
      %v4716 = vpop.f32.mrb[0].mxu0
      %v4717 = vadd.f32 0.0, %v4716
      %v4718 = vpop.f32.mrb[0].mxu0
      %4719 = vmatprep.mubr.bf16.mxu0 0
      %4720 = vmatmul.mubr.bf16.gmra.mrb[0].mxu0 %v4597
      %v4721 = vpop.f32.mrb[0].mxu0
      %v4722 = vadd.f32 0.0, %v4721
      %v4723 = vpop.f32.mrb[0].mxu0
      %v4724 = vpop.f32.mrb[0].mxu0
      %v4725 = vadd.f32 0.0, %v4724
      %v4726 = vpop.f32.mrb[0].mxu0
      %4727 = vmatprep.mubr.bf16.mxu0 0
      %4728 = vmatmul.mubr.bf16.gmra.mrb[0].mxu0 %v4600
      %v4729 = vpop.f32.mrb[0].mxu0
      %v4730 = vadd.f32 0.0, %v4729
      %v4731 = vpop.f32.mrb[0].mxu0
      %v4732 = vpop.f32.mrb[0].mxu0
      %v4733 = vadd.f32 0.0, %v4732
      %v4734 = vpop.f32.mrb[0].mxu0
      %4735 = vmatprep.mubr.bf16.mxu0 0
      %4736 = vmatmul.mubr.bf16.gmra.mrb[0].mxu0 %v4603
      %v4737 = vpop.f32.mrb[0].mxu0
      %v4738 = vadd.f32 0.0, %v4737
      %v4739 = vpop.f32.mrb[0].mxu0
      %v4740 = vpop.f32.mrb[0].mxu0
      %v4741 = vadd.f32 0.0, %v4740
      %v4742 = vpop.f32.mrb[0].mxu0
      %4743 = vmatprep.mubr.bf16.mxu0 0
      %4744 = vmatmul.mubr.bf16.gmra.mrb[0].mxu0 %v4606
      %v4745 = vpop.f32.mrb[0].mxu0
      %v4746 = vadd.f32 0.0, %v4745
      %v4747 = vpop.f32.mrb[0].mxu0
      %v4748 = vpop.f32.mrb[0].mxu0
      %v4749 = vadd.f32 0.0, %v4748
      %v4750 = vpop.f32.mrb[0].mxu0
      %4751 = vmatprep.mubr.bf16.mxu0 0
      %4752 = vmatmul.mubr.bf16.gmra.mrb[0].mxu0 %v4609
      %v4753 = vpop.f32.mrb[0].mxu0
      %v4754 = vadd.f32 0.0, %v4753
      %v4755 = vpop.f32.mrb[0].mxu0
      %v4756 = vpop.f32.mrb[0].mxu0
      %v4757 = vadd.f32 0.0, %v4756
      %v4758 = vpop.f32.mrb[0].mxu0
      %4759 = vmatprep.mubr.bf16.mxu0 0
      %4760 = vmatmul.mubr.bf16.gmra.mrb[0].mxu0 %v4612
      %v4761 = vpop.f32.mrb[0].mxu0
      %v4762 = vadd.f32 0.0, %v4761
      %v4763 = vpop.f32.mrb[0].mxu0
      %v4764 = vpop.f32.mrb[0].mxu0
      %v4765 = vadd.f32 0.0, %v4764
      %v4766 = vpop.f32.mrb[0].mxu0
      %4767 = vmatprep.mubr.bf16.mxu0 0
      %4768 = vmatmul.mubr.bf16.gmra.mrb[0].mxu0 %v4615
      %v4769 = vpop.f32.mrb[0].mxu0
      %v4770 = vadd.f32 0.0, %v4769
      %v4771 = vpop.f32.mrb[0].mxu0
      %v4772 = vpop.f32.mrb[0].mxu0
      %v4773 = vadd.f32 0.0, %v4772
      %v4774 = vpop.f32.mrb[0].mxu0
      %4775 = vmatprep.mubr.bf16.mxu0 0
      %4776 = vmatmul.mubr.bf16.gmra.mrb[0].mxu0 %v4618
      %v4777 = vpop.f32.mrb[0].mxu0
      %v4778 = vadd.f32 0.0, %v4777
      %v4779 = vpop.f32.mrb[0].mxu0
      %v4780 = vpop.f32.mrb[0].mxu0
      %v4781 = vadd.f32 0.0, %v4780
      %v4782 = vpop.f32.mrb[0].mxu0
      %4783 = vdwg.mxu0
      %v4784 = vadd.f32 %v4058, %v4658
      %v4785 = vadd.f32 %v4059, %v4661
      %v4786 = vadd.f32 %v4060, %v4666
      %v4787 = vadd.f32 %v4061, %v4669
      %v4788 = vadd.f32 %v4062, %v4674
      %v4789 = vadd.f32 %v4063, %v4677
      %v4790 = vadd.f32 %v4064, %v4682
      %v4791 = vadd.f32 %v4065, %v4685
      %v4792 = vadd.f32 %v4066, %v4690
      %v4793 = vadd.f32 %v4067, %v4693
      %v4794 = vadd.f32 %v4068, %v4698
      %v4795 = vadd.f32 %v4069, %v4701
      %v4796 = vadd.f32 %v4070, %v4706
      %v4797 = vadd.f32 %v4071, %v4709
      %v4798 = vadd.f32 %v4072, %v4714
      %v4799 = vadd.f32 %v4073, %v4717
      %v4800 = vadd.f32 %v4074, %v4722
      %v4801 = vadd.f32 %v4075, %v4725
      %v4802 = vadd.f32 %v4076, %v4730
      %v4803 = vadd.f32 %v4077, %v4733
      %v4804 = vadd.f32 %v4078, %v4738
      %v4805 = vadd.f32 %v4079, %v4741
      %v4806 = vadd.f32 %v4080, %v4746
      %v4807 = vadd.f32 %v4081, %v4749
      %v4808 = vadd.f32 %v4082, %v4754
      %v4809 = vadd.f32 %v4083, %v4757
      %v4810 = vadd.f32 %v4084, %v4762
      %v4811 = vadd.f32 %v4085, %v4765
      %v4812 = vadd.f32 %v4086, %v4770
      %v4813 = vadd.f32 %v4087, %v4773
      %v4814 = vadd.f32 %v4088, %v4778
      %v4815 = vadd.f32 %v4089, %v4781
      %v4816 = vld [vmem:[%s3731] sm:$0xe]
      %v4817 = vld [vmem:[%s3731 + $0xc] sm:$0xe]
      %v4818 = vld [vmem:[%s3731 + $0x18] sm:$0xe]
      %v4819 = vld [vmem:[%s3731 + $0x24] sm:$0xe]
      %v4820 = vld [vmem:[%s3731 + $0x30] sm:$0xe]
      %v4821 = vld [vmem:[%s3731 + $0x3c] sm:$0xe]
      %v4822 = vld [vmem:[%s3731 + $0x48] sm:$0xe]
      %v4823 = vld [vmem:[%s3731 + $0x54] sm:$0xe]
      %v4824 = vld [vmem:[%s3731 + $0x60] sm:$0xe]
      %v4825 = vld [vmem:[%s3731 + $0x6c] sm:$0xe]
      %v4826 = vld [vmem:[%s3731 + $0x78] sm:$0xe]
      %v4827 = vld [vmem:[%s3731 + $0x84] sm:$0xe]
      %v4828 = vld [vmem:[%s3731 + $0x90] sm:$0xe]
      %v4829 = vld [vmem:[%s3731 + $0x9c] sm:$0xe]
      %v4830 = vld [vmem:[%s3731 + $0xa8] sm:$0xe]
      %v4831 = vld [vmem:[%s3731 + $0xb4] sm:$0xe]
      %v4880 = vrot.slane %v4816, 5
      %v4881 = vrot.slane %v4880, 4
      %v4882 = vrot.slane %v4091, 5
      %v4883 = vsel %vm1770, %v4881, %v4882
      %v4884 = vrot.slane %v4882, 4
      %v4885 = vrot.slane %v4092, 5
      %v4886 = vsel %vm1770, %v4884, %v4885
      %v4887 = vrot.slane %v4817, 5
      %v4888 = vrot.slane %v4887, 4
      %v4889 = vrot.slane %v4094, 5
      %v4890 = vsel %vm1770, %v4888, %v4889
      %v4891 = vrot.slane %v4889, 4
      %v4892 = vrot.slane %v4095, 5
      %v4893 = vsel %vm1770, %v4891, %v4892
      %v4894 = vrot.slane %v4818, 5
      %v4895 = vrot.slane %v4894, 4
      %v4896 = vrot.slane %v4097, 5
      %v4897 = vsel %vm1770, %v4895, %v4896
      %v4898 = vrot.slane %v4896, 4
      %v4899 = vrot.slane %v4098, 5
      %v4900 = vsel %vm1770, %v4898, %v4899
      %v4901 = vrot.slane %v4819, 5
      %v4902 = vrot.slane %v4901, 4
      %v4903 = vrot.slane %v4100, 5
      %v4904 = vsel %vm1770, %v4902, %v4903
      %v4905 = vrot.slane %v4903, 4
      %v4906 = vrot.slane %v4101, 5
      %v4907 = vsel %vm1770, %v4905, %v4906
      %v4908 = vrot.slane %v4820, 5
      %v4909 = vrot.slane %v4908, 4
      %v4910 = vrot.slane %v4103, 5
      %v4911 = vsel %vm1770, %v4909, %v4910
      %v4912 = vrot.slane %v4910, 4
      %v4913 = vrot.slane %v4104, 5
      %v4914 = vsel %vm1770, %v4912, %v4913
      %v4915 = vrot.slane %v4821, 5
      %v4916 = vrot.slane %v4915, 4
      %v4917 = vrot.slane %v4106, 5
      %v4918 = vsel %vm1770, %v4916, %v4917
      %v4919 = vrot.slane %v4917, 4
      %v4920 = vrot.slane %v4107, 5
      %v4921 = vsel %vm1770, %v4919, %v4920
      %v4922 = vrot.slane %v4822, 5
      %v4923 = vrot.slane %v4922, 4
      %v4924 = vrot.slane %v4109, 5
      %v4925 = vsel %vm1770, %v4923, %v4924
      %v4926 = vrot.slane %v4924, 4
      %v4927 = vrot.slane %v4110, 5
      %v4928 = vsel %vm1770, %v4926, %v4927
      %v4929 = vrot.slane %v4823, 5
      %v4930 = vrot.slane %v4929, 4
      %v4931 = vrot.slane %v4112, 5
      %v4932 = vsel %vm1770, %v4930, %v4931
      %v4933 = vrot.slane %v4931, 4
      %v4934 = vrot.slane %v4113, 5
      %v4935 = vsel %vm1770, %v4933, %v4934
      %v4936 = vrot.slane %v4824, 5
      %v4937 = vrot.slane %v4936, 4
      %v4938 = vrot.slane %v4115, 5
      %v4939 = vsel %vm1770, %v4937, %v4938
      %v4940 = vrot.slane %v4938, 4
      %v4941 = vrot.slane %v4116, 5
      %v4942 = vsel %vm1770, %v4940, %v4941
      %v4943 = vrot.slane %v4825, 5
      %v4944 = vrot.slane %v4943, 4
      %v4945 = vrot.slane %v4118, 5
      %v4946 = vsel %vm1770, %v4944, %v4945
      %v4947 = vrot.slane %v4945, 4
      %v4948 = vrot.slane %v4119, 5
      %v4949 = vsel %vm1770, %v4947, %v4948
      %v4950 = vrot.slane %v4826, 5
      %v4951 = vrot.slane %v4950, 4
      %v4952 = vrot.slane %v4121, 5
      %v4953 = vsel %vm1770, %v4951, %v4952
      %v4954 = vrot.slane %v4952, 4
      %v4955 = vrot.slane %v4122, 5
      %v4956 = vsel %vm1770, %v4954, %v4955
      %v4957 = vrot.slane %v4827, 5
      %v4958 = vrot.slane %v4957, 4
      %v4959 = vrot.slane %v4124, 5
      %v4960 = vsel %vm1770, %v4958, %v4959
      %v4961 = vrot.slane %v4959, 4
      %v4962 = vrot.slane %v4125, 5
      %v4963 = vsel %vm1770, %v4961, %v4962
      %v4964 = vrot.slane %v4828, 5
      %v4965 = vrot.slane %v4964, 4
      %v4966 = vrot.slane %v4127, 5
      %v4967 = vsel %vm1770, %v4965, %v4966
      %v4968 = vrot.slane %v4966, 4
      %v4969 = vrot.slane %v4128, 5
      %v4970 = vsel %vm1770, %v4968, %v4969
      %v4971 = vrot.slane %v4829, 5
      %v4972 = vrot.slane %v4971, 4
      %v4973 = vrot.slane %v4130, 5
      %v4974 = vsel %vm1770, %v4972, %v4973
      %v4975 = vrot.slane %v4973, 4
      %v4976 = vrot.slane %v4131, 5
      %v4977 = vsel %vm1770, %v4975, %v4976
      %v4978 = vrot.slane %v4830, 5
      %v4979 = vrot.slane %v4978, 4
      %v4980 = vrot.slane %v4133, 5
      %v4981 = vsel %vm1770, %v4979, %v4980
      %v4982 = vrot.slane %v4980, 4
      %v4983 = vrot.slane %v4134, 5
      %v4984 = vsel %vm1770, %v4982, %v4983
      %v4985 = vrot.slane %v4831, 5
      %v4986 = vrot.slane %v4985, 4
      %v4987 = vrot.slane %v4136, 5
      %v4988 = vsel %vm1770, %v4986, %v4987
      %v4989 = vrot.slane %v4987, 4
      %v4990 = vrot.slane %v4137, 5
      %v4991 = vsel %vm1770, %v4989, %v4990
      %s4992 = scalar_lea.vmem %s1, 16
      %v4993 = vld [vmem:[%s4992] sm:$0x3]
      %v4994 = vunpack.c.l.b16 %v4883
      %v4995 = vunpack.c.l.b16 %v4886
      %v4996 = vunpack.c.l.b16 %v4890
      %v4997 = vunpack.c.l.b16 %v4893
      %v4998 = vunpack.c.l.b16 %v4897
      %v4999 = vunpack.c.l.b16 %v4900
      %v5000 = vunpack.c.l.b16 %v4904
      %v5001 = vunpack.c.l.b16 %v4907
      %v5002 = vunpack.c.l.b16 %v4911
      %v5003 = vunpack.c.l.b16 %v4914
      %v5004 = vunpack.c.l.b16 %v4918
      %v5005 = vunpack.c.l.b16 %v4921
      %v5006 = vunpack.c.l.b16 %v4925
      %v5007 = vunpack.c.l.b16 %v4928
      %v5008 = vunpack.c.l.b16 %v4932
      %v5009 = vunpack.c.l.b16 %v4935
      %v5010 = vunpack.c.l.b16 %v4939
      %v5011 = vunpack.c.l.b16 %v4942
      %v5012 = vunpack.c.l.b16 %v4946
      %v5013 = vunpack.c.l.b16 %v4949
      %v5014 = vunpack.c.l.b16 %v4953
      %v5015 = vunpack.c.l.b16 %v4956
      %v5016 = vunpack.c.l.b16 %v4960
      %v5017 = vunpack.c.l.b16 %v4963
      %v5018 = vunpack.c.l.b16 %v4967
      %v5019 = vunpack.c.l.b16 %v4970
      %v5020 = vunpack.c.l.b16 %v4974
      %v5021 = vunpack.c.l.b16 %v4977
      %v5022 = vunpack.c.l.b16 %v4981
      %v5023 = vunpack.c.l.b16 %v4984
      %v5024 = vunpack.c.l.b16 %v4988
      %v5025 = vunpack.c.l.b16 %v4991
      %v5026 = vpack.c.b16 %v4995, %v4994
      %v5027 = vpack.c.b16 %v4997, %v4996
      %v5028 = vpack.c.b16 %v4999, %v4998
      %v5029 = vpack.c.b16 %v5001, %v5000
      %v5030 = vpack.c.b16 %v5003, %v5002
      %v5031 = vpack.c.b16 %v5005, %v5004
      %v5032 = vpack.c.b16 %v5007, %v5006
      %v5033 = vpack.c.b16 %v5009, %v5008
      %v5034 = vpack.c.b16 %v5011, %v5010
      %v5035 = vpack.c.b16 %v5013, %v5012
      %v5036 = vpack.c.b16 %v5015, %v5014
      %v5037 = vpack.c.b16 %v5017, %v5016
      %v5038 = vpack.c.b16 %v5019, %v5018
      %v5039 = vpack.c.b16 %v5021, %v5020
      %v5040 = vpack.c.b16 %v5023, %v5022
      %v5041 = vpack.c.b16 %v5025, %v5024
      %v5043 = vsel %vm1214, %v5026, 0
      %v5046 = vsel %vm1214, %v5027, 0
      %v5049 = vsel %vm1214, %v5028, 0
      %v5052 = vsel %vm1214, %v5029, 0
      %v5055 = vsel %vm1214, %v5030, 0
      %v5058 = vsel %vm1214, %v5031, 0
      %v5061 = vsel %vm1214, %v5032, 0
      %v5064 = vsel %vm1214, %v5033, 0
      %v5067 = vsel %vm1214, %v5034, 0
      %v5070 = vsel %vm1214, %v5035, 0
      %v5073 = vsel %vm1214, %v5036, 0
      %v5076 = vsel %vm1214, %v5037, 0
      %v5079 = vsel %vm1214, %v5038, 0
      %v5082 = vsel %vm1214, %v5039, 0
      %v5085 = vsel %vm1214, %v5040, 0
      %v5088 = vsel %vm1214, %v5041, 0
      %v5091 = vsel %vm1263, %v4993, 0
      %5093 = vmatprep.subr.bf16.mxu0 0
      %5094 = vmatpush1.bf16.msra.mxu0 %v5091
      %5095 = vmatprep.subr.bf16.mxu0 0
      %5096 = vmatpush1.bf16.msra.mxu0 0
      %5097 = vmatprep.subr.bf16.mxu0 0
      %5098 = vmatpush1.bf16.msra.mxu0 0
      %5099 = vmatprep.subr.bf16.mxu0 0
      %5100 = vmatpush1.bf16.msra.mxu0 0
      %5101 = vmatprep.subr.bf16.mxu0 0
      %5102 = vmatpush1.bf16.msra.mxu0 0
      %5103 = vmatprep.subr.bf16.mxu0 0
      %5104 = vmatpush1.bf16.msra.mxu0 0
      %5105 = vmatprep.subr.bf16.mxu0 0
      %5106 = vmatpush1.bf16.msra.mxu0 0
      %5107 = vmatprep.subr.bf16.mxu0 0
      %5108 = vmatpush1.bf16.msra.mxu0 0
      %5109 = vmatprep.subr.bf16.mxu0 0
      %5110 = vmatpush1.bf16.msra.mxu0 0
      %5111 = vmatprep.subr.bf16.mxu0 0
      %5112 = vmatpush1.bf16.msra.mxu0 0
      %5113 = vmatprep.subr.bf16.mxu0 0
      %5114 = vmatpush1.bf16.msra.mxu0 0
      %5115 = vmatprep.subr.bf16.mxu0 0
      %5116 = vmatpush1.bf16.msra.mxu0 0
      %5117 = vmatprep.subr.bf16.mxu0 0
      %5118 = vmatpush1.bf16.msra.mxu0 0
      %5119 = vmatprep.subr.bf16.mxu0 0
      %5120 = vmatpush1.bf16.msra.mxu0 0
      %5121 = vmatprep.subr.bf16.mxu0 0
      %5122 = vmatpush1.bf16.msra.mxu0 0
      %5123 = vmatprep.subr.bf16.mxu0 0
      %5124 = vmatpush1.bf16.msra.mxu0 0
      %5125 = vmatprep.mubr.bf16.mxu0 0
      %5126 = vmatmul.mubr.bf16.gmra.mrb[0].mxu0 %v5043
      %v5127 = vpop.f32.mrb[0].mxu0
      %v5128 = vadd.f32 0.0, %v5127
      %v5129 = vpop.f32.mrb[0].mxu0
      %v5130 = vpop.f32.mrb[0].mxu0
      %v5131 = vadd.f32 0.0, %v5130
      %v5132 = vpop.f32.mrb[0].mxu0
      %5133 = vmatprep.mubr.bf16.mxu0 0
      %5134 = vmatmul.mubr.bf16.gmra.mrb[0].mxu0 %v5046
      %v5135 = vpop.f32.mrb[0].mxu0
      %v5136 = vadd.f32 0.0, %v5135
      %v5137 = vpop.f32.mrb[0].mxu0
      %v5138 = vpop.f32.mrb[0].mxu0
      %v5139 = vadd.f32 0.0, %v5138
      %v5140 = vpop.f32.mrb[0].mxu0
      %5141 = vmatprep.mubr.bf16.mxu0 0
      %5142 = vmatmul.mubr.bf16.gmra.mrb[0].mxu0 %v5049
      %v5143 = vpop.f32.mrb[0].mxu0
      %v5144 = vadd.f32 0.0, %v5143
      %v5145 = vpop.f32.mrb[0].mxu0
      %v5146 = vpop.f32.mrb[0].mxu0
      %v5147 = vadd.f32 0.0, %v5146
      %v5148 = vpop.f32.mrb[0].mxu0
      %5149 = vmatprep.mubr.bf16.mxu0 0
      %5150 = vmatmul.mubr.bf16.gmra.mrb[0].mxu0 %v5052
      %v5151 = vpop.f32.mrb[0].mxu0
      %v5152 = vadd.f32 0.0, %v5151
      %v5153 = vpop.f32.mrb[0].mxu0
      %v5154 = vpop.f32.mrb[0].mxu0
      %v5155 = vadd.f32 0.0, %v5154
      %v5156 = vpop.f32.mrb[0].mxu0
      %5157 = vmatprep.mubr.bf16.mxu0 0
      %5158 = vmatmul.mubr.bf16.gmra.mrb[0].mxu0 %v5055
      %v5159 = vpop.f32.mrb[0].mxu0
      %v5160 = vadd.f32 0.0, %v5159
      %v5161 = vpop.f32.mrb[0].mxu0
      %v5162 = vpop.f32.mrb[0].mxu0
      %v5163 = vadd.f32 0.0, %v5162
      %v5164 = vpop.f32.mrb[0].mxu0
      %5165 = vmatprep.mubr.bf16.mxu0 0
      %5166 = vmatmul.mubr.bf16.gmra.mrb[0].mxu0 %v5058
      %v5167 = vpop.f32.mrb[0].mxu0
      %v5168 = vadd.f32 0.0, %v5167
      %v5169 = vpop.f32.mrb[0].mxu0
      %v5170 = vpop.f32.mrb[0].mxu0
      %v5171 = vadd.f32 0.0, %v5170
      %v5172 = vpop.f32.mrb[0].mxu0
      %5173 = vmatprep.mubr.bf16.mxu0 0
      %5174 = vmatmul.mubr.bf16.gmra.mrb[0].mxu0 %v5061
      %v5175 = vpop.f32.mrb[0].mxu0
      %v5176 = vadd.f32 0.0, %v5175
      %v5177 = vpop.f32.mrb[0].mxu0
      %v5178 = vpop.f32.mrb[0].mxu0
      %v5179 = vadd.f32 0.0, %v5178
      %v5180 = vpop.f32.mrb[0].mxu0
      %5181 = vmatprep.mubr.bf16.mxu0 0
      %5182 = vmatmul.mubr.bf16.gmra.mrb[0].mxu0 %v5064
      %v5183 = vpop.f32.mrb[0].mxu0
      %v5184 = vadd.f32 0.0, %v5183
      %v5185 = vpop.f32.mrb[0].mxu0
      %v5186 = vpop.f32.mrb[0].mxu0
      %v5187 = vadd.f32 0.0, %v5186
      %v5188 = vpop.f32.mrb[0].mxu0
      %5189 = vmatprep.mubr.bf16.mxu0 0
      %5190 = vmatmul.mubr.bf16.gmra.mrb[0].mxu0 %v5067
      %v5191 = vpop.f32.mrb[0].mxu0
      %v5192 = vadd.f32 0.0, %v5191
      %v5193 = vpop.f32.mrb[0].mxu0
      %v5194 = vpop.f32.mrb[0].mxu0
      %v5195 = vadd.f32 0.0, %v5194
      %v5196 = vpop.f32.mrb[0].mxu0
      %5197 = vmatprep.mubr.bf16.mxu0 0
      %5198 = vmatmul.mubr.bf16.gmra.mrb[0].mxu0 %v5070
      %v5199 = vpop.f32.mrb[0].mxu0
      %v5200 = vadd.f32 0.0, %v5199
      %v5201 = vpop.f32.mrb[0].mxu0
      %v5202 = vpop.f32.mrb[0].mxu0
      %v5203 = vadd.f32 0.0, %v5202
      %v5204 = vpop.f32.mrb[0].mxu0
      %5205 = vmatprep.mubr.bf16.mxu0 0
      %5206 = vmatmul.mubr.bf16.gmra.mrb[0].mxu0 %v5073
      %v5207 = vpop.f32.mrb[0].mxu0
      %v5208 = vadd.f32 0.0, %v5207
      %v5209 = vpop.f32.mrb[0].mxu0
      %v5210 = vpop.f32.mrb[0].mxu0
      %v5211 = vadd.f32 0.0, %v5210
      %v5212 = vpop.f32.mrb[0].mxu0
      %5213 = vmatprep.mubr.bf16.mxu0 0
      %5214 = vmatmul.mubr.bf16.gmra.mrb[0].mxu0 %v5076
      %v5215 = vpop.f32.mrb[0].mxu0
      %v5216 = vadd.f32 0.0, %v5215
      %v5217 = vpop.f32.mrb[0].mxu0
      %v5218 = vpop.f32.mrb[0].mxu0
      %v5219 = vadd.f32 0.0, %v5218
      %v5220 = vpop.f32.mrb[0].mxu0
      %5221 = vmatprep.mubr.bf16.mxu0 0
      %5222 = vmatmul.mubr.bf16.gmra.mrb[0].mxu0 %v5079
      %v5223 = vpop.f32.mrb[0].mxu0
      %v5224 = vadd.f32 0.0, %v5223
      %v5225 = vpop.f32.mrb[0].mxu0
      %v5226 = vpop.f32.mrb[0].mxu0
      %v5227 = vadd.f32 0.0, %v5226
      %v5228 = vpop.f32.mrb[0].mxu0
      %5229 = vmatprep.mubr.bf16.mxu0 0
      %5230 = vmatmul.mubr.bf16.gmra.mrb[0].mxu0 %v5082
      %v5231 = vpop.f32.mrb[0].mxu0
      %v5232 = vadd.f32 0.0, %v5231
      %v5233 = vpop.f32.mrb[0].mxu0
      %v5234 = vpop.f32.mrb[0].mxu0
      %v5235 = vadd.f32 0.0, %v5234
      %v5236 = vpop.f32.mrb[0].mxu0
      %5237 = vmatprep.mubr.bf16.mxu0 0
      %5238 = vmatmul.mubr.bf16.gmra.mrb[0].mxu0 %v5085
      %v5239 = vpop.f32.mrb[0].mxu0
      %v5240 = vadd.f32 0.0, %v5239
      %v5241 = vpop.f32.mrb[0].mxu0
      %v5242 = vpop.f32.mrb[0].mxu0
      %v5243 = vadd.f32 0.0, %v5242
      %v5244 = vpop.f32.mrb[0].mxu0
      %5245 = vmatprep.mubr.bf16.mxu0 0
      %5246 = vmatmul.mubr.bf16.gmra.mrb[0].mxu0 %v5088
      %v5247 = vpop.f32.mrb[0].mxu0
      %v5248 = vadd.f32 0.0, %v5247
      %v5249 = vpop.f32.mrb[0].mxu0
      %v5250 = vpop.f32.mrb[0].mxu0
      %v5251 = vadd.f32 0.0, %v5250
      %v5252 = vpop.f32.mrb[0].mxu0
      %5253 = vdwg.mxu0
      %v5254 = vadd.f32 %v4784, %v5128
      %v5255 = vadd.f32 %v4785, %v5131
      %v5256 = vadd.f32 %v4786, %v5136
      %v5257 = vadd.f32 %v4787, %v5139
      %v5258 = vadd.f32 %v4788, %v5144
      %v5259 = vadd.f32 %v4789, %v5147
      %v5260 = vadd.f32 %v4790, %v5152
      %v5261 = vadd.f32 %v4791, %v5155
      %v5262 = vadd.f32 %v4792, %v5160
      %v5263 = vadd.f32 %v4793, %v5163
      %v5264 = vadd.f32 %v4794, %v5168
      %v5265 = vadd.f32 %v4795, %v5171
      %v5266 = vadd.f32 %v4796, %v5176
      %v5267 = vadd.f32 %v4797, %v5179
      %v5268 = vadd.f32 %v4798, %v5184
      %v5269 = vadd.f32 %v4799, %v5187
      %v5270 = vadd.f32 %v4800, %v5192
      %v5271 = vadd.f32 %v4801, %v5195
      %v5272 = vadd.f32 %v4802, %v5200
      %v5273 = vadd.f32 %v4803, %v5203
      %v5274 = vadd.f32 %v4804, %v5208
      %v5275 = vadd.f32 %v4805, %v5211
      %v5276 = vadd.f32 %v4806, %v5216
      %v5277 = vadd.f32 %v4807, %v5219
      %v5278 = vadd.f32 %v4808, %v5224
      %v5279 = vadd.f32 %v4809, %v5227
      %v5280 = vadd.f32 %v4810, %v5232
      %v5281 = vadd.f32 %v4811, %v5235
      %v5282 = vadd.f32 %v4812, %v5240
      %v5283 = vadd.f32 %v4813, %v5243
      %v5284 = vadd.f32 %v4814, %v5248
      %v5285 = vadd.f32 %v4815, %v5251
      %v5286 = vld [vmem:[%s3] sm:$0x1]
      %v5287 = vlaneseq
      %v5288 = vshrl.u32 %v5287, 7
      %v5289 = vsub.s32 0, %v5288
      %v5290 = vrot.slane %v5286, %v5289
      %v5291 = vmul.f32 %v5254, %v5290
      %v5292 = vmul.f32 %v5255, %v5290
      %v5293 = vmul.f32 %v5256, %v5290
      %v5294 = vmul.f32 %v5257, %v5290
      %v5295 = vmul.f32 %v5258, %v5290
      %v5296 = vmul.f32 %v5259, %v5290
      %v5297 = vmul.f32 %v5260, %v5290
      %v5298 = vmul.f32 %v5261, %v5290
      %v5299 = vmul.f32 %v5262, %v5290
      %v5300 = vmul.f32 %v5263, %v5290
      %v5301 = vmul.f32 %v5264, %v5290
      %v5302 = vmul.f32 %v5265, %v5290
      %v5303 = vmul.f32 %v5266, %v5290
      %v5304 = vmul.f32 %v5267, %v5290
      %v5305 = vmul.f32 %v5268, %v5290
      %v5306 = vmul.f32 %v5269, %v5290
      %v5307 = vmul.f32 %v5270, %v5290
      %v5308 = vmul.f32 %v5271, %v5290
      %v5309 = vmul.f32 %v5272, %v5290
      %v5310 = vmul.f32 %v5273, %v5290
      %v5311 = vmul.f32 %v5274, %v5290
      %v5312 = vmul.f32 %v5275, %v5290
      %v5313 = vmul.f32 %v5276, %v5290
      %v5314 = vmul.f32 %v5277, %v5290
      %v5315 = vmul.f32 %v5278, %v5290
      %v5316 = vmul.f32 %v5279, %v5290
      %v5317 = vmul.f32 %v5280, %v5290
      %v5318 = vmul.f32 %v5281, %v5290
      %v5319 = vmul.f32 %v5282, %v5290
      %v5320 = vmul.f32 %v5283, %v5290
      %v5321 = vmul.f32 %v5284, %v5290
      %v5322 = vmul.f32 %v5285, %v5290
      %v5323 = vld [vmem:[%s3 + $0x1] sm:$0x1]
      %v5324 = vlaneseq
      %v5325 = vshrl.u32 %v5324, 7
      %v5326 = vsub.s32 0, %v5325
      %v5327 = vrot.slane %v5323, %v5326
      %v5328 = vadd.f32 %v5291, %v5327
      %v5329 = vadd.f32 %v5292, %v5327
      %v5330 = vadd.f32 %v5293, %v5327
      %v5331 = vadd.f32 %v5294, %v5327
      %v5332 = vadd.f32 %v5295, %v5327
      %v5333 = vadd.f32 %v5296, %v5327
      %v5334 = vadd.f32 %v5297, %v5327
      %v5335 = vadd.f32 %v5298, %v5327
      %v5336 = vadd.f32 %v5299, %v5327
      %v5337 = vadd.f32 %v5300, %v5327
      %v5338 = vadd.f32 %v5301, %v5327
      %v5339 = vadd.f32 %v5302, %v5327
      %v5340 = vadd.f32 %v5303, %v5327
      %v5341 = vadd.f32 %v5304, %v5327
      %v5342 = vadd.f32 %v5305, %v5327
      %v5343 = vadd.f32 %v5306, %v5327
      %v5344 = vadd.f32 %v5307, %v5327
      %v5345 = vadd.f32 %v5308, %v5327
      %v5346 = vadd.f32 %v5309, %v5327
      %v5347 = vadd.f32 %v5310, %v5327
      %v5348 = vadd.f32 %v5311, %v5327
      %v5349 = vadd.f32 %v5312, %v5327
      %v5350 = vadd.f32 %v5313, %v5327
      %v5351 = vadd.f32 %v5314, %v5327
      %v5352 = vadd.f32 %v5315, %v5327
      %v5353 = vadd.f32 %v5316, %v5327
      %v5354 = vadd.f32 %v5317, %v5327
      %v5355 = vadd.f32 %v5318, %v5327
      %v5356 = vadd.f32 %v5319, %v5327
      %v5357 = vadd.f32 %v5320, %v5327
      %v5358 = vadd.f32 %v5321, %v5327
      %v5359 = vadd.f32 %v5322, %v5327
      %v5360 = vmax.f32 %v5328, 0.0
      %v5361 = vmax.f32 %v5329, 0.0
      %v5362 = vmax.f32 %v5330, 0.0
      %v5363 = vmax.f32 %v5331, 0.0
      %v5364 = vmax.f32 %v5332, 0.0
      %v5365 = vmax.f32 %v5333, 0.0
      %v5366 = vmax.f32 %v5334, 0.0
      %v5367 = vmax.f32 %v5335, 0.0
      %v5368 = vmax.f32 %v5336, 0.0
      %v5369 = vmax.f32 %v5337, 0.0
      %v5370 = vmax.f32 %v5338, 0.0
      %v5371 = vmax.f32 %v5339, 0.0
      %v5372 = vmax.f32 %v5340, 0.0
      %v5373 = vmax.f32 %v5341, 0.0
      %v5374 = vmax.f32 %v5342, 0.0
      %v5375 = vmax.f32 %v5343, 0.0
      %v5376 = vmax.f32 %v5344, 0.0
      %v5377 = vmax.f32 %v5345, 0.0
      %v5378 = vmax.f32 %v5346, 0.0
      %v5379 = vmax.f32 %v5347, 0.0
      %v5380 = vmax.f32 %v5348, 0.0
      %v5381 = vmax.f32 %v5349, 0.0
      %v5382 = vmax.f32 %v5350, 0.0
      %v5383 = vmax.f32 %v5351, 0.0
      %v5384 = vmax.f32 %v5352, 0.0
      %v5385 = vmax.f32 %v5353, 0.0
      %v5386 = vmax.f32 %v5354, 0.0
      %v5387 = vmax.f32 %v5355, 0.0
      %v5388 = vmax.f32 %v5356, 0.0
      %v5389 = vmax.f32 %v5357, 0.0
      %v5390 = vmax.f32 %v5358, 0.0
      %v5391 = vmax.f32 %v5359, 0.0
      %v5392 = vpack.c.bf16 %v5361, %v5360
      %v5393 = vpack.c.bf16 %v5363, %v5362
      %v5394 = vpack.c.bf16 %v5365, %v5364
      %v5395 = vpack.c.bf16 %v5367, %v5366
      %v5396 = vpack.c.bf16 %v5369, %v5368
      %v5397 = vpack.c.bf16 %v5371, %v5370
      %v5398 = vpack.c.bf16 %v5373, %v5372
      %v5399 = vpack.c.bf16 %v5375, %v5374
      %v5400 = vpack.c.bf16 %v5377, %v5376
      %v5401 = vpack.c.bf16 %v5379, %v5378
      %v5402 = vpack.c.bf16 %v5381, %v5380
      %v5403 = vpack.c.bf16 %v5383, %v5382
      %v5404 = vpack.c.bf16 %v5385, %v5384
      %v5405 = vpack.c.bf16 %v5387, %v5386
      %v5406 = vpack.c.bf16 %v5389, %v5388
      %v5407 = vpack.c.bf16 %v5391, %v5390
      %5408 = vst.msk [vmem:[#allocation3] sm:$0xf] %vm199, 0
      %5409 = vst.msk [vmem:[#allocation3 + $0x4] sm:$0xf] %vm199, 0
      %5410 = vst.msk [vmem:[#allocation3 + $0x8] sm:$0x1] %vm202, 0
      %5411 = vst.msk [vmem:[#allocation3 + $0xc] sm:$0xf] %vm199, 0
      %5412 = vst.msk [vmem:[#allocation3 + $0x10] sm:$0xf] %vm199, 0
      %5413 = vst.msk [vmem:[#allocation3 + $0x14] sm:$0x1] %vm202, 0
      %5414 = vst.msk [vmem:[#allocation3 + $0x18] sm:$0xf] %vm199, 0
      %5415 = vst.msk [vmem:[#allocation3 + $0x1c] sm:$0xf] %vm199, 0
      %5416 = vst.msk [vmem:[#allocation3 + $0x20] sm:$0x1] %vm202, 0
      %5417 = vst.msk [vmem:[#allocation3 + $0x24] sm:$0xf] %vm199, 0
      %5418 = vst.msk [vmem:[#allocation3 + $0x28] sm:$0xf] %vm199, 0
      %5419 = vst.msk [vmem:[#allocation3 + $0x2c] sm:$0x1] %vm202, 0
      %5420 = vst.msk [vmem:[#allocation3 + $0x30] sm:$0xf] %vm199, 0
      %5421 = vst.msk [vmem:[#allocation3 + $0x34] sm:$0xf] %vm199, 0
      %5422 = vst.msk [vmem:[#allocation3 + $0x38] sm:$0x1] %vm202, 0
      %5423 = vst.msk [vmem:[#allocation3 + $0x3c] sm:$0xf] %vm199, 0
      %5424 = vst.msk [vmem:[#allocation3 + $0x40] sm:$0xf] %vm199, 0
      %5425 = vst.msk [vmem:[#allocation3 + $0x44] sm:$0x1] %vm202, 0
      %5426 = vst.msk [vmem:[#allocation3 + $0x48] sm:$0xf] %vm199, 0
      %5427 = vst.msk [vmem:[#allocation3 + $0x4c] sm:$0xf] %vm199, 0
      %5428 = vst.msk [vmem:[#allocation3 + $0x50] sm:$0x1] %vm202, 0
      %5429 = vst.msk [vmem:[#allocation3 + $0x54] sm:$0xf] %vm199, 0
      %5430 = vst.msk [vmem:[#allocation3 + $0x58] sm:$0xf] %vm199, 0
      %5431 = vst.msk [vmem:[#allocation3 + $0x5c] sm:$0x1] %vm202, 0
      %5432 = vst.msk [vmem:[#allocation3 + $0x60] sm:$0xf] %vm199, 0
      %5433 = vst.msk [vmem:[#allocation3 + $0x64] sm:$0xf] %vm199, 0
      %5434 = vst.msk [vmem:[#allocation3 + $0x68] sm:$0x1] %vm202, 0
      %5435 = vst.msk [vmem:[#allocation3 + $0x6c] sm:$0xf] %vm199, 0
      %5436 = vst.msk [vmem:[#allocation3 + $0x70] sm:$0xf] %vm199, 0
      %5437 = vst.msk [vmem:[#allocation3 + $0x74] sm:$0x1] %vm202, 0
      %5438 = vst.msk [vmem:[#allocation3 + $0x78] sm:$0xf] %vm199, 0
      %5439 = vst.msk [vmem:[#allocation3 + $0x7c] sm:$0xf] %vm199, 0
      %5440 = vst.msk [vmem:[#allocation3 + $0x80] sm:$0x1] %vm202, 0
      %5441 = vst.msk [vmem:[#allocation3 + $0x84] sm:$0xf] %vm199, 0
      %5442 = vst.msk [vmem:[#allocation3 + $0x88] sm:$0xf] %vm199, 0
      %5443 = vst.msk [vmem:[#allocation3 + $0x8c] sm:$0x1] %vm202, 0
      %5444 = vst.msk [vmem:[#allocation3 + $0x90] sm:$0xf] %vm199, 0
      %5445 = vst.msk [vmem:[#allocation3 + $0x94] sm:$0xf] %vm199, 0
      %5446 = vst.msk [vmem:[#allocation3 + $0x98] sm:$0x1] %vm202, 0
      %5447 = vst.msk [vmem:[#allocation3 + $0x9c] sm:$0xf] %vm199, 0
      %5448 = vst.msk [vmem:[#allocation3 + $0xa0] sm:$0xf] %vm199, 0
      %5449 = vst.msk [vmem:[#allocation3 + $0xa4] sm:$0x1] %vm202, 0
      %5450 = vst.msk [vmem:[#allocation3 + $0xa8] sm:$0xf] %vm199, 0
      %5451 = vst.msk [vmem:[#allocation3 + $0xac] sm:$0xf] %vm199, 0
      %5452 = vst.msk [vmem:[#allocation3 + $0xb0] sm:$0x1] %vm202, 0
      %5453 = vst.msk [vmem:[#allocation3 + $0xb4] sm:$0xf] %vm199, 0
      %5454 = vst.msk [vmem:[#allocation3 + $0xb8] sm:$0xf] %vm199, 0
      %5455 = vst.msk [vmem:[#allocation3 + $0xbc] sm:$0x1] %vm202, 0
      %5456 = vst.msk [vmem:[#allocation3 + $0xc0] sm:$0xf] %vm199, 0
      %5457 = vst.msk [vmem:[#allocation3 + $0xc4] sm:$0xf] %vm199, 0
      %5458 = vst.msk [vmem:[#allocation3 + $0xc8] sm:$0x1] %vm202, 0
      %5459 = vst.msk [vmem:[#allocation3 + $0xcc] sm:$0xf] %vm199, 0
      %5460 = vst.msk [vmem:[#allocation3 + $0xd0] sm:$0xf] %vm199, 0
      %5461 = vst.msk [vmem:[#allocation3 + $0xd4] sm:$0x1] %vm202, 0
      %v5478 = vunpack.c.l.b16 %v5392
      %v5479 = vunpack.c.h.b16 %v5392
      %v5480 = vunpack.c.l.b16 %v5393
      %v5481 = vunpack.c.h.b16 %v5393
      %v5482 = vunpack.c.l.b16 %v5394
      %v5483 = vunpack.c.h.b16 %v5394
      %v5484 = vunpack.c.l.b16 %v5395
      %v5485 = vunpack.c.h.b16 %v5395
      %v5486 = vunpack.c.l.b16 %v5396
      %v5487 = vunpack.c.h.b16 %v5396
      %v5488 = vunpack.c.l.b16 %v5397
      %v5489 = vunpack.c.h.b16 %v5397
      %v5490 = vunpack.c.l.b16 %v5398
      %v5491 = vunpack.c.h.b16 %v5398
      %v5492 = vunpack.c.l.b16 %v5399
      %v5493 = vunpack.c.h.b16 %v5399
      %v5494 = vunpack.c.l.b16 %v5400
      %v5495 = vunpack.c.h.b16 %v5400
      %v5496 = vunpack.c.l.b16 %v5401
      %v5497 = vunpack.c.h.b16 %v5401
      %v5498 = vunpack.c.l.b16 %v5402
      %v5499 = vunpack.c.h.b16 %v5402
      %v5500 = vunpack.c.l.b16 %v5403
      %v5501 = vunpack.c.h.b16 %v5403
      %v5502 = vunpack.c.l.b16 %v5404
      %v5503 = vunpack.c.h.b16 %v5404
      %v5504 = vunpack.c.l.b16 %v5405
      %v5505 = vunpack.c.h.b16 %v5405
      %v5506 = vunpack.c.l.b16 %v5406
      %v5507 = vunpack.c.h.b16 %v5406
      %v5508 = vunpack.c.l.b16 %v5407
      %v5509 = vunpack.c.h.b16 %v5407
      %v5510 = vpack.c.b16 %v5478, %v5478
      %v5511 = vpack.c.b16 %v5479, %v5479
      %v5512 = vpack.c.b16 %v5480, %v5480
      %v5513 = vpack.c.b16 %v5481, %v5481
      %v5514 = vpack.c.b16 %v5482, %v5482
      %v5515 = vpack.c.b16 %v5483, %v5483
      %v5516 = vpack.c.b16 %v5484, %v5484
      %v5517 = vpack.c.b16 %v5485, %v5485
      %v5518 = vpack.c.b16 %v5486, %v5486
      %v5519 = vpack.c.b16 %v5487, %v5487
      %v5520 = vpack.c.b16 %v5488, %v5488
      %v5521 = vpack.c.b16 %v5489, %v5489
      %v5522 = vpack.c.b16 %v5490, %v5490
      %v5523 = vpack.c.b16 %v5491, %v5491
      %v5524 = vpack.c.b16 %v5492, %v5492
      %v5525 = vpack.c.b16 %v5493, %v5493
      %v5526 = vpack.c.b16 %v5494, %v5494
      %v5527 = vpack.c.b16 %v5495, %v5495
      %v5528 = vpack.c.b16 %v5496, %v5496
      %v5529 = vpack.c.b16 %v5497, %v5497
      %v5530 = vpack.c.b16 %v5498, %v5498
      %v5531 = vpack.c.b16 %v5499, %v5499
      %v5532 = vpack.c.b16 %v5500, %v5500
      %v5533 = vpack.c.b16 %v5501, %v5501
      %v5534 = vpack.c.b16 %v5502, %v5502
      %v5535 = vpack.c.b16 %v5503, %v5503
      %v5536 = vpack.c.b16 %v5504, %v5504
      %v5537 = vpack.c.b16 %v5505, %v5505
      %v5538 = vpack.c.b16 %v5506, %v5506
      %v5539 = vpack.c.b16 %v5507, %v5507
      %v5540 = vpack.c.b16 %v5508, %v5508
      %v5541 = vpack.c.b16 %v5509, %v5509
      %v5543 = vshrl.u32 %v5510, 16
      %v5545 = vrot.slane %v5543, 7
      %v5546 = vshll.u32 %v5510, 16
      %v5548 = vor.u32 %v5545, %v5546
      %v5549 = vrot.slane %v5545, 4
      %v5551 = vshrl.u32 %v5511, 16
      %v5553 = vrot.slane %v5551, 7
      %v5554 = vshll.u32 %v5511, 16
      %v5556 = vor.u32 %v5553, %v5554
      %v5557 = vsel %vm289, %v5549, %v5556
      %v5558 = vrot.slane %v5553, 4
      %v5560 = vshrl.u32 %v5512, 16
      %v5562 = vrot.slane %v5560, 7
      %v5563 = vshll.u32 %v5512, 16
      %v5565 = vor.u32 %v5562, %v5563
      %v5566 = vrot.slane %v5562, 4
      %v5568 = vshrl.u32 %v5513, 16
      %v5570 = vrot.slane %v5568, 7
      %v5571 = vshll.u32 %v5513, 16
      %v5573 = vor.u32 %v5570, %v5571
      %v5574 = vsel %vm289, %v5566, %v5573
      %v5575 = vrot.slane %v5570, 4
      %v5577 = vshrl.u32 %v5514, 16
      %v5579 = vrot.slane %v5577, 7
      %v5580 = vshll.u32 %v5514, 16
      %v5582 = vor.u32 %v5579, %v5580
      %v5583 = vrot.slane %v5579, 4
      %v5585 = vshrl.u32 %v5515, 16
      %v5587 = vrot.slane %v5585, 7
      %v5588 = vshll.u32 %v5515, 16
      %v5590 = vor.u32 %v5587, %v5588
      %v5591 = vsel %vm289, %v5583, %v5590
      %v5592 = vrot.slane %v5587, 4
      %v5594 = vshrl.u32 %v5516, 16
      %v5596 = vrot.slane %v5594, 7
      %v5597 = vshll.u32 %v5516, 16
      %v5599 = vor.u32 %v5596, %v5597
      %v5600 = vrot.slane %v5596, 4
      %v5602 = vshrl.u32 %v5517, 16
      %v5604 = vrot.slane %v5602, 7
      %v5605 = vshll.u32 %v5517, 16
      %v5607 = vor.u32 %v5604, %v5605
      %v5608 = vsel %vm289, %v5600, %v5607
      %v5609 = vrot.slane %v5604, 4
      %v5611 = vshrl.u32 %v5518, 16
      %v5613 = vrot.slane %v5611, 7
      %v5614 = vshll.u32 %v5518, 16
      %v5616 = vor.u32 %v5613, %v5614
      %v5617 = vrot.slane %v5613, 4
      %v5619 = vshrl.u32 %v5519, 16
      %v5621 = vrot.slane %v5619, 7
      %v5622 = vshll.u32 %v5519, 16
      %v5624 = vor.u32 %v5621, %v5622
      %v5625 = vsel %vm289, %v5617, %v5624
      %v5626 = vrot.slane %v5621, 4
      %v5628 = vshrl.u32 %v5520, 16
      %v5630 = vrot.slane %v5628, 7
      %v5631 = vshll.u32 %v5520, 16
      %v5633 = vor.u32 %v5630, %v5631
      %v5634 = vrot.slane %v5630, 4
      %v5636 = vshrl.u32 %v5521, 16
      %v5638 = vrot.slane %v5636, 7
      %v5639 = vshll.u32 %v5521, 16
      %v5641 = vor.u32 %v5638, %v5639
      %v5642 = vsel %vm289, %v5634, %v5641
      %v5643 = vrot.slane %v5638, 4
      %v5645 = vshrl.u32 %v5522, 16
      %v5647 = vrot.slane %v5645, 7
      %v5648 = vshll.u32 %v5522, 16
      %v5650 = vor.u32 %v5647, %v5648
      %v5651 = vrot.slane %v5647, 4
      %v5653 = vshrl.u32 %v5523, 16
      %v5655 = vrot.slane %v5653, 7
      %v5656 = vshll.u32 %v5523, 16
      %v5658 = vor.u32 %v5655, %v5656
      %v5659 = vsel %vm289, %v5651, %v5658
      %v5660 = vrot.slane %v5655, 4
      %v5662 = vshrl.u32 %v5524, 16
      %v5664 = vrot.slane %v5662, 7
      %v5665 = vshll.u32 %v5524, 16
      %v5667 = vor.u32 %v5664, %v5665
      %v5668 = vrot.slane %v5664, 4
      %v5670 = vshrl.u32 %v5525, 16
      %v5672 = vrot.slane %v5670, 7
      %v5673 = vshll.u32 %v5525, 16
      %v5675 = vor.u32 %v5672, %v5673
      %v5676 = vsel %vm289, %v5668, %v5675
      %v5677 = vrot.slane %v5672, 4
      %v5679 = vshrl.u32 %v5526, 16
      %v5681 = vrot.slane %v5679, 7
      %v5682 = vshll.u32 %v5526, 16
      %v5684 = vor.u32 %v5681, %v5682
      %v5685 = vrot.slane %v5681, 4
      %v5687 = vshrl.u32 %v5527, 16
      %v5689 = vrot.slane %v5687, 7
      %v5690 = vshll.u32 %v5527, 16
      %v5692 = vor.u32 %v5689, %v5690
      %v5693 = vsel %vm289, %v5685, %v5692
      %v5694 = vrot.slane %v5689, 4
      %v5696 = vshrl.u32 %v5528, 16
      %v5698 = vrot.slane %v5696, 7
      %v5699 = vshll.u32 %v5528, 16
      %v5701 = vor.u32 %v5698, %v5699
      %v5702 = vrot.slane %v5698, 4
      %v5704 = vshrl.u32 %v5529, 16
      %v5706 = vrot.slane %v5704, 7
      %v5707 = vshll.u32 %v5529, 16
      %v5709 = vor.u32 %v5706, %v5707
      %v5710 = vsel %vm289, %v5702, %v5709
      %v5711 = vrot.slane %v5706, 4
      %v5713 = vshrl.u32 %v5530, 16
      %v5715 = vrot.slane %v5713, 7
      %v5716 = vshll.u32 %v5530, 16
      %v5718 = vor.u32 %v5715, %v5716
      %v5719 = vrot.slane %v5715, 4
      %v5721 = vshrl.u32 %v5531, 16
      %v5723 = vrot.slane %v5721, 7
      %v5724 = vshll.u32 %v5531, 16
      %v5726 = vor.u32 %v5723, %v5724
      %v5727 = vsel %vm289, %v5719, %v5726
      %v5728 = vrot.slane %v5723, 4
      %v5730 = vshrl.u32 %v5532, 16
      %v5732 = vrot.slane %v5730, 7
      %v5733 = vshll.u32 %v5532, 16
      %v5735 = vor.u32 %v5732, %v5733
      %v5736 = vrot.slane %v5732, 4
      %v5738 = vshrl.u32 %v5533, 16
      %v5740 = vrot.slane %v5738, 7
      %v5741 = vshll.u32 %v5533, 16
      %v5743 = vor.u32 %v5740, %v5741
      %v5744 = vsel %vm289, %v5736, %v5743
      %v5745 = vrot.slane %v5740, 4
      %v5747 = vshrl.u32 %v5534, 16
      %v5749 = vrot.slane %v5747, 7
      %v5750 = vshll.u32 %v5534, 16
      %v5752 = vor.u32 %v5749, %v5750
      %v5753 = vrot.slane %v5749, 4
      %v5755 = vshrl.u32 %v5535, 16
      %v5757 = vrot.slane %v5755, 7
      %v5758 = vshll.u32 %v5535, 16
      %v5760 = vor.u32 %v5757, %v5758
      %v5761 = vsel %vm289, %v5753, %v5760
      %v5762 = vrot.slane %v5757, 4
      %v5764 = vshrl.u32 %v5536, 16
      %v5766 = vrot.slane %v5764, 7
      %v5767 = vshll.u32 %v5536, 16
      %v5769 = vor.u32 %v5766, %v5767
      %v5770 = vrot.slane %v5766, 4
      %v5772 = vshrl.u32 %v5537, 16
      %v5774 = vrot.slane %v5772, 7
      %v5775 = vshll.u32 %v5537, 16
      %v5777 = vor.u32 %v5774, %v5775
      %v5778 = vsel %vm289, %v5770, %v5777
      %v5779 = vrot.slane %v5774, 4
      %v5781 = vshrl.u32 %v5538, 16
      %v5783 = vrot.slane %v5781, 7
      %v5784 = vshll.u32 %v5538, 16
      %v5786 = vor.u32 %v5783, %v5784
      %v5787 = vrot.slane %v5783, 4
      %v5789 = vshrl.u32 %v5539, 16
      %v5791 = vrot.slane %v5789, 7
      %v5792 = vshll.u32 %v5539, 16
      %v5794 = vor.u32 %v5791, %v5792
      %v5795 = vsel %vm289, %v5787, %v5794
      %v5796 = vrot.slane %v5791, 4
      %v5798 = vshrl.u32 %v5540, 16
      %v5800 = vrot.slane %v5798, 7
      %v5801 = vshll.u32 %v5540, 16
      %v5803 = vor.u32 %v5800, %v5801
      %v5804 = vrot.slane %v5800, 4
      %v5806 = vshrl.u32 %v5541, 16
      %v5808 = vrot.slane %v5806, 7
      %v5809 = vshll.u32 %v5541, 16
      %v5811 = vor.u32 %v5808, %v5809
      %v5812 = vsel %vm289, %v5804, %v5811
      %v5813 = vrot.slane %v5808, 4
      %s5862 = scalar_lea.vmem [#allocation3], 12
      %v5863 = vld [vmem:[%s5862] sm:$0xf]
      %v5864 = vsel %vm613, %v5548, %v5863
      %5865 = vst [vmem:[%s5862] sm:$0xf] %v5864
      %5866 = vst.msk [vmem:[%s5862 + $0x4] sm:$0xf] %vm199, %v5557
      %v5867 = vld [vmem:[%s5862 + $0x8] sm:$0x1]
      %v5868 = vsel %vm619, %v5558, %v5867
      %5869 = vst [vmem:[%s5862 + $0x8] sm:$0x1] %v5868
      %v5870 = vld [vmem:[%s5862 + $0xc] sm:$0xf]
      %v5871 = vsel %vm613, %v5565, %v5870
      %5872 = vst [vmem:[%s5862 + $0xc] sm:$0xf] %v5871
      %5873 = vst.msk [vmem:[%s5862 + $0x10] sm:$0xf] %vm199, %v5574
      %v5874 = vld [vmem:[%s5862 + $0x14] sm:$0x1]
      %v5875 = vsel %vm619, %v5575, %v5874
      %5876 = vst [vmem:[%s5862 + $0x14] sm:$0x1] %v5875
      %v5877 = vld [vmem:[%s5862 + $0x18] sm:$0xf]
      %v5878 = vsel %vm613, %v5582, %v5877
      %5879 = vst [vmem:[%s5862 + $0x18] sm:$0xf] %v5878
      %5880 = vst.msk [vmem:[%s5862 + $0x1c] sm:$0xf] %vm199, %v5591
      %v5881 = vld [vmem:[%s5862 + $0x20] sm:$0x1]
      %v5882 = vsel %vm619, %v5592, %v5881
      %5883 = vst [vmem:[%s5862 + $0x20] sm:$0x1] %v5882
      %v5884 = vld [vmem:[%s5862 + $0x24] sm:$0xf]
      %v5885 = vsel %vm613, %v5599, %v5884
      %5886 = vst [vmem:[%s5862 + $0x24] sm:$0xf] %v5885
      %5887 = vst.msk [vmem:[%s5862 + $0x28] sm:$0xf] %vm199, %v5608
      %v5888 = vld [vmem:[%s5862 + $0x2c] sm:$0x1]
      %v5889 = vsel %vm619, %v5609, %v5888
      %5890 = vst [vmem:[%s5862 + $0x2c] sm:$0x1] %v5889
      %v5891 = vld [vmem:[%s5862 + $0x30] sm:$0xf]
      %v5892 = vsel %vm613, %v5616, %v5891
      %5893 = vst [vmem:[%s5862 + $0x30] sm:$0xf] %v5892
      %5894 = vst.msk [vmem:[%s5862 + $0x34] sm:$0xf] %vm199, %v5625
      %v5895 = vld [vmem:[%s5862 + $0x38] sm:$0x1]
      %v5896 = vsel %vm619, %v5626, %v5895
      %5897 = vst [vmem:[%s5862 + $0x38] sm:$0x1] %v5896
      %v5898 = vld [vmem:[%s5862 + $0x3c] sm:$0xf]
      %v5899 = vsel %vm613, %v5633, %v5898
      %5900 = vst [vmem:[%s5862 + $0x3c] sm:$0xf] %v5899
      %5901 = vst.msk [vmem:[%s5862 + $0x40] sm:$0xf] %vm199, %v5642
      %v5902 = vld [vmem:[%s5862 + $0x44] sm:$0x1]
      %v5903 = vsel %vm619, %v5643, %v5902
      %5904 = vst [vmem:[%s5862 + $0x44] sm:$0x1] %v5903
      %v5905 = vld [vmem:[%s5862 + $0x48] sm:$0xf]
      %v5906 = vsel %vm613, %v5650, %v5905
      %5907 = vst [vmem:[%s5862 + $0x48] sm:$0xf] %v5906
      %5908 = vst.msk [vmem:[%s5862 + $0x4c] sm:$0xf] %vm199, %v5659
      %v5909 = vld [vmem:[%s5862 + $0x50] sm:$0x1]
      %v5910 = vsel %vm619, %v5660, %v5909
      %5911 = vst [vmem:[%s5862 + $0x50] sm:$0x1] %v5910
      %v5912 = vld [vmem:[%s5862 + $0x54] sm:$0xf]
      %v5913 = vsel %vm613, %v5667, %v5912
      %5914 = vst [vmem:[%s5862 + $0x54] sm:$0xf] %v5913
      %5915 = vst.msk [vmem:[%s5862 + $0x58] sm:$0xf] %vm199, %v5676
      %v5916 = vld [vmem:[%s5862 + $0x5c] sm:$0x1]
      %v5917 = vsel %vm619, %v5677, %v5916
      %5918 = vst [vmem:[%s5862 + $0x5c] sm:$0x1] %v5917
      %v5919 = vld [vmem:[%s5862 + $0x60] sm:$0xf]
      %v5920 = vsel %vm613, %v5684, %v5919
      %5921 = vst [vmem:[%s5862 + $0x60] sm:$0xf] %v5920
      %5922 = vst.msk [vmem:[%s5862 + $0x64] sm:$0xf] %vm199, %v5693
      %v5923 = vld [vmem:[%s5862 + $0x68] sm:$0x1]
      %v5924 = vsel %vm619, %v5694, %v5923
      %5925 = vst [vmem:[%s5862 + $0x68] sm:$0x1] %v5924
      %v5926 = vld [vmem:[%s5862 + $0x6c] sm:$0xf]
      %v5927 = vsel %vm613, %v5701, %v5926
      %5928 = vst [vmem:[%s5862 + $0x6c] sm:$0xf] %v5927
      %5929 = vst.msk [vmem:[%s5862 + $0x70] sm:$0xf] %vm199, %v5710
      %v5930 = vld [vmem:[%s5862 + $0x74] sm:$0x1]
      %v5931 = vsel %vm619, %v5711, %v5930
      %5932 = vst [vmem:[%s5862 + $0x74] sm:$0x1] %v5931
      %v5933 = vld [vmem:[%s5862 + $0x78] sm:$0xf]
      %v5934 = vsel %vm613, %v5718, %v5933
      %5935 = vst [vmem:[%s5862 + $0x78] sm:$0xf] %v5934
      %5936 = vst.msk [vmem:[%s5862 + $0x7c] sm:$0xf] %vm199, %v5727
      %v5937 = vld [vmem:[%s5862 + $0x80] sm:$0x1]
      %v5938 = vsel %vm619, %v5728, %v5937
      %5939 = vst [vmem:[%s5862 + $0x80] sm:$0x1] %v5938
      %v5940 = vld [vmem:[%s5862 + $0x84] sm:$0xf]
      %v5941 = vsel %vm613, %v5735, %v5940
      %5942 = vst [vmem:[%s5862 + $0x84] sm:$0xf] %v5941
      %5943 = vst.msk [vmem:[%s5862 + $0x88] sm:$0xf] %vm199, %v5744
      %v5944 = vld [vmem:[%s5862 + $0x8c] sm:$0x1]
      %v5945 = vsel %vm619, %v5745, %v5944
      %5946 = vst [vmem:[%s5862 + $0x8c] sm:$0x1] %v5945
      %v5947 = vld [vmem:[%s5862 + $0x90] sm:$0xf]
      %v5948 = vsel %vm613, %v5752, %v5947
      %5949 = vst [vmem:[%s5862 + $0x90] sm:$0xf] %v5948
      %5950 = vst.msk [vmem:[%s5862 + $0x94] sm:$0xf] %vm199, %v5761
      %v5951 = vld [vmem:[%s5862 + $0x98] sm:$0x1]
      %v5952 = vsel %vm619, %v5762, %v5951
      %5953 = vst [vmem:[%s5862 + $0x98] sm:$0x1] %v5952
      %v5954 = vld [vmem:[%s5862 + $0x9c] sm:$0xf]
      %v5955 = vsel %vm613, %v5769, %v5954
      %5956 = vst [vmem:[%s5862 + $0x9c] sm:$0xf] %v5955
      %5957 = vst.msk [vmem:[%s5862 + $0xa0] sm:$0xf] %vm199, %v5778
      %v5958 = vld [vmem:[%s5862 + $0xa4] sm:$0x1]
      %v5959 = vsel %vm619, %v5779, %v5958
      %5960 = vst [vmem:[%s5862 + $0xa4] sm:$0x1] %v5959
      %v5961 = vld [vmem:[%s5862 + $0xa8] sm:$0xf]
      %v5962 = vsel %vm613, %v5786, %v5961
      %5963 = vst [vmem:[%s5862 + $0xa8] sm:$0xf] %v5962
      %5964 = vst.msk [vmem:[%s5862 + $0xac] sm:$0xf] %vm199, %v5795
      %v5965 = vld [vmem:[%s5862 + $0xb0] sm:$0x1]
      %v5966 = vsel %vm619, %v5796, %v5965
      %5967 = vst [vmem:[%s5862 + $0xb0] sm:$0x1] %v5966
      %v5968 = vld [vmem:[%s5862 + $0xb4] sm:$0xf]
      %v5969 = vsel %vm613, %v5803, %v5968
      %5970 = vst [vmem:[%s5862 + $0xb4] sm:$0xf] %v5969
      %5971 = vst.msk [vmem:[%s5862 + $0xb8] sm:$0xf] %vm199, %v5812
      %v5972 = vld [vmem:[%s5862 + $0xbc] sm:$0x1]
      %v5973 = vsel %vm619, %v5813, %v5972
      %5974 = vst [vmem:[%s5862 + $0xbc] sm:$0x1] %v5973
      %v5975 = vld [vmem:[#allocation3] sm:$0xf]
      %v5976 = vld [vmem:[#allocation3 + $0x4] sm:$0xf]
      %v5977 = vld [vmem:[#allocation3 + $0xc] sm:$0xf]
      %v5978 = vld [vmem:[#allocation3 + $0x10] sm:$0xf]
      %v5979 = vld [vmem:[#allocation3 + $0x18] sm:$0xf]
      %v5980 = vld [vmem:[#allocation3 + $0x1c] sm:$0xf]
      %v5981 = vld [vmem:[#allocation3 + $0x24] sm:$0xf]
      %v5982 = vld [vmem:[#allocation3 + $0x28] sm:$0xf]
      %v5983 = vld [vmem:[#allocation3 + $0x30] sm:$0xf]
      %v5984 = vld [vmem:[#allocation3 + $0x34] sm:$0xf]
      %v5985 = vld [vmem:[#allocation3 + $0x3c] sm:$0xf]
      %v5986 = vld [vmem:[#allocation3 + $0x40] sm:$0xf]
      %v5987 = vld [vmem:[#allocation3 + $0x48] sm:$0xf]
      %v5988 = vld [vmem:[#allocation3 + $0x4c] sm:$0xf]
      %v5989 = vld [vmem:[#allocation3 + $0x54] sm:$0xf]
      %v5990 = vld [vmem:[#allocation3 + $0x58] sm:$0xf]
      %v5991 = vld [vmem:[#allocation3 + $0x60] sm:$0xf]
      %v5992 = vld [vmem:[#allocation3 + $0x64] sm:$0xf]
      %v5993 = vld [vmem:[#allocation3 + $0x6c] sm:$0xf]
      %v5994 = vld [vmem:[#allocation3 + $0x70] sm:$0xf]
      %v5995 = vld [vmem:[#allocation3 + $0x78] sm:$0xf]
      %v5996 = vld [vmem:[#allocation3 + $0x7c] sm:$0xf]
      %v5997 = vld [vmem:[#allocation3 + $0x84] sm:$0xf]
      %v5998 = vld [vmem:[#allocation3 + $0x88] sm:$0xf]
      %v5999 = vld [vmem:[#allocation3 + $0x90] sm:$0xf]
      %v6000 = vld [vmem:[#allocation3 + $0x94] sm:$0xf]
      %v6001 = vld [vmem:[#allocation3 + $0x9c] sm:$0xf]
      %v6002 = vld [vmem:[#allocation3 + $0xa0] sm:$0xf]
      %v6003 = vld [vmem:[#allocation3 + $0xa8] sm:$0xf]
      %v6004 = vld [vmem:[#allocation3 + $0xac] sm:$0xf]
      %v6005 = vld [vmem:[#allocation3 + $0xb4] sm:$0xf]
      %v6006 = vld [vmem:[#allocation3 + $0xb8] sm:$0xf]
      %v6007 = vld [vmem:[%s2] sm:$0x3]
      %v6008 = vld [vmem:[#allocation3 + $0x8] sm:$0x1]
      %v6009 = vld [vmem:[#allocation3 + $0x14] sm:$0x1]
      %v6010 = vld [vmem:[#allocation3 + $0x20] sm:$0x1]
      %v6011 = vld [vmem:[#allocation3 + $0x2c] sm:$0x1]
      %v6012 = vld [vmem:[#allocation3 + $0x38] sm:$0x1]
      %v6013 = vld [vmem:[#allocation3 + $0x44] sm:$0x1]
      %v6014 = vld [vmem:[#allocation3 + $0x50] sm:$0x1]
      %v6015 = vld [vmem:[#allocation3 + $0x5c] sm:$0x1]
      %v6016 = vld [vmem:[#allocation3 + $0x68] sm:$0x1]
      %v6017 = vld [vmem:[#allocation3 + $0x74] sm:$0x1]
      %v6018 = vld [vmem:[#allocation3 + $0x80] sm:$0x1]
      %v6019 = vld [vmem:[#allocation3 + $0x8c] sm:$0x1]
      %v6020 = vld [vmem:[#allocation3 + $0x98] sm:$0x1]
      %v6021 = vld [vmem:[#allocation3 + $0xa4] sm:$0x1]
      %v6022 = vld [vmem:[#allocation3 + $0xb0] sm:$0x1]
      %v6023 = vld [vmem:[#allocation3 + $0xbc] sm:$0x1]
      %v6025 = vshrl.u32 %v5975, 16
      %v6027 = vrot.slane %v6025, 4
      %v6028 = vshll.u32 %v5975, 16
      %v6030 = vrot.slane %v6028, 5
      %v6031 = vor.u32 %v6027, %v6030
      %v6032 = vrot.slane %v6031, 4
      %v6034 = vshll.u32 %v5976, 16
      %v6036 = vrot.slane %v6034, 5
      %v6037 = vsel %vm779, %v6032, %v6036
      %v6038 = vshrl.u32 %v5976, 16
      %v6040 = vrot.slane %v6038, 4
      %v6041 = vor.u32 %v6040, %v6036
      %v6042 = vrot.slane %v6041, 4
      %v6044 = vshll.u32 %v6008, 16
      %v6046 = vrot.slane %v6044, 5
      %v6047 = vsel %vm779, %v6042, %v6046
      %v6049 = vshrl.u32 %v5977, 16
      %v6051 = vrot.slane %v6049, 4
      %v6052 = vshll.u32 %v5977, 16
      %v6054 = vrot.slane %v6052, 5
      %v6055 = vor.u32 %v6051, %v6054
      %v6056 = vrot.slane %v6055, 4
      %v6058 = vshll.u32 %v5978, 16
      %v6060 = vrot.slane %v6058, 5
      %v6061 = vsel %vm779, %v6056, %v6060
      %v6062 = vshrl.u32 %v5978, 16
      %v6064 = vrot.slane %v6062, 4
      %v6065 = vor.u32 %v6064, %v6060
      %v6066 = vrot.slane %v6065, 4
      %v6068 = vshll.u32 %v6009, 16
      %v6070 = vrot.slane %v6068, 5
      %v6071 = vsel %vm779, %v6066, %v6070
      %v6073 = vshrl.u32 %v5979, 16
      %v6075 = vrot.slane %v6073, 4
      %v6076 = vshll.u32 %v5979, 16
      %v6078 = vrot.slane %v6076, 5
      %v6079 = vor.u32 %v6075, %v6078
      %v6080 = vrot.slane %v6079, 4
      %v6082 = vshll.u32 %v5980, 16
      %v6084 = vrot.slane %v6082, 5
      %v6085 = vsel %vm779, %v6080, %v6084
      %v6086 = vshrl.u32 %v5980, 16
      %v6088 = vrot.slane %v6086, 4
      %v6089 = vor.u32 %v6088, %v6084
      %v6090 = vrot.slane %v6089, 4
      %v6092 = vshll.u32 %v6010, 16
      %v6094 = vrot.slane %v6092, 5
      %v6095 = vsel %vm779, %v6090, %v6094
      %v6097 = vshrl.u32 %v5981, 16
      %v6099 = vrot.slane %v6097, 4
      %v6100 = vshll.u32 %v5981, 16
      %v6102 = vrot.slane %v6100, 5
      %v6103 = vor.u32 %v6099, %v6102
      %v6104 = vrot.slane %v6103, 4
      %v6106 = vshll.u32 %v5982, 16
      %v6108 = vrot.slane %v6106, 5
      %v6109 = vsel %vm779, %v6104, %v6108
      %v6110 = vshrl.u32 %v5982, 16
      %v6112 = vrot.slane %v6110, 4
      %v6113 = vor.u32 %v6112, %v6108
      %v6114 = vrot.slane %v6113, 4
      %v6116 = vshll.u32 %v6011, 16
      %v6118 = vrot.slane %v6116, 5
      %v6119 = vsel %vm779, %v6114, %v6118
      %v6121 = vshrl.u32 %v5983, 16
      %v6123 = vrot.slane %v6121, 4
      %v6124 = vshll.u32 %v5983, 16
      %v6126 = vrot.slane %v6124, 5
      %v6127 = vor.u32 %v6123, %v6126
      %v6128 = vrot.slane %v6127, 4
      %v6130 = vshll.u32 %v5984, 16
      %v6132 = vrot.slane %v6130, 5
      %v6133 = vsel %vm779, %v6128, %v6132
      %v6134 = vshrl.u32 %v5984, 16
      %v6136 = vrot.slane %v6134, 4
      %v6137 = vor.u32 %v6136, %v6132
      %v6138 = vrot.slane %v6137, 4
      %v6140 = vshll.u32 %v6012, 16
      %v6142 = vrot.slane %v6140, 5
      %v6143 = vsel %vm779, %v6138, %v6142
      %v6145 = vshrl.u32 %v5985, 16
      %v6147 = vrot.slane %v6145, 4
      %v6148 = vshll.u32 %v5985, 16
      %v6150 = vrot.slane %v6148, 5
      %v6151 = vor.u32 %v6147, %v6150
      %v6152 = vrot.slane %v6151, 4
      %v6154 = vshll.u32 %v5986, 16
      %v6156 = vrot.slane %v6154, 5
      %v6157 = vsel %vm779, %v6152, %v6156
      %v6158 = vshrl.u32 %v5986, 16
      %v6160 = vrot.slane %v6158, 4
      %v6161 = vor.u32 %v6160, %v6156
      %v6162 = vrot.slane %v6161, 4
      %v6164 = vshll.u32 %v6013, 16
      %v6166 = vrot.slane %v6164, 5
      %v6167 = vsel %vm779, %v6162, %v6166
      %v6169 = vshrl.u32 %v5987, 16
      %v6171 = vrot.slane %v6169, 4
      %v6172 = vshll.u32 %v5987, 16
      %v6174 = vrot.slane %v6172, 5
      %v6175 = vor.u32 %v6171, %v6174
      %v6176 = vrot.slane %v6175, 4
      %v6178 = vshll.u32 %v5988, 16
      %v6180 = vrot.slane %v6178, 5
      %v6181 = vsel %vm779, %v6176, %v6180
      %v6182 = vshrl.u32 %v5988, 16
      %v6184 = vrot.slane %v6182, 4
      %v6185 = vor.u32 %v6184, %v6180
      %v6186 = vrot.slane %v6185, 4
      %v6188 = vshll.u32 %v6014, 16
      %v6190 = vrot.slane %v6188, 5
      %v6191 = vsel %vm779, %v6186, %v6190
      %v6193 = vshrl.u32 %v5989, 16
      %v6195 = vrot.slane %v6193, 4
      %v6196 = vshll.u32 %v5989, 16
      %v6198 = vrot.slane %v6196, 5
      %v6199 = vor.u32 %v6195, %v6198
      %v6200 = vrot.slane %v6199, 4
      %v6202 = vshll.u32 %v5990, 16
      %v6204 = vrot.slane %v6202, 5
      %v6205 = vsel %vm779, %v6200, %v6204
      %v6206 = vshrl.u32 %v5990, 16
      %v6208 = vrot.slane %v6206, 4
      %v6209 = vor.u32 %v6208, %v6204
      %v6210 = vrot.slane %v6209, 4
      %v6212 = vshll.u32 %v6015, 16
      %v6214 = vrot.slane %v6212, 5
      %v6215 = vsel %vm779, %v6210, %v6214
      %v6217 = vshrl.u32 %v5991, 16
      %v6219 = vrot.slane %v6217, 4
      %v6220 = vshll.u32 %v5991, 16
      %v6222 = vrot.slane %v6220, 5
      %v6223 = vor.u32 %v6219, %v6222
      %v6224 = vrot.slane %v6223, 4
      %v6226 = vshll.u32 %v5992, 16
      %v6228 = vrot.slane %v6226, 5
      %v6229 = vsel %vm779, %v6224, %v6228
      %v6230 = vshrl.u32 %v5992, 16
      %v6232 = vrot.slane %v6230, 4
      %v6233 = vor.u32 %v6232, %v6228
      %v6234 = vrot.slane %v6233, 4
      %v6236 = vshll.u32 %v6016, 16
      %v6238 = vrot.slane %v6236, 5
      %v6239 = vsel %vm779, %v6234, %v6238
      %v6241 = vshrl.u32 %v5993, 16
      %v6243 = vrot.slane %v6241, 4
      %v6244 = vshll.u32 %v5993, 16
      %v6246 = vrot.slane %v6244, 5
      %v6247 = vor.u32 %v6243, %v6246
      %v6248 = vrot.slane %v6247, 4
      %v6250 = vshll.u32 %v5994, 16
      %v6252 = vrot.slane %v6250, 5
      %v6253 = vsel %vm779, %v6248, %v6252
      %v6254 = vshrl.u32 %v5994, 16
      %v6256 = vrot.slane %v6254, 4
      %v6257 = vor.u32 %v6256, %v6252
      %v6258 = vrot.slane %v6257, 4
      %v6260 = vshll.u32 %v6017, 16
      %v6262 = vrot.slane %v6260, 5
      %v6263 = vsel %vm779, %v6258, %v6262
      %v6265 = vshrl.u32 %v5995, 16
      %v6267 = vrot.slane %v6265, 4
      %v6268 = vshll.u32 %v5995, 16
      %v6270 = vrot.slane %v6268, 5
      %v6271 = vor.u32 %v6267, %v6270
      %v6272 = vrot.slane %v6271, 4
      %v6274 = vshll.u32 %v5996, 16
      %v6276 = vrot.slane %v6274, 5
      %v6277 = vsel %vm779, %v6272, %v6276
      %v6278 = vshrl.u32 %v5996, 16
      %v6280 = vrot.slane %v6278, 4
      %v6281 = vor.u32 %v6280, %v6276
      %v6282 = vrot.slane %v6281, 4
      %v6284 = vshll.u32 %v6018, 16
      %v6286 = vrot.slane %v6284, 5
      %v6287 = vsel %vm779, %v6282, %v6286
      %v6289 = vshrl.u32 %v5997, 16
      %v6291 = vrot.slane %v6289, 4
      %v6292 = vshll.u32 %v5997, 16
      %v6294 = vrot.slane %v6292, 5
      %v6295 = vor.u32 %v6291, %v6294
      %v6296 = vrot.slane %v6295, 4
      %v6298 = vshll.u32 %v5998, 16
      %v6300 = vrot.slane %v6298, 5
      %v6301 = vsel %vm779, %v6296, %v6300
      %v6302 = vshrl.u32 %v5998, 16
      %v6304 = vrot.slane %v6302, 4
      %v6305 = vor.u32 %v6304, %v6300
      %v6306 = vrot.slane %v6305, 4
      %v6308 = vshll.u32 %v6019, 16
      %v6310 = vrot.slane %v6308, 5
      %v6311 = vsel %vm779, %v6306, %v6310
      %v6313 = vshrl.u32 %v5999, 16
      %v6315 = vrot.slane %v6313, 4
      %v6316 = vshll.u32 %v5999, 16
      %v6318 = vrot.slane %v6316, 5
      %v6319 = vor.u32 %v6315, %v6318
      %v6320 = vrot.slane %v6319, 4
      %v6322 = vshll.u32 %v6000, 16
      %v6324 = vrot.slane %v6322, 5
      %v6325 = vsel %vm779, %v6320, %v6324
      %v6326 = vshrl.u32 %v6000, 16
      %v6328 = vrot.slane %v6326, 4
      %v6329 = vor.u32 %v6328, %v6324
      %v6330 = vrot.slane %v6329, 4
      %v6332 = vshll.u32 %v6020, 16
      %v6334 = vrot.slane %v6332, 5
      %v6335 = vsel %vm779, %v6330, %v6334
      %v6337 = vshrl.u32 %v6001, 16
      %v6339 = vrot.slane %v6337, 4
      %v6340 = vshll.u32 %v6001, 16
      %v6342 = vrot.slane %v6340, 5
      %v6343 = vor.u32 %v6339, %v6342
      %v6344 = vrot.slane %v6343, 4
      %v6346 = vshll.u32 %v6002, 16
      %v6348 = vrot.slane %v6346, 5
      %v6349 = vsel %vm779, %v6344, %v6348
      %v6350 = vshrl.u32 %v6002, 16
      %v6352 = vrot.slane %v6350, 4
      %v6353 = vor.u32 %v6352, %v6348
      %v6354 = vrot.slane %v6353, 4
      %v6356 = vshll.u32 %v6021, 16
      %v6358 = vrot.slane %v6356, 5
      %v6359 = vsel %vm779, %v6354, %v6358
      %v6361 = vshrl.u32 %v6003, 16
      %v6363 = vrot.slane %v6361, 4
      %v6364 = vshll.u32 %v6003, 16
      %v6366 = vrot.slane %v6364, 5
      %v6367 = vor.u32 %v6363, %v6366
      %v6368 = vrot.slane %v6367, 4
      %v6370 = vshll.u32 %v6004, 16
      %v6372 = vrot.slane %v6370, 5
      %v6373 = vsel %vm779, %v6368, %v6372
      %v6374 = vshrl.u32 %v6004, 16
      %v6376 = vrot.slane %v6374, 4
      %v6377 = vor.u32 %v6376, %v6372
      %v6378 = vrot.slane %v6377, 4
      %v6380 = vshll.u32 %v6022, 16
      %v6382 = vrot.slane %v6380, 5
      %v6383 = vsel %vm779, %v6378, %v6382
      %v6385 = vshrl.u32 %v6005, 16
      %v6387 = vrot.slane %v6385, 4
      %v6388 = vshll.u32 %v6005, 16
      %v6390 = vrot.slane %v6388, 5
      %v6391 = vor.u32 %v6387, %v6390
      %v6392 = vrot.slane %v6391, 4
      %v6394 = vshll.u32 %v6006, 16
      %v6396 = vrot.slane %v6394, 5
      %v6397 = vsel %vm779, %v6392, %v6396
      %v6398 = vshrl.u32 %v6006, 16
      %v6400 = vrot.slane %v6398, 4
      %v6401 = vor.u32 %v6400, %v6396
      %v6402 = vrot.slane %v6401, 4
      %v6404 = vshll.u32 %v6023, 16
      %v6406 = vrot.slane %v6404, 5
      %v6407 = vsel %vm779, %v6402, %v6406
      %s6408 = scalar_lea.vmem %s2, 2
      %v6409 = vld [vmem:[%s6408] sm:$0x3]
      %v6410 = vunpack.c.l.b16 %v6037
      %v6411 = vunpack.c.l.b16 %v6047
      %v6412 = vunpack.c.l.b16 %v6061
      %v6413 = vunpack.c.l.b16 %v6071
      %v6414 = vunpack.c.l.b16 %v6085
      %v6415 = vunpack.c.l.b16 %v6095
      %v6416 = vunpack.c.l.b16 %v6109
      %v6417 = vunpack.c.l.b16 %v6119
      %v6418 = vunpack.c.l.b16 %v6133
      %v6419 = vunpack.c.l.b16 %v6143
      %v6420 = vunpack.c.l.b16 %v6157
      %v6421 = vunpack.c.l.b16 %v6167
      %v6422 = vunpack.c.l.b16 %v6181
      %v6423 = vunpack.c.l.b16 %v6191
      %v6424 = vunpack.c.l.b16 %v6205
      %v6425 = vunpack.c.l.b16 %v6215
      %v6426 = vunpack.c.l.b16 %v6229
      %v6427 = vunpack.c.l.b16 %v6239
      %v6428 = vunpack.c.l.b16 %v6253
      %v6429 = vunpack.c.l.b16 %v6263
      %v6430 = vunpack.c.l.b16 %v6277
      %v6431 = vunpack.c.l.b16 %v6287
      %v6432 = vunpack.c.l.b16 %v6301
      %v6433 = vunpack.c.l.b16 %v6311
      %v6434 = vunpack.c.l.b16 %v6325
      %v6435 = vunpack.c.l.b16 %v6335
      %v6436 = vunpack.c.l.b16 %v6349
      %v6437 = vunpack.c.l.b16 %v6359
      %v6438 = vunpack.c.l.b16 %v6373
      %v6439 = vunpack.c.l.b16 %v6383
      %v6440 = vunpack.c.l.b16 %v6397
      %v6441 = vunpack.c.l.b16 %v6407
      %v6442 = vpack.c.b16 %v6411, %v6410
      %v6443 = vpack.c.b16 %v6413, %v6412
      %v6444 = vpack.c.b16 %v6415, %v6414
      %v6445 = vpack.c.b16 %v6417, %v6416
      %v6446 = vpack.c.b16 %v6419, %v6418
      %v6447 = vpack.c.b16 %v6421, %v6420
      %v6448 = vpack.c.b16 %v6423, %v6422
      %v6449 = vpack.c.b16 %v6425, %v6424
      %v6450 = vpack.c.b16 %v6427, %v6426
      %v6451 = vpack.c.b16 %v6429, %v6428
      %v6452 = vpack.c.b16 %v6431, %v6430
      %v6453 = vpack.c.b16 %v6433, %v6432
      %v6454 = vpack.c.b16 %v6435, %v6434
      %v6455 = vpack.c.b16 %v6437, %v6436
      %v6456 = vpack.c.b16 %v6439, %v6438
      %v6457 = vpack.c.b16 %v6441, %v6440
      %v6459 = vsel %vm1214, %v6442, 0
      %v6462 = vsel %vm1214, %v6443, 0
      %v6465 = vsel %vm1214, %v6444, 0
      %v6468 = vsel %vm1214, %v6445, 0
      %v6471 = vsel %vm1214, %v6446, 0
      %v6474 = vsel %vm1214, %v6447, 0
      %v6477 = vsel %vm1214, %v6448, 0
      %v6480 = vsel %vm1214, %v6449, 0
      %v6483 = vsel %vm1214, %v6450, 0
      %v6486 = vsel %vm1214, %v6451, 0
      %v6489 = vsel %vm1214, %v6452, 0
      %v6492 = vsel %vm1214, %v6453, 0
      %v6495 = vsel %vm1214, %v6454, 0
      %v6498 = vsel %vm1214, %v6455, 0
      %v6501 = vsel %vm1214, %v6456, 0
      %v6504 = vsel %vm1214, %v6457, 0
      %v6507 = vsel %vm1263, %v6409, 0
      %6509 = vmatprep.subr.bf16.mxu0 0
      %6510 = vmatpush1.bf16.msra.mxu0 %v6507
      %6511 = vmatprep.subr.bf16.mxu0 0
      %6512 = vmatpush1.bf16.msra.mxu0 0
      %6513 = vmatprep.subr.bf16.mxu0 0
      %6514 = vmatpush1.bf16.msra.mxu0 0
      %6515 = vmatprep.subr.bf16.mxu0 0
      %6516 = vmatpush1.bf16.msra.mxu0 0
      %6517 = vmatprep.subr.bf16.mxu0 0
      %6518 = vmatpush1.bf16.msra.mxu0 0
      %6519 = vmatprep.subr.bf16.mxu0 0
      %6520 = vmatpush1.bf16.msra.mxu0 0
      %6521 = vmatprep.subr.bf16.mxu0 0
      %6522 = vmatpush1.bf16.msra.mxu0 0
      %6523 = vmatprep.subr.bf16.mxu0 0
      %6524 = vmatpush1.bf16.msra.mxu0 0
      %6525 = vmatprep.subr.bf16.mxu0 0
      %6526 = vmatpush1.bf16.msra.mxu0 0
      %6527 = vmatprep.subr.bf16.mxu0 0
      %6528 = vmatpush1.bf16.msra.mxu0 0
      %6529 = vmatprep.subr.bf16.mxu0 0
      %6530 = vmatpush1.bf16.msra.mxu0 0
      %6531 = vmatprep.subr.bf16.mxu0 0
      %6532 = vmatpush1.bf16.msra.mxu0 0
      %6533 = vmatprep.subr.bf16.mxu0 0
      %6534 = vmatpush1.bf16.msra.mxu0 0
      %6535 = vmatprep.subr.bf16.mxu0 0
      %6536 = vmatpush1.bf16.msra.mxu0 0
      %6537 = vmatprep.subr.bf16.mxu0 0
      %6538 = vmatpush1.bf16.msra.mxu0 0
      %6539 = vmatprep.subr.bf16.mxu0 0
      %6540 = vmatpush1.bf16.msra.mxu0 0
      %6541 = vmatprep.mubr.bf16.mxu0 0
      %6542 = vmatmul.mubr.bf16.gmra.mrb[0].mxu0 %v6459
      %v6543 = vpop.f32.mrb[0].mxu0
      %v6544 = vadd.f32 0.0, %v6543
      %v6545 = vpop.f32.mrb[0].mxu0
      %v6546 = vpop.f32.mrb[0].mxu0
      %v6547 = vadd.f32 0.0, %v6546
      %v6548 = vpop.f32.mrb[0].mxu0
      %6549 = vmatprep.mubr.bf16.mxu0 0
      %6550 = vmatmul.mubr.bf16.gmra.mrb[0].mxu0 %v6462
      %v6551 = vpop.f32.mrb[0].mxu0
      %v6552 = vadd.f32 0.0, %v6551
      %v6553 = vpop.f32.mrb[0].mxu0
      %v6554 = vpop.f32.mrb[0].mxu0
      %v6555 = vadd.f32 0.0, %v6554
      %v6556 = vpop.f32.mrb[0].mxu0
      %6557 = vmatprep.mubr.bf16.mxu0 0
      %6558 = vmatmul.mubr.bf16.gmra.mrb[0].mxu0 %v6465
      %v6559 = vpop.f32.mrb[0].mxu0
      %v6560 = vadd.f32 0.0, %v6559
      %v6561 = vpop.f32.mrb[0].mxu0
      %v6562 = vpop.f32.mrb[0].mxu0
      %v6563 = vadd.f32 0.0, %v6562
      %v6564 = vpop.f32.mrb[0].mxu0
      %6565 = vmatprep.mubr.bf16.mxu0 0
      %6566 = vmatmul.mubr.bf16.gmra.mrb[0].mxu0 %v6468
      %v6567 = vpop.f32.mrb[0].mxu0
      %v6568 = vadd.f32 0.0, %v6567
      %v6569 = vpop.f32.mrb[0].mxu0
      %v6570 = vpop.f32.mrb[0].mxu0
      %v6571 = vadd.f32 0.0, %v6570
      %v6572 = vpop.f32.mrb[0].mxu0
      %6573 = vmatprep.mubr.bf16.mxu0 0
      %6574 = vmatmul.mubr.bf16.gmra.mrb[0].mxu0 %v6471
      %v6575 = vpop.f32.mrb[0].mxu0
      %v6576 = vadd.f32 0.0, %v6575
      %v6577 = vpop.f32.mrb[0].mxu0
      %v6578 = vpop.f32.mrb[0].mxu0
      %v6579 = vadd.f32 0.0, %v6578
      %v6580 = vpop.f32.mrb[0].mxu0
      %6581 = vmatprep.mubr.bf16.mxu0 0
      %6582 = vmatmul.mubr.bf16.gmra.mrb[0].mxu0 %v6474
      %v6583 = vpop.f32.mrb[0].mxu0
      %v6584 = vadd.f32 0.0, %v6583
      %v6585 = vpop.f32.mrb[0].mxu0
      %v6586 = vpop.f32.mrb[0].mxu0
      %v6587 = vadd.f32 0.0, %v6586
      %v6588 = vpop.f32.mrb[0].mxu0
      %6589 = vmatprep.mubr.bf16.mxu0 0
      %6590 = vmatmul.mubr.bf16.gmra.mrb[0].mxu0 %v6477
      %v6591 = vpop.f32.mrb[0].mxu0
      %v6592 = vadd.f32 0.0, %v6591
      %v6593 = vpop.f32.mrb[0].mxu0
      %v6594 = vpop.f32.mrb[0].mxu0
      %v6595 = vadd.f32 0.0, %v6594
      %v6596 = vpop.f32.mrb[0].mxu0
      %6597 = vmatprep.mubr.bf16.mxu0 0
      %6598 = vmatmul.mubr.bf16.gmra.mrb[0].mxu0 %v6480
      %v6599 = vpop.f32.mrb[0].mxu0
      %v6600 = vadd.f32 0.0, %v6599
      %v6601 = vpop.f32.mrb[0].mxu0
      %v6602 = vpop.f32.mrb[0].mxu0
      %v6603 = vadd.f32 0.0, %v6602
      %v6604 = vpop.f32.mrb[0].mxu0
      %6605 = vmatprep.mubr.bf16.mxu0 0
      %6606 = vmatmul.mubr.bf16.gmra.mrb[0].mxu0 %v6483
      %v6607 = vpop.f32.mrb[0].mxu0
      %v6608 = vadd.f32 0.0, %v6607
      %v6609 = vpop.f32.mrb[0].mxu0
      %v6610 = vpop.f32.mrb[0].mxu0
      %v6611 = vadd.f32 0.0, %v6610
      %v6612 = vpop.f32.mrb[0].mxu0
      %6613 = vmatprep.mubr.bf16.mxu0 0
      %6614 = vmatmul.mubr.bf16.gmra.mrb[0].mxu0 %v6486
      %v6615 = vpop.f32.mrb[0].mxu0
      %v6616 = vadd.f32 0.0, %v6615
      %v6617 = vpop.f32.mrb[0].mxu0
      %v6618 = vpop.f32.mrb[0].mxu0
      %v6619 = vadd.f32 0.0, %v6618
      %v6620 = vpop.f32.mrb[0].mxu0
      %6621 = vmatprep.mubr.bf16.mxu0 0
      %6622 = vmatmul.mubr.bf16.gmra.mrb[0].mxu0 %v6489
      %v6623 = vpop.f32.mrb[0].mxu0
      %v6624 = vadd.f32 0.0, %v6623
      %v6625 = vpop.f32.mrb[0].mxu0
      %v6626 = vpop.f32.mrb[0].mxu0
      %v6627 = vadd.f32 0.0, %v6626
      %v6628 = vpop.f32.mrb[0].mxu0
      %6629 = vmatprep.mubr.bf16.mxu0 0
      %6630 = vmatmul.mubr.bf16.gmra.mrb[0].mxu0 %v6492
      %v6631 = vpop.f32.mrb[0].mxu0
      %v6632 = vadd.f32 0.0, %v6631
      %v6633 = vpop.f32.mrb[0].mxu0
      %v6634 = vpop.f32.mrb[0].mxu0
      %v6635 = vadd.f32 0.0, %v6634
      %v6636 = vpop.f32.mrb[0].mxu0
      %6637 = vmatprep.mubr.bf16.mxu0 0
      %6638 = vmatmul.mubr.bf16.gmra.mrb[0].mxu0 %v6495
      %v6639 = vpop.f32.mrb[0].mxu0
      %v6640 = vadd.f32 0.0, %v6639
      %v6641 = vpop.f32.mrb[0].mxu0
      %v6642 = vpop.f32.mrb[0].mxu0
      %v6643 = vadd.f32 0.0, %v6642
      %v6644 = vpop.f32.mrb[0].mxu0
      %6645 = vmatprep.mubr.bf16.mxu0 0
      %6646 = vmatmul.mubr.bf16.gmra.mrb[0].mxu0 %v6498
      %v6647 = vpop.f32.mrb[0].mxu0
      %v6648 = vadd.f32 0.0, %v6647
      %v6649 = vpop.f32.mrb[0].mxu0
      %v6650 = vpop.f32.mrb[0].mxu0
      %v6651 = vadd.f32 0.0, %v6650
      %v6652 = vpop.f32.mrb[0].mxu0
      %6653 = vmatprep.mubr.bf16.mxu0 0
      %6654 = vmatmul.mubr.bf16.gmra.mrb[0].mxu0 %v6501
      %v6655 = vpop.f32.mrb[0].mxu0
      %v6656 = vadd.f32 0.0, %v6655
      %v6657 = vpop.f32.mrb[0].mxu0
      %v6658 = vpop.f32.mrb[0].mxu0
      %v6659 = vadd.f32 0.0, %v6658
      %v6660 = vpop.f32.mrb[0].mxu0
      %6661 = vmatprep.mubr.bf16.mxu0 0
      %6662 = vmatmul.mubr.bf16.gmra.mrb[0].mxu0 %v6504
      %v6663 = vpop.f32.mrb[0].mxu0
      %v6664 = vadd.f32 0.0, %v6663
      %v6665 = vpop.f32.mrb[0].mxu0
      %v6666 = vpop.f32.mrb[0].mxu0
      %v6667 = vadd.f32 0.0, %v6666
      %v6668 = vpop.f32.mrb[0].mxu0
      %6669 = vdwg.mxu0
      %v6702 = vunpack.c.l.b16 %v5975
      %v6703 = vunpack.c.l.b16 %v5976
      %v6704 = vunpack.c.l.b16 %v5977
      %v6705 = vunpack.c.l.b16 %v5978
      %v6706 = vunpack.c.l.b16 %v5979
      %v6707 = vunpack.c.l.b16 %v5980
      %v6708 = vunpack.c.l.b16 %v5981
      %v6709 = vunpack.c.l.b16 %v5982
      %v6710 = vunpack.c.l.b16 %v5983
      %v6711 = vunpack.c.l.b16 %v5984
      %v6712 = vunpack.c.l.b16 %v5985
      %v6713 = vunpack.c.l.b16 %v5986
      %v6714 = vunpack.c.l.b16 %v5987
      %v6715 = vunpack.c.l.b16 %v5988
      %v6716 = vunpack.c.l.b16 %v5989
      %v6717 = vunpack.c.l.b16 %v5990
      %v6718 = vunpack.c.l.b16 %v5991
      %v6719 = vunpack.c.l.b16 %v5992
      %v6720 = vunpack.c.l.b16 %v5993
      %v6721 = vunpack.c.l.b16 %v5994
      %v6722 = vunpack.c.l.b16 %v5995
      %v6723 = vunpack.c.l.b16 %v5996
      %v6724 = vunpack.c.l.b16 %v5997
      %v6725 = vunpack.c.l.b16 %v5998
      %v6726 = vunpack.c.l.b16 %v5999
      %v6727 = vunpack.c.l.b16 %v6000
      %v6728 = vunpack.c.l.b16 %v6001
      %v6729 = vunpack.c.l.b16 %v6002
      %v6730 = vunpack.c.l.b16 %v6003
      %v6731 = vunpack.c.l.b16 %v6004
      %v6732 = vunpack.c.l.b16 %v6005
      %v6733 = vunpack.c.l.b16 %v6006
      %v6734 = vpack.c.b16 %v6703, %v6702
      %v6735 = vpack.c.b16 %v6705, %v6704
      %v6736 = vpack.c.b16 %v6707, %v6706
      %v6737 = vpack.c.b16 %v6709, %v6708
      %v6738 = vpack.c.b16 %v6711, %v6710
      %v6739 = vpack.c.b16 %v6713, %v6712
      %v6740 = vpack.c.b16 %v6715, %v6714
      %v6741 = vpack.c.b16 %v6717, %v6716
      %v6742 = vpack.c.b16 %v6719, %v6718
      %v6743 = vpack.c.b16 %v6721, %v6720
      %v6744 = vpack.c.b16 %v6723, %v6722
      %v6745 = vpack.c.b16 %v6725, %v6724
      %v6746 = vpack.c.b16 %v6727, %v6726
      %v6747 = vpack.c.b16 %v6729, %v6728
      %v6748 = vpack.c.b16 %v6731, %v6730
      %v6749 = vpack.c.b16 %v6733, %v6732
      %v6751 = vsel %vm1214, %v6734, 0
      %v6754 = vsel %vm1214, %v6735, 0
      %v6757 = vsel %vm1214, %v6736, 0
      %v6760 = vsel %vm1214, %v6737, 0
      %v6763 = vsel %vm1214, %v6738, 0
      %v6766 = vsel %vm1214, %v6739, 0
      %v6769 = vsel %vm1214, %v6740, 0
      %v6772 = vsel %vm1214, %v6741, 0
      %v6775 = vsel %vm1214, %v6742, 0
      %v6778 = vsel %vm1214, %v6743, 0
      %v6781 = vsel %vm1214, %v6744, 0
      %v6784 = vsel %vm1214, %v6745, 0
      %v6787 = vsel %vm1214, %v6746, 0
      %v6790 = vsel %vm1214, %v6747, 0
      %v6793 = vsel %vm1214, %v6748, 0
      %v6796 = vsel %vm1214, %v6749, 0
      %v6799 = vsel %vm1263, %v6007, 0
      %6801 = vmatprep.subr.bf16.mxu0 0
      %6802 = vmatpush1.bf16.msra.mxu0 %v6799
      %6803 = vmatprep.subr.bf16.mxu0 0
      %6804 = vmatpush1.bf16.msra.mxu0 0
      %6805 = vmatprep.subr.bf16.mxu0 0
      %6806 = vmatpush1.bf16.msra.mxu0 0
      %6807 = vmatprep.subr.bf16.mxu0 0
      %6808 = vmatpush1.bf16.msra.mxu0 0
      %6809 = vmatprep.subr.bf16.mxu0 0
      %6810 = vmatpush1.bf16.msra.mxu0 0
      %6811 = vmatprep.subr.bf16.mxu0 0
      %6812 = vmatpush1.bf16.msra.mxu0 0
      %6813 = vmatprep.subr.bf16.mxu0 0
      %6814 = vmatpush1.bf16.msra.mxu0 0
      %6815 = vmatprep.subr.bf16.mxu0 0
      %6816 = vmatpush1.bf16.msra.mxu0 0
      %6817 = vmatprep.subr.bf16.mxu0 0
      %6818 = vmatpush1.bf16.msra.mxu0 0
      %6819 = vmatprep.subr.bf16.mxu0 0
      %6820 = vmatpush1.bf16.msra.mxu0 0
      %6821 = vmatprep.subr.bf16.mxu0 0
      %6822 = vmatpush1.bf16.msra.mxu0 0
      %6823 = vmatprep.subr.bf16.mxu0 0
      %6824 = vmatpush1.bf16.msra.mxu0 0
      %6825 = vmatprep.subr.bf16.mxu0 0
      %6826 = vmatpush1.bf16.msra.mxu0 0
      %6827 = vmatprep.subr.bf16.mxu0 0
      %6828 = vmatpush1.bf16.msra.mxu0 0
      %6829 = vmatprep.subr.bf16.mxu0 0
      %6830 = vmatpush1.bf16.msra.mxu0 0
      %6831 = vmatprep.subr.bf16.mxu0 0
      %6832 = vmatpush1.bf16.msra.mxu0 0
      %6833 = vmatprep.mubr.bf16.mxu0 0
      %6834 = vmatmul.mubr.bf16.gmra.mrb[0].mxu0 %v6751
      %v6835 = vpop.f32.mrb[0].mxu0
      %v6836 = vadd.f32 %v6544, %v6835
      %v6837 = vpop.f32.mrb[0].mxu0
      %v6838 = vpop.f32.mrb[0].mxu0
      %v6839 = vadd.f32 %v6547, %v6838
      %v6840 = vpop.f32.mrb[0].mxu0
      %6841 = vmatprep.mubr.bf16.mxu0 0
      %6842 = vmatmul.mubr.bf16.gmra.mrb[0].mxu0 %v6754
      %v6843 = vpop.f32.mrb[0].mxu0
      %v6844 = vadd.f32 %v6552, %v6843
      %v6845 = vpop.f32.mrb[0].mxu0
      %v6846 = vpop.f32.mrb[0].mxu0
      %v6847 = vadd.f32 %v6555, %v6846
      %v6848 = vpop.f32.mrb[0].mxu0
      %6849 = vmatprep.mubr.bf16.mxu0 0
      %6850 = vmatmul.mubr.bf16.gmra.mrb[0].mxu0 %v6757
      %v6851 = vpop.f32.mrb[0].mxu0
      %v6852 = vadd.f32 %v6560, %v6851
      %v6853 = vpop.f32.mrb[0].mxu0
      %v6854 = vpop.f32.mrb[0].mxu0
      %v6855 = vadd.f32 %v6563, %v6854
      %v6856 = vpop.f32.mrb[0].mxu0
      %6857 = vmatprep.mubr.bf16.mxu0 0
      %6858 = vmatmul.mubr.bf16.gmra.mrb[0].mxu0 %v6760
      %v6859 = vpop.f32.mrb[0].mxu0
      %v6860 = vadd.f32 %v6568, %v6859
      %v6861 = vpop.f32.mrb[0].mxu0
      %v6862 = vpop.f32.mrb[0].mxu0
      %v6863 = vadd.f32 %v6571, %v6862
      %v6864 = vpop.f32.mrb[0].mxu0
      %6865 = vmatprep.mubr.bf16.mxu0 0
      %6866 = vmatmul.mubr.bf16.gmra.mrb[0].mxu0 %v6763
      %v6867 = vpop.f32.mrb[0].mxu0
      %v6868 = vadd.f32 %v6576, %v6867
      %v6869 = vpop.f32.mrb[0].mxu0
      %v6870 = vpop.f32.mrb[0].mxu0
      %v6871 = vadd.f32 %v6579, %v6870
      %v6872 = vpop.f32.mrb[0].mxu0
      %6873 = vmatprep.mubr.bf16.mxu0 0
      %6874 = vmatmul.mubr.bf16.gmra.mrb[0].mxu0 %v6766
      %v6875 = vpop.f32.mrb[0].mxu0
      %v6876 = vadd.f32 %v6584, %v6875
      %v6877 = vpop.f32.mrb[0].mxu0
      %v6878 = vpop.f32.mrb[0].mxu0
      %v6879 = vadd.f32 %v6587, %v6878
      %v6880 = vpop.f32.mrb[0].mxu0
      %6881 = vmatprep.mubr.bf16.mxu0 0
      %6882 = vmatmul.mubr.bf16.gmra.mrb[0].mxu0 %v6769
      %v6883 = vpop.f32.mrb[0].mxu0
      %v6884 = vadd.f32 %v6592, %v6883
      %v6885 = vpop.f32.mrb[0].mxu0
      %v6886 = vpop.f32.mrb[0].mxu0
      %v6887 = vadd.f32 %v6595, %v6886
      %v6888 = vpop.f32.mrb[0].mxu0
      %6889 = vmatprep.mubr.bf16.mxu0 0
      %6890 = vmatmul.mubr.bf16.gmra.mrb[0].mxu0 %v6772
      %v6891 = vpop.f32.mrb[0].mxu0
      %v6892 = vadd.f32 %v6600, %v6891
      %v6893 = vpop.f32.mrb[0].mxu0
      %v6894 = vpop.f32.mrb[0].mxu0
      %v6895 = vadd.f32 %v6603, %v6894
      %v6896 = vpop.f32.mrb[0].mxu0
      %6897 = vmatprep.mubr.bf16.mxu0 0
      %6898 = vmatmul.mubr.bf16.gmra.mrb[0].mxu0 %v6775
      %v6899 = vpop.f32.mrb[0].mxu0
      %v6900 = vadd.f32 %v6608, %v6899
      %v6901 = vpop.f32.mrb[0].mxu0
      %v6902 = vpop.f32.mrb[0].mxu0
      %v6903 = vadd.f32 %v6611, %v6902
      %v6904 = vpop.f32.mrb[0].mxu0
      %6905 = vmatprep.mubr.bf16.mxu0 0
      %6906 = vmatmul.mubr.bf16.gmra.mrb[0].mxu0 %v6778
      %v6907 = vpop.f32.mrb[0].mxu0
      %v6908 = vadd.f32 %v6616, %v6907
      %v6909 = vpop.f32.mrb[0].mxu0
      %v6910 = vpop.f32.mrb[0].mxu0
      %v6911 = vadd.f32 %v6619, %v6910
      %v6912 = vpop.f32.mrb[0].mxu0
      %6913 = vmatprep.mubr.bf16.mxu0 0
      %6914 = vmatmul.mubr.bf16.gmra.mrb[0].mxu0 %v6781
      %v6915 = vpop.f32.mrb[0].mxu0
      %v6916 = vadd.f32 %v6624, %v6915
      %v6917 = vpop.f32.mrb[0].mxu0
      %v6918 = vpop.f32.mrb[0].mxu0
      %v6919 = vadd.f32 %v6627, %v6918
      %v6920 = vpop.f32.mrb[0].mxu0
      %6921 = vmatprep.mubr.bf16.mxu0 0
      %6922 = vmatmul.mubr.bf16.gmra.mrb[0].mxu0 %v6784
      %v6923 = vpop.f32.mrb[0].mxu0
      %v6924 = vadd.f32 %v6632, %v6923
      %v6925 = vpop.f32.mrb[0].mxu0
      %v6926 = vpop.f32.mrb[0].mxu0
      %v6927 = vadd.f32 %v6635, %v6926
      %v6928 = vpop.f32.mrb[0].mxu0
      %6929 = vmatprep.mubr.bf16.mxu0 0
      %6930 = vmatmul.mubr.bf16.gmra.mrb[0].mxu0 %v6787
      %v6931 = vpop.f32.mrb[0].mxu0
      %v6932 = vadd.f32 %v6640, %v6931
      %v6933 = vpop.f32.mrb[0].mxu0
      %v6934 = vpop.f32.mrb[0].mxu0
      %v6935 = vadd.f32 %v6643, %v6934
      %v6936 = vpop.f32.mrb[0].mxu0
      %6937 = vmatprep.mubr.bf16.mxu0 0
      %6938 = vmatmul.mubr.bf16.gmra.mrb[0].mxu0 %v6790
      %v6939 = vpop.f32.mrb[0].mxu0
      %v6940 = vadd.f32 %v6648, %v6939
      %v6941 = vpop.f32.mrb[0].mxu0
      %v6942 = vpop.f32.mrb[0].mxu0
      %v6943 = vadd.f32 %v6651, %v6942
      %v6944 = vpop.f32.mrb[0].mxu0
      %6945 = vmatprep.mubr.bf16.mxu0 0
      %6946 = vmatmul.mubr.bf16.gmra.mrb[0].mxu0 %v6793
      %v6947 = vpop.f32.mrb[0].mxu0
      %v6948 = vadd.f32 %v6656, %v6947
      %v6949 = vpop.f32.mrb[0].mxu0
      %v6950 = vpop.f32.mrb[0].mxu0
      %v6951 = vadd.f32 %v6659, %v6950
      %v6952 = vpop.f32.mrb[0].mxu0
      %6953 = vmatprep.mubr.bf16.mxu0 0
      %6954 = vmatmul.mubr.bf16.gmra.mrb[0].mxu0 %v6796
      %v6955 = vpop.f32.mrb[0].mxu0
      %v6956 = vadd.f32 %v6664, %v6955
      %v6957 = vpop.f32.mrb[0].mxu0
      %v6958 = vpop.f32.mrb[0].mxu0
      %v6959 = vadd.f32 %v6667, %v6958
      %v6960 = vpop.f32.mrb[0].mxu0
      %6961 = vdwg.mxu0
      %v6962 = vld [vmem:[#allocation3] sm:$0xe]
      %v6963 = vld [vmem:[#allocation3 + $0xc] sm:$0xe]
      %v6964 = vld [vmem:[#allocation3 + $0x18] sm:$0xe]
      %v6965 = vld [vmem:[#allocation3 + $0x24] sm:$0xe]
      %v6966 = vld [vmem:[#allocation3 + $0x30] sm:$0xe]
      %v6967 = vld [vmem:[#allocation3 + $0x3c] sm:$0xe]
      %v6968 = vld [vmem:[#allocation3 + $0x48] sm:$0xe]
      %v6969 = vld [vmem:[#allocation3 + $0x54] sm:$0xe]
      %v6970 = vld [vmem:[#allocation3 + $0x60] sm:$0xe]
      %v6971 = vld [vmem:[#allocation3 + $0x6c] sm:$0xe]
      %v6972 = vld [vmem:[#allocation3 + $0x78] sm:$0xe]
      %v6973 = vld [vmem:[#allocation3 + $0x84] sm:$0xe]
      %v6974 = vld [vmem:[#allocation3 + $0x90] sm:$0xe]
      %v6975 = vld [vmem:[#allocation3 + $0x9c] sm:$0xe]
      %v6976 = vld [vmem:[#allocation3 + $0xa8] sm:$0xe]
      %v6977 = vld [vmem:[#allocation3 + $0xb4] sm:$0xe]
      %v7010 = vrot.slane %v6962, 5
      %v7011 = vrot.slane %v7010, 4
      %v7012 = vrot.slane %v5976, 5
      %v7013 = vsel %vm1770, %v7011, %v7012
      %v7014 = vrot.slane %v7012, 4
      %v7015 = vrot.slane %v6008, 5
      %v7016 = vsel %vm1770, %v7014, %v7015
      %v7017 = vrot.slane %v6963, 5
      %v7018 = vrot.slane %v7017, 4
      %v7019 = vrot.slane %v5978, 5
      %v7020 = vsel %vm1770, %v7018, %v7019
      %v7021 = vrot.slane %v7019, 4
      %v7022 = vrot.slane %v6009, 5
      %v7023 = vsel %vm1770, %v7021, %v7022
      %v7024 = vrot.slane %v6964, 5
      %v7025 = vrot.slane %v7024, 4
      %v7026 = vrot.slane %v5980, 5
      %v7027 = vsel %vm1770, %v7025, %v7026
      %v7028 = vrot.slane %v7026, 4
      %v7029 = vrot.slane %v6010, 5
      %v7030 = vsel %vm1770, %v7028, %v7029
      %v7031 = vrot.slane %v6965, 5
      %v7032 = vrot.slane %v7031, 4
      %v7033 = vrot.slane %v5982, 5
      %v7034 = vsel %vm1770, %v7032, %v7033
      %v7035 = vrot.slane %v7033, 4
      %v7036 = vrot.slane %v6011, 5
      %v7037 = vsel %vm1770, %v7035, %v7036
      %v7038 = vrot.slane %v6966, 5
      %v7039 = vrot.slane %v7038, 4
      %v7040 = vrot.slane %v5984, 5
      %v7041 = vsel %vm1770, %v7039, %v7040
      %v7042 = vrot.slane %v7040, 4
      %v7043 = vrot.slane %v6012, 5
      %v7044 = vsel %vm1770, %v7042, %v7043
      %v7045 = vrot.slane %v6967, 5
      %v7046 = vrot.slane %v7045, 4
      %v7047 = vrot.slane %v5986, 5
      %v7048 = vsel %vm1770, %v7046, %v7047
      %v7049 = vrot.slane %v7047, 4
      %v7050 = vrot.slane %v6013, 5
      %v7051 = vsel %vm1770, %v7049, %v7050
      %v7052 = vrot.slane %v6968, 5
      %v7053 = vrot.slane %v7052, 4
      %v7054 = vrot.slane %v5988, 5
      %v7055 = vsel %vm1770, %v7053, %v7054
      %v7056 = vrot.slane %v7054, 4
      %v7057 = vrot.slane %v6014, 5
      %v7058 = vsel %vm1770, %v7056, %v7057
      %v7059 = vrot.slane %v6969, 5
      %v7060 = vrot.slane %v7059, 4
      %v7061 = vrot.slane %v5990, 5
      %v7062 = vsel %vm1770, %v7060, %v7061
      %v7063 = vrot.slane %v7061, 4
      %v7064 = vrot.slane %v6015, 5
      %v7065 = vsel %vm1770, %v7063, %v7064
      %v7066 = vrot.slane %v6970, 5
      %v7067 = vrot.slane %v7066, 4
      %v7068 = vrot.slane %v5992, 5
      %v7069 = vsel %vm1770, %v7067, %v7068
      %v7070 = vrot.slane %v7068, 4
      %v7071 = vrot.slane %v6016, 5
      %v7072 = vsel %vm1770, %v7070, %v7071
      %v7073 = vrot.slane %v6971, 5
      %v7074 = vrot.slane %v7073, 4
      %v7075 = vrot.slane %v5994, 5
      %v7076 = vsel %vm1770, %v7074, %v7075
      %v7077 = vrot.slane %v7075, 4
      %v7078 = vrot.slane %v6017, 5
      %v7079 = vsel %vm1770, %v7077, %v7078
      %v7080 = vrot.slane %v6972, 5
      %v7081 = vrot.slane %v7080, 4
      %v7082 = vrot.slane %v5996, 5
      %v7083 = vsel %vm1770, %v7081, %v7082
      %v7084 = vrot.slane %v7082, 4
      %v7085 = vrot.slane %v6018, 5
      %v7086 = vsel %vm1770, %v7084, %v7085
      %v7087 = vrot.slane %v6973, 5
      %v7088 = vrot.slane %v7087, 4
      %v7089 = vrot.slane %v5998, 5
      %v7090 = vsel %vm1770, %v7088, %v7089
      %v7091 = vrot.slane %v7089, 4
      %v7092 = vrot.slane %v6019, 5
      %v7093 = vsel %vm1770, %v7091, %v7092
      %v7094 = vrot.slane %v6974, 5
      %v7095 = vrot.slane %v7094, 4
      %v7096 = vrot.slane %v6000, 5
      %v7097 = vsel %vm1770, %v7095, %v7096
      %v7098 = vrot.slane %v7096, 4
      %v7099 = vrot.slane %v6020, 5
      %v7100 = vsel %vm1770, %v7098, %v7099
      %v7101 = vrot.slane %v6975, 5
      %v7102 = vrot.slane %v7101, 4
      %v7103 = vrot.slane %v6002, 5
      %v7104 = vsel %vm1770, %v7102, %v7103
      %v7105 = vrot.slane %v7103, 4
      %v7106 = vrot.slane %v6021, 5
      %v7107 = vsel %vm1770, %v7105, %v7106
      %v7108 = vrot.slane %v6976, 5
      %v7109 = vrot.slane %v7108, 4
      %v7110 = vrot.slane %v6004, 5
      %v7111 = vsel %vm1770, %v7109, %v7110
      %v7112 = vrot.slane %v7110, 4
      %v7113 = vrot.slane %v6022, 5
      %v7114 = vsel %vm1770, %v7112, %v7113
      %v7115 = vrot.slane %v6977, 5
      %v7116 = vrot.slane %v7115, 4
      %v7117 = vrot.slane %v6006, 5
      %v7118 = vsel %vm1770, %v7116, %v7117
      %v7119 = vrot.slane %v7117, 4
      %v7120 = vrot.slane %v6023, 5
      %v7121 = vsel %vm1770, %v7119, %v7120
      %s7122 = scalar_lea.vmem %s2, 4
      %v7123 = vld [vmem:[%s7122] sm:$0x3]
      %v7124 = vunpack.c.l.b16 %v7013
      %v7125 = vunpack.c.l.b16 %v7016
      %v7126 = vunpack.c.l.b16 %v7020
      %v7127 = vunpack.c.l.b16 %v7023
      %v7128 = vunpack.c.l.b16 %v7027
      %v7129 = vunpack.c.l.b16 %v7030
      %v7130 = vunpack.c.l.b16 %v7034
      %v7131 = vunpack.c.l.b16 %v7037
      %v7132 = vunpack.c.l.b16 %v7041
      %v7133 = vunpack.c.l.b16 %v7044
      %v7134 = vunpack.c.l.b16 %v7048
      %v7135 = vunpack.c.l.b16 %v7051
      %v7136 = vunpack.c.l.b16 %v7055
      %v7137 = vunpack.c.l.b16 %v7058
      %v7138 = vunpack.c.l.b16 %v7062
      %v7139 = vunpack.c.l.b16 %v7065
      %v7140 = vunpack.c.l.b16 %v7069
      %v7141 = vunpack.c.l.b16 %v7072
      %v7142 = vunpack.c.l.b16 %v7076
      %v7143 = vunpack.c.l.b16 %v7079
      %v7144 = vunpack.c.l.b16 %v7083
      %v7145 = vunpack.c.l.b16 %v7086
      %v7146 = vunpack.c.l.b16 %v7090
      %v7147 = vunpack.c.l.b16 %v7093
      %v7148 = vunpack.c.l.b16 %v7097
      %v7149 = vunpack.c.l.b16 %v7100
      %v7150 = vunpack.c.l.b16 %v7104
      %v7151 = vunpack.c.l.b16 %v7107
      %v7152 = vunpack.c.l.b16 %v7111
      %v7153 = vunpack.c.l.b16 %v7114
      %v7154 = vunpack.c.l.b16 %v7118
      %v7155 = vunpack.c.l.b16 %v7121
      %v7156 = vpack.c.b16 %v7125, %v7124
      %v7157 = vpack.c.b16 %v7127, %v7126
      %v7158 = vpack.c.b16 %v7129, %v7128
      %v7159 = vpack.c.b16 %v7131, %v7130
      %v7160 = vpack.c.b16 %v7133, %v7132
      %v7161 = vpack.c.b16 %v7135, %v7134
      %v7162 = vpack.c.b16 %v7137, %v7136
      %v7163 = vpack.c.b16 %v7139, %v7138
      %v7164 = vpack.c.b16 %v7141, %v7140
      %v7165 = vpack.c.b16 %v7143, %v7142
      %v7166 = vpack.c.b16 %v7145, %v7144
      %v7167 = vpack.c.b16 %v7147, %v7146
      %v7168 = vpack.c.b16 %v7149, %v7148
      %v7169 = vpack.c.b16 %v7151, %v7150
      %v7170 = vpack.c.b16 %v7153, %v7152
      %v7171 = vpack.c.b16 %v7155, %v7154
      %v7173 = vsel %vm1214, %v7156, 0
      %v7176 = vsel %vm1214, %v7157, 0
      %v7179 = vsel %vm1214, %v7158, 0
      %v7182 = vsel %vm1214, %v7159, 0
      %v7185 = vsel %vm1214, %v7160, 0
      %v7188 = vsel %vm1214, %v7161, 0
      %v7191 = vsel %vm1214, %v7162, 0
      %v7194 = vsel %vm1214, %v7163, 0
      %v7197 = vsel %vm1214, %v7164, 0
      %v7200 = vsel %vm1214, %v7165, 0
      %v7203 = vsel %vm1214, %v7166, 0
      %v7206 = vsel %vm1214, %v7167, 0
      %v7209 = vsel %vm1214, %v7168, 0
      %v7212 = vsel %vm1214, %v7169, 0
      %v7215 = vsel %vm1214, %v7170, 0
      %v7218 = vsel %vm1214, %v7171, 0
      %v7221 = vsel %vm1263, %v7123, 0
      %7223 = vmatprep.subr.bf16.mxu0 0
      %7224 = vmatpush1.bf16.msra.mxu0 %v7221
      %7225 = vmatprep.subr.bf16.mxu0 0
      %7226 = vmatpush1.bf16.msra.mxu0 0
      %7227 = vmatprep.subr.bf16.mxu0 0
      %7228 = vmatpush1.bf16.msra.mxu0 0
      %7229 = vmatprep.subr.bf16.mxu0 0
      %7230 = vmatpush1.bf16.msra.mxu0 0
      %7231 = vmatprep.subr.bf16.mxu0 0
      %7232 = vmatpush1.bf16.msra.mxu0 0
      %7233 = vmatprep.subr.bf16.mxu0 0
      %7234 = vmatpush1.bf16.msra.mxu0 0
      %7235 = vmatprep.subr.bf16.mxu0 0
      %7236 = vmatpush1.bf16.msra.mxu0 0
      %7237 = vmatprep.subr.bf16.mxu0 0
      %7238 = vmatpush1.bf16.msra.mxu0 0
      %7239 = vmatprep.subr.bf16.mxu0 0
      %7240 = vmatpush1.bf16.msra.mxu0 0
      %7241 = vmatprep.subr.bf16.mxu0 0
      %7242 = vmatpush1.bf16.msra.mxu0 0
      %7243 = vmatprep.subr.bf16.mxu0 0
      %7244 = vmatpush1.bf16.msra.mxu0 0
      %7245 = vmatprep.subr.bf16.mxu0 0
      %7246 = vmatpush1.bf16.msra.mxu0 0
      %7247 = vmatprep.subr.bf16.mxu0 0
      %7248 = vmatpush1.bf16.msra.mxu0 0
      %7249 = vmatprep.subr.bf16.mxu0 0
      %7250 = vmatpush1.bf16.msra.mxu0 0
      %7251 = vmatprep.subr.bf16.mxu0 0
      %7252 = vmatpush1.bf16.msra.mxu0 0
      %7253 = vmatprep.subr.bf16.mxu0 0
      %7254 = vmatpush1.bf16.msra.mxu0 0
      %7255 = vmatprep.mubr.bf16.mxu0 0
      %7256 = vmatmul.mubr.bf16.gmra.mrb[0].mxu0 %v7173
      %v7257 = vpop.f32.mrb[0].mxu0
      %v7258 = vadd.f32 0.0, %v7257
      %v7259 = vpop.f32.mrb[0].mxu0
      %v7260 = vpop.f32.mrb[0].mxu0
      %v7261 = vadd.f32 0.0, %v7260
      %v7262 = vpop.f32.mrb[0].mxu0
      %7263 = vmatprep.mubr.bf16.mxu0 0
      %7264 = vmatmul.mubr.bf16.gmra.mrb[0].mxu0 %v7176
      %v7265 = vpop.f32.mrb[0].mxu0
      %v7266 = vadd.f32 0.0, %v7265
      %v7267 = vpop.f32.mrb[0].mxu0
      %v7268 = vpop.f32.mrb[0].mxu0
      %v7269 = vadd.f32 0.0, %v7268
      %v7270 = vpop.f32.mrb[0].mxu0
      %7271 = vmatprep.mubr.bf16.mxu0 0
      %7272 = vmatmul.mubr.bf16.gmra.mrb[0].mxu0 %v7179
      %v7273 = vpop.f32.mrb[0].mxu0
      %v7274 = vadd.f32 0.0, %v7273
      %v7275 = vpop.f32.mrb[0].mxu0
      %v7276 = vpop.f32.mrb[0].mxu0
      %v7277 = vadd.f32 0.0, %v7276
      %v7278 = vpop.f32.mrb[0].mxu0
      %7279 = vmatprep.mubr.bf16.mxu0 0
      %7280 = vmatmul.mubr.bf16.gmra.mrb[0].mxu0 %v7182
      %v7281 = vpop.f32.mrb[0].mxu0
      %v7282 = vadd.f32 0.0, %v7281
      %v7283 = vpop.f32.mrb[0].mxu0
      %v7284 = vpop.f32.mrb[0].mxu0
      %v7285 = vadd.f32 0.0, %v7284
      %v7286 = vpop.f32.mrb[0].mxu0
      %7287 = vmatprep.mubr.bf16.mxu0 0
      %7288 = vmatmul.mubr.bf16.gmra.mrb[0].mxu0 %v7185
      %v7289 = vpop.f32.mrb[0].mxu0
      %v7290 = vadd.f32 0.0, %v7289
      %v7291 = vpop.f32.mrb[0].mxu0
      %v7292 = vpop.f32.mrb[0].mxu0
      %v7293 = vadd.f32 0.0, %v7292
      %v7294 = vpop.f32.mrb[0].mxu0
      %7295 = vmatprep.mubr.bf16.mxu0 0
      %7296 = vmatmul.mubr.bf16.gmra.mrb[0].mxu0 %v7188
      %v7297 = vpop.f32.mrb[0].mxu0
      %v7298 = vadd.f32 0.0, %v7297
      %v7299 = vpop.f32.mrb[0].mxu0
      %v7300 = vpop.f32.mrb[0].mxu0
      %v7301 = vadd.f32 0.0, %v7300
      %v7302 = vpop.f32.mrb[0].mxu0
      %7303 = vmatprep.mubr.bf16.mxu0 0
      %7304 = vmatmul.mubr.bf16.gmra.mrb[0].mxu0 %v7191
      %v7305 = vpop.f32.mrb[0].mxu0
      %v7306 = vadd.f32 0.0, %v7305
      %v7307 = vpop.f32.mrb[0].mxu0
      %v7308 = vpop.f32.mrb[0].mxu0
      %v7309 = vadd.f32 0.0, %v7308
      %v7310 = vpop.f32.mrb[0].mxu0
      %7311 = vmatprep.mubr.bf16.mxu0 0
      %7312 = vmatmul.mubr.bf16.gmra.mrb[0].mxu0 %v7194
      %v7313 = vpop.f32.mrb[0].mxu0
      %v7314 = vadd.f32 0.0, %v7313
      %v7315 = vpop.f32.mrb[0].mxu0
      %v7316 = vpop.f32.mrb[0].mxu0
      %v7317 = vadd.f32 0.0, %v7316
      %v7318 = vpop.f32.mrb[0].mxu0
      %7319 = vmatprep.mubr.bf16.mxu0 0
      %7320 = vmatmul.mubr.bf16.gmra.mrb[0].mxu0 %v7197
      %v7321 = vpop.f32.mrb[0].mxu0
      %v7322 = vadd.f32 0.0, %v7321
      %v7323 = vpop.f32.mrb[0].mxu0
      %v7324 = vpop.f32.mrb[0].mxu0
      %v7325 = vadd.f32 0.0, %v7324
      %v7326 = vpop.f32.mrb[0].mxu0
      %7327 = vmatprep.mubr.bf16.mxu0 0
      %7328 = vmatmul.mubr.bf16.gmra.mrb[0].mxu0 %v7200
      %v7329 = vpop.f32.mrb[0].mxu0
      %v7330 = vadd.f32 0.0, %v7329
      %v7331 = vpop.f32.mrb[0].mxu0
      %v7332 = vpop.f32.mrb[0].mxu0
      %v7333 = vadd.f32 0.0, %v7332
      %v7334 = vpop.f32.mrb[0].mxu0
      %7335 = vmatprep.mubr.bf16.mxu0 0
      %7336 = vmatmul.mubr.bf16.gmra.mrb[0].mxu0 %v7203
      %v7337 = vpop.f32.mrb[0].mxu0
      %v7338 = vadd.f32 0.0, %v7337
      %v7339 = vpop.f32.mrb[0].mxu0
      %v7340 = vpop.f32.mrb[0].mxu0
      %v7341 = vadd.f32 0.0, %v7340
      %v7342 = vpop.f32.mrb[0].mxu0
      %7343 = vmatprep.mubr.bf16.mxu0 0
      %7344 = vmatmul.mubr.bf16.gmra.mrb[0].mxu0 %v7206
      %v7345 = vpop.f32.mrb[0].mxu0
      %v7346 = vadd.f32 0.0, %v7345
      %v7347 = vpop.f32.mrb[0].mxu0
      %v7348 = vpop.f32.mrb[0].mxu0
      %v7349 = vadd.f32 0.0, %v7348
      %v7350 = vpop.f32.mrb[0].mxu0
      %7351 = vmatprep.mubr.bf16.mxu0 0
      %7352 = vmatmul.mubr.bf16.gmra.mrb[0].mxu0 %v7209
      %v7353 = vpop.f32.mrb[0].mxu0
      %v7354 = vadd.f32 0.0, %v7353
      %v7355 = vpop.f32.mrb[0].mxu0
      %v7356 = vpop.f32.mrb[0].mxu0
      %v7357 = vadd.f32 0.0, %v7356
      %v7358 = vpop.f32.mrb[0].mxu0
      %7359 = vmatprep.mubr.bf16.mxu0 0
      %7360 = vmatmul.mubr.bf16.gmra.mrb[0].mxu0 %v7212
      %v7361 = vpop.f32.mrb[0].mxu0
      %v7362 = vadd.f32 0.0, %v7361
      %v7363 = vpop.f32.mrb[0].mxu0
      %v7364 = vpop.f32.mrb[0].mxu0
      %v7365 = vadd.f32 0.0, %v7364
      %v7366 = vpop.f32.mrb[0].mxu0
      %7367 = vmatprep.mubr.bf16.mxu0 0
      %7368 = vmatmul.mubr.bf16.gmra.mrb[0].mxu0 %v7215
      %v7369 = vpop.f32.mrb[0].mxu0
      %v7370 = vadd.f32 0.0, %v7369
      %v7371 = vpop.f32.mrb[0].mxu0
      %v7372 = vpop.f32.mrb[0].mxu0
      %v7373 = vadd.f32 0.0, %v7372
      %v7374 = vpop.f32.mrb[0].mxu0
      %7375 = vmatprep.mubr.bf16.mxu0 0
      %7376 = vmatmul.mubr.bf16.gmra.mrb[0].mxu0 %v7218
      %v7377 = vpop.f32.mrb[0].mxu0
      %v7378 = vadd.f32 0.0, %v7377
      %v7379 = vpop.f32.mrb[0].mxu0
      %v7380 = vpop.f32.mrb[0].mxu0
      %v7381 = vadd.f32 0.0, %v7380
      %v7382 = vpop.f32.mrb[0].mxu0
      %7383 = vdwg.mxu0
      %v7384 = vadd.f32 %v6836, %v7258
      %v7385 = vadd.f32 %v6839, %v7261
      %v7386 = vadd.f32 %v6844, %v7266
      %v7387 = vadd.f32 %v6847, %v7269
      %v7388 = vadd.f32 %v6852, %v7274
      %v7389 = vadd.f32 %v6855, %v7277
      %v7390 = vadd.f32 %v6860, %v7282
      %v7391 = vadd.f32 %v6863, %v7285
      %v7392 = vadd.f32 %v6868, %v7290
      %v7393 = vadd.f32 %v6871, %v7293
      %v7394 = vadd.f32 %v6876, %v7298
      %v7395 = vadd.f32 %v6879, %v7301
      %v7396 = vadd.f32 %v6884, %v7306
      %v7397 = vadd.f32 %v6887, %v7309
      %v7398 = vadd.f32 %v6892, %v7314
      %v7399 = vadd.f32 %v6895, %v7317
      %v7400 = vadd.f32 %v6900, %v7322
      %v7401 = vadd.f32 %v6903, %v7325
      %v7402 = vadd.f32 %v6908, %v7330
      %v7403 = vadd.f32 %v6911, %v7333
      %v7404 = vadd.f32 %v6916, %v7338
      %v7405 = vadd.f32 %v6919, %v7341
      %v7406 = vadd.f32 %v6924, %v7346
      %v7407 = vadd.f32 %v6927, %v7349
      %v7408 = vadd.f32 %v6932, %v7354
      %v7409 = vadd.f32 %v6935, %v7357
      %v7410 = vadd.f32 %v6940, %v7362
      %v7411 = vadd.f32 %v6943, %v7365
      %v7412 = vadd.f32 %v6948, %v7370
      %v7413 = vadd.f32 %v6951, %v7373
      %v7414 = vadd.f32 %v6956, %v7378
      %v7415 = vadd.f32 %v6959, %v7381
      %v7416 = vld [vmem:[%s5862] sm:$0xf]
      %v7417 = vld [vmem:[%s5862 + $0x4] sm:$0xf]
      %v7418 = vld [vmem:[%s5862 + $0xc] sm:$0xf]
      %v7419 = vld [vmem:[%s5862 + $0x10] sm:$0xf]
      %v7420 = vld [vmem:[%s5862 + $0x18] sm:$0xf]
      %v7421 = vld [vmem:[%s5862 + $0x1c] sm:$0xf]
      %v7422 = vld [vmem:[%s5862 + $0x24] sm:$0xf]
      %v7423 = vld [vmem:[%s5862 + $0x28] sm:$0xf]
      %v7424 = vld [vmem:[%s5862 + $0x30] sm:$0xf]
      %v7425 = vld [vmem:[%s5862 + $0x34] sm:$0xf]
      %v7426 = vld [vmem:[%s5862 + $0x3c] sm:$0xf]
      %v7427 = vld [vmem:[%s5862 + $0x40] sm:$0xf]
      %v7428 = vld [vmem:[%s5862 + $0x48] sm:$0xf]
      %v7429 = vld [vmem:[%s5862 + $0x4c] sm:$0xf]
      %v7430 = vld [vmem:[%s5862 + $0x54] sm:$0xf]
      %v7431 = vld [vmem:[%s5862 + $0x58] sm:$0xf]
      %v7432 = vld [vmem:[%s5862 + $0x60] sm:$0xf]
      %v7433 = vld [vmem:[%s5862 + $0x64] sm:$0xf]
      %v7434 = vld [vmem:[%s5862 + $0x6c] sm:$0xf]
      %v7435 = vld [vmem:[%s5862 + $0x70] sm:$0xf]
      %v7436 = vld [vmem:[%s5862 + $0x78] sm:$0xf]
      %v7437 = vld [vmem:[%s5862 + $0x7c] sm:$0xf]
      %v7438 = vld [vmem:[%s5862 + $0x84] sm:$0xf]
      %v7439 = vld [vmem:[%s5862 + $0x88] sm:$0xf]
      %v7440 = vld [vmem:[%s5862 + $0x90] sm:$0xf]
      %v7441 = vld [vmem:[%s5862 + $0x94] sm:$0xf]
      %v7442 = vld [vmem:[%s5862 + $0x9c] sm:$0xf]
      %v7443 = vld [vmem:[%s5862 + $0xa0] sm:$0xf]
      %v7444 = vld [vmem:[%s5862 + $0xa8] sm:$0xf]
      %v7445 = vld [vmem:[%s5862 + $0xac] sm:$0xf]
      %v7446 = vld [vmem:[%s5862 + $0xb4] sm:$0xf]
      %v7447 = vld [vmem:[%s5862 + $0xb8] sm:$0xf]
      %s7448 = scalar_lea.vmem %s2, 6
      %v7449 = vld [vmem:[%s7448] sm:$0x3]
      %v7482 = vunpack.c.l.b16 %v7416
      %v7483 = vunpack.c.l.b16 %v7417
      %v7484 = vunpack.c.l.b16 %v7418
      %v7485 = vunpack.c.l.b16 %v7419
      %v7486 = vunpack.c.l.b16 %v7420
      %v7487 = vunpack.c.l.b16 %v7421
      %v7488 = vunpack.c.l.b16 %v7422
      %v7489 = vunpack.c.l.b16 %v7423
      %v7490 = vunpack.c.l.b16 %v7424
      %v7491 = vunpack.c.l.b16 %v7425
      %v7492 = vunpack.c.l.b16 %v7426
      %v7493 = vunpack.c.l.b16 %v7427
      %v7494 = vunpack.c.l.b16 %v7428
      %v7495 = vunpack.c.l.b16 %v7429
      %v7496 = vunpack.c.l.b16 %v7430
      %v7497 = vunpack.c.l.b16 %v7431
      %v7498 = vunpack.c.l.b16 %v7432
      %v7499 = vunpack.c.l.b16 %v7433
      %v7500 = vunpack.c.l.b16 %v7434
      %v7501 = vunpack.c.l.b16 %v7435
      %v7502 = vunpack.c.l.b16 %v7436
      %v7503 = vunpack.c.l.b16 %v7437
      %v7504 = vunpack.c.l.b16 %v7438
      %v7505 = vunpack.c.l.b16 %v7439
      %v7506 = vunpack.c.l.b16 %v7440
      %v7507 = vunpack.c.l.b16 %v7441
      %v7508 = vunpack.c.l.b16 %v7442
      %v7509 = vunpack.c.l.b16 %v7443
      %v7510 = vunpack.c.l.b16 %v7444
      %v7511 = vunpack.c.l.b16 %v7445
      %v7512 = vunpack.c.l.b16 %v7446
      %v7513 = vunpack.c.l.b16 %v7447
      %v7514 = vpack.c.b16 %v7483, %v7482
      %v7515 = vpack.c.b16 %v7485, %v7484
      %v7516 = vpack.c.b16 %v7487, %v7486
      %v7517 = vpack.c.b16 %v7489, %v7488
      %v7518 = vpack.c.b16 %v7491, %v7490
      %v7519 = vpack.c.b16 %v7493, %v7492
      %v7520 = vpack.c.b16 %v7495, %v7494
      %v7521 = vpack.c.b16 %v7497, %v7496
      %v7522 = vpack.c.b16 %v7499, %v7498
      %v7523 = vpack.c.b16 %v7501, %v7500
      %v7524 = vpack.c.b16 %v7503, %v7502
      %v7525 = vpack.c.b16 %v7505, %v7504
      %v7526 = vpack.c.b16 %v7507, %v7506
      %v7527 = vpack.c.b16 %v7509, %v7508
      %v7528 = vpack.c.b16 %v7511, %v7510
      %v7529 = vpack.c.b16 %v7513, %v7512
      %v7531 = vsel %vm1214, %v7514, 0
      %v7534 = vsel %vm1214, %v7515, 0
      %v7537 = vsel %vm1214, %v7516, 0
      %v7540 = vsel %vm1214, %v7517, 0
      %v7543 = vsel %vm1214, %v7518, 0
      %v7546 = vsel %vm1214, %v7519, 0
      %v7549 = vsel %vm1214, %v7520, 0
      %v7552 = vsel %vm1214, %v7521, 0
      %v7555 = vsel %vm1214, %v7522, 0
      %v7558 = vsel %vm1214, %v7523, 0
      %v7561 = vsel %vm1214, %v7524, 0
      %v7564 = vsel %vm1214, %v7525, 0
      %v7567 = vsel %vm1214, %v7526, 0
      %v7570 = vsel %vm1214, %v7527, 0
      %v7573 = vsel %vm1214, %v7528, 0
      %v7576 = vsel %vm1214, %v7529, 0
      %v7579 = vsel %vm1263, %v7449, 0
      %7581 = vmatprep.subr.bf16.mxu0 0
      %7582 = vmatpush1.bf16.msra.mxu0 %v7579
      %7583 = vmatprep.subr.bf16.mxu0 0
      %7584 = vmatpush1.bf16.msra.mxu0 0
      %7585 = vmatprep.subr.bf16.mxu0 0
      %7586 = vmatpush1.bf16.msra.mxu0 0
      %7587 = vmatprep.subr.bf16.mxu0 0
      %7588 = vmatpush1.bf16.msra.mxu0 0
      %7589 = vmatprep.subr.bf16.mxu0 0
      %7590 = vmatpush1.bf16.msra.mxu0 0
      %7591 = vmatprep.subr.bf16.mxu0 0
      %7592 = vmatpush1.bf16.msra.mxu0 0
      %7593 = vmatprep.subr.bf16.mxu0 0
      %7594 = vmatpush1.bf16.msra.mxu0 0
      %7595 = vmatprep.subr.bf16.mxu0 0
      %7596 = vmatpush1.bf16.msra.mxu0 0
      %7597 = vmatprep.subr.bf16.mxu0 0
      %7598 = vmatpush1.bf16.msra.mxu0 0
      %7599 = vmatprep.subr.bf16.mxu0 0
      %7600 = vmatpush1.bf16.msra.mxu0 0
      %7601 = vmatprep.subr.bf16.mxu0 0
      %7602 = vmatpush1.bf16.msra.mxu0 0
      %7603 = vmatprep.subr.bf16.mxu0 0
      %7604 = vmatpush1.bf16.msra.mxu0 0
      %7605 = vmatprep.subr.bf16.mxu0 0
      %7606 = vmatpush1.bf16.msra.mxu0 0
      %7607 = vmatprep.subr.bf16.mxu0 0
      %7608 = vmatpush1.bf16.msra.mxu0 0
      %7609 = vmatprep.subr.bf16.mxu0 0
      %7610 = vmatpush1.bf16.msra.mxu0 0
      %7611 = vmatprep.subr.bf16.mxu0 0
      %7612 = vmatpush1.bf16.msra.mxu0 0
      %7613 = vmatprep.mubr.bf16.mxu0 0
      %7614 = vmatmul.mubr.bf16.gmra.mrb[0].mxu0 %v7531
      %v7615 = vpop.f32.mrb[0].mxu0
      %v7616 = vadd.f32 0.0, %v7615
      %v7617 = vpop.f32.mrb[0].mxu0
      %v7618 = vpop.f32.mrb[0].mxu0
      %v7619 = vadd.f32 0.0, %v7618
      %v7620 = vpop.f32.mrb[0].mxu0
      %7621 = vmatprep.mubr.bf16.mxu0 0
      %7622 = vmatmul.mubr.bf16.gmra.mrb[0].mxu0 %v7534
      %v7623 = vpop.f32.mrb[0].mxu0
      %v7624 = vadd.f32 0.0, %v7623
      %v7625 = vpop.f32.mrb[0].mxu0
      %v7626 = vpop.f32.mrb[0].mxu0
      %v7627 = vadd.f32 0.0, %v7626
      %v7628 = vpop.f32.mrb[0].mxu0
      %7629 = vmatprep.mubr.bf16.mxu0 0
      %7630 = vmatmul.mubr.bf16.gmra.mrb[0].mxu0 %v7537
      %v7631 = vpop.f32.mrb[0].mxu0
      %v7632 = vadd.f32 0.0, %v7631
      %v7633 = vpop.f32.mrb[0].mxu0
      %v7634 = vpop.f32.mrb[0].mxu0
      %v7635 = vadd.f32 0.0, %v7634
      %v7636 = vpop.f32.mrb[0].mxu0
      %7637 = vmatprep.mubr.bf16.mxu0 0
      %7638 = vmatmul.mubr.bf16.gmra.mrb[0].mxu0 %v7540
      %v7639 = vpop.f32.mrb[0].mxu0
      %v7640 = vadd.f32 0.0, %v7639
      %v7641 = vpop.f32.mrb[0].mxu0
      %v7642 = vpop.f32.mrb[0].mxu0
      %v7643 = vadd.f32 0.0, %v7642
      %v7644 = vpop.f32.mrb[0].mxu0
      %7645 = vmatprep.mubr.bf16.mxu0 0
      %7646 = vmatmul.mubr.bf16.gmra.mrb[0].mxu0 %v7543
      %v7647 = vpop.f32.mrb[0].mxu0
      %v7648 = vadd.f32 0.0, %v7647
      %v7649 = vpop.f32.mrb[0].mxu0
      %v7650 = vpop.f32.mrb[0].mxu0
      %v7651 = vadd.f32 0.0, %v7650
      %v7652 = vpop.f32.mrb[0].mxu0
      %7653 = vmatprep.mubr.bf16.mxu0 0
      %7654 = vmatmul.mubr.bf16.gmra.mrb[0].mxu0 %v7546
      %v7655 = vpop.f32.mrb[0].mxu0
      %v7656 = vadd.f32 0.0, %v7655
      %v7657 = vpop.f32.mrb[0].mxu0
      %v7658 = vpop.f32.mrb[0].mxu0
      %v7659 = vadd.f32 0.0, %v7658
      %v7660 = vpop.f32.mrb[0].mxu0
      %7661 = vmatprep.mubr.bf16.mxu0 0
      %7662 = vmatmul.mubr.bf16.gmra.mrb[0].mxu0 %v7549
      %v7663 = vpop.f32.mrb[0].mxu0
      %v7664 = vadd.f32 0.0, %v7663
      %v7665 = vpop.f32.mrb[0].mxu0
      %v7666 = vpop.f32.mrb[0].mxu0
      %v7667 = vadd.f32 0.0, %v7666
      %v7668 = vpop.f32.mrb[0].mxu0
      %7669 = vmatprep.mubr.bf16.mxu0 0
      %7670 = vmatmul.mubr.bf16.gmra.mrb[0].mxu0 %v7552
      %v7671 = vpop.f32.mrb[0].mxu0
      %v7672 = vadd.f32 0.0, %v7671
      %v7673 = vpop.f32.mrb[0].mxu0
      %v7674 = vpop.f32.mrb[0].mxu0
      %v7675 = vadd.f32 0.0, %v7674
      %v7676 = vpop.f32.mrb[0].mxu0
      %7677 = vmatprep.mubr.bf16.mxu0 0
      %7678 = vmatmul.mubr.bf16.gmra.mrb[0].mxu0 %v7555
      %v7679 = vpop.f32.mrb[0].mxu0
      %v7680 = vadd.f32 0.0, %v7679
      %v7681 = vpop.f32.mrb[0].mxu0
      %v7682 = vpop.f32.mrb[0].mxu0
      %v7683 = vadd.f32 0.0, %v7682
      %v7684 = vpop.f32.mrb[0].mxu0
      %7685 = vmatprep.mubr.bf16.mxu0 0
      %7686 = vmatmul.mubr.bf16.gmra.mrb[0].mxu0 %v7558
      %v7687 = vpop.f32.mrb[0].mxu0
      %v7688 = vadd.f32 0.0, %v7687
      %v7689 = vpop.f32.mrb[0].mxu0
      %v7690 = vpop.f32.mrb[0].mxu0
      %v7691 = vadd.f32 0.0, %v7690
      %v7692 = vpop.f32.mrb[0].mxu0
      %7693 = vmatprep.mubr.bf16.mxu0 0
      %7694 = vmatmul.mubr.bf16.gmra.mrb[0].mxu0 %v7561
      %v7695 = vpop.f32.mrb[0].mxu0
      %v7696 = vadd.f32 0.0, %v7695
      %v7697 = vpop.f32.mrb[0].mxu0
      %v7698 = vpop.f32.mrb[0].mxu0
      %v7699 = vadd.f32 0.0, %v7698
      %v7700 = vpop.f32.mrb[0].mxu0
      %7701 = vmatprep.mubr.bf16.mxu0 0
      %7702 = vmatmul.mubr.bf16.gmra.mrb[0].mxu0 %v7564
      %v7703 = vpop.f32.mrb[0].mxu0
      %v7704 = vadd.f32 0.0, %v7703
      %v7705 = vpop.f32.mrb[0].mxu0
      %v7706 = vpop.f32.mrb[0].mxu0
      %v7707 = vadd.f32 0.0, %v7706
      %v7708 = vpop.f32.mrb[0].mxu0
      %7709 = vmatprep.mubr.bf16.mxu0 0
      %7710 = vmatmul.mubr.bf16.gmra.mrb[0].mxu0 %v7567
      %v7711 = vpop.f32.mrb[0].mxu0
      %v7712 = vadd.f32 0.0, %v7711
      %v7713 = vpop.f32.mrb[0].mxu0
      %v7714 = vpop.f32.mrb[0].mxu0
      %v7715 = vadd.f32 0.0, %v7714
      %v7716 = vpop.f32.mrb[0].mxu0
      %7717 = vmatprep.mubr.bf16.mxu0 0
      %7718 = vmatmul.mubr.bf16.gmra.mrb[0].mxu0 %v7570
      %v7719 = vpop.f32.mrb[0].mxu0
      %v7720 = vadd.f32 0.0, %v7719
      %v7721 = vpop.f32.mrb[0].mxu0
      %v7722 = vpop.f32.mrb[0].mxu0
      %v7723 = vadd.f32 0.0, %v7722
      %v7724 = vpop.f32.mrb[0].mxu0
      %7725 = vmatprep.mubr.bf16.mxu0 0
      %7726 = vmatmul.mubr.bf16.gmra.mrb[0].mxu0 %v7573
      %v7727 = vpop.f32.mrb[0].mxu0
      %v7728 = vadd.f32 0.0, %v7727
      %v7729 = vpop.f32.mrb[0].mxu0
      %v7730 = vpop.f32.mrb[0].mxu0
      %v7731 = vadd.f32 0.0, %v7730
      %v7732 = vpop.f32.mrb[0].mxu0
      %7733 = vmatprep.mubr.bf16.mxu0 0
      %7734 = vmatmul.mubr.bf16.gmra.mrb[0].mxu0 %v7576
      %v7735 = vpop.f32.mrb[0].mxu0
      %v7736 = vadd.f32 0.0, %v7735
      %v7737 = vpop.f32.mrb[0].mxu0
      %v7738 = vpop.f32.mrb[0].mxu0
      %v7739 = vadd.f32 0.0, %v7738
      %v7740 = vpop.f32.mrb[0].mxu0
      %7741 = vdwg.mxu0
      %v7742 = vadd.f32 %v7384, %v7616
      %v7743 = vadd.f32 %v7385, %v7619
      %v7744 = vadd.f32 %v7386, %v7624
      %v7745 = vadd.f32 %v7387, %v7627
      %v7746 = vadd.f32 %v7388, %v7632
      %v7747 = vadd.f32 %v7389, %v7635
      %v7748 = vadd.f32 %v7390, %v7640
      %v7749 = vadd.f32 %v7391, %v7643
      %v7750 = vadd.f32 %v7392, %v7648
      %v7751 = vadd.f32 %v7393, %v7651
      %v7752 = vadd.f32 %v7394, %v7656
      %v7753 = vadd.f32 %v7395, %v7659
      %v7754 = vadd.f32 %v7396, %v7664
      %v7755 = vadd.f32 %v7397, %v7667
      %v7756 = vadd.f32 %v7398, %v7672
      %v7757 = vadd.f32 %v7399, %v7675
      %v7758 = vadd.f32 %v7400, %v7680
      %v7759 = vadd.f32 %v7401, %v7683
      %v7760 = vadd.f32 %v7402, %v7688
      %v7761 = vadd.f32 %v7403, %v7691
      %v7762 = vadd.f32 %v7404, %v7696
      %v7763 = vadd.f32 %v7405, %v7699
      %v7764 = vadd.f32 %v7406, %v7704
      %v7765 = vadd.f32 %v7407, %v7707
      %v7766 = vadd.f32 %v7408, %v7712
      %v7767 = vadd.f32 %v7409, %v7715
      %v7768 = vadd.f32 %v7410, %v7720
      %v7769 = vadd.f32 %v7411, %v7723
      %v7770 = vadd.f32 %v7412, %v7728
      %v7771 = vadd.f32 %v7413, %v7731
      %v7772 = vadd.f32 %v7414, %v7736
      %v7773 = vadd.f32 %v7415, %v7739
      %v7774 = vld [vmem:[%s5862] sm:$0xf]
      %v7775 = vld [vmem:[%s5862 + $0x4] sm:$0xf]
      %v7776 = vld [vmem:[%s5862 + $0x8] sm:$0x1]
      %v7777 = vld [vmem:[%s5862 + $0xc] sm:$0xf]
      %v7778 = vld [vmem:[%s5862 + $0x10] sm:$0xf]
      %v7779 = vld [vmem:[%s5862 + $0x14] sm:$0x1]
      %v7780 = vld [vmem:[%s5862 + $0x18] sm:$0xf]
      %v7781 = vld [vmem:[%s5862 + $0x1c] sm:$0xf]
      %v7782 = vld [vmem:[%s5862 + $0x20] sm:$0x1]
      %v7783 = vld [vmem:[%s5862 + $0x24] sm:$0xf]
      %v7784 = vld [vmem:[%s5862 + $0x28] sm:$0xf]
      %v7785 = vld [vmem:[%s5862 + $0x2c] sm:$0x1]
      %v7786 = vld [vmem:[%s5862 + $0x30] sm:$0xf]
      %v7787 = vld [vmem:[%s5862 + $0x34] sm:$0xf]
      %v7788 = vld [vmem:[%s5862 + $0x38] sm:$0x1]
      %v7789 = vld [vmem:[%s5862 + $0x3c] sm:$0xf]
      %v7790 = vld [vmem:[%s5862 + $0x40] sm:$0xf]
      %v7791 = vld [vmem:[%s5862 + $0x44] sm:$0x1]
      %v7792 = vld [vmem:[%s5862 + $0x48] sm:$0xf]
      %v7793 = vld [vmem:[%s5862 + $0x4c] sm:$0xf]
      %v7794 = vld [vmem:[%s5862 + $0x50] sm:$0x1]
      %v7795 = vld [vmem:[%s5862 + $0x54] sm:$0xf]
      %v7796 = vld [vmem:[%s5862 + $0x58] sm:$0xf]
      %v7797 = vld [vmem:[%s5862 + $0x5c] sm:$0x1]
      %v7798 = vld [vmem:[%s5862 + $0x60] sm:$0xf]
      %v7799 = vld [vmem:[%s5862 + $0x64] sm:$0xf]
      %v7800 = vld [vmem:[%s5862 + $0x68] sm:$0x1]
      %v7801 = vld [vmem:[%s5862 + $0x6c] sm:$0xf]
      %v7802 = vld [vmem:[%s5862 + $0x70] sm:$0xf]
      %v7803 = vld [vmem:[%s5862 + $0x74] sm:$0x1]
      %v7804 = vld [vmem:[%s5862 + $0x78] sm:$0xf]
      %v7805 = vld [vmem:[%s5862 + $0x7c] sm:$0xf]
      %v7806 = vld [vmem:[%s5862 + $0x80] sm:$0x1]
      %v7807 = vld [vmem:[%s5862 + $0x84] sm:$0xf]
      %v7808 = vld [vmem:[%s5862 + $0x88] sm:$0xf]
      %v7809 = vld [vmem:[%s5862 + $0x8c] sm:$0x1]
      %v7810 = vld [vmem:[%s5862 + $0x90] sm:$0xf]
      %v7811 = vld [vmem:[%s5862 + $0x94] sm:$0xf]
      %v7812 = vld [vmem:[%s5862 + $0x98] sm:$0x1]
      %v7813 = vld [vmem:[%s5862 + $0x9c] sm:$0xf]
      %v7814 = vld [vmem:[%s5862 + $0xa0] sm:$0xf]
      %v7815 = vld [vmem:[%s5862 + $0xa4] sm:$0x1]
      %v7816 = vld [vmem:[%s5862 + $0xa8] sm:$0xf]
      %v7817 = vld [vmem:[%s5862 + $0xac] sm:$0xf]
      %v7818 = vld [vmem:[%s5862 + $0xb0] sm:$0x1]
      %v7819 = vld [vmem:[%s5862 + $0xb4] sm:$0xf]
      %v7820 = vld [vmem:[%s5862 + $0xb8] sm:$0xf]
      %v7821 = vld [vmem:[%s5862 + $0xbc] sm:$0x1]
      %v7823 = vshrl.u32 %v7774, 16
      %v7825 = vrot.slane %v7823, 4
      %v7826 = vshll.u32 %v7774, 16
      %v7828 = vrot.slane %v7826, 5
      %v7829 = vor.u32 %v7825, %v7828
      %v7830 = vrot.slane %v7829, 4
      %v7832 = vshll.u32 %v7775, 16
      %v7834 = vrot.slane %v7832, 5
      %v7835 = vsel %vm779, %v7830, %v7834
      %v7836 = vshrl.u32 %v7775, 16
      %v7838 = vrot.slane %v7836, 4
      %v7839 = vor.u32 %v7838, %v7834
      %v7840 = vrot.slane %v7839, 4
      %v7842 = vshll.u32 %v7776, 16
      %v7844 = vrot.slane %v7842, 5
      %v7845 = vsel %vm779, %v7840, %v7844
      %v7847 = vshrl.u32 %v7777, 16
      %v7849 = vrot.slane %v7847, 4
      %v7850 = vshll.u32 %v7777, 16
      %v7852 = vrot.slane %v7850, 5
      %v7853 = vor.u32 %v7849, %v7852
      %v7854 = vrot.slane %v7853, 4
      %v7856 = vshll.u32 %v7778, 16
      %v7858 = vrot.slane %v7856, 5
      %v7859 = vsel %vm779, %v7854, %v7858
      %v7860 = vshrl.u32 %v7778, 16
      %v7862 = vrot.slane %v7860, 4
      %v7863 = vor.u32 %v7862, %v7858
      %v7864 = vrot.slane %v7863, 4
      %v7866 = vshll.u32 %v7779, 16
      %v7868 = vrot.slane %v7866, 5
      %v7869 = vsel %vm779, %v7864, %v7868
      %v7871 = vshrl.u32 %v7780, 16
      %v7873 = vrot.slane %v7871, 4
      %v7874 = vshll.u32 %v7780, 16
      %v7876 = vrot.slane %v7874, 5
      %v7877 = vor.u32 %v7873, %v7876
      %v7878 = vrot.slane %v7877, 4
      %v7880 = vshll.u32 %v7781, 16
      %v7882 = vrot.slane %v7880, 5
      %v7883 = vsel %vm779, %v7878, %v7882
      %v7884 = vshrl.u32 %v7781, 16
      %v7886 = vrot.slane %v7884, 4
      %v7887 = vor.u32 %v7886, %v7882
      %v7888 = vrot.slane %v7887, 4
      %v7890 = vshll.u32 %v7782, 16
      %v7892 = vrot.slane %v7890, 5
      %v7893 = vsel %vm779, %v7888, %v7892
      %v7895 = vshrl.u32 %v7783, 16
      %v7897 = vrot.slane %v7895, 4
      %v7898 = vshll.u32 %v7783, 16
      %v7900 = vrot.slane %v7898, 5
      %v7901 = vor.u32 %v7897, %v7900
      %v7902 = vrot.slane %v7901, 4
      %v7904 = vshll.u32 %v7784, 16
      %v7906 = vrot.slane %v7904, 5
      %v7907 = vsel %vm779, %v7902, %v7906
      %v7908 = vshrl.u32 %v7784, 16
      %v7910 = vrot.slane %v7908, 4
      %v7911 = vor.u32 %v7910, %v7906
      %v7912 = vrot.slane %v7911, 4
      %v7914 = vshll.u32 %v7785, 16
      %v7916 = vrot.slane %v7914, 5
      %v7917 = vsel %vm779, %v7912, %v7916
      %v7919 = vshrl.u32 %v7786, 16
      %v7921 = vrot.slane %v7919, 4
      %v7922 = vshll.u32 %v7786, 16
      %v7924 = vrot.slane %v7922, 5
      %v7925 = vor.u32 %v7921, %v7924
      %v7926 = vrot.slane %v7925, 4
      %v7928 = vshll.u32 %v7787, 16
      %v7930 = vrot.slane %v7928, 5
      %v7931 = vsel %vm779, %v7926, %v7930
      %v7932 = vshrl.u32 %v7787, 16
      %v7934 = vrot.slane %v7932, 4
      %v7935 = vor.u32 %v7934, %v7930
      %v7936 = vrot.slane %v7935, 4
      %v7938 = vshll.u32 %v7788, 16
      %v7940 = vrot.slane %v7938, 5
      %v7941 = vsel %vm779, %v7936, %v7940
      %v7943 = vshrl.u32 %v7789, 16
      %v7945 = vrot.slane %v7943, 4
      %v7946 = vshll.u32 %v7789, 16
      %v7948 = vrot.slane %v7946, 5
      %v7949 = vor.u32 %v7945, %v7948
      %v7950 = vrot.slane %v7949, 4
      %v7952 = vshll.u32 %v7790, 16
      %v7954 = vrot.slane %v7952, 5
      %v7955 = vsel %vm779, %v7950, %v7954
      %v7956 = vshrl.u32 %v7790, 16
      %v7958 = vrot.slane %v7956, 4
      %v7959 = vor.u32 %v7958, %v7954
      %v7960 = vrot.slane %v7959, 4
      %v7962 = vshll.u32 %v7791, 16
      %v7964 = vrot.slane %v7962, 5
      %v7965 = vsel %vm779, %v7960, %v7964
      %v7967 = vshrl.u32 %v7792, 16
      %v7969 = vrot.slane %v7967, 4
      %v7970 = vshll.u32 %v7792, 16
      %v7972 = vrot.slane %v7970, 5
      %v7973 = vor.u32 %v7969, %v7972
      %v7974 = vrot.slane %v7973, 4
      %v7976 = vshll.u32 %v7793, 16
      %v7978 = vrot.slane %v7976, 5
      %v7979 = vsel %vm779, %v7974, %v7978
      %v7980 = vshrl.u32 %v7793, 16
      %v7982 = vrot.slane %v7980, 4
      %v7983 = vor.u32 %v7982, %v7978
      %v7984 = vrot.slane %v7983, 4
      %v7986 = vshll.u32 %v7794, 16
      %v7988 = vrot.slane %v7986, 5
      %v7989 = vsel %vm779, %v7984, %v7988
      %v7991 = vshrl.u32 %v7795, 16
      %v7993 = vrot.slane %v7991, 4
      %v7994 = vshll.u32 %v7795, 16
      %v7996 = vrot.slane %v7994, 5
      %v7997 = vor.u32 %v7993, %v7996
      %v7998 = vrot.slane %v7997, 4
      %v8000 = vshll.u32 %v7796, 16
      %v8002 = vrot.slane %v8000, 5
      %v8003 = vsel %vm779, %v7998, %v8002
      %v8004 = vshrl.u32 %v7796, 16
      %v8006 = vrot.slane %v8004, 4
      %v8007 = vor.u32 %v8006, %v8002
      %v8008 = vrot.slane %v8007, 4
      %v8010 = vshll.u32 %v7797, 16
      %v8012 = vrot.slane %v8010, 5
      %v8013 = vsel %vm779, %v8008, %v8012
      %v8015 = vshrl.u32 %v7798, 16
      %v8017 = vrot.slane %v8015, 4
      %v8018 = vshll.u32 %v7798, 16
      %v8020 = vrot.slane %v8018, 5
      %v8021 = vor.u32 %v8017, %v8020
      %v8022 = vrot.slane %v8021, 4
      %v8024 = vshll.u32 %v7799, 16
      %v8026 = vrot.slane %v8024, 5
      %v8027 = vsel %vm779, %v8022, %v8026
      %v8028 = vshrl.u32 %v7799, 16
      %v8030 = vrot.slane %v8028, 4
      %v8031 = vor.u32 %v8030, %v8026
      %v8032 = vrot.slane %v8031, 4
      %v8034 = vshll.u32 %v7800, 16
      %v8036 = vrot.slane %v8034, 5
      %v8037 = vsel %vm779, %v8032, %v8036
      %v8039 = vshrl.u32 %v7801, 16
      %v8041 = vrot.slane %v8039, 4
      %v8042 = vshll.u32 %v7801, 16
      %v8044 = vrot.slane %v8042, 5
      %v8045 = vor.u32 %v8041, %v8044
      %v8046 = vrot.slane %v8045, 4
      %v8048 = vshll.u32 %v7802, 16
      %v8050 = vrot.slane %v8048, 5
      %v8051 = vsel %vm779, %v8046, %v8050
      %v8052 = vshrl.u32 %v7802, 16
      %v8054 = vrot.slane %v8052, 4
      %v8055 = vor.u32 %v8054, %v8050
      %v8056 = vrot.slane %v8055, 4
      %v8058 = vshll.u32 %v7803, 16
      %v8060 = vrot.slane %v8058, 5
      %v8061 = vsel %vm779, %v8056, %v8060
      %v8063 = vshrl.u32 %v7804, 16
      %v8065 = vrot.slane %v8063, 4
      %v8066 = vshll.u32 %v7804, 16
      %v8068 = vrot.slane %v8066, 5
      %v8069 = vor.u32 %v8065, %v8068
      %v8070 = vrot.slane %v8069, 4
      %v8072 = vshll.u32 %v7805, 16
      %v8074 = vrot.slane %v8072, 5
      %v8075 = vsel %vm779, %v8070, %v8074
      %v8076 = vshrl.u32 %v7805, 16
      %v8078 = vrot.slane %v8076, 4
      %v8079 = vor.u32 %v8078, %v8074
      %v8080 = vrot.slane %v8079, 4
      %v8082 = vshll.u32 %v7806, 16
      %v8084 = vrot.slane %v8082, 5
      %v8085 = vsel %vm779, %v8080, %v8084
      %v8087 = vshrl.u32 %v7807, 16
      %v8089 = vrot.slane %v8087, 4
      %v8090 = vshll.u32 %v7807, 16
      %v8092 = vrot.slane %v8090, 5
      %v8093 = vor.u32 %v8089, %v8092
      %v8094 = vrot.slane %v8093, 4
      %v8096 = vshll.u32 %v7808, 16
      %v8098 = vrot.slane %v8096, 5
      %v8099 = vsel %vm779, %v8094, %v8098
      %v8100 = vshrl.u32 %v7808, 16
      %v8102 = vrot.slane %v8100, 4
      %v8103 = vor.u32 %v8102, %v8098
      %v8104 = vrot.slane %v8103, 4
      %v8106 = vshll.u32 %v7809, 16
      %v8108 = vrot.slane %v8106, 5
      %v8109 = vsel %vm779, %v8104, %v8108
      %v8111 = vshrl.u32 %v7810, 16
      %v8113 = vrot.slane %v8111, 4
      %v8114 = vshll.u32 %v7810, 16
      %v8116 = vrot.slane %v8114, 5
      %v8117 = vor.u32 %v8113, %v8116
      %v8118 = vrot.slane %v8117, 4
      %v8120 = vshll.u32 %v7811, 16
      %v8122 = vrot.slane %v8120, 5
      %v8123 = vsel %vm779, %v8118, %v8122
      %v8124 = vshrl.u32 %v7811, 16
      %v8126 = vrot.slane %v8124, 4
      %v8127 = vor.u32 %v8126, %v8122
      %v8128 = vrot.slane %v8127, 4
      %v8130 = vshll.u32 %v7812, 16
      %v8132 = vrot.slane %v8130, 5
      %v8133 = vsel %vm779, %v8128, %v8132
      %v8135 = vshrl.u32 %v7813, 16
      %v8137 = vrot.slane %v8135, 4
      %v8138 = vshll.u32 %v7813, 16
      %v8140 = vrot.slane %v8138, 5
      %v8141 = vor.u32 %v8137, %v8140
      %v8142 = vrot.slane %v8141, 4
      %v8144 = vshll.u32 %v7814, 16
      %v8146 = vrot.slane %v8144, 5
      %v8147 = vsel %vm779, %v8142, %v8146
      %v8148 = vshrl.u32 %v7814, 16
      %v8150 = vrot.slane %v8148, 4
      %v8151 = vor.u32 %v8150, %v8146
      %v8152 = vrot.slane %v8151, 4
      %v8154 = vshll.u32 %v7815, 16
      %v8156 = vrot.slane %v8154, 5
      %v8157 = vsel %vm779, %v8152, %v8156
      %v8159 = vshrl.u32 %v7816, 16
      %v8161 = vrot.slane %v8159, 4
      %v8162 = vshll.u32 %v7816, 16
      %v8164 = vrot.slane %v8162, 5
      %v8165 = vor.u32 %v8161, %v8164
      %v8166 = vrot.slane %v8165, 4
      %v8168 = vshll.u32 %v7817, 16
      %v8170 = vrot.slane %v8168, 5
      %v8171 = vsel %vm779, %v8166, %v8170
      %v8172 = vshrl.u32 %v7817, 16
      %v8174 = vrot.slane %v8172, 4
      %v8175 = vor.u32 %v8174, %v8170
      %v8176 = vrot.slane %v8175, 4
      %v8178 = vshll.u32 %v7818, 16
      %v8180 = vrot.slane %v8178, 5
      %v8181 = vsel %vm779, %v8176, %v8180
      %v8183 = vshrl.u32 %v7819, 16
      %v8185 = vrot.slane %v8183, 4
      %v8186 = vshll.u32 %v7819, 16
      %v8188 = vrot.slane %v8186, 5
      %v8189 = vor.u32 %v8185, %v8188
      %v8190 = vrot.slane %v8189, 4
      %v8192 = vshll.u32 %v7820, 16
      %v8194 = vrot.slane %v8192, 5
      %v8195 = vsel %vm779, %v8190, %v8194
      %v8196 = vshrl.u32 %v7820, 16
      %v8198 = vrot.slane %v8196, 4
      %v8199 = vor.u32 %v8198, %v8194
      %v8200 = vrot.slane %v8199, 4
      %v8202 = vshll.u32 %v7821, 16
      %v8204 = vrot.slane %v8202, 5
      %v8205 = vsel %vm779, %v8200, %v8204
      %s8206 = scalar_lea.vmem %s2, 8
      %v8207 = vld [vmem:[%s8206] sm:$0x3]
      %v8208 = vunpack.c.l.b16 %v7835
      %v8209 = vunpack.c.l.b16 %v7845
      %v8210 = vunpack.c.l.b16 %v7859
      %v8211 = vunpack.c.l.b16 %v7869
      %v8212 = vunpack.c.l.b16 %v7883
      %v8213 = vunpack.c.l.b16 %v7893
      %v8214 = vunpack.c.l.b16 %v7907
      %v8215 = vunpack.c.l.b16 %v7917
      %v8216 = vunpack.c.l.b16 %v7931
      %v8217 = vunpack.c.l.b16 %v7941
      %v8218 = vunpack.c.l.b16 %v7955
      %v8219 = vunpack.c.l.b16 %v7965
      %v8220 = vunpack.c.l.b16 %v7979
      %v8221 = vunpack.c.l.b16 %v7989
      %v8222 = vunpack.c.l.b16 %v8003
      %v8223 = vunpack.c.l.b16 %v8013
      %v8224 = vunpack.c.l.b16 %v8027
      %v8225 = vunpack.c.l.b16 %v8037
      %v8226 = vunpack.c.l.b16 %v8051
      %v8227 = vunpack.c.l.b16 %v8061
      %v8228 = vunpack.c.l.b16 %v8075
      %v8229 = vunpack.c.l.b16 %v8085
      %v8230 = vunpack.c.l.b16 %v8099
      %v8231 = vunpack.c.l.b16 %v8109
      %v8232 = vunpack.c.l.b16 %v8123
      %v8233 = vunpack.c.l.b16 %v8133
      %v8234 = vunpack.c.l.b16 %v8147
      %v8235 = vunpack.c.l.b16 %v8157
      %v8236 = vunpack.c.l.b16 %v8171
      %v8237 = vunpack.c.l.b16 %v8181
      %v8238 = vunpack.c.l.b16 %v8195
      %v8239 = vunpack.c.l.b16 %v8205
      %v8240 = vpack.c.b16 %v8209, %v8208
      %v8241 = vpack.c.b16 %v8211, %v8210
      %v8242 = vpack.c.b16 %v8213, %v8212
      %v8243 = vpack.c.b16 %v8215, %v8214
      %v8244 = vpack.c.b16 %v8217, %v8216
      %v8245 = vpack.c.b16 %v8219, %v8218
      %v8246 = vpack.c.b16 %v8221, %v8220
      %v8247 = vpack.c.b16 %v8223, %v8222
      %v8248 = vpack.c.b16 %v8225, %v8224
      %v8249 = vpack.c.b16 %v8227, %v8226
      %v8250 = vpack.c.b16 %v8229, %v8228
      %v8251 = vpack.c.b16 %v8231, %v8230
      %v8252 = vpack.c.b16 %v8233, %v8232
      %v8253 = vpack.c.b16 %v8235, %v8234
      %v8254 = vpack.c.b16 %v8237, %v8236
      %v8255 = vpack.c.b16 %v8239, %v8238
      %v8257 = vsel %vm1214, %v8240, 0
      %v8260 = vsel %vm1214, %v8241, 0
      %v8263 = vsel %vm1214, %v8242, 0
      %v8266 = vsel %vm1214, %v8243, 0
      %v8269 = vsel %vm1214, %v8244, 0
      %v8272 = vsel %vm1214, %v8245, 0
      %v8275 = vsel %vm1214, %v8246, 0
      %v8278 = vsel %vm1214, %v8247, 0
      %v8281 = vsel %vm1214, %v8248, 0
      %v8284 = vsel %vm1214, %v8249, 0
      %v8287 = vsel %vm1214, %v8250, 0
      %v8290 = vsel %vm1214, %v8251, 0
      %v8293 = vsel %vm1214, %v8252, 0
      %v8296 = vsel %vm1214, %v8253, 0
      %v8299 = vsel %vm1214, %v8254, 0
      %v8302 = vsel %vm1214, %v8255, 0
      %v8305 = vsel %vm1263, %v8207, 0
      %8307 = vmatprep.subr.bf16.mxu0 0
      %8308 = vmatpush1.bf16.msra.mxu0 %v8305
      %8309 = vmatprep.subr.bf16.mxu0 0
      %8310 = vmatpush1.bf16.msra.mxu0 0
      %8311 = vmatprep.subr.bf16.mxu0 0
      %8312 = vmatpush1.bf16.msra.mxu0 0
      %8313 = vmatprep.subr.bf16.mxu0 0
      %8314 = vmatpush1.bf16.msra.mxu0 0
      %8315 = vmatprep.subr.bf16.mxu0 0
      %8316 = vmatpush1.bf16.msra.mxu0 0
      %8317 = vmatprep.subr.bf16.mxu0 0
      %8318 = vmatpush1.bf16.msra.mxu0 0
      %8319 = vmatprep.subr.bf16.mxu0 0
      %8320 = vmatpush1.bf16.msra.mxu0 0
      %8321 = vmatprep.subr.bf16.mxu0 0
      %8322 = vmatpush1.bf16.msra.mxu0 0
      %8323 = vmatprep.subr.bf16.mxu0 0
      %8324 = vmatpush1.bf16.msra.mxu0 0
      %8325 = vmatprep.subr.bf16.mxu0 0
      %8326 = vmatpush1.bf16.msra.mxu0 0
      %8327 = vmatprep.subr.bf16.mxu0 0
      %8328 = vmatpush1.bf16.msra.mxu0 0
      %8329 = vmatprep.subr.bf16.mxu0 0
      %8330 = vmatpush1.bf16.msra.mxu0 0
      %8331 = vmatprep.subr.bf16.mxu0 0
      %8332 = vmatpush1.bf16.msra.mxu0 0
      %8333 = vmatprep.subr.bf16.mxu0 0
      %8334 = vmatpush1.bf16.msra.mxu0 0
      %8335 = vmatprep.subr.bf16.mxu0 0
      %8336 = vmatpush1.bf16.msra.mxu0 0
      %8337 = vmatprep.subr.bf16.mxu0 0
      %8338 = vmatpush1.bf16.msra.mxu0 0
      %8339 = vmatprep.mubr.bf16.mxu0 0
      %8340 = vmatmul.mubr.bf16.gmra.mrb[0].mxu0 %v8257
      %v8341 = vpop.f32.mrb[0].mxu0
      %v8342 = vadd.f32 0.0, %v8341
      %v8343 = vpop.f32.mrb[0].mxu0
      %v8344 = vpop.f32.mrb[0].mxu0
      %v8345 = vadd.f32 0.0, %v8344
      %v8346 = vpop.f32.mrb[0].mxu0
      %8347 = vmatprep.mubr.bf16.mxu0 0
      %8348 = vmatmul.mubr.bf16.gmra.mrb[0].mxu0 %v8260
      %v8349 = vpop.f32.mrb[0].mxu0
      %v8350 = vadd.f32 0.0, %v8349
      %v8351 = vpop.f32.mrb[0].mxu0
      %v8352 = vpop.f32.mrb[0].mxu0
      %v8353 = vadd.f32 0.0, %v8352
      %v8354 = vpop.f32.mrb[0].mxu0
      %8355 = vmatprep.mubr.bf16.mxu0 0
      %8356 = vmatmul.mubr.bf16.gmra.mrb[0].mxu0 %v8263
      %v8357 = vpop.f32.mrb[0].mxu0
      %v8358 = vadd.f32 0.0, %v8357
      %v8359 = vpop.f32.mrb[0].mxu0
      %v8360 = vpop.f32.mrb[0].mxu0
      %v8361 = vadd.f32 0.0, %v8360
      %v8362 = vpop.f32.mrb[0].mxu0
      %8363 = vmatprep.mubr.bf16.mxu0 0
      %8364 = vmatmul.mubr.bf16.gmra.mrb[0].mxu0 %v8266
      %v8365 = vpop.f32.mrb[0].mxu0
      %v8366 = vadd.f32 0.0, %v8365
      %v8367 = vpop.f32.mrb[0].mxu0
      %v8368 = vpop.f32.mrb[0].mxu0
      %v8369 = vadd.f32 0.0, %v8368
      %v8370 = vpop.f32.mrb[0].mxu0
      %8371 = vmatprep.mubr.bf16.mxu0 0
      %8372 = vmatmul.mubr.bf16.gmra.mrb[0].mxu0 %v8269
      %v8373 = vpop.f32.mrb[0].mxu0
      %v8374 = vadd.f32 0.0, %v8373
      %v8375 = vpop.f32.mrb[0].mxu0
      %v8376 = vpop.f32.mrb[0].mxu0
      %v8377 = vadd.f32 0.0, %v8376
      %v8378 = vpop.f32.mrb[0].mxu0
      %8379 = vmatprep.mubr.bf16.mxu0 0
      %8380 = vmatmul.mubr.bf16.gmra.mrb[0].mxu0 %v8272
      %v8381 = vpop.f32.mrb[0].mxu0
      %v8382 = vadd.f32 0.0, %v8381
      %v8383 = vpop.f32.mrb[0].mxu0
      %v8384 = vpop.f32.mrb[0].mxu0
      %v8385 = vadd.f32 0.0, %v8384
      %v8386 = vpop.f32.mrb[0].mxu0
      %8387 = vmatprep.mubr.bf16.mxu0 0
      %8388 = vmatmul.mubr.bf16.gmra.mrb[0].mxu0 %v8275
      %v8389 = vpop.f32.mrb[0].mxu0
      %v8390 = vadd.f32 0.0, %v8389
      %v8391 = vpop.f32.mrb[0].mxu0
      %v8392 = vpop.f32.mrb[0].mxu0
      %v8393 = vadd.f32 0.0, %v8392
      %v8394 = vpop.f32.mrb[0].mxu0
      %8395 = vmatprep.mubr.bf16.mxu0 0
      %8396 = vmatmul.mubr.bf16.gmra.mrb[0].mxu0 %v8278
      %v8397 = vpop.f32.mrb[0].mxu0
      %v8398 = vadd.f32 0.0, %v8397
      %v8399 = vpop.f32.mrb[0].mxu0
      %v8400 = vpop.f32.mrb[0].mxu0
      %v8401 = vadd.f32 0.0, %v8400
      %v8402 = vpop.f32.mrb[0].mxu0
      %8403 = vmatprep.mubr.bf16.mxu0 0
      %8404 = vmatmul.mubr.bf16.gmra.mrb[0].mxu0 %v8281
      %v8405 = vpop.f32.mrb[0].mxu0
      %v8406 = vadd.f32 0.0, %v8405
      %v8407 = vpop.f32.mrb[0].mxu0
      %v8408 = vpop.f32.mrb[0].mxu0
      %v8409 = vadd.f32 0.0, %v8408
      %v8410 = vpop.f32.mrb[0].mxu0
      %8411 = vmatprep.mubr.bf16.mxu0 0
      %8412 = vmatmul.mubr.bf16.gmra.mrb[0].mxu0 %v8284
      %v8413 = vpop.f32.mrb[0].mxu0
      %v8414 = vadd.f32 0.0, %v8413
      %v8415 = vpop.f32.mrb[0].mxu0
      %v8416 = vpop.f32.mrb[0].mxu0
      %v8417 = vadd.f32 0.0, %v8416
      %v8418 = vpop.f32.mrb[0].mxu0
      %8419 = vmatprep.mubr.bf16.mxu0 0
      %8420 = vmatmul.mubr.bf16.gmra.mrb[0].mxu0 %v8287
      %v8421 = vpop.f32.mrb[0].mxu0
      %v8422 = vadd.f32 0.0, %v8421
      %v8423 = vpop.f32.mrb[0].mxu0
      %v8424 = vpop.f32.mrb[0].mxu0
      %v8425 = vadd.f32 0.0, %v8424
      %v8426 = vpop.f32.mrb[0].mxu0
      %8427 = vmatprep.mubr.bf16.mxu0 0
      %8428 = vmatmul.mubr.bf16.gmra.mrb[0].mxu0 %v8290
      %v8429 = vpop.f32.mrb[0].mxu0
      %v8430 = vadd.f32 0.0, %v8429
      %v8431 = vpop.f32.mrb[0].mxu0
      %v8432 = vpop.f32.mrb[0].mxu0
      %v8433 = vadd.f32 0.0, %v8432
      %v8434 = vpop.f32.mrb[0].mxu0
      %8435 = vmatprep.mubr.bf16.mxu0 0
      %8436 = vmatmul.mubr.bf16.gmra.mrb[0].mxu0 %v8293
      %v8437 = vpop.f32.mrb[0].mxu0
      %v8438 = vadd.f32 0.0, %v8437
      %v8439 = vpop.f32.mrb[0].mxu0
      %v8440 = vpop.f32.mrb[0].mxu0
      %v8441 = vadd.f32 0.0, %v8440
      %v8442 = vpop.f32.mrb[0].mxu0
      %8443 = vmatprep.mubr.bf16.mxu0 0
      %8444 = vmatmul.mubr.bf16.gmra.mrb[0].mxu0 %v8296
      %v8445 = vpop.f32.mrb[0].mxu0
      %v8446 = vadd.f32 0.0, %v8445
      %v8447 = vpop.f32.mrb[0].mxu0
      %v8448 = vpop.f32.mrb[0].mxu0
      %v8449 = vadd.f32 0.0, %v8448
      %v8450 = vpop.f32.mrb[0].mxu0
      %8451 = vmatprep.mubr.bf16.mxu0 0
      %8452 = vmatmul.mubr.bf16.gmra.mrb[0].mxu0 %v8299
      %v8453 = vpop.f32.mrb[0].mxu0
      %v8454 = vadd.f32 0.0, %v8453
      %v8455 = vpop.f32.mrb[0].mxu0
      %v8456 = vpop.f32.mrb[0].mxu0
      %v8457 = vadd.f32 0.0, %v8456
      %v8458 = vpop.f32.mrb[0].mxu0
      %8459 = vmatprep.mubr.bf16.mxu0 0
      %8460 = vmatmul.mubr.bf16.gmra.mrb[0].mxu0 %v8302
      %v8461 = vpop.f32.mrb[0].mxu0
      %v8462 = vadd.f32 0.0, %v8461
      %v8463 = vpop.f32.mrb[0].mxu0
      %v8464 = vpop.f32.mrb[0].mxu0
      %v8465 = vadd.f32 0.0, %v8464
      %v8466 = vpop.f32.mrb[0].mxu0
      %8467 = vdwg.mxu0
      %v8468 = vadd.f32 %v7742, %v8342
      %v8469 = vadd.f32 %v7743, %v8345
      %v8470 = vadd.f32 %v7744, %v8350
      %v8471 = vadd.f32 %v7745, %v8353
      %v8472 = vadd.f32 %v7746, %v8358
      %v8473 = vadd.f32 %v7747, %v8361
      %v8474 = vadd.f32 %v7748, %v8366
      %v8475 = vadd.f32 %v7749, %v8369
      %v8476 = vadd.f32 %v7750, %v8374
      %v8477 = vadd.f32 %v7751, %v8377
      %v8478 = vadd.f32 %v7752, %v8382
      %v8479 = vadd.f32 %v7753, %v8385
      %v8480 = vadd.f32 %v7754, %v8390
      %v8481 = vadd.f32 %v7755, %v8393
      %v8482 = vadd.f32 %v7756, %v8398
      %v8483 = vadd.f32 %v7757, %v8401
      %v8484 = vadd.f32 %v7758, %v8406
      %v8485 = vadd.f32 %v7759, %v8409
      %v8486 = vadd.f32 %v7760, %v8414
      %v8487 = vadd.f32 %v7761, %v8417
      %v8488 = vadd.f32 %v7762, %v8422
      %v8489 = vadd.f32 %v7763, %v8425
      %v8490 = vadd.f32 %v7764, %v8430
      %v8491 = vadd.f32 %v7765, %v8433
      %v8492 = vadd.f32 %v7766, %v8438
      %v8493 = vadd.f32 %v7767, %v8441
      %v8494 = vadd.f32 %v7768, %v8446
      %v8495 = vadd.f32 %v7769, %v8449
      %v8496 = vadd.f32 %v7770, %v8454
      %v8497 = vadd.f32 %v7771, %v8457
      %v8498 = vadd.f32 %v7772, %v8462
      %v8499 = vadd.f32 %v7773, %v8465
      %v8500 = vld [vmem:[%s5862] sm:$0xe]
      %v8501 = vld [vmem:[%s5862 + $0xc] sm:$0xe]
      %v8502 = vld [vmem:[%s5862 + $0x18] sm:$0xe]
      %v8503 = vld [vmem:[%s5862 + $0x24] sm:$0xe]
      %v8504 = vld [vmem:[%s5862 + $0x30] sm:$0xe]
      %v8505 = vld [vmem:[%s5862 + $0x3c] sm:$0xe]
      %v8506 = vld [vmem:[%s5862 + $0x48] sm:$0xe]
      %v8507 = vld [vmem:[%s5862 + $0x54] sm:$0xe]
      %v8508 = vld [vmem:[%s5862 + $0x60] sm:$0xe]
      %v8509 = vld [vmem:[%s5862 + $0x6c] sm:$0xe]
      %v8510 = vld [vmem:[%s5862 + $0x78] sm:$0xe]
      %v8511 = vld [vmem:[%s5862 + $0x84] sm:$0xe]
      %v8512 = vld [vmem:[%s5862 + $0x90] sm:$0xe]
      %v8513 = vld [vmem:[%s5862 + $0x9c] sm:$0xe]
      %v8514 = vld [vmem:[%s5862 + $0xa8] sm:$0xe]
      %v8515 = vld [vmem:[%s5862 + $0xb4] sm:$0xe]
      %v8564 = vrot.slane %v8500, 5
      %v8565 = vrot.slane %v8564, 4
      %v8566 = vrot.slane %v7775, 5
      %v8567 = vsel %vm1770, %v8565, %v8566
      %v8568 = vrot.slane %v8566, 4
      %v8569 = vrot.slane %v7776, 5
      %v8570 = vsel %vm1770, %v8568, %v8569
      %v8571 = vrot.slane %v8501, 5
      %v8572 = vrot.slane %v8571, 4
      %v8573 = vrot.slane %v7778, 5
      %v8574 = vsel %vm1770, %v8572, %v8573
      %v8575 = vrot.slane %v8573, 4
      %v8576 = vrot.slane %v7779, 5
      %v8577 = vsel %vm1770, %v8575, %v8576
      %v8578 = vrot.slane %v8502, 5
      %v8579 = vrot.slane %v8578, 4
      %v8580 = vrot.slane %v7781, 5
      %v8581 = vsel %vm1770, %v8579, %v8580
      %v8582 = vrot.slane %v8580, 4
      %v8583 = vrot.slane %v7782, 5
      %v8584 = vsel %vm1770, %v8582, %v8583
      %v8585 = vrot.slane %v8503, 5
      %v8586 = vrot.slane %v8585, 4
      %v8587 = vrot.slane %v7784, 5
      %v8588 = vsel %vm1770, %v8586, %v8587
      %v8589 = vrot.slane %v8587, 4
      %v8590 = vrot.slane %v7785, 5
      %v8591 = vsel %vm1770, %v8589, %v8590
      %v8592 = vrot.slane %v8504, 5
      %v8593 = vrot.slane %v8592, 4
      %v8594 = vrot.slane %v7787, 5
      %v8595 = vsel %vm1770, %v8593, %v8594
      %v8596 = vrot.slane %v8594, 4
      %v8597 = vrot.slane %v7788, 5
      %v8598 = vsel %vm1770, %v8596, %v8597
      %v8599 = vrot.slane %v8505, 5
      %v8600 = vrot.slane %v8599, 4
      %v8601 = vrot.slane %v7790, 5
      %v8602 = vsel %vm1770, %v8600, %v8601
      %v8603 = vrot.slane %v8601, 4
      %v8604 = vrot.slane %v7791, 5
      %v8605 = vsel %vm1770, %v8603, %v8604
      %v8606 = vrot.slane %v8506, 5
      %v8607 = vrot.slane %v8606, 4
      %v8608 = vrot.slane %v7793, 5
      %v8609 = vsel %vm1770, %v8607, %v8608
      %v8610 = vrot.slane %v8608, 4
      %v8611 = vrot.slane %v7794, 5
      %v8612 = vsel %vm1770, %v8610, %v8611
      %v8613 = vrot.slane %v8507, 5
      %v8614 = vrot.slane %v8613, 4
      %v8615 = vrot.slane %v7796, 5
      %v8616 = vsel %vm1770, %v8614, %v8615
      %v8617 = vrot.slane %v8615, 4
      %v8618 = vrot.slane %v7797, 5
      %v8619 = vsel %vm1770, %v8617, %v8618
      %v8620 = vrot.slane %v8508, 5
      %v8621 = vrot.slane %v8620, 4
      %v8622 = vrot.slane %v7799, 5
      %v8623 = vsel %vm1770, %v8621, %v8622
      %v8624 = vrot.slane %v8622, 4
      %v8625 = vrot.slane %v7800, 5
      %v8626 = vsel %vm1770, %v8624, %v8625
      %v8627 = vrot.slane %v8509, 5
      %v8628 = vrot.slane %v8627, 4
      %v8629 = vrot.slane %v7802, 5
      %v8630 = vsel %vm1770, %v8628, %v8629
      %v8631 = vrot.slane %v8629, 4
      %v8632 = vrot.slane %v7803, 5
      %v8633 = vsel %vm1770, %v8631, %v8632
      %v8634 = vrot.slane %v8510, 5
      %v8635 = vrot.slane %v8634, 4
      %v8636 = vrot.slane %v7805, 5
      %v8637 = vsel %vm1770, %v8635, %v8636
      %v8638 = vrot.slane %v8636, 4
      %v8639 = vrot.slane %v7806, 5
      %v8640 = vsel %vm1770, %v8638, %v8639
      %v8641 = vrot.slane %v8511, 5
      %v8642 = vrot.slane %v8641, 4
      %v8643 = vrot.slane %v7808, 5
      %v8644 = vsel %vm1770, %v8642, %v8643
      %v8645 = vrot.slane %v8643, 4
      %v8646 = vrot.slane %v7809, 5
      %v8647 = vsel %vm1770, %v8645, %v8646
      %v8648 = vrot.slane %v8512, 5
      %v8649 = vrot.slane %v8648, 4
      %v8650 = vrot.slane %v7811, 5
      %v8651 = vsel %vm1770, %v8649, %v8650
      %v8652 = vrot.slane %v8650, 4
      %v8653 = vrot.slane %v7812, 5
      %v8654 = vsel %vm1770, %v8652, %v8653
      %v8655 = vrot.slane %v8513, 5
      %v8656 = vrot.slane %v8655, 4
      %v8657 = vrot.slane %v7814, 5
      %v8658 = vsel %vm1770, %v8656, %v8657
      %v8659 = vrot.slane %v8657, 4
      %v8660 = vrot.slane %v7815, 5
      %v8661 = vsel %vm1770, %v8659, %v8660
      %v8662 = vrot.slane %v8514, 5
      %v8663 = vrot.slane %v8662, 4
      %v8664 = vrot.slane %v7817, 5
      %v8665 = vsel %vm1770, %v8663, %v8664
      %v8666 = vrot.slane %v8664, 4
      %v8667 = vrot.slane %v7818, 5
      %v8668 = vsel %vm1770, %v8666, %v8667
      %v8669 = vrot.slane %v8515, 5
      %v8670 = vrot.slane %v8669, 4
      %v8671 = vrot.slane %v7820, 5
      %v8672 = vsel %vm1770, %v8670, %v8671
      %v8673 = vrot.slane %v8671, 4
      %v8674 = vrot.slane %v7821, 5
      %v8675 = vsel %vm1770, %v8673, %v8674
      %s8676 = scalar_lea.vmem %s2, 10
      %v8677 = vld [vmem:[%s8676] sm:$0x3]
      %v8678 = vunpack.c.l.b16 %v8567
      %v8679 = vunpack.c.l.b16 %v8570
      %v8680 = vunpack.c.l.b16 %v8574
      %v8681 = vunpack.c.l.b16 %v8577
      %v8682 = vunpack.c.l.b16 %v8581
      %v8683 = vunpack.c.l.b16 %v8584
      %v8684 = vunpack.c.l.b16 %v8588
      %v8685 = vunpack.c.l.b16 %v8591
      %v8686 = vunpack.c.l.b16 %v8595
      %v8687 = vunpack.c.l.b16 %v8598
      %v8688 = vunpack.c.l.b16 %v8602
      %v8689 = vunpack.c.l.b16 %v8605
      %v8690 = vunpack.c.l.b16 %v8609
      %v8691 = vunpack.c.l.b16 %v8612
      %v8692 = vunpack.c.l.b16 %v8616
      %v8693 = vunpack.c.l.b16 %v8619
      %v8694 = vunpack.c.l.b16 %v8623
      %v8695 = vunpack.c.l.b16 %v8626
      %v8696 = vunpack.c.l.b16 %v8630
      %v8697 = vunpack.c.l.b16 %v8633
      %v8698 = vunpack.c.l.b16 %v8637
      %v8699 = vunpack.c.l.b16 %v8640
      %v8700 = vunpack.c.l.b16 %v8644
      %v8701 = vunpack.c.l.b16 %v8647
      %v8702 = vunpack.c.l.b16 %v8651
      %v8703 = vunpack.c.l.b16 %v8654
      %v8704 = vunpack.c.l.b16 %v8658
      %v8705 = vunpack.c.l.b16 %v8661
      %v8706 = vunpack.c.l.b16 %v8665
      %v8707 = vunpack.c.l.b16 %v8668
      %v8708 = vunpack.c.l.b16 %v8672
      %v8709 = vunpack.c.l.b16 %v8675
      %v8710 = vpack.c.b16 %v8679, %v8678
      %v8711 = vpack.c.b16 %v8681, %v8680
      %v8712 = vpack.c.b16 %v8683, %v8682
      %v8713 = vpack.c.b16 %v8685, %v8684
      %v8714 = vpack.c.b16 %v8687, %v8686
      %v8715 = vpack.c.b16 %v8689, %v8688
      %v8716 = vpack.c.b16 %v8691, %v8690
      %v8717 = vpack.c.b16 %v8693, %v8692
      %v8718 = vpack.c.b16 %v8695, %v8694
      %v8719 = vpack.c.b16 %v8697, %v8696
      %v8720 = vpack.c.b16 %v8699, %v8698
      %v8721 = vpack.c.b16 %v8701, %v8700
      %v8722 = vpack.c.b16 %v8703, %v8702
      %v8723 = vpack.c.b16 %v8705, %v8704
      %v8724 = vpack.c.b16 %v8707, %v8706
      %v8725 = vpack.c.b16 %v8709, %v8708
      %v8727 = vsel %vm1214, %v8710, 0
      %v8730 = vsel %vm1214, %v8711, 0
      %v8733 = vsel %vm1214, %v8712, 0
      %v8736 = vsel %vm1214, %v8713, 0
      %v8739 = vsel %vm1214, %v8714, 0
      %v8742 = vsel %vm1214, %v8715, 0
      %v8745 = vsel %vm1214, %v8716, 0
      %v8748 = vsel %vm1214, %v8717, 0
      %v8751 = vsel %vm1214, %v8718, 0
      %v8754 = vsel %vm1214, %v8719, 0
      %v8757 = vsel %vm1214, %v8720, 0
      %v8760 = vsel %vm1214, %v8721, 0
      %v8763 = vsel %vm1214, %v8722, 0
      %v8766 = vsel %vm1214, %v8723, 0
      %v8769 = vsel %vm1214, %v8724, 0
      %v8772 = vsel %vm1214, %v8725, 0
      %v8775 = vsel %vm1263, %v8677, 0
      %8777 = vmatprep.subr.bf16.mxu0 0
      %8778 = vmatpush1.bf16.msra.mxu0 %v8775
      %8779 = vmatprep.subr.bf16.mxu0 0
      %8780 = vmatpush1.bf16.msra.mxu0 0
      %8781 = vmatprep.subr.bf16.mxu0 0
      %8782 = vmatpush1.bf16.msra.mxu0 0
      %8783 = vmatprep.subr.bf16.mxu0 0
      %8784 = vmatpush1.bf16.msra.mxu0 0
      %8785 = vmatprep.subr.bf16.mxu0 0
      %8786 = vmatpush1.bf16.msra.mxu0 0
      %8787 = vmatprep.subr.bf16.mxu0 0
      %8788 = vmatpush1.bf16.msra.mxu0 0
      %8789 = vmatprep.subr.bf16.mxu0 0
      %8790 = vmatpush1.bf16.msra.mxu0 0
      %8791 = vmatprep.subr.bf16.mxu0 0
      %8792 = vmatpush1.bf16.msra.mxu0 0
      %8793 = vmatprep.subr.bf16.mxu0 0
      %8794 = vmatpush1.bf16.msra.mxu0 0
      %8795 = vmatprep.subr.bf16.mxu0 0
      %8796 = vmatpush1.bf16.msra.mxu0 0
      %8797 = vmatprep.subr.bf16.mxu0 0
      %8798 = vmatpush1.bf16.msra.mxu0 0
      %8799 = vmatprep.subr.bf16.mxu0 0
      %8800 = vmatpush1.bf16.msra.mxu0 0
      %8801 = vmatprep.subr.bf16.mxu0 0
      %8802 = vmatpush1.bf16.msra.mxu0 0
      %8803 = vmatprep.subr.bf16.mxu0 0
      %8804 = vmatpush1.bf16.msra.mxu0 0
      %8805 = vmatprep.subr.bf16.mxu0 0
      %8806 = vmatpush1.bf16.msra.mxu0 0
      %8807 = vmatprep.subr.bf16.mxu0 0
      %8808 = vmatpush1.bf16.msra.mxu0 0
      %8809 = vmatprep.mubr.bf16.mxu0 0
      %8810 = vmatmul.mubr.bf16.gmra.mrb[0].mxu0 %v8727
      %v8811 = vpop.f32.mrb[0].mxu0
      %v8812 = vadd.f32 0.0, %v8811
      %v8813 = vpop.f32.mrb[0].mxu0
      %v8814 = vpop.f32.mrb[0].mxu0
      %v8815 = vadd.f32 0.0, %v8814
      %v8816 = vpop.f32.mrb[0].mxu0
      %8817 = vmatprep.mubr.bf16.mxu0 0
      %8818 = vmatmul.mubr.bf16.gmra.mrb[0].mxu0 %v8730
      %v8819 = vpop.f32.mrb[0].mxu0
      %v8820 = vadd.f32 0.0, %v8819
      %v8821 = vpop.f32.mrb[0].mxu0
      %v8822 = vpop.f32.mrb[0].mxu0
      %v8823 = vadd.f32 0.0, %v8822
      %v8824 = vpop.f32.mrb[0].mxu0
      %8825 = vmatprep.mubr.bf16.mxu0 0
      %8826 = vmatmul.mubr.bf16.gmra.mrb[0].mxu0 %v8733
      %v8827 = vpop.f32.mrb[0].mxu0
      %v8828 = vadd.f32 0.0, %v8827
      %v8829 = vpop.f32.mrb[0].mxu0
      %v8830 = vpop.f32.mrb[0].mxu0
      %v8831 = vadd.f32 0.0, %v8830
      %v8832 = vpop.f32.mrb[0].mxu0
      %8833 = vmatprep.mubr.bf16.mxu0 0
      %8834 = vmatmul.mubr.bf16.gmra.mrb[0].mxu0 %v8736
      %v8835 = vpop.f32.mrb[0].mxu0
      %v8836 = vadd.f32 0.0, %v8835
      %v8837 = vpop.f32.mrb[0].mxu0
      %v8838 = vpop.f32.mrb[0].mxu0
      %v8839 = vadd.f32 0.0, %v8838
      %v8840 = vpop.f32.mrb[0].mxu0
      %8841 = vmatprep.mubr.bf16.mxu0 0
      %8842 = vmatmul.mubr.bf16.gmra.mrb[0].mxu0 %v8739
      %v8843 = vpop.f32.mrb[0].mxu0
      %v8844 = vadd.f32 0.0, %v8843
      %v8845 = vpop.f32.mrb[0].mxu0
      %v8846 = vpop.f32.mrb[0].mxu0
      %v8847 = vadd.f32 0.0, %v8846
      %v8848 = vpop.f32.mrb[0].mxu0
      %8849 = vmatprep.mubr.bf16.mxu0 0
      %8850 = vmatmul.mubr.bf16.gmra.mrb[0].mxu0 %v8742
      %v8851 = vpop.f32.mrb[0].mxu0
      %v8852 = vadd.f32 0.0, %v8851
      %v8853 = vpop.f32.mrb[0].mxu0
      %v8854 = vpop.f32.mrb[0].mxu0
      %v8855 = vadd.f32 0.0, %v8854
      %v8856 = vpop.f32.mrb[0].mxu0
      %8857 = vmatprep.mubr.bf16.mxu0 0
      %8858 = vmatmul.mubr.bf16.gmra.mrb[0].mxu0 %v8745
      %v8859 = vpop.f32.mrb[0].mxu0
      %v8860 = vadd.f32 0.0, %v8859
      %v8861 = vpop.f32.mrb[0].mxu0
      %v8862 = vpop.f32.mrb[0].mxu0
      %v8863 = vadd.f32 0.0, %v8862
      %v8864 = vpop.f32.mrb[0].mxu0
      %8865 = vmatprep.mubr.bf16.mxu0 0
      %8866 = vmatmul.mubr.bf16.gmra.mrb[0].mxu0 %v8748
      %v8867 = vpop.f32.mrb[0].mxu0
      %v8868 = vadd.f32 0.0, %v8867
      %v8869 = vpop.f32.mrb[0].mxu0
      %v8870 = vpop.f32.mrb[0].mxu0
      %v8871 = vadd.f32 0.0, %v8870
      %v8872 = vpop.f32.mrb[0].mxu0
      %8873 = vmatprep.mubr.bf16.mxu0 0
      %8874 = vmatmul.mubr.bf16.gmra.mrb[0].mxu0 %v8751
      %v8875 = vpop.f32.mrb[0].mxu0
      %v8876 = vadd.f32 0.0, %v8875
      %v8877 = vpop.f32.mrb[0].mxu0
      %v8878 = vpop.f32.mrb[0].mxu0
      %v8879 = vadd.f32 0.0, %v8878
      %v8880 = vpop.f32.mrb[0].mxu0
      %8881 = vmatprep.mubr.bf16.mxu0 0
      %8882 = vmatmul.mubr.bf16.gmra.mrb[0].mxu0 %v8754
      %v8883 = vpop.f32.mrb[0].mxu0
      %v8884 = vadd.f32 0.0, %v8883
      %v8885 = vpop.f32.mrb[0].mxu0
      %v8886 = vpop.f32.mrb[0].mxu0
      %v8887 = vadd.f32 0.0, %v8886
      %v8888 = vpop.f32.mrb[0].mxu0
      %8889 = vmatprep.mubr.bf16.mxu0 0
      %8890 = vmatmul.mubr.bf16.gmra.mrb[0].mxu0 %v8757
      %v8891 = vpop.f32.mrb[0].mxu0
      %v8892 = vadd.f32 0.0, %v8891
      %v8893 = vpop.f32.mrb[0].mxu0
      %v8894 = vpop.f32.mrb[0].mxu0
      %v8895 = vadd.f32 0.0, %v8894
      %v8896 = vpop.f32.mrb[0].mxu0
      %8897 = vmatprep.mubr.bf16.mxu0 0
      %8898 = vmatmul.mubr.bf16.gmra.mrb[0].mxu0 %v8760
      %v8899 = vpop.f32.mrb[0].mxu0
      %v8900 = vadd.f32 0.0, %v8899
      %v8901 = vpop.f32.mrb[0].mxu0
      %v8902 = vpop.f32.mrb[0].mxu0
      %v8903 = vadd.f32 0.0, %v8902
      %v8904 = vpop.f32.mrb[0].mxu0
      %8905 = vmatprep.mubr.bf16.mxu0 0
      %8906 = vmatmul.mubr.bf16.gmra.mrb[0].mxu0 %v8763
      %v8907 = vpop.f32.mrb[0].mxu0
      %v8908 = vadd.f32 0.0, %v8907
      %v8909 = vpop.f32.mrb[0].mxu0
      %v8910 = vpop.f32.mrb[0].mxu0
      %v8911 = vadd.f32 0.0, %v8910
      %v8912 = vpop.f32.mrb[0].mxu0
      %8913 = vmatprep.mubr.bf16.mxu0 0
      %8914 = vmatmul.mubr.bf16.gmra.mrb[0].mxu0 %v8766
      %v8915 = vpop.f32.mrb[0].mxu0
      %v8916 = vadd.f32 0.0, %v8915
      %v8917 = vpop.f32.mrb[0].mxu0
      %v8918 = vpop.f32.mrb[0].mxu0
      %v8919 = vadd.f32 0.0, %v8918
      %v8920 = vpop.f32.mrb[0].mxu0
      %8921 = vmatprep.mubr.bf16.mxu0 0
      %8922 = vmatmul.mubr.bf16.gmra.mrb[0].mxu0 %v8769
      %v8923 = vpop.f32.mrb[0].mxu0
      %v8924 = vadd.f32 0.0, %v8923
      %v8925 = vpop.f32.mrb[0].mxu0
      %v8926 = vpop.f32.mrb[0].mxu0
      %v8927 = vadd.f32 0.0, %v8926
      %v8928 = vpop.f32.mrb[0].mxu0
      %8929 = vmatprep.mubr.bf16.mxu0 0
      %8930 = vmatmul.mubr.bf16.gmra.mrb[0].mxu0 %v8772
      %v8931 = vpop.f32.mrb[0].mxu0
      %v8932 = vadd.f32 0.0, %v8931
      %v8933 = vpop.f32.mrb[0].mxu0
      %v8934 = vpop.f32.mrb[0].mxu0
      %v8935 = vadd.f32 0.0, %v8934
      %v8936 = vpop.f32.mrb[0].mxu0
      %8937 = vdwg.mxu0
      %v8938 = vadd.f32 %v8468, %v8812
      %v8939 = vadd.f32 %v8469, %v8815
      %v8940 = vadd.f32 %v8470, %v8820
      %v8941 = vadd.f32 %v8471, %v8823
      %v8942 = vadd.f32 %v8472, %v8828
      %v8943 = vadd.f32 %v8473, %v8831
      %v8944 = vadd.f32 %v8474, %v8836
      %v8945 = vadd.f32 %v8475, %v8839
      %v8946 = vadd.f32 %v8476, %v8844
      %v8947 = vadd.f32 %v8477, %v8847
      %v8948 = vadd.f32 %v8478, %v8852
      %v8949 = vadd.f32 %v8479, %v8855
      %v8950 = vadd.f32 %v8480, %v8860
      %v8951 = vadd.f32 %v8481, %v8863
      %v8952 = vadd.f32 %v8482, %v8868
      %v8953 = vadd.f32 %v8483, %v8871
      %v8954 = vadd.f32 %v8484, %v8876
      %v8955 = vadd.f32 %v8485, %v8879
      %v8956 = vadd.f32 %v8486, %v8884
      %v8957 = vadd.f32 %v8487, %v8887
      %v8958 = vadd.f32 %v8488, %v8892
      %v8959 = vadd.f32 %v8489, %v8895
      %v8960 = vadd.f32 %v8490, %v8900
      %v8961 = vadd.f32 %v8491, %v8903
      %v8962 = vadd.f32 %v8492, %v8908
      %v8963 = vadd.f32 %v8493, %v8911
      %v8964 = vadd.f32 %v8494, %v8916
      %v8965 = vadd.f32 %v8495, %v8919
      %v8966 = vadd.f32 %v8496, %v8924
      %v8967 = vadd.f32 %v8497, %v8927
      %v8968 = vadd.f32 %v8498, %v8932
      %v8969 = vadd.f32 %v8499, %v8935
      %s8970 = scalar_lea.vmem [#allocation3], 24
      %v8971 = vld [vmem:[%s8970] sm:$0xf]
      %v8972 = vld [vmem:[%s8970 + $0x4] sm:$0xf]
      %v8973 = vld [vmem:[%s8970 + $0xc] sm:$0xf]
      %v8974 = vld [vmem:[%s8970 + $0x10] sm:$0xf]
      %v8975 = vld [vmem:[%s8970 + $0x18] sm:$0xf]
      %v8976 = vld [vmem:[%s8970 + $0x1c] sm:$0xf]
      %v8977 = vld [vmem:[%s8970 + $0x24] sm:$0xf]
      %v8978 = vld [vmem:[%s8970 + $0x28] sm:$0xf]
      %v8979 = vld [vmem:[%s8970 + $0x30] sm:$0xf]
      %v8980 = vld [vmem:[%s8970 + $0x34] sm:$0xf]
      %v8981 = vld [vmem:[%s8970 + $0x3c] sm:$0xf]
      %v8982 = vld [vmem:[%s8970 + $0x40] sm:$0xf]
      %v8983 = vld [vmem:[%s8970 + $0x48] sm:$0xf]
      %v8984 = vld [vmem:[%s8970 + $0x4c] sm:$0xf]
      %v8985 = vld [vmem:[%s8970 + $0x54] sm:$0xf]
      %v8986 = vld [vmem:[%s8970 + $0x58] sm:$0xf]
      %v8987 = vld [vmem:[%s8970 + $0x60] sm:$0xf]
      %v8988 = vld [vmem:[%s8970 + $0x64] sm:$0xf]
      %v8989 = vld [vmem:[%s8970 + $0x6c] sm:$0xf]
      %v8990 = vld [vmem:[%s8970 + $0x70] sm:$0xf]
      %v8991 = vld [vmem:[%s8970 + $0x78] sm:$0xf]
      %v8992 = vld [vmem:[%s8970 + $0x7c] sm:$0xf]
      %v8993 = vld [vmem:[%s8970 + $0x84] sm:$0xf]
      %v8994 = vld [vmem:[%s8970 + $0x88] sm:$0xf]
      %v8995 = vld [vmem:[%s8970 + $0x90] sm:$0xf]
      %v8996 = vld [vmem:[%s8970 + $0x94] sm:$0xf]
      %v8997 = vld [vmem:[%s8970 + $0x9c] sm:$0xf]
      %v8998 = vld [vmem:[%s8970 + $0xa0] sm:$0xf]
      %v8999 = vld [vmem:[%s8970 + $0xa8] sm:$0xf]
      %v9000 = vld [vmem:[%s8970 + $0xac] sm:$0xf]
      %v9001 = vld [vmem:[%s8970 + $0xb4] sm:$0xf]
      %v9002 = vld [vmem:[%s8970 + $0xb8] sm:$0xf]
      %s9003 = scalar_lea.vmem %s2, 12
      %v9004 = vld [vmem:[%s9003] sm:$0x3]
      %v9037 = vunpack.c.l.b16 %v8971
      %v9038 = vunpack.c.l.b16 %v8972
      %v9039 = vunpack.c.l.b16 %v8973
      %v9040 = vunpack.c.l.b16 %v8974
      %v9041 = vunpack.c.l.b16 %v8975
      %v9042 = vunpack.c.l.b16 %v8976
      %v9043 = vunpack.c.l.b16 %v8977
      %v9044 = vunpack.c.l.b16 %v8978
      %v9045 = vunpack.c.l.b16 %v8979
      %v9046 = vunpack.c.l.b16 %v8980
      %v9047 = vunpack.c.l.b16 %v8981
      %v9048 = vunpack.c.l.b16 %v8982
      %v9049 = vunpack.c.l.b16 %v8983
      %v9050 = vunpack.c.l.b16 %v8984
      %v9051 = vunpack.c.l.b16 %v8985
      %v9052 = vunpack.c.l.b16 %v8986
      %v9053 = vunpack.c.l.b16 %v8987
      %v9054 = vunpack.c.l.b16 %v8988
      %v9055 = vunpack.c.l.b16 %v8989
      %v9056 = vunpack.c.l.b16 %v8990
      %v9057 = vunpack.c.l.b16 %v8991
      %v9058 = vunpack.c.l.b16 %v8992
      %v9059 = vunpack.c.l.b16 %v8993
      %v9060 = vunpack.c.l.b16 %v8994
      %v9061 = vunpack.c.l.b16 %v8995
      %v9062 = vunpack.c.l.b16 %v8996
      %v9063 = vunpack.c.l.b16 %v8997
      %v9064 = vunpack.c.l.b16 %v8998
      %v9065 = vunpack.c.l.b16 %v8999
      %v9066 = vunpack.c.l.b16 %v9000
      %v9067 = vunpack.c.l.b16 %v9001
      %v9068 = vunpack.c.l.b16 %v9002
      %v9069 = vpack.c.b16 %v9038, %v9037
      %v9070 = vpack.c.b16 %v9040, %v9039
      %v9071 = vpack.c.b16 %v9042, %v9041
      %v9072 = vpack.c.b16 %v9044, %v9043
      %v9073 = vpack.c.b16 %v9046, %v9045
      %v9074 = vpack.c.b16 %v9048, %v9047
      %v9075 = vpack.c.b16 %v9050, %v9049
      %v9076 = vpack.c.b16 %v9052, %v9051
      %v9077 = vpack.c.b16 %v9054, %v9053
      %v9078 = vpack.c.b16 %v9056, %v9055
      %v9079 = vpack.c.b16 %v9058, %v9057
      %v9080 = vpack.c.b16 %v9060, %v9059
      %v9081 = vpack.c.b16 %v9062, %v9061
      %v9082 = vpack.c.b16 %v9064, %v9063
      %v9083 = vpack.c.b16 %v9066, %v9065
      %v9084 = vpack.c.b16 %v9068, %v9067
      %v9086 = vsel %vm1214, %v9069, 0
      %v9089 = vsel %vm1214, %v9070, 0
      %v9092 = vsel %vm1214, %v9071, 0
      %v9095 = vsel %vm1214, %v9072, 0
      %v9098 = vsel %vm1214, %v9073, 0
      %v9101 = vsel %vm1214, %v9074, 0
      %v9104 = vsel %vm1214, %v9075, 0
      %v9107 = vsel %vm1214, %v9076, 0
      %v9110 = vsel %vm1214, %v9077, 0
      %v9113 = vsel %vm1214, %v9078, 0
      %v9116 = vsel %vm1214, %v9079, 0
      %v9119 = vsel %vm1214, %v9080, 0
      %v9122 = vsel %vm1214, %v9081, 0
      %v9125 = vsel %vm1214, %v9082, 0
      %v9128 = vsel %vm1214, %v9083, 0
      %v9131 = vsel %vm1214, %v9084, 0
      %v9134 = vsel %vm1263, %v9004, 0
      %9136 = vmatprep.subr.bf16.mxu0 0
      %9137 = vmatpush1.bf16.msra.mxu0 %v9134
      %9138 = vmatprep.subr.bf16.mxu0 0
      %9139 = vmatpush1.bf16.msra.mxu0 0
      %9140 = vmatprep.subr.bf16.mxu0 0
      %9141 = vmatpush1.bf16.msra.mxu0 0
      %9142 = vmatprep.subr.bf16.mxu0 0
      %9143 = vmatpush1.bf16.msra.mxu0 0
      %9144 = vmatprep.subr.bf16.mxu0 0
      %9145 = vmatpush1.bf16.msra.mxu0 0
      %9146 = vmatprep.subr.bf16.mxu0 0
      %9147 = vmatpush1.bf16.msra.mxu0 0
      %9148 = vmatprep.subr.bf16.mxu0 0
      %9149 = vmatpush1.bf16.msra.mxu0 0
      %9150 = vmatprep.subr.bf16.mxu0 0
      %9151 = vmatpush1.bf16.msra.mxu0 0
      %9152 = vmatprep.subr.bf16.mxu0 0
      %9153 = vmatpush1.bf16.msra.mxu0 0
      %9154 = vmatprep.subr.bf16.mxu0 0
      %9155 = vmatpush1.bf16.msra.mxu0 0
      %9156 = vmatprep.subr.bf16.mxu0 0
      %9157 = vmatpush1.bf16.msra.mxu0 0
      %9158 = vmatprep.subr.bf16.mxu0 0
      %9159 = vmatpush1.bf16.msra.mxu0 0
      %9160 = vmatprep.subr.bf16.mxu0 0
      %9161 = vmatpush1.bf16.msra.mxu0 0
      %9162 = vmatprep.subr.bf16.mxu0 0
      %9163 = vmatpush1.bf16.msra.mxu0 0
      %9164 = vmatprep.subr.bf16.mxu0 0
      %9165 = vmatpush1.bf16.msra.mxu0 0
      %9166 = vmatprep.subr.bf16.mxu0 0
      %9167 = vmatpush1.bf16.msra.mxu0 0
      %9168 = vmatprep.mubr.bf16.mxu0 0
      %9169 = vmatmul.mubr.bf16.gmra.mrb[0].mxu0 %v9086
      %v9170 = vpop.f32.mrb[0].mxu0
      %v9171 = vadd.f32 0.0, %v9170
      %v9172 = vpop.f32.mrb[0].mxu0
      %v9173 = vpop.f32.mrb[0].mxu0
      %v9174 = vadd.f32 0.0, %v9173
      %v9175 = vpop.f32.mrb[0].mxu0
      %9176 = vmatprep.mubr.bf16.mxu0 0
      %9177 = vmatmul.mubr.bf16.gmra.mrb[0].mxu0 %v9089
      %v9178 = vpop.f32.mrb[0].mxu0
      %v9179 = vadd.f32 0.0, %v9178
      %v9180 = vpop.f32.mrb[0].mxu0
      %v9181 = vpop.f32.mrb[0].mxu0
      %v9182 = vadd.f32 0.0, %v9181
      %v9183 = vpop.f32.mrb[0].mxu0
      %9184 = vmatprep.mubr.bf16.mxu0 0
      %9185 = vmatmul.mubr.bf16.gmra.mrb[0].mxu0 %v9092
      %v9186 = vpop.f32.mrb[0].mxu0
      %v9187 = vadd.f32 0.0, %v9186
      %v9188 = vpop.f32.mrb[0].mxu0
      %v9189 = vpop.f32.mrb[0].mxu0
      %v9190 = vadd.f32 0.0, %v9189
      %v9191 = vpop.f32.mrb[0].mxu0
      %9192 = vmatprep.mubr.bf16.mxu0 0
      %9193 = vmatmul.mubr.bf16.gmra.mrb[0].mxu0 %v9095
      %v9194 = vpop.f32.mrb[0].mxu0
      %v9195 = vadd.f32 0.0, %v9194
      %v9196 = vpop.f32.mrb[0].mxu0
      %v9197 = vpop.f32.mrb[0].mxu0
      %v9198 = vadd.f32 0.0, %v9197
      %v9199 = vpop.f32.mrb[0].mxu0
      %9200 = vmatprep.mubr.bf16.mxu0 0
      %9201 = vmatmul.mubr.bf16.gmra.mrb[0].mxu0 %v9098
      %v9202 = vpop.f32.mrb[0].mxu0
      %v9203 = vadd.f32 0.0, %v9202
      %v9204 = vpop.f32.mrb[0].mxu0
      %v9205 = vpop.f32.mrb[0].mxu0
      %v9206 = vadd.f32 0.0, %v9205
      %v9207 = vpop.f32.mrb[0].mxu0
      %9208 = vmatprep.mubr.bf16.mxu0 0
      %9209 = vmatmul.mubr.bf16.gmra.mrb[0].mxu0 %v9101
      %v9210 = vpop.f32.mrb[0].mxu0
      %v9211 = vadd.f32 0.0, %v9210
      %v9212 = vpop.f32.mrb[0].mxu0
      %v9213 = vpop.f32.mrb[0].mxu0
      %v9214 = vadd.f32 0.0, %v9213
      %v9215 = vpop.f32.mrb[0].mxu0
      %9216 = vmatprep.mubr.bf16.mxu0 0
      %9217 = vmatmul.mubr.bf16.gmra.mrb[0].mxu0 %v9104
      %v9218 = vpop.f32.mrb[0].mxu0
      %v9219 = vadd.f32 0.0, %v9218
      %v9220 = vpop.f32.mrb[0].mxu0
      %v9221 = vpop.f32.mrb[0].mxu0
      %v9222 = vadd.f32 0.0, %v9221
      %v9223 = vpop.f32.mrb[0].mxu0
      %9224 = vmatprep.mubr.bf16.mxu0 0
      %9225 = vmatmul.mubr.bf16.gmra.mrb[0].mxu0 %v9107
      %v9226 = vpop.f32.mrb[0].mxu0
      %v9227 = vadd.f32 0.0, %v9226
      %v9228 = vpop.f32.mrb[0].mxu0
      %v9229 = vpop.f32.mrb[0].mxu0
      %v9230 = vadd.f32 0.0, %v9229
      %v9231 = vpop.f32.mrb[0].mxu0
      %9232 = vmatprep.mubr.bf16.mxu0 0
      %9233 = vmatmul.mubr.bf16.gmra.mrb[0].mxu0 %v9110
      %v9234 = vpop.f32.mrb[0].mxu0
      %v9235 = vadd.f32 0.0, %v9234
      %v9236 = vpop.f32.mrb[0].mxu0
      %v9237 = vpop.f32.mrb[0].mxu0
      %v9238 = vadd.f32 0.0, %v9237
      %v9239 = vpop.f32.mrb[0].mxu0
      %9240 = vmatprep.mubr.bf16.mxu0 0
      %9241 = vmatmul.mubr.bf16.gmra.mrb[0].mxu0 %v9113
      %v9242 = vpop.f32.mrb[0].mxu0
      %v9243 = vadd.f32 0.0, %v9242
      %v9244 = vpop.f32.mrb[0].mxu0
      %v9245 = vpop.f32.mrb[0].mxu0
      %v9246 = vadd.f32 0.0, %v9245
      %v9247 = vpop.f32.mrb[0].mxu0
      %9248 = vmatprep.mubr.bf16.mxu0 0
      %9249 = vmatmul.mubr.bf16.gmra.mrb[0].mxu0 %v9116
      %v9250 = vpop.f32.mrb[0].mxu0
      %v9251 = vadd.f32 0.0, %v9250
      %v9252 = vpop.f32.mrb[0].mxu0
      %v9253 = vpop.f32.mrb[0].mxu0
      %v9254 = vadd.f32 0.0, %v9253
      %v9255 = vpop.f32.mrb[0].mxu0
      %9256 = vmatprep.mubr.bf16.mxu0 0
      %9257 = vmatmul.mubr.bf16.gmra.mrb[0].mxu0 %v9119
      %v9258 = vpop.f32.mrb[0].mxu0
      %v9259 = vadd.f32 0.0, %v9258
      %v9260 = vpop.f32.mrb[0].mxu0
      %v9261 = vpop.f32.mrb[0].mxu0
      %v9262 = vadd.f32 0.0, %v9261
      %v9263 = vpop.f32.mrb[0].mxu0
      %9264 = vmatprep.mubr.bf16.mxu0 0
      %9265 = vmatmul.mubr.bf16.gmra.mrb[0].mxu0 %v9122
      %v9266 = vpop.f32.mrb[0].mxu0
      %v9267 = vadd.f32 0.0, %v9266
      %v9268 = vpop.f32.mrb[0].mxu0
      %v9269 = vpop.f32.mrb[0].mxu0
      %v9270 = vadd.f32 0.0, %v9269
      %v9271 = vpop.f32.mrb[0].mxu0
      %9272 = vmatprep.mubr.bf16.mxu0 0
      %9273 = vmatmul.mubr.bf16.gmra.mrb[0].mxu0 %v9125
      %v9274 = vpop.f32.mrb[0].mxu0
      %v9275 = vadd.f32 0.0, %v9274
      %v9276 = vpop.f32.mrb[0].mxu0
      %v9277 = vpop.f32.mrb[0].mxu0
      %v9278 = vadd.f32 0.0, %v9277
      %v9279 = vpop.f32.mrb[0].mxu0
      %9280 = vmatprep.mubr.bf16.mxu0 0
      %9281 = vmatmul.mubr.bf16.gmra.mrb[0].mxu0 %v9128
      %v9282 = vpop.f32.mrb[0].mxu0
      %v9283 = vadd.f32 0.0, %v9282
      %v9284 = vpop.f32.mrb[0].mxu0
      %v9285 = vpop.f32.mrb[0].mxu0
      %v9286 = vadd.f32 0.0, %v9285
      %v9287 = vpop.f32.mrb[0].mxu0
      %9288 = vmatprep.mubr.bf16.mxu0 0
      %9289 = vmatmul.mubr.bf16.gmra.mrb[0].mxu0 %v9131
      %v9290 = vpop.f32.mrb[0].mxu0
      %v9291 = vadd.f32 0.0, %v9290
      %v9292 = vpop.f32.mrb[0].mxu0
      %v9293 = vpop.f32.mrb[0].mxu0
      %v9294 = vadd.f32 0.0, %v9293
      %v9295 = vpop.f32.mrb[0].mxu0
      %9296 = vdwg.mxu0
      %v9297 = vadd.f32 %v8938, %v9171
      %v9298 = vadd.f32 %v8939, %v9174
      %v9299 = vadd.f32 %v8940, %v9179
      %v9300 = vadd.f32 %v8941, %v9182
      %v9301 = vadd.f32 %v8942, %v9187
      %v9302 = vadd.f32 %v8943, %v9190
      %v9303 = vadd.f32 %v8944, %v9195
      %v9304 = vadd.f32 %v8945, %v9198
      %v9305 = vadd.f32 %v8946, %v9203
      %v9306 = vadd.f32 %v8947, %v9206
      %v9307 = vadd.f32 %v8948, %v9211
      %v9308 = vadd.f32 %v8949, %v9214
      %v9309 = vadd.f32 %v8950, %v9219
      %v9310 = vadd.f32 %v8951, %v9222
      %v9311 = vadd.f32 %v8952, %v9227
      %v9312 = vadd.f32 %v8953, %v9230
      %v9313 = vadd.f32 %v8954, %v9235
      %v9314 = vadd.f32 %v8955, %v9238
      %v9315 = vadd.f32 %v8956, %v9243
      %v9316 = vadd.f32 %v8957, %v9246
      %v9317 = vadd.f32 %v8958, %v9251
      %v9318 = vadd.f32 %v8959, %v9254
      %v9319 = vadd.f32 %v8960, %v9259
      %v9320 = vadd.f32 %v8961, %v9262
      %v9321 = vadd.f32 %v8962, %v9267
      %v9322 = vadd.f32 %v8963, %v9270
      %v9323 = vadd.f32 %v8964, %v9275
      %v9324 = vadd.f32 %v8965, %v9278
      %v9325 = vadd.f32 %v8966, %v9283
      %v9326 = vadd.f32 %v8967, %v9286
      %v9327 = vadd.f32 %v8968, %v9291
      %v9328 = vadd.f32 %v8969, %v9294
      %v9329 = vld [vmem:[%s8970] sm:$0xf]
      %v9330 = vld [vmem:[%s8970 + $0x4] sm:$0xf]
      %v9331 = vld [vmem:[%s8970 + $0x8] sm:$0x1]
      %v9332 = vld [vmem:[%s8970 + $0xc] sm:$0xf]
      %v9333 = vld [vmem:[%s8970 + $0x10] sm:$0xf]
      %v9334 = vld [vmem:[%s8970 + $0x14] sm:$0x1]
      %v9335 = vld [vmem:[%s8970 + $0x18] sm:$0xf]
      %v9336 = vld [vmem:[%s8970 + $0x1c] sm:$0xf]
      %v9337 = vld [vmem:[%s8970 + $0x20] sm:$0x1]
      %v9338 = vld [vmem:[%s8970 + $0x24] sm:$0xf]
      %v9339 = vld [vmem:[%s8970 + $0x28] sm:$0xf]
      %v9340 = vld [vmem:[%s8970 + $0x2c] sm:$0x1]
      %v9341 = vld [vmem:[%s8970 + $0x30] sm:$0xf]
      %v9342 = vld [vmem:[%s8970 + $0x34] sm:$0xf]
      %v9343 = vld [vmem:[%s8970 + $0x38] sm:$0x1]
      %v9344 = vld [vmem:[%s8970 + $0x3c] sm:$0xf]
      %v9345 = vld [vmem:[%s8970 + $0x40] sm:$0xf]
      %v9346 = vld [vmem:[%s8970 + $0x44] sm:$0x1]
      %v9347 = vld [vmem:[%s8970 + $0x48] sm:$0xf]
      %v9348 = vld [vmem:[%s8970 + $0x4c] sm:$0xf]
      %v9349 = vld [vmem:[%s8970 + $0x50] sm:$0x1]
      %v9350 = vld [vmem:[%s8970 + $0x54] sm:$0xf]
      %v9351 = vld [vmem:[%s8970 + $0x58] sm:$0xf]
      %v9352 = vld [vmem:[%s8970 + $0x5c] sm:$0x1]
      %v9353 = vld [vmem:[%s8970 + $0x60] sm:$0xf]
      %v9354 = vld [vmem:[%s8970 + $0x64] sm:$0xf]
      %v9355 = vld [vmem:[%s8970 + $0x68] sm:$0x1]
      %v9356 = vld [vmem:[%s8970 + $0x6c] sm:$0xf]
      %v9357 = vld [vmem:[%s8970 + $0x70] sm:$0xf]
      %v9358 = vld [vmem:[%s8970 + $0x74] sm:$0x1]
      %v9359 = vld [vmem:[%s8970 + $0x78] sm:$0xf]
      %v9360 = vld [vmem:[%s8970 + $0x7c] sm:$0xf]
      %v9361 = vld [vmem:[%s8970 + $0x80] sm:$0x1]
      %v9362 = vld [vmem:[%s8970 + $0x84] sm:$0xf]
      %v9363 = vld [vmem:[%s8970 + $0x88] sm:$0xf]
      %v9364 = vld [vmem:[%s8970 + $0x8c] sm:$0x1]
      %v9365 = vld [vmem:[%s8970 + $0x90] sm:$0xf]
      %v9366 = vld [vmem:[%s8970 + $0x94] sm:$0xf]
      %v9367 = vld [vmem:[%s8970 + $0x98] sm:$0x1]
      %v9368 = vld [vmem:[%s8970 + $0x9c] sm:$0xf]
      %v9369 = vld [vmem:[%s8970 + $0xa0] sm:$0xf]
      %v9370 = vld [vmem:[%s8970 + $0xa4] sm:$0x1]
      %v9371 = vld [vmem:[%s8970 + $0xa8] sm:$0xf]
      %v9372 = vld [vmem:[%s8970 + $0xac] sm:$0xf]
      %v9373 = vld [vmem:[%s8970 + $0xb0] sm:$0x1]
      %v9374 = vld [vmem:[%s8970 + $0xb4] sm:$0xf]
      %v9375 = vld [vmem:[%s8970 + $0xb8] sm:$0xf]
      %v9376 = vld [vmem:[%s8970 + $0xbc] sm:$0x1]
      %v9378 = vshrl.u32 %v9329, 16
      %v9380 = vrot.slane %v9378, 4
      %v9381 = vshll.u32 %v9329, 16
      %v9383 = vrot.slane %v9381, 5
      %v9384 = vor.u32 %v9380, %v9383
      %v9385 = vrot.slane %v9384, 4
      %v9387 = vshll.u32 %v9330, 16
      %v9389 = vrot.slane %v9387, 5
      %v9390 = vsel %vm779, %v9385, %v9389
      %v9391 = vshrl.u32 %v9330, 16
      %v9393 = vrot.slane %v9391, 4
      %v9394 = vor.u32 %v9393, %v9389
      %v9395 = vrot.slane %v9394, 4
      %v9397 = vshll.u32 %v9331, 16
      %v9399 = vrot.slane %v9397, 5
      %v9400 = vsel %vm779, %v9395, %v9399
      %v9402 = vshrl.u32 %v9332, 16
      %v9404 = vrot.slane %v9402, 4
      %v9405 = vshll.u32 %v9332, 16
      %v9407 = vrot.slane %v9405, 5
      %v9408 = vor.u32 %v9404, %v9407
      %v9409 = vrot.slane %v9408, 4
      %v9411 = vshll.u32 %v9333, 16
      %v9413 = vrot.slane %v9411, 5
      %v9414 = vsel %vm779, %v9409, %v9413
      %v9415 = vshrl.u32 %v9333, 16
      %v9417 = vrot.slane %v9415, 4
      %v9418 = vor.u32 %v9417, %v9413
      %v9419 = vrot.slane %v9418, 4
      %v9421 = vshll.u32 %v9334, 16
      %v9423 = vrot.slane %v9421, 5
      %v9424 = vsel %vm779, %v9419, %v9423
      %v9426 = vshrl.u32 %v9335, 16
      %v9428 = vrot.slane %v9426, 4
      %v9429 = vshll.u32 %v9335, 16
      %v9431 = vrot.slane %v9429, 5
      %v9432 = vor.u32 %v9428, %v9431
      %v9433 = vrot.slane %v9432, 4
      %v9435 = vshll.u32 %v9336, 16
      %v9437 = vrot.slane %v9435, 5
      %v9438 = vsel %vm779, %v9433, %v9437
      %v9439 = vshrl.u32 %v9336, 16
      %v9441 = vrot.slane %v9439, 4
      %v9442 = vor.u32 %v9441, %v9437
      %v9443 = vrot.slane %v9442, 4
      %v9445 = vshll.u32 %v9337, 16
      %v9447 = vrot.slane %v9445, 5
      %v9448 = vsel %vm779, %v9443, %v9447
      %v9450 = vshrl.u32 %v9338, 16
      %v9452 = vrot.slane %v9450, 4
      %v9453 = vshll.u32 %v9338, 16
      %v9455 = vrot.slane %v9453, 5
      %v9456 = vor.u32 %v9452, %v9455
      %v9457 = vrot.slane %v9456, 4
      %v9459 = vshll.u32 %v9339, 16
      %v9461 = vrot.slane %v9459, 5
      %v9462 = vsel %vm779, %v9457, %v9461
      %v9463 = vshrl.u32 %v9339, 16
      %v9465 = vrot.slane %v9463, 4
      %v9466 = vor.u32 %v9465, %v9461
      %v9467 = vrot.slane %v9466, 4
      %v9469 = vshll.u32 %v9340, 16
      %v9471 = vrot.slane %v9469, 5
      %v9472 = vsel %vm779, %v9467, %v9471
      %v9474 = vshrl.u32 %v9341, 16
      %v9476 = vrot.slane %v9474, 4
      %v9477 = vshll.u32 %v9341, 16
      %v9479 = vrot.slane %v9477, 5
      %v9480 = vor.u32 %v9476, %v9479
      %v9481 = vrot.slane %v9480, 4
      %v9483 = vshll.u32 %v9342, 16
      %v9485 = vrot.slane %v9483, 5
      %v9486 = vsel %vm779, %v9481, %v9485
      %v9487 = vshrl.u32 %v9342, 16
      %v9489 = vrot.slane %v9487, 4
      %v9490 = vor.u32 %v9489, %v9485
      %v9491 = vrot.slane %v9490, 4
      %v9493 = vshll.u32 %v9343, 16
      %v9495 = vrot.slane %v9493, 5
      %v9496 = vsel %vm779, %v9491, %v9495
      %v9498 = vshrl.u32 %v9344, 16
      %v9500 = vrot.slane %v9498, 4
      %v9501 = vshll.u32 %v9344, 16
      %v9503 = vrot.slane %v9501, 5
      %v9504 = vor.u32 %v9500, %v9503
      %v9505 = vrot.slane %v9504, 4
      %v9507 = vshll.u32 %v9345, 16
      %v9509 = vrot.slane %v9507, 5
      %v9510 = vsel %vm779, %v9505, %v9509
      %v9511 = vshrl.u32 %v9345, 16
      %v9513 = vrot.slane %v9511, 4
      %v9514 = vor.u32 %v9513, %v9509
      %v9515 = vrot.slane %v9514, 4
      %v9517 = vshll.u32 %v9346, 16
      %v9519 = vrot.slane %v9517, 5
      %v9520 = vsel %vm779, %v9515, %v9519
      %v9522 = vshrl.u32 %v9347, 16
      %v9524 = vrot.slane %v9522, 4
      %v9525 = vshll.u32 %v9347, 16
      %v9527 = vrot.slane %v9525, 5
      %v9528 = vor.u32 %v9524, %v9527
      %v9529 = vrot.slane %v9528, 4
      %v9531 = vshll.u32 %v9348, 16
      %v9533 = vrot.slane %v9531, 5
      %v9534 = vsel %vm779, %v9529, %v9533
      %v9535 = vshrl.u32 %v9348, 16
      %v9537 = vrot.slane %v9535, 4
      %v9538 = vor.u32 %v9537, %v9533
      %v9539 = vrot.slane %v9538, 4
      %v9541 = vshll.u32 %v9349, 16
      %v9543 = vrot.slane %v9541, 5
      %v9544 = vsel %vm779, %v9539, %v9543
      %v9546 = vshrl.u32 %v9350, 16
      %v9548 = vrot.slane %v9546, 4
      %v9549 = vshll.u32 %v9350, 16
      %v9551 = vrot.slane %v9549, 5
      %v9552 = vor.u32 %v9548, %v9551
      %v9553 = vrot.slane %v9552, 4
      %v9555 = vshll.u32 %v9351, 16
      %v9557 = vrot.slane %v9555, 5
      %v9558 = vsel %vm779, %v9553, %v9557
      %v9559 = vshrl.u32 %v9351, 16
      %v9561 = vrot.slane %v9559, 4
      %v9562 = vor.u32 %v9561, %v9557
      %v9563 = vrot.slane %v9562, 4
      %v9565 = vshll.u32 %v9352, 16
      %v9567 = vrot.slane %v9565, 5
      %v9568 = vsel %vm779, %v9563, %v9567
      %v9570 = vshrl.u32 %v9353, 16
      %v9572 = vrot.slane %v9570, 4
      %v9573 = vshll.u32 %v9353, 16
      %v9575 = vrot.slane %v9573, 5
      %v9576 = vor.u32 %v9572, %v9575
      %v9577 = vrot.slane %v9576, 4
      %v9579 = vshll.u32 %v9354, 16
      %v9581 = vrot.slane %v9579, 5
      %v9582 = vsel %vm779, %v9577, %v9581
      %v9583 = vshrl.u32 %v9354, 16
      %v9585 = vrot.slane %v9583, 4
      %v9586 = vor.u32 %v9585, %v9581
      %v9587 = vrot.slane %v9586, 4
      %v9589 = vshll.u32 %v9355, 16
      %v9591 = vrot.slane %v9589, 5
      %v9592 = vsel %vm779, %v9587, %v9591
      %v9594 = vshrl.u32 %v9356, 16
      %v9596 = vrot.slane %v9594, 4
      %v9597 = vshll.u32 %v9356, 16
      %v9599 = vrot.slane %v9597, 5
      %v9600 = vor.u32 %v9596, %v9599
      %v9601 = vrot.slane %v9600, 4
      %v9603 = vshll.u32 %v9357, 16
      %v9605 = vrot.slane %v9603, 5
      %v9606 = vsel %vm779, %v9601, %v9605
      %v9607 = vshrl.u32 %v9357, 16
      %v9609 = vrot.slane %v9607, 4
      %v9610 = vor.u32 %v9609, %v9605
      %v9611 = vrot.slane %v9610, 4
      %v9613 = vshll.u32 %v9358, 16
      %v9615 = vrot.slane %v9613, 5
      %v9616 = vsel %vm779, %v9611, %v9615
      %v9618 = vshrl.u32 %v9359, 16
      %v9620 = vrot.slane %v9618, 4
      %v9621 = vshll.u32 %v9359, 16
      %v9623 = vrot.slane %v9621, 5
      %v9624 = vor.u32 %v9620, %v9623
      %v9625 = vrot.slane %v9624, 4
      %v9627 = vshll.u32 %v9360, 16
      %v9629 = vrot.slane %v9627, 5
      %v9630 = vsel %vm779, %v9625, %v9629
      %v9631 = vshrl.u32 %v9360, 16
      %v9633 = vrot.slane %v9631, 4
      %v9634 = vor.u32 %v9633, %v9629
      %v9635 = vrot.slane %v9634, 4
      %v9637 = vshll.u32 %v9361, 16
      %v9639 = vrot.slane %v9637, 5
      %v9640 = vsel %vm779, %v9635, %v9639
      %v9642 = vshrl.u32 %v9362, 16
      %v9644 = vrot.slane %v9642, 4
      %v9645 = vshll.u32 %v9362, 16
      %v9647 = vrot.slane %v9645, 5
      %v9648 = vor.u32 %v9644, %v9647
      %v9649 = vrot.slane %v9648, 4
      %v9651 = vshll.u32 %v9363, 16
      %v9653 = vrot.slane %v9651, 5
      %v9654 = vsel %vm779, %v9649, %v9653
      %v9655 = vshrl.u32 %v9363, 16
      %v9657 = vrot.slane %v9655, 4
      %v9658 = vor.u32 %v9657, %v9653
      %v9659 = vrot.slane %v9658, 4
      %v9661 = vshll.u32 %v9364, 16
      %v9663 = vrot.slane %v9661, 5
      %v9664 = vsel %vm779, %v9659, %v9663
      %v9666 = vshrl.u32 %v9365, 16
      %v9668 = vrot.slane %v9666, 4
      %v9669 = vshll.u32 %v9365, 16
      %v9671 = vrot.slane %v9669, 5
      %v9672 = vor.u32 %v9668, %v9671
      %v9673 = vrot.slane %v9672, 4
      %v9675 = vshll.u32 %v9366, 16
      %v9677 = vrot.slane %v9675, 5
      %v9678 = vsel %vm779, %v9673, %v9677
      %v9679 = vshrl.u32 %v9366, 16
      %v9681 = vrot.slane %v9679, 4
      %v9682 = vor.u32 %v9681, %v9677
      %v9683 = vrot.slane %v9682, 4
      %v9685 = vshll.u32 %v9367, 16
      %v9687 = vrot.slane %v9685, 5
      %v9688 = vsel %vm779, %v9683, %v9687
      %v9690 = vshrl.u32 %v9368, 16
      %v9692 = vrot.slane %v9690, 4
      %v9693 = vshll.u32 %v9368, 16
      %v9695 = vrot.slane %v9693, 5
      %v9696 = vor.u32 %v9692, %v9695
      %v9697 = vrot.slane %v9696, 4
      %v9699 = vshll.u32 %v9369, 16
      %v9701 = vrot.slane %v9699, 5
      %v9702 = vsel %vm779, %v9697, %v9701
      %v9703 = vshrl.u32 %v9369, 16
      %v9705 = vrot.slane %v9703, 4
      %v9706 = vor.u32 %v9705, %v9701
      %v9707 = vrot.slane %v9706, 4
      %v9709 = vshll.u32 %v9370, 16
      %v9711 = vrot.slane %v9709, 5
      %v9712 = vsel %vm779, %v9707, %v9711
      %v9714 = vshrl.u32 %v9371, 16
      %v9716 = vrot.slane %v9714, 4
      %v9717 = vshll.u32 %v9371, 16
      %v9719 = vrot.slane %v9717, 5
      %v9720 = vor.u32 %v9716, %v9719
      %v9721 = vrot.slane %v9720, 4
      %v9723 = vshll.u32 %v9372, 16
      %v9725 = vrot.slane %v9723, 5
      %v9726 = vsel %vm779, %v9721, %v9725
      %v9727 = vshrl.u32 %v9372, 16
      %v9729 = vrot.slane %v9727, 4
      %v9730 = vor.u32 %v9729, %v9725
      %v9731 = vrot.slane %v9730, 4
      %v9733 = vshll.u32 %v9373, 16
      %v9735 = vrot.slane %v9733, 5
      %v9736 = vsel %vm779, %v9731, %v9735
      %v9738 = vshrl.u32 %v9374, 16
      %v9740 = vrot.slane %v9738, 4
      %v9741 = vshll.u32 %v9374, 16
      %v9743 = vrot.slane %v9741, 5
      %v9744 = vor.u32 %v9740, %v9743
      %v9745 = vrot.slane %v9744, 4
      %v9747 = vshll.u32 %v9375, 16
      %v9749 = vrot.slane %v9747, 5
      %v9750 = vsel %vm779, %v9745, %v9749
      %v9751 = vshrl.u32 %v9375, 16
      %v9753 = vrot.slane %v9751, 4
      %v9754 = vor.u32 %v9753, %v9749
      %v9755 = vrot.slane %v9754, 4
      %v9757 = vshll.u32 %v9376, 16
      %v9759 = vrot.slane %v9757, 5
      %v9760 = vsel %vm779, %v9755, %v9759
      %s9761 = scalar_lea.vmem %s2, 14
      %v9762 = vld [vmem:[%s9761] sm:$0x3]
      %v9763 = vunpack.c.l.b16 %v9390
      %v9764 = vunpack.c.l.b16 %v9400
      %v9765 = vunpack.c.l.b16 %v9414
      %v9766 = vunpack.c.l.b16 %v9424
      %v9767 = vunpack.c.l.b16 %v9438
      %v9768 = vunpack.c.l.b16 %v9448
      %v9769 = vunpack.c.l.b16 %v9462
      %v9770 = vunpack.c.l.b16 %v9472
      %v9771 = vunpack.c.l.b16 %v9486
      %v9772 = vunpack.c.l.b16 %v9496
      %v9773 = vunpack.c.l.b16 %v9510
      %v9774 = vunpack.c.l.b16 %v9520
      %v9775 = vunpack.c.l.b16 %v9534
      %v9776 = vunpack.c.l.b16 %v9544
      %v9777 = vunpack.c.l.b16 %v9558
      %v9778 = vunpack.c.l.b16 %v9568
      %v9779 = vunpack.c.l.b16 %v9582
      %v9780 = vunpack.c.l.b16 %v9592
      %v9781 = vunpack.c.l.b16 %v9606
      %v9782 = vunpack.c.l.b16 %v9616
      %v9783 = vunpack.c.l.b16 %v9630
      %v9784 = vunpack.c.l.b16 %v9640
      %v9785 = vunpack.c.l.b16 %v9654
      %v9786 = vunpack.c.l.b16 %v9664
      %v9787 = vunpack.c.l.b16 %v9678
      %v9788 = vunpack.c.l.b16 %v9688
      %v9789 = vunpack.c.l.b16 %v9702
      %v9790 = vunpack.c.l.b16 %v9712
      %v9791 = vunpack.c.l.b16 %v9726
      %v9792 = vunpack.c.l.b16 %v9736
      %v9793 = vunpack.c.l.b16 %v9750
      %v9794 = vunpack.c.l.b16 %v9760
      %v9795 = vpack.c.b16 %v9764, %v9763
      %v9796 = vpack.c.b16 %v9766, %v9765
      %v9797 = vpack.c.b16 %v9768, %v9767
      %v9798 = vpack.c.b16 %v9770, %v9769
      %v9799 = vpack.c.b16 %v9772, %v9771
      %v9800 = vpack.c.b16 %v9774, %v9773
      %v9801 = vpack.c.b16 %v9776, %v9775
      %v9802 = vpack.c.b16 %v9778, %v9777
      %v9803 = vpack.c.b16 %v9780, %v9779
      %v9804 = vpack.c.b16 %v9782, %v9781
      %v9805 = vpack.c.b16 %v9784, %v9783
      %v9806 = vpack.c.b16 %v9786, %v9785
      %v9807 = vpack.c.b16 %v9788, %v9787
      %v9808 = vpack.c.b16 %v9790, %v9789
      %v9809 = vpack.c.b16 %v9792, %v9791
      %v9810 = vpack.c.b16 %v9794, %v9793
      %v9812 = vsel %vm1214, %v9795, 0
      %v9815 = vsel %vm1214, %v9796, 0
      %v9818 = vsel %vm1214, %v9797, 0
      %v9821 = vsel %vm1214, %v9798, 0
      %v9824 = vsel %vm1214, %v9799, 0
      %v9827 = vsel %vm1214, %v9800, 0
      %v9830 = vsel %vm1214, %v9801, 0
      %v9833 = vsel %vm1214, %v9802, 0
      %v9836 = vsel %vm1214, %v9803, 0
      %v9839 = vsel %vm1214, %v9804, 0
      %v9842 = vsel %vm1214, %v9805, 0
      %v9845 = vsel %vm1214, %v9806, 0
      %v9848 = vsel %vm1214, %v9807, 0
      %v9851 = vsel %vm1214, %v9808, 0
      %v9854 = vsel %vm1214, %v9809, 0
      %v9857 = vsel %vm1214, %v9810, 0
      %v9860 = vsel %vm1263, %v9762, 0
      %9862 = vmatprep.subr.bf16.mxu0 0
      %9863 = vmatpush1.bf16.msra.mxu0 %v9860
      %9864 = vmatprep.subr.bf16.mxu0 0
      %9865 = vmatpush1.bf16.msra.mxu0 0
      %9866 = vmatprep.subr.bf16.mxu0 0
      %9867 = vmatpush1.bf16.msra.mxu0 0
      %9868 = vmatprep.subr.bf16.mxu0 0
      %9869 = vmatpush1.bf16.msra.mxu0 0
      %9870 = vmatprep.subr.bf16.mxu0 0
      %9871 = vmatpush1.bf16.msra.mxu0 0
      %9872 = vmatprep.subr.bf16.mxu0 0
      %9873 = vmatpush1.bf16.msra.mxu0 0
      %9874 = vmatprep.subr.bf16.mxu0 0
      %9875 = vmatpush1.bf16.msra.mxu0 0
      %9876 = vmatprep.subr.bf16.mxu0 0
      %9877 = vmatpush1.bf16.msra.mxu0 0
      %9878 = vmatprep.subr.bf16.mxu0 0
      %9879 = vmatpush1.bf16.msra.mxu0 0
      %9880 = vmatprep.subr.bf16.mxu0 0
      %9881 = vmatpush1.bf16.msra.mxu0 0
      %9882 = vmatprep.subr.bf16.mxu0 0
      %9883 = vmatpush1.bf16.msra.mxu0 0
      %9884 = vmatprep.subr.bf16.mxu0 0
      %9885 = vmatpush1.bf16.msra.mxu0 0
      %9886 = vmatprep.subr.bf16.mxu0 0
      %9887 = vmatpush1.bf16.msra.mxu0 0
      %9888 = vmatprep.subr.bf16.mxu0 0
      %9889 = vmatpush1.bf16.msra.mxu0 0
      %9890 = vmatprep.subr.bf16.mxu0 0
      %9891 = vmatpush1.bf16.msra.mxu0 0
      %9892 = vmatprep.subr.bf16.mxu0 0
      %9893 = vmatpush1.bf16.msra.mxu0 0
      %9894 = vmatprep.mubr.bf16.mxu0 0
      %9895 = vmatmul.mubr.bf16.gmra.mrb[0].mxu0 %v9812
      %v9896 = vpop.f32.mrb[0].mxu0
      %v9897 = vadd.f32 0.0, %v9896
      %v9898 = vpop.f32.mrb[0].mxu0
      %v9899 = vpop.f32.mrb[0].mxu0
      %v9900 = vadd.f32 0.0, %v9899
      %v9901 = vpop.f32.mrb[0].mxu0
      %9902 = vmatprep.mubr.bf16.mxu0 0
      %9903 = vmatmul.mubr.bf16.gmra.mrb[0].mxu0 %v9815
      %v9904 = vpop.f32.mrb[0].mxu0
      %v9905 = vadd.f32 0.0, %v9904
      %v9906 = vpop.f32.mrb[0].mxu0
      %v9907 = vpop.f32.mrb[0].mxu0
      %v9908 = vadd.f32 0.0, %v9907
      %v9909 = vpop.f32.mrb[0].mxu0
      %9910 = vmatprep.mubr.bf16.mxu0 0
      %9911 = vmatmul.mubr.bf16.gmra.mrb[0].mxu0 %v9818
      %v9912 = vpop.f32.mrb[0].mxu0
      %v9913 = vadd.f32 0.0, %v9912
      %v9914 = vpop.f32.mrb[0].mxu0
      %v9915 = vpop.f32.mrb[0].mxu0
      %v9916 = vadd.f32 0.0, %v9915
      %v9917 = vpop.f32.mrb[0].mxu0
      %9918 = vmatprep.mubr.bf16.mxu0 0
      %9919 = vmatmul.mubr.bf16.gmra.mrb[0].mxu0 %v9821
      %v9920 = vpop.f32.mrb[0].mxu0
      %v9921 = vadd.f32 0.0, %v9920
      %v9922 = vpop.f32.mrb[0].mxu0
      %v9923 = vpop.f32.mrb[0].mxu0
      %v9924 = vadd.f32 0.0, %v9923
      %v9925 = vpop.f32.mrb[0].mxu0
      %9926 = vmatprep.mubr.bf16.mxu0 0
      %9927 = vmatmul.mubr.bf16.gmra.mrb[0].mxu0 %v9824
      %v9928 = vpop.f32.mrb[0].mxu0
      %v9929 = vadd.f32 0.0, %v9928
      %v9930 = vpop.f32.mrb[0].mxu0
      %v9931 = vpop.f32.mrb[0].mxu0
      %v9932 = vadd.f32 0.0, %v9931
      %v9933 = vpop.f32.mrb[0].mxu0
      %9934 = vmatprep.mubr.bf16.mxu0 0
      %9935 = vmatmul.mubr.bf16.gmra.mrb[0].mxu0 %v9827
      %v9936 = vpop.f32.mrb[0].mxu0
      %v9937 = vadd.f32 0.0, %v9936
      %v9938 = vpop.f32.mrb[0].mxu0
      %v9939 = vpop.f32.mrb[0].mxu0
      %v9940 = vadd.f32 0.0, %v9939
      %v9941 = vpop.f32.mrb[0].mxu0
      %9942 = vmatprep.mubr.bf16.mxu0 0
      %9943 = vmatmul.mubr.bf16.gmra.mrb[0].mxu0 %v9830
      %v9944 = vpop.f32.mrb[0].mxu0
      %v9945 = vadd.f32 0.0, %v9944
      %v9946 = vpop.f32.mrb[0].mxu0
      %v9947 = vpop.f32.mrb[0].mxu0
      %v9948 = vadd.f32 0.0, %v9947
      %v9949 = vpop.f32.mrb[0].mxu0
      %9950 = vmatprep.mubr.bf16.mxu0 0
      %9951 = vmatmul.mubr.bf16.gmra.mrb[0].mxu0 %v9833
      %v9952 = vpop.f32.mrb[0].mxu0
      %v9953 = vadd.f32 0.0, %v9952
      %v9954 = vpop.f32.mrb[0].mxu0
      %v9955 = vpop.f32.mrb[0].mxu0
      %v9956 = vadd.f32 0.0, %v9955
      %v9957 = vpop.f32.mrb[0].mxu0
      %9958 = vmatprep.mubr.bf16.mxu0 0
      %9959 = vmatmul.mubr.bf16.gmra.mrb[0].mxu0 %v9836
      %v9960 = vpop.f32.mrb[0].mxu0
      %v9961 = vadd.f32 0.0, %v9960
      %v9962 = vpop.f32.mrb[0].mxu0
      %v9963 = vpop.f32.mrb[0].mxu0
      %v9964 = vadd.f32 0.0, %v9963
      %v9965 = vpop.f32.mrb[0].mxu0
      %9966 = vmatprep.mubr.bf16.mxu0 0
      %9967 = vmatmul.mubr.bf16.gmra.mrb[0].mxu0 %v9839
      %v9968 = vpop.f32.mrb[0].mxu0
      %v9969 = vadd.f32 0.0, %v9968
      %v9970 = vpop.f32.mrb[0].mxu0
      %v9971 = vpop.f32.mrb[0].mxu0
      %v9972 = vadd.f32 0.0, %v9971
      %v9973 = vpop.f32.mrb[0].mxu0
      %9974 = vmatprep.mubr.bf16.mxu0 0
      %9975 = vmatmul.mubr.bf16.gmra.mrb[0].mxu0 %v9842
      %v9976 = vpop.f32.mrb[0].mxu0
      %v9977 = vadd.f32 0.0, %v9976
      %v9978 = vpop.f32.mrb[0].mxu0
      %v9979 = vpop.f32.mrb[0].mxu0
      %v9980 = vadd.f32 0.0, %v9979
      %v9981 = vpop.f32.mrb[0].mxu0
      %9982 = vmatprep.mubr.bf16.mxu0 0
      %9983 = vmatmul.mubr.bf16.gmra.mrb[0].mxu0 %v9845
      %v9984 = vpop.f32.mrb[0].mxu0
      %v9985 = vadd.f32 0.0, %v9984
      %v9986 = vpop.f32.mrb[0].mxu0
      %v9987 = vpop.f32.mrb[0].mxu0
      %v9988 = vadd.f32 0.0, %v9987
      %v9989 = vpop.f32.mrb[0].mxu0
      %9990 = vmatprep.mubr.bf16.mxu0 0
      %9991 = vmatmul.mubr.bf16.gmra.mrb[0].mxu0 %v9848
      %v9992 = vpop.f32.mrb[0].mxu0
      %v9993 = vadd.f32 0.0, %v9992
      %v9994 = vpop.f32.mrb[0].mxu0
      %v9995 = vpop.f32.mrb[0].mxu0
      %v9996 = vadd.f32 0.0, %v9995
      %v9997 = vpop.f32.mrb[0].mxu0
      %9998 = vmatprep.mubr.bf16.mxu0 0
      %9999 = vmatmul.mubr.bf16.gmra.mrb[0].mxu0 %v9851
      %v10000 = vpop.f32.mrb[0].mxu0
      %v10001 = vadd.f32 0.0, %v10000
      %v10002 = vpop.f32.mrb[0].mxu0
      %v10003 = vpop.f32.mrb[0].mxu0
      %v10004 = vadd.f32 0.0, %v10003
      %v10005 = vpop.f32.mrb[0].mxu0
      %10006 = vmatprep.mubr.bf16.mxu0 0
      %10007 = vmatmul.mubr.bf16.gmra.mrb[0].mxu0 %v9854
      %v10008 = vpop.f32.mrb[0].mxu0
      %v10009 = vadd.f32 0.0, %v10008
      %v10010 = vpop.f32.mrb[0].mxu0
      %v10011 = vpop.f32.mrb[0].mxu0
      %v10012 = vadd.f32 0.0, %v10011
      %v10013 = vpop.f32.mrb[0].mxu0
      %10014 = vmatprep.mubr.bf16.mxu0 0
      %10015 = vmatmul.mubr.bf16.gmra.mrb[0].mxu0 %v9857
      %v10016 = vpop.f32.mrb[0].mxu0
      %v10017 = vadd.f32 0.0, %v10016
      %v10018 = vpop.f32.mrb[0].mxu0
      %v10019 = vpop.f32.mrb[0].mxu0
      %v10020 = vadd.f32 0.0, %v10019
      %v10021 = vpop.f32.mrb[0].mxu0
      %10022 = vdwg.mxu0
      %v10023 = vadd.f32 %v9297, %v9897
      %v10024 = vadd.f32 %v9298, %v9900
      %v10025 = vadd.f32 %v9299, %v9905
      %v10026 = vadd.f32 %v9300, %v9908
      %v10027 = vadd.f32 %v9301, %v9913
      %v10028 = vadd.f32 %v9302, %v9916
      %v10029 = vadd.f32 %v9303, %v9921
      %v10030 = vadd.f32 %v9304, %v9924
      %v10031 = vadd.f32 %v9305, %v9929
      %v10032 = vadd.f32 %v9306, %v9932
      %v10033 = vadd.f32 %v9307, %v9937
      %v10034 = vadd.f32 %v9308, %v9940
      %v10035 = vadd.f32 %v9309, %v9945
      %v10036 = vadd.f32 %v9310, %v9948
      %v10037 = vadd.f32 %v9311, %v9953
      %v10038 = vadd.f32 %v9312, %v9956
      %v10039 = vadd.f32 %v9313, %v9961
      %v10040 = vadd.f32 %v9314, %v9964
      %v10041 = vadd.f32 %v9315, %v9969
      %v10042 = vadd.f32 %v9316, %v9972
      %v10043 = vadd.f32 %v9317, %v9977
      %v10044 = vadd.f32 %v9318, %v9980
      %v10045 = vadd.f32 %v9319, %v9985
      %v10046 = vadd.f32 %v9320, %v9988
      %v10047 = vadd.f32 %v9321, %v9993
      %v10048 = vadd.f32 %v9322, %v9996
      %v10049 = vadd.f32 %v9323, %v10001
      %v10050 = vadd.f32 %v9324, %v10004
      %v10051 = vadd.f32 %v9325, %v10009
      %v10052 = vadd.f32 %v9326, %v10012
      %v10053 = vadd.f32 %v9327, %v10017
      %v10054 = vadd.f32 %v9328, %v10020
      %v10055 = vld [vmem:[%s8970] sm:$0xe]
      %v10056 = vld [vmem:[%s8970 + $0xc] sm:$0xe]
      %v10057 = vld [vmem:[%s8970 + $0x18] sm:$0xe]
      %v10058 = vld [vmem:[%s8970 + $0x24] sm:$0xe]
      %v10059 = vld [vmem:[%s8970 + $0x30] sm:$0xe]
      %v10060 = vld [vmem:[%s8970 + $0x3c] sm:$0xe]
      %v10061 = vld [vmem:[%s8970 + $0x48] sm:$0xe]
      %v10062 = vld [vmem:[%s8970 + $0x54] sm:$0xe]
      %v10063 = vld [vmem:[%s8970 + $0x60] sm:$0xe]
      %v10064 = vld [vmem:[%s8970 + $0x6c] sm:$0xe]
      %v10065 = vld [vmem:[%s8970 + $0x78] sm:$0xe]
      %v10066 = vld [vmem:[%s8970 + $0x84] sm:$0xe]
      %v10067 = vld [vmem:[%s8970 + $0x90] sm:$0xe]
      %v10068 = vld [vmem:[%s8970 + $0x9c] sm:$0xe]
      %v10069 = vld [vmem:[%s8970 + $0xa8] sm:$0xe]
      %v10070 = vld [vmem:[%s8970 + $0xb4] sm:$0xe]
      %v10119 = vrot.slane %v10055, 5
      %v10120 = vrot.slane %v10119, 4
      %v10121 = vrot.slane %v9330, 5
      %v10122 = vsel %vm1770, %v10120, %v10121
      %v10123 = vrot.slane %v10121, 4
      %v10124 = vrot.slane %v9331, 5
      %v10125 = vsel %vm1770, %v10123, %v10124
      %v10126 = vrot.slane %v10056, 5
      %v10127 = vrot.slane %v10126, 4
      %v10128 = vrot.slane %v9333, 5
      %v10129 = vsel %vm1770, %v10127, %v10128
      %v10130 = vrot.slane %v10128, 4
      %v10131 = vrot.slane %v9334, 5
      %v10132 = vsel %vm1770, %v10130, %v10131
      %v10133 = vrot.slane %v10057, 5
      %v10134 = vrot.slane %v10133, 4
      %v10135 = vrot.slane %v9336, 5
      %v10136 = vsel %vm1770, %v10134, %v10135
      %v10137 = vrot.slane %v10135, 4
      %v10138 = vrot.slane %v9337, 5
      %v10139 = vsel %vm1770, %v10137, %v10138
      %v10140 = vrot.slane %v10058, 5
      %v10141 = vrot.slane %v10140, 4
      %v10142 = vrot.slane %v9339, 5
      %v10143 = vsel %vm1770, %v10141, %v10142
      %v10144 = vrot.slane %v10142, 4
      %v10145 = vrot.slane %v9340, 5
      %v10146 = vsel %vm1770, %v10144, %v10145
      %v10147 = vrot.slane %v10059, 5
      %v10148 = vrot.slane %v10147, 4
      %v10149 = vrot.slane %v9342, 5
      %v10150 = vsel %vm1770, %v10148, %v10149
      %v10151 = vrot.slane %v10149, 4
      %v10152 = vrot.slane %v9343, 5
      %v10153 = vsel %vm1770, %v10151, %v10152
      %v10154 = vrot.slane %v10060, 5
      %v10155 = vrot.slane %v10154, 4
      %v10156 = vrot.slane %v9345, 5
      %v10157 = vsel %vm1770, %v10155, %v10156
      %v10158 = vrot.slane %v10156, 4
      %v10159 = vrot.slane %v9346, 5
      %v10160 = vsel %vm1770, %v10158, %v10159
      %v10161 = vrot.slane %v10061, 5
      %v10162 = vrot.slane %v10161, 4
      %v10163 = vrot.slane %v9348, 5
      %v10164 = vsel %vm1770, %v10162, %v10163
      %v10165 = vrot.slane %v10163, 4
      %v10166 = vrot.slane %v9349, 5
      %v10167 = vsel %vm1770, %v10165, %v10166
      %v10168 = vrot.slane %v10062, 5
      %v10169 = vrot.slane %v10168, 4
      %v10170 = vrot.slane %v9351, 5
      %v10171 = vsel %vm1770, %v10169, %v10170
      %v10172 = vrot.slane %v10170, 4
      %v10173 = vrot.slane %v9352, 5
      %v10174 = vsel %vm1770, %v10172, %v10173
      %v10175 = vrot.slane %v10063, 5
      %v10176 = vrot.slane %v10175, 4
      %v10177 = vrot.slane %v9354, 5
      %v10178 = vsel %vm1770, %v10176, %v10177
      %v10179 = vrot.slane %v10177, 4
      %v10180 = vrot.slane %v9355, 5
      %v10181 = vsel %vm1770, %v10179, %v10180
      %v10182 = vrot.slane %v10064, 5
      %v10183 = vrot.slane %v10182, 4
      %v10184 = vrot.slane %v9357, 5
      %v10185 = vsel %vm1770, %v10183, %v10184
      %v10186 = vrot.slane %v10184, 4
      %v10187 = vrot.slane %v9358, 5
      %v10188 = vsel %vm1770, %v10186, %v10187
      %v10189 = vrot.slane %v10065, 5
      %v10190 = vrot.slane %v10189, 4
      %v10191 = vrot.slane %v9360, 5
      %v10192 = vsel %vm1770, %v10190, %v10191
      %v10193 = vrot.slane %v10191, 4
      %v10194 = vrot.slane %v9361, 5
      %v10195 = vsel %vm1770, %v10193, %v10194
      %v10196 = vrot.slane %v10066, 5
      %v10197 = vrot.slane %v10196, 4
      %v10198 = vrot.slane %v9363, 5
      %v10199 = vsel %vm1770, %v10197, %v10198
      %v10200 = vrot.slane %v10198, 4
      %v10201 = vrot.slane %v9364, 5
      %v10202 = vsel %vm1770, %v10200, %v10201
      %v10203 = vrot.slane %v10067, 5
      %v10204 = vrot.slane %v10203, 4
      %v10205 = vrot.slane %v9366, 5
      %v10206 = vsel %vm1770, %v10204, %v10205
      %v10207 = vrot.slane %v10205, 4
      %v10208 = vrot.slane %v9367, 5
      %v10209 = vsel %vm1770, %v10207, %v10208
      %v10210 = vrot.slane %v10068, 5
      %v10211 = vrot.slane %v10210, 4
      %v10212 = vrot.slane %v9369, 5
      %v10213 = vsel %vm1770, %v10211, %v10212
      %v10214 = vrot.slane %v10212, 4
      %v10215 = vrot.slane %v9370, 5
      %v10216 = vsel %vm1770, %v10214, %v10215
      %v10217 = vrot.slane %v10069, 5
      %v10218 = vrot.slane %v10217, 4
      %v10219 = vrot.slane %v9372, 5
      %v10220 = vsel %vm1770, %v10218, %v10219
      %v10221 = vrot.slane %v10219, 4
      %v10222 = vrot.slane %v9373, 5
      %v10223 = vsel %vm1770, %v10221, %v10222
      %v10224 = vrot.slane %v10070, 5
      %v10225 = vrot.slane %v10224, 4
      %v10226 = vrot.slane %v9375, 5
      %v10227 = vsel %vm1770, %v10225, %v10226
      %v10228 = vrot.slane %v10226, 4
      %v10229 = vrot.slane %v9376, 5
      %v10230 = vsel %vm1770, %v10228, %v10229
      %s10231 = scalar_lea.vmem %s2, 16
      %v10232 = vld [vmem:[%s10231] sm:$0x3]
      %v10233 = vunpack.c.l.b16 %v10122
      %v10234 = vunpack.c.l.b16 %v10125
      %v10235 = vunpack.c.l.b16 %v10129
      %v10236 = vunpack.c.l.b16 %v10132
      %v10237 = vunpack.c.l.b16 %v10136
      %v10238 = vunpack.c.l.b16 %v10139
      %v10239 = vunpack.c.l.b16 %v10143
      %v10240 = vunpack.c.l.b16 %v10146
      %v10241 = vunpack.c.l.b16 %v10150
      %v10242 = vunpack.c.l.b16 %v10153
      %v10243 = vunpack.c.l.b16 %v10157
      %v10244 = vunpack.c.l.b16 %v10160
      %v10245 = vunpack.c.l.b16 %v10164
      %v10246 = vunpack.c.l.b16 %v10167
      %v10247 = vunpack.c.l.b16 %v10171
      %v10248 = vunpack.c.l.b16 %v10174
      %v10249 = vunpack.c.l.b16 %v10178
      %v10250 = vunpack.c.l.b16 %v10181
      %v10251 = vunpack.c.l.b16 %v10185
      %v10252 = vunpack.c.l.b16 %v10188
      %v10253 = vunpack.c.l.b16 %v10192
      %v10254 = vunpack.c.l.b16 %v10195
      %v10255 = vunpack.c.l.b16 %v10199
      %v10256 = vunpack.c.l.b16 %v10202
      %v10257 = vunpack.c.l.b16 %v10206
      %v10258 = vunpack.c.l.b16 %v10209
      %v10259 = vunpack.c.l.b16 %v10213
      %v10260 = vunpack.c.l.b16 %v10216
      %v10261 = vunpack.c.l.b16 %v10220
      %v10262 = vunpack.c.l.b16 %v10223
      %v10263 = vunpack.c.l.b16 %v10227
      %v10264 = vunpack.c.l.b16 %v10230
      %v10265 = vpack.c.b16 %v10234, %v10233
      %v10266 = vpack.c.b16 %v10236, %v10235
      %v10267 = vpack.c.b16 %v10238, %v10237
      %v10268 = vpack.c.b16 %v10240, %v10239
      %v10269 = vpack.c.b16 %v10242, %v10241
      %v10270 = vpack.c.b16 %v10244, %v10243
      %v10271 = vpack.c.b16 %v10246, %v10245
      %v10272 = vpack.c.b16 %v10248, %v10247
      %v10273 = vpack.c.b16 %v10250, %v10249
      %v10274 = vpack.c.b16 %v10252, %v10251
      %v10275 = vpack.c.b16 %v10254, %v10253
      %v10276 = vpack.c.b16 %v10256, %v10255
      %v10277 = vpack.c.b16 %v10258, %v10257
      %v10278 = vpack.c.b16 %v10260, %v10259
      %v10279 = vpack.c.b16 %v10262, %v10261
      %v10280 = vpack.c.b16 %v10264, %v10263
      %v10282 = vsel %vm1214, %v10265, 0
      %v10285 = vsel %vm1214, %v10266, 0
      %v10288 = vsel %vm1214, %v10267, 0
      %v10291 = vsel %vm1214, %v10268, 0
      %v10294 = vsel %vm1214, %v10269, 0
      %v10297 = vsel %vm1214, %v10270, 0
      %v10300 = vsel %vm1214, %v10271, 0
      %v10303 = vsel %vm1214, %v10272, 0
      %v10306 = vsel %vm1214, %v10273, 0
      %v10309 = vsel %vm1214, %v10274, 0
      %v10312 = vsel %vm1214, %v10275, 0
      %v10315 = vsel %vm1214, %v10276, 0
      %v10318 = vsel %vm1214, %v10277, 0
      %v10321 = vsel %vm1214, %v10278, 0
      %v10324 = vsel %vm1214, %v10279, 0
      %v10327 = vsel %vm1214, %v10280, 0
      %v10330 = vsel %vm1263, %v10232, 0
      %10332 = vmatprep.subr.bf16.mxu0 0
      %10333 = vmatpush1.bf16.msra.mxu0 %v10330
      %10334 = vmatprep.subr.bf16.mxu0 0
      %10335 = vmatpush1.bf16.msra.mxu0 0
      %10336 = vmatprep.subr.bf16.mxu0 0
      %10337 = vmatpush1.bf16.msra.mxu0 0
      %10338 = vmatprep.subr.bf16.mxu0 0
      %10339 = vmatpush1.bf16.msra.mxu0 0
      %10340 = vmatprep.subr.bf16.mxu0 0
      %10341 = vmatpush1.bf16.msra.mxu0 0
      %10342 = vmatprep.subr.bf16.mxu0 0
      %10343 = vmatpush1.bf16.msra.mxu0 0
      %10344 = vmatprep.subr.bf16.mxu0 0
      %10345 = vmatpush1.bf16.msra.mxu0 0
      %10346 = vmatprep.subr.bf16.mxu0 0
      %10347 = vmatpush1.bf16.msra.mxu0 0
      %10348 = vmatprep.subr.bf16.mxu0 0
      %10349 = vmatpush1.bf16.msra.mxu0 0
      %10350 = vmatprep.subr.bf16.mxu0 0
      %10351 = vmatpush1.bf16.msra.mxu0 0
      %10352 = vmatprep.subr.bf16.mxu0 0
      %10353 = vmatpush1.bf16.msra.mxu0 0
      %10354 = vmatprep.subr.bf16.mxu0 0
      %10355 = vmatpush1.bf16.msra.mxu0 0
      %10356 = vmatprep.subr.bf16.mxu0 0
      %10357 = vmatpush1.bf16.msra.mxu0 0
      %10358 = vmatprep.subr.bf16.mxu0 0
      %10359 = vmatpush1.bf16.msra.mxu0 0
      %10360 = vmatprep.subr.bf16.mxu0 0
      %10361 = vmatpush1.bf16.msra.mxu0 0
      %10362 = vmatprep.subr.bf16.mxu0 0
      %10363 = vmatpush1.bf16.msra.mxu0 0
      %10364 = vmatprep.mubr.bf16.mxu0 0
      %10365 = vmatmul.mubr.bf16.gmra.mrb[0].mxu0 %v10282
      %v10366 = vpop.f32.mrb[0].mxu0
      %v10367 = vadd.f32 0.0, %v10366
      %v10368 = vpop.f32.mrb[0].mxu0
      %v10369 = vpop.f32.mrb[0].mxu0
      %v10370 = vadd.f32 0.0, %v10369
      %v10371 = vpop.f32.mrb[0].mxu0
      %10372 = vmatprep.mubr.bf16.mxu0 0
      %10373 = vmatmul.mubr.bf16.gmra.mrb[0].mxu0 %v10285
      %v10374 = vpop.f32.mrb[0].mxu0
      %v10375 = vadd.f32 0.0, %v10374
      %v10376 = vpop.f32.mrb[0].mxu0
      %v10377 = vpop.f32.mrb[0].mxu0
      %v10378 = vadd.f32 0.0, %v10377
      %v10379 = vpop.f32.mrb[0].mxu0
      %10380 = vmatprep.mubr.bf16.mxu0 0
      %10381 = vmatmul.mubr.bf16.gmra.mrb[0].mxu0 %v10288
      %v10382 = vpop.f32.mrb[0].mxu0
      %v10383 = vadd.f32 0.0, %v10382
      %v10384 = vpop.f32.mrb[0].mxu0
      %v10385 = vpop.f32.mrb[0].mxu0
      %v10386 = vadd.f32 0.0, %v10385
      %v10387 = vpop.f32.mrb[0].mxu0
      %10388 = vmatprep.mubr.bf16.mxu0 0
      %10389 = vmatmul.mubr.bf16.gmra.mrb[0].mxu0 %v10291
      %v10390 = vpop.f32.mrb[0].mxu0
      %v10391 = vadd.f32 0.0, %v10390
      %v10392 = vpop.f32.mrb[0].mxu0
      %v10393 = vpop.f32.mrb[0].mxu0
      %v10394 = vadd.f32 0.0, %v10393
      %v10395 = vpop.f32.mrb[0].mxu0
      %10396 = vmatprep.mubr.bf16.mxu0 0
      %10397 = vmatmul.mubr.bf16.gmra.mrb[0].mxu0 %v10294
      %v10398 = vpop.f32.mrb[0].mxu0
      %v10399 = vadd.f32 0.0, %v10398
      %v10400 = vpop.f32.mrb[0].mxu0
      %v10401 = vpop.f32.mrb[0].mxu0
      %v10402 = vadd.f32 0.0, %v10401
      %v10403 = vpop.f32.mrb[0].mxu0
      %10404 = vmatprep.mubr.bf16.mxu0 0
      %10405 = vmatmul.mubr.bf16.gmra.mrb[0].mxu0 %v10297
      %v10406 = vpop.f32.mrb[0].mxu0
      %v10407 = vadd.f32 0.0, %v10406
      %v10408 = vpop.f32.mrb[0].mxu0
      %v10409 = vpop.f32.mrb[0].mxu0
      %v10410 = vadd.f32 0.0, %v10409
      %v10411 = vpop.f32.mrb[0].mxu0
      %10412 = vmatprep.mubr.bf16.mxu0 0
      %10413 = vmatmul.mubr.bf16.gmra.mrb[0].mxu0 %v10300
      %v10414 = vpop.f32.mrb[0].mxu0
      %v10415 = vadd.f32 0.0, %v10414
      %v10416 = vpop.f32.mrb[0].mxu0
      %v10417 = vpop.f32.mrb[0].mxu0
      %v10418 = vadd.f32 0.0, %v10417
      %v10419 = vpop.f32.mrb[0].mxu0
      %10420 = vmatprep.mubr.bf16.mxu0 0
      %10421 = vmatmul.mubr.bf16.gmra.mrb[0].mxu0 %v10303
      %v10422 = vpop.f32.mrb[0].mxu0
      %v10423 = vadd.f32 0.0, %v10422
      %v10424 = vpop.f32.mrb[0].mxu0
      %v10425 = vpop.f32.mrb[0].mxu0
      %v10426 = vadd.f32 0.0, %v10425
      %v10427 = vpop.f32.mrb[0].mxu0
      %10428 = vmatprep.mubr.bf16.mxu0 0
      %10429 = vmatmul.mubr.bf16.gmra.mrb[0].mxu0 %v10306
      %v10430 = vpop.f32.mrb[0].mxu0
      %v10431 = vadd.f32 0.0, %v10430
      %v10432 = vpop.f32.mrb[0].mxu0
      %v10433 = vpop.f32.mrb[0].mxu0
      %v10434 = vadd.f32 0.0, %v10433
      %v10435 = vpop.f32.mrb[0].mxu0
      %10436 = vmatprep.mubr.bf16.mxu0 0
      %10437 = vmatmul.mubr.bf16.gmra.mrb[0].mxu0 %v10309
      %v10438 = vpop.f32.mrb[0].mxu0
      %v10439 = vadd.f32 0.0, %v10438
      %v10440 = vpop.f32.mrb[0].mxu0
      %v10441 = vpop.f32.mrb[0].mxu0
      %v10442 = vadd.f32 0.0, %v10441
      %v10443 = vpop.f32.mrb[0].mxu0
      %10444 = vmatprep.mubr.bf16.mxu0 0
      %10445 = vmatmul.mubr.bf16.gmra.mrb[0].mxu0 %v10312
      %v10446 = vpop.f32.mrb[0].mxu0
      %v10447 = vadd.f32 0.0, %v10446
      %v10448 = vpop.f32.mrb[0].mxu0
      %v10449 = vpop.f32.mrb[0].mxu0
      %v10450 = vadd.f32 0.0, %v10449
      %v10451 = vpop.f32.mrb[0].mxu0
      %10452 = vmatprep.mubr.bf16.mxu0 0
      %10453 = vmatmul.mubr.bf16.gmra.mrb[0].mxu0 %v10315
      %v10454 = vpop.f32.mrb[0].mxu0
      %v10455 = vadd.f32 0.0, %v10454
      %v10456 = vpop.f32.mrb[0].mxu0
      %v10457 = vpop.f32.mrb[0].mxu0
      %v10458 = vadd.f32 0.0, %v10457
      %v10459 = vpop.f32.mrb[0].mxu0
      %10460 = vmatprep.mubr.bf16.mxu0 0
      %10461 = vmatmul.mubr.bf16.gmra.mrb[0].mxu0 %v10318
      %v10462 = vpop.f32.mrb[0].mxu0
      %v10463 = vadd.f32 0.0, %v10462
      %v10464 = vpop.f32.mrb[0].mxu0
      %v10465 = vpop.f32.mrb[0].mxu0
      %v10466 = vadd.f32 0.0, %v10465
      %v10467 = vpop.f32.mrb[0].mxu0
      %10468 = vmatprep.mubr.bf16.mxu0 0
      %10469 = vmatmul.mubr.bf16.gmra.mrb[0].mxu0 %v10321
      %v10470 = vpop.f32.mrb[0].mxu0
      %v10471 = vadd.f32 0.0, %v10470
      %v10472 = vpop.f32.mrb[0].mxu0
      %v10473 = vpop.f32.mrb[0].mxu0
      %v10474 = vadd.f32 0.0, %v10473
      %v10475 = vpop.f32.mrb[0].mxu0
      %10476 = vmatprep.mubr.bf16.mxu0 0
      %10477 = vmatmul.mubr.bf16.gmra.mrb[0].mxu0 %v10324
      %v10478 = vpop.f32.mrb[0].mxu0
      %v10479 = vadd.f32 0.0, %v10478
      %v10480 = vpop.f32.mrb[0].mxu0
      %v10481 = vpop.f32.mrb[0].mxu0
      %v10482 = vadd.f32 0.0, %v10481
      %v10483 = vpop.f32.mrb[0].mxu0
      %10484 = vmatprep.mubr.bf16.mxu0 0
      %10485 = vmatmul.mubr.bf16.gmra.mrb[0].mxu0 %v10327
      %v10486 = vpop.f32.mrb[0].mxu0
      %v10487 = vadd.f32 0.0, %v10486
      %v10488 = vpop.f32.mrb[0].mxu0
      %v10489 = vpop.f32.mrb[0].mxu0
      %v10490 = vadd.f32 0.0, %v10489
      %v10491 = vpop.f32.mrb[0].mxu0
      %10492 = vdwg.mxu0
      %v10493 = vadd.f32 %v10023, %v10367
      %v10494 = vadd.f32 %v10024, %v10370
      %v10495 = vadd.f32 %v10025, %v10375
      %v10496 = vadd.f32 %v10026, %v10378
      %v10497 = vadd.f32 %v10027, %v10383
      %v10498 = vadd.f32 %v10028, %v10386
      %v10499 = vadd.f32 %v10029, %v10391
      %v10500 = vadd.f32 %v10030, %v10394
      %v10501 = vadd.f32 %v10031, %v10399
      %v10502 = vadd.f32 %v10032, %v10402
      %v10503 = vadd.f32 %v10033, %v10407
      %v10504 = vadd.f32 %v10034, %v10410
      %v10505 = vadd.f32 %v10035, %v10415
      %v10506 = vadd.f32 %v10036, %v10418
      %v10507 = vadd.f32 %v10037, %v10423
      %v10508 = vadd.f32 %v10038, %v10426
      %v10509 = vadd.f32 %v10039, %v10431
      %v10510 = vadd.f32 %v10040, %v10434
      %v10511 = vadd.f32 %v10041, %v10439
      %v10512 = vadd.f32 %v10042, %v10442
      %v10513 = vadd.f32 %v10043, %v10447
      %v10514 = vadd.f32 %v10044, %v10450
      %v10515 = vadd.f32 %v10045, %v10455
      %v10516 = vadd.f32 %v10046, %v10458
      %v10517 = vadd.f32 %v10047, %v10463
      %v10518 = vadd.f32 %v10048, %v10466
      %v10519 = vadd.f32 %v10049, %v10471
      %v10520 = vadd.f32 %v10050, %v10474
      %v10521 = vadd.f32 %v10051, %v10479
      %v10522 = vadd.f32 %v10052, %v10482
      %v10523 = vadd.f32 %v10053, %v10487
      %v10524 = vadd.f32 %v10054, %v10490
      %v10525 = vld [vmem:[%s3 + $0x2] sm:$0x1]
      %v10526 = vlaneseq
      %v10527 = vshrl.u32 %v10526, 7
      %v10528 = vsub.s32 0, %v10527
      %v10529 = vrot.slane %v10525, %v10528
      %v10530 = vmul.f32 %v10493, %v10529
      %v10531 = vmul.f32 %v10494, %v10529
      %v10532 = vmul.f32 %v10495, %v10529
      %v10533 = vmul.f32 %v10496, %v10529
      %v10534 = vmul.f32 %v10497, %v10529
      %v10535 = vmul.f32 %v10498, %v10529
      %v10536 = vmul.f32 %v10499, %v10529
      %v10537 = vmul.f32 %v10500, %v10529
      %v10538 = vmul.f32 %v10501, %v10529
      %v10539 = vmul.f32 %v10502, %v10529
      %v10540 = vmul.f32 %v10503, %v10529
      %v10541 = vmul.f32 %v10504, %v10529
      %v10542 = vmul.f32 %v10505, %v10529
      %v10543 = vmul.f32 %v10506, %v10529
      %v10544 = vmul.f32 %v10507, %v10529
      %v10545 = vmul.f32 %v10508, %v10529
      %v10546 = vmul.f32 %v10509, %v10529
      %v10547 = vmul.f32 %v10510, %v10529
      %v10548 = vmul.f32 %v10511, %v10529
      %v10549 = vmul.f32 %v10512, %v10529
      %v10550 = vmul.f32 %v10513, %v10529
      %v10551 = vmul.f32 %v10514, %v10529
      %v10552 = vmul.f32 %v10515, %v10529
      %v10553 = vmul.f32 %v10516, %v10529
      %v10554 = vmul.f32 %v10517, %v10529
      %v10555 = vmul.f32 %v10518, %v10529
      %v10556 = vmul.f32 %v10519, %v10529
      %v10557 = vmul.f32 %v10520, %v10529
      %v10558 = vmul.f32 %v10521, %v10529
      %v10559 = vmul.f32 %v10522, %v10529
      %v10560 = vmul.f32 %v10523, %v10529
      %v10561 = vmul.f32 %v10524, %v10529
      %v10562 = vld [vmem:[%s3 + $0x3] sm:$0x1]
      %v10563 = vlaneseq
      %v10564 = vshrl.u32 %v10563, 7
      %v10565 = vsub.s32 0, %v10564
      %v10566 = vrot.slane %v10562, %v10565
      %v10567 = vadd.f32 %v10530, %v10566
      %v10568 = vadd.f32 %v10531, %v10566
      %v10569 = vadd.f32 %v10532, %v10566
      %v10570 = vadd.f32 %v10533, %v10566
      %v10571 = vadd.f32 %v10534, %v10566
      %v10572 = vadd.f32 %v10535, %v10566
      %v10573 = vadd.f32 %v10536, %v10566
      %v10574 = vadd.f32 %v10537, %v10566
      %v10575 = vadd.f32 %v10538, %v10566
      %v10576 = vadd.f32 %v10539, %v10566
      %v10577 = vadd.f32 %v10540, %v10566
      %v10578 = vadd.f32 %v10541, %v10566
      %v10579 = vadd.f32 %v10542, %v10566
      %v10580 = vadd.f32 %v10543, %v10566
      %v10581 = vadd.f32 %v10544, %v10566
      %v10582 = vadd.f32 %v10545, %v10566
      %v10583 = vadd.f32 %v10546, %v10566
      %v10584 = vadd.f32 %v10547, %v10566
      %v10585 = vadd.f32 %v10548, %v10566
      %v10586 = vadd.f32 %v10549, %v10566
      %v10587 = vadd.f32 %v10550, %v10566
      %v10588 = vadd.f32 %v10551, %v10566
      %v10589 = vadd.f32 %v10552, %v10566
      %v10590 = vadd.f32 %v10553, %v10566
      %v10591 = vadd.f32 %v10554, %v10566
      %v10592 = vadd.f32 %v10555, %v10566
      %v10593 = vadd.f32 %v10556, %v10566
      %v10594 = vadd.f32 %v10557, %v10566
      %v10595 = vadd.f32 %v10558, %v10566
      %v10596 = vadd.f32 %v10559, %v10566
      %v10597 = vadd.f32 %v10560, %v10566
      %v10598 = vadd.f32 %v10561, %v10566
      %v10599 = vld [vmem:[%s192] sm:$0xf]
      %v10600 = vld [vmem:[%s192 + $0x4] sm:$0xf]
      %v10601 = vld [vmem:[%s192 + $0x8] sm:$0xf]
      %v10602 = vld [vmem:[%s192 + $0xc] sm:$0xf]
      %v10603 = vld [vmem:[%s192 + $0x10] sm:$0xf]
      %v10604 = vld [vmem:[%s192 + $0x14] sm:$0xf]
      %v10605 = vld [vmem:[%s192 + $0x18] sm:$0xf]
      %v10606 = vld [vmem:[%s192 + $0x1c] sm:$0xf]
      %v10607 = vld [vmem:[%s192 + $0x20] sm:$0xf]
      %v10608 = vld [vmem:[%s192 + $0x24] sm:$0xf]
      %v10609 = vld [vmem:[%s192 + $0x28] sm:$0xf]
      %v10610 = vld [vmem:[%s192 + $0x2c] sm:$0xf]
      %v10611 = vld [vmem:[%s192 + $0x30] sm:$0xf]
      %v10612 = vld [vmem:[%s192 + $0x34] sm:$0xf]
      %v10613 = vld [vmem:[%s192 + $0x38] sm:$0xf]
      %v10614 = vld [vmem:[%s192 + $0x3c] sm:$0xf]
      %v10615 = vld [vmem:[%s192 + $0x40] sm:$0xf]
      %v10616 = vld [vmem:[%s192 + $0x44] sm:$0xf]
      %v10617 = vld [vmem:[%s192 + $0x48] sm:$0xf]
      %v10618 = vld [vmem:[%s192 + $0x4c] sm:$0xf]
      %v10619 = vld [vmem:[%s192 + $0x50] sm:$0xf]
      %v10620 = vld [vmem:[%s192 + $0x54] sm:$0xf]
      %v10621 = vld [vmem:[%s192 + $0x58] sm:$0xf]
      %v10622 = vld [vmem:[%s192 + $0x5c] sm:$0xf]
      %v10623 = vld [vmem:[%s192 + $0x60] sm:$0xf]
      %v10624 = vld [vmem:[%s192 + $0x64] sm:$0xf]
      %v10625 = vld [vmem:[%s192 + $0x68] sm:$0xf]
      %v10626 = vld [vmem:[%s192 + $0x6c] sm:$0xf]
      %v10627 = vld [vmem:[%s192 + $0x70] sm:$0xf]
      %v10628 = vld [vmem:[%s192 + $0x74] sm:$0xf]
      %v10629 = vld [vmem:[%s192 + $0x78] sm:$0xf]
      %v10630 = vld [vmem:[%s192 + $0x7c] sm:$0xf]
      %v10631 = vunpack.c.l.bf16 %v10599
      %v10632 = vunpack.c.l.bf16 %v10600
      %v10633 = vunpack.c.l.bf16 %v10601
      %v10634 = vunpack.c.l.bf16 %v10602
      %v10635 = vunpack.c.l.bf16 %v10603
      %v10636 = vunpack.c.l.bf16 %v10604
      %v10637 = vunpack.c.l.bf16 %v10605
      %v10638 = vunpack.c.l.bf16 %v10606
      %v10639 = vunpack.c.l.bf16 %v10607
      %v10640 = vunpack.c.l.bf16 %v10608
      %v10641 = vunpack.c.l.bf16 %v10609
      %v10642 = vunpack.c.l.bf16 %v10610
      %v10643 = vunpack.c.l.bf16 %v10611
      %v10644 = vunpack.c.l.bf16 %v10612
      %v10645 = vunpack.c.l.bf16 %v10613
      %v10646 = vunpack.c.l.bf16 %v10614
      %v10647 = vunpack.c.l.bf16 %v10615
      %v10648 = vunpack.c.l.bf16 %v10616
      %v10649 = vunpack.c.l.bf16 %v10617
      %v10650 = vunpack.c.l.bf16 %v10618
      %v10651 = vunpack.c.l.bf16 %v10619
      %v10652 = vunpack.c.l.bf16 %v10620
      %v10653 = vunpack.c.l.bf16 %v10621
      %v10654 = vunpack.c.l.bf16 %v10622
      %v10655 = vunpack.c.l.bf16 %v10623
      %v10656 = vunpack.c.l.bf16 %v10624
      %v10657 = vunpack.c.l.bf16 %v10625
      %v10658 = vunpack.c.l.bf16 %v10626
      %v10659 = vunpack.c.l.bf16 %v10627
      %v10660 = vunpack.c.l.bf16 %v10628
      %v10661 = vunpack.c.l.bf16 %v10629
      %v10662 = vunpack.c.l.bf16 %v10630
      %v10663 = vadd.f32 %v10567, %v10631
      %v10664 = vadd.f32 %v10568, %v10632
      %v10665 = vadd.f32 %v10569, %v10633
      %v10666 = vadd.f32 %v10570, %v10634
      %v10667 = vadd.f32 %v10571, %v10635
      %v10668 = vadd.f32 %v10572, %v10636
      %v10669 = vadd.f32 %v10573, %v10637
      %v10670 = vadd.f32 %v10574, %v10638
      %v10671 = vadd.f32 %v10575, %v10639
      %v10672 = vadd.f32 %v10576, %v10640
      %v10673 = vadd.f32 %v10577, %v10641
      %v10674 = vadd.f32 %v10578, %v10642
      %v10675 = vadd.f32 %v10579, %v10643
      %v10676 = vadd.f32 %v10580, %v10644
      %v10677 = vadd.f32 %v10581, %v10645
      %v10678 = vadd.f32 %v10582, %v10646
      %v10679 = vadd.f32 %v10583, %v10647
      %v10680 = vadd.f32 %v10584, %v10648
      %v10681 = vadd.f32 %v10585, %v10649
      %v10682 = vadd.f32 %v10586, %v10650
      %v10683 = vadd.f32 %v10587, %v10651
      %v10684 = vadd.f32 %v10588, %v10652
      %v10685 = vadd.f32 %v10589, %v10653
      %v10686 = vadd.f32 %v10590, %v10654
      %v10687 = vadd.f32 %v10591, %v10655
      %v10688 = vadd.f32 %v10592, %v10656
      %v10689 = vadd.f32 %v10593, %v10657
      %v10690 = vadd.f32 %v10594, %v10658
      %v10691 = vadd.f32 %v10595, %v10659
      %v10692 = vadd.f32 %v10596, %v10660
      %v10693 = vadd.f32 %v10597, %v10661
      %v10694 = vadd.f32 %v10598, %v10662
      %v10695 = vmax.f32 %v10663, 0.0
      %v10696 = vmax.f32 %v10664, 0.0
      %v10697 = vmax.f32 %v10665, 0.0
      %v10698 = vmax.f32 %v10666, 0.0
      %v10699 = vmax.f32 %v10667, 0.0
      %v10700 = vmax.f32 %v10668, 0.0
      %v10701 = vmax.f32 %v10669, 0.0
      %v10702 = vmax.f32 %v10670, 0.0
      %v10703 = vmax.f32 %v10671, 0.0
      %v10704 = vmax.f32 %v10672, 0.0
      %v10705 = vmax.f32 %v10673, 0.0
      %v10706 = vmax.f32 %v10674, 0.0
      %v10707 = vmax.f32 %v10675, 0.0
      %v10708 = vmax.f32 %v10676, 0.0
      %v10709 = vmax.f32 %v10677, 0.0
      %v10710 = vmax.f32 %v10678, 0.0
      %v10711 = vmax.f32 %v10679, 0.0
      %v10712 = vmax.f32 %v10680, 0.0
      %v10713 = vmax.f32 %v10681, 0.0
      %v10714 = vmax.f32 %v10682, 0.0
      %v10715 = vmax.f32 %v10683, 0.0
      %v10716 = vmax.f32 %v10684, 0.0
      %v10717 = vmax.f32 %v10685, 0.0
      %v10718 = vmax.f32 %v10686, 0.0
      %v10719 = vmax.f32 %v10687, 0.0
      %v10720 = vmax.f32 %v10688, 0.0
      %v10721 = vmax.f32 %v10689, 0.0
      %v10722 = vmax.f32 %v10690, 0.0
      %v10723 = vmax.f32 %v10691, 0.0
      %v10724 = vmax.f32 %v10692, 0.0
      %v10725 = vmax.f32 %v10693, 0.0
      %v10726 = vmax.f32 %v10694, 0.0
      %10727 = vst.msk [vmem:[%s197] sm:$0xff] %vm1214, %v10695
      %10728 = vst.msk [vmem:[%s197 + $0x8] sm:$0xff] %vm1214, %v10696
      %10729 = vst.msk [vmem:[%s197 + $0x10] sm:$0xff] %vm1214, %v10697
      %10730 = vst.msk [vmem:[%s197 + $0x18] sm:$0xff] %vm1214, %v10698
      %10731 = vst.msk [vmem:[%s197 + $0x20] sm:$0xff] %vm1214, %v10699
      %10732 = vst.msk [vmem:[%s197 + $0x28] sm:$0xff] %vm1214, %v10700
      %10733 = vst.msk [vmem:[%s197 + $0x30] sm:$0xff] %vm1214, %v10701
      %10734 = vst.msk [vmem:[%s197 + $0x38] sm:$0xff] %vm1214, %v10702
      %10735 = vst.msk [vmem:[%s197 + $0x40] sm:$0xff] %vm1214, %v10703
      %10736 = vst.msk [vmem:[%s197 + $0x48] sm:$0xff] %vm1214, %v10704
      %10737 = vst.msk [vmem:[%s197 + $0x50] sm:$0xff] %vm1214, %v10705
      %10738 = vst.msk [vmem:[%s197 + $0x58] sm:$0xff] %vm1214, %v10706
      %10739 = vst.msk [vmem:[%s197 + $0x60] sm:$0xff] %vm1214, %v10707
      %10740 = vst.msk [vmem:[%s197 + $0x68] sm:$0xff] %vm1214, %v10708
      %10741 = vst.msk [vmem:[%s197 + $0x70] sm:$0xff] %vm1214, %v10709
      %10742 = vst.msk [vmem:[%s197 + $0x78] sm:$0xff] %vm1214, %v10710
      %10743 = vst.msk [vmem:[%s197 + $0x80] sm:$0xff] %vm1214, %v10711
      %10744 = vst.msk [vmem:[%s197 + $0x88] sm:$0xff] %vm1214, %v10712
      %10745 = vst.msk [vmem:[%s197 + $0x90] sm:$0xff] %vm1214, %v10713
      %10746 = vst.msk [vmem:[%s197 + $0x98] sm:$0xff] %vm1214, %v10714
      %10747 = vst.msk [vmem:[%s197 + $0xa0] sm:$0xff] %vm1214, %v10715
      %10748 = vst.msk [vmem:[%s197 + $0xa8] sm:$0xff] %vm1214, %v10716
      %10749 = vst.msk [vmem:[%s197 + $0xb0] sm:$0xff] %vm1214, %v10717
      %10750 = vst.msk [vmem:[%s197 + $0xb8] sm:$0xff] %vm1214, %v10718
      %10751 = vst.msk [vmem:[%s197 + $0xc0] sm:$0xff] %vm1214, %v10719
      %10752 = vst.msk [vmem:[%s197 + $0xc8] sm:$0xff] %vm1214, %v10720
      %10753 = vst.msk [vmem:[%s197 + $0xd0] sm:$0xff] %vm1214, %v10721
      %10754 = vst.msk [vmem:[%s197 + $0xd8] sm:$0xff] %vm1214, %v10722
      %10755 = vst.msk [vmem:[%s197 + $0xe0] sm:$0xff] %vm1214, %v10723
      %10756 = vst.msk [vmem:[%s197 + $0xe8] sm:$0xff] %vm1214, %v10724
      %10757 = vst.msk [vmem:[%s197 + $0xf0] sm:$0xff] %vm1214, %v10725
      %10758 = vst.msk [vmem:[%s197 + $0xf8] sm:$0xff] %vm1214, %v10726
      %p10759 = scmp.lt.s32.totalorder %s15, 1
      %s10760 = scalar_select %p10759, %s15, 1
      %s10761 = smul.addr %s10760, 32
      %s10762 = smul.addr %s10761, 8
      %s10763 = scalar_lea.vmem %s4, %s10762
      // Predicated region
      $region37: #{basic_block_forward.1} parent=35 // pred_check
        %p10764 = pneg %p122
      $region38: #{basic_block_forward.1} parent=35 // pred_check_branch
        %10766 = sbr.rel (%p10764) target = $region40
      $region39: #{basic_block_forward.1} parent=35 // pred_region
        _
      $region40: #{basic_block_forward.1} parent=35 // pred_fallthru
        _
    $region36: #{basic_block_forward.1} parent=5 // pred_fallthru
      _
    %p10767 = scmp.le.s32.totalorder 2, %s10
    // Predicated region
    $region41: #{basic_block_forward.1} parent=5 // pred_check
      %p10768 = pneg %p10767
    $region42: #{basic_block_forward.1} parent=5 // pred_check_branch
      %10770 = sbr.rel (%p10768) target = $region44
    $region43: #{basic_block_forward.1} parent=5 // pred_region
      %s10771 = ssub.s32 %s10, 2
      // Predicated region
      $region45: #{basic_block_forward.1} parent=43 // pred_check
        %p10772 = pneg %p128
      $region46: #{basic_block_forward.1} parent=43 // pred_check_branch
        %10774 = sbr.rel (%p10772) target = $region48
      $region47: #{basic_block_forward.1} parent=43 // pred_region
        %p10775 = scmp.lt.s32.totalorder %s16, 1
        %s10776 = scalar_select %p10775, %s16, 1
        %s10777 = smul.addr %s10776, 32
        %s10778 = smul.addr %s10777, 8
        %s10779 = scalar_lea.vmem %s4, %s10778
      $region48: #{basic_block_forward.1} parent=43 // pred_fallthru
        _
    $region44: #{basic_block_forward.1} parent=5 // pred_fallthru
      _
  $region6: #{basic_block_forward.1} parent=0 // loop_footer
    %s14 = sadd.s32 1, %s10
  $region7: #{basic_block_forward.1} parent=0 // loop_footer_branch
    %9 = sbr.rel target = $region3
  $region8: #{basic_block_forward.1} parent=0 // loop_exit
    _

</llo_original>
